<compile_context>
chip_gen: v7x
topology: tpu7x:2x2x1
jax: 0.10.0
libtpu: 0.0.40
codegen_flags: <defaults>
</compile_context>

<pallas_src>
import jax
import jax.numpy as jnp
from jax.experimental import pallas as pl
from jax.experimental.pallas import tpu as pltpu


MAX_B_TILE = 64  # images per grid step (multiple of 8); ~8 MiB VMEM at 64


def _round_up(n, m):
    return ((n + m - 1) // m) * m


# ------------------------------- fused kernel -------------------------------


def _make_cnn_kernel(bt):
    """Fused forward for one tile of `bt` images (bt % 8 == 0)."""
    f32 = jnp.float32
    bf16 = jnp.bfloat16
    m1 = 7 * bt  # stacked M for conv1/conv2 (valid rows r=1..7, batch-minor)

    def kernel(x_ref, band1_ref, bias1_ref, band2_ref, bias2_ref,
               wl_ref, bl_ref, o_ref, z_ref, m2_ref):
        # x_ref:     (4, 7*bt, 160)   bf16  conv1 im2row LHS, one slab per tap
        #                                   t0 = 2*row_parity + row_tap;
        #                                   row = r*bt + b, col = dy*32 + x_col
        # band1_ref: (2, 160, 288)    bf16  conv1 bands (dy folded into K)
        # bias1_ref: (1, 288)         f32
        # band2_ref: (2, 5, 288, 224) bf16  conv2 bands
        # bias2_ref: (1, 224)         f32
        # wl_ref:    (7, 224, 128)    bf16  linear weight per pooled row
        # bl_ref:    (1, 128)         f32
        # o_ref:     (bt, 128)        f32
        # z_ref:     (2, 9*bt, 288)   bf16  conv2 zero-padded input (scratch)
        # m2_ref:    (7*bt, 224)      f32   conv2 pre-activation running max

        # conv2 row padding (rows w=0 and w=8 of each parity slab).  Re-written
        # every step so it is correct even when the grid is core-sharded.
        zpad = jnp.zeros((bt, 288), bf16)
        for pi in range(2):
            z_ref[pi, 0:bt, :] = zpad
            z_ref[pi, 8 * bt:9 * bt, :] = zpad

        # ---- conv1 (5x5, pad 2) + bias + ReLU + 2x2 maxpool ----------------
        # Pooling = elementwise max of the 4 (row-tap, col-tap) matmul results;
        # bias/ReLU commute with the max.  Output is written directly as the
        # even/odd-row halves of conv2's zero-padded input.
        for pi in range(2):
            m = None
            for hp in range(2):
                lhs = x_ref[2 * pi + hp]                       # (7*bt, 160) bf16
                for p in range(2):
                    d = jnp.dot(lhs, band1_ref[p], preferred_element_type=f32)
                    m = d if m is None else jnp.maximum(m, d)
            z = jnp.maximum(m + bias1_ref[...], 0.0)           # (7*bt, 288) f32
            z_ref[pi, bt:8 * bt, :] = z.astype(bf16)

        # ---- conv2 (5x5, pad 2) + bias + ReLU + 2x2 maxpool ----------------
        # Row windows are contiguous, 8-aligned static slices of the z scratch.
        first = True
        for hp in range(2):
            for p in range(2):
                acc = None
                for dy in range(5):
                    t2 = hp + dy
                    off = (t2 // 2) * bt
                    lhs = z_ref[t2 % 2, off:off + m1, :]       # (7*bt, 288) bf16
                    d = jnp.dot(lhs, band2_ref[p, dy],
                                preferred_element_type=f32)
                    acc = d if acc is None else acc + d
                if first:
                    m2_ref[...] = acc
                    first = False
                else:
                    m2_ref[...] = jnp.maximum(m2_ref[...], acc)
        p2 = jnp.maximum(m2_ref[...] + bias2_ref[...], 0.0).astype(bf16)

        # ---- linear: out[b] = sum_h p2[h*bt + b] @ WL[h] + bl ---------------
        out = jnp.dot(p2[0:bt, :], wl_ref[0], preferred_element_type=f32)
        for h in range(1, 7):
            out = out + jnp.dot(p2[h * bt:(h + 1) * bt, :], wl_ref[h],
                                preferred_element_type=f32)
        o_ref[...] = out + bl_ref[...]

    return kernel


# --------------------------- parameter preparation --------------------------


def prepare_cnn_params(params):
    """One-time conversion of PyTorch-layout params into kernel-layout params."""
    w1, b1, w2, b2, wl, bl = params

    # conv1 band, dy folded into the contraction:
    #   band1[p, dy*32 + (2*wo + p + dx), (wo+2)*16 + c] = w1[c, 0, dy, dx]
    wo = jnp.arange(14)[:, None, None]
    dx = jnp.arange(5)[None, :, None]
    c = jnp.arange(16)[None, None, :]
    cols1 = jnp.broadcast_to((wo + 2) * 16 + c, (14, 5, 16))
    band1 = jnp.zeros((2, 5, 32, 288), jnp.float32)
    for p in range(2):
        rows1 = jnp.broadcast_to(2 * wo + p + dx, (14, 5, 16))
        for dy in range(5):
            vals = jnp.broadcast_to(w1[:, 0, dy, :].T[None], (14, 5, 16))
            band1 = band1.at[p, dy, rows1, cols1].set(vals)
    band1 = band1.reshape(2, 160, 288).astype(jnp.bfloat16)
    bias1 = jnp.concatenate(
        [jnp.zeros(32), jnp.tile(b1, 14), jnp.zeros(32)]
    ).astype(jnp.float32)[None, :]                                  # (1, 288)

    # conv2 bands: band2[p, dy, (2*wo+p+dx)*16 + ci, wo*32 + co] = w2[co, ci, dy, dx]
    wo2 = jnp.arange(7)[:, None, None, None]
    dx2 = jnp.arange(5)[None, :, None, None]
    ci = jnp.arange(16)[None, None, :, None]
    co = jnp.arange(32)[None, None, None, :]
    ocols2 = jnp.broadcast_to(wo2 * 32 + co, (7, 5, 16, 32))
    band2 = jnp.zeros((2, 5, 288, 224), jnp.float32)
    for p in range(2):
        icols2 = jnp.broadcast_to((2 * wo2 + p + dx2) * 16 + ci, (7, 5, 16, 32))
        for dy in range(5):
            vals = jnp.broadcast_to(
                jnp.transpose(w2[:, :, dy, :], (2, 1, 0))[None], (7, 5, 16, 32))
            band2 = band2.at[p, dy, icols2, ocols2].set(vals)
    band2 = band2.astype(jnp.bfloat16)
    bias2 = jnp.tile(b2, 7).astype(jnp.float32)[None, :]            # (1, 224)

    # linear: wl3[ho, wo*32 + co, n] = wl[n, co*49 + ho*7 + wo]  (CHW flatten)
    nout = wl.shape[0]
    wl3 = wl.reshape(nout, 32, 7, 7).transpose(2, 3, 1, 0).reshape(7, 224, nout)
    wl3 = wl3.astype(jnp.bfloat16)
    bl_row = bl.astype(jnp.float32)[None, :]                        # (1, 128)

    return band1, bias1, band2, bias2, wl3, bl_row


def _prep_input(x_nchw, bt):
    """(B,1,28,28) -> (n_tiles, 4, 7*bt, 160) bf16 conv1 im2row slabs.

    Slab t0 = 2*pool_row_parity + pool_row_tap; row = r*bt + b_local (r=0..6);
    column = dy*32 + padded_image_col, value = padded_img[4*r + t0 + dy, col].
    """
    bsz = x_nchw.shape[0]
    assert bsz % bt == 0
    nt = bsz // bt
    xi = x_nchw.reshape(bsz, 28, 28).astype(jnp.float32)
    xp = jnp.pad(xi, ((0, 0), (2, 2), (2, 2)))                      # (B, 32, 32)
    t0 = jnp.arange(4)[:, None, None]
    r = jnp.arange(7)[None, :, None]
    dy = jnp.arange(5)[None, None, :]
    rows = 4 * r + t0 + dy                                          # (4, 7, 5)
    xg = jnp.take(xp, rows, axis=1)                                 # (B, 4, 7, 5, 32)
    xg = xg.reshape(bsz, 4, 7, 160)
    xg = xg.reshape(nt, bt, 4, 7, 160).transpose(0, 2, 3, 1, 4)     # (nt,4,7,bt,160)
    return xg.reshape(nt, 4, 7 * bt, 160).astype(jnp.bfloat16)


# ------------------------------- full forward -------------------------------


def cnn_forward(x_nchw, kparams, b_tile=MAX_B_TILE):
    band1, bias1, band2, bias2, wl3, bl_row = kparams
    bsz = x_nchw.shape[0]

    bt = _round_up(min(b_tile, _round_up(bsz, 8)), 8)   # batch tile, multiple of 8
    padded = _round_up(bsz, bt)
    nt = padded // bt
    if padded != bsz:
        x_nchw = jnp.pad(x_nchw, ((0, padded - bsz), (0, 0), (0, 0), (0, 0)))

    xg = _prep_input(x_nchw, bt)                        # (nt, 4, 7*bt, 160) bf16

    flops_per_img = (8 * 2 * 7 * 160 * 288              # conv1
                     + 20 * 2 * 7 * 288 * 224           # conv2
                     + 7 * 2 * 224 * 128)               # linear
    weight_bytes = ((band1.size + band2.size + wl3.size) * 2
                    + (bias1.size + bias2.size + bl_row.size) * 4)
    cost = pl.CostEstimate(
        flops=flops_per_img * padded, transcendentals=0,
        bytes_accessed=int(xg.size * 2 + padded * 128 * 4 + weight_bytes))

    out = pl.pallas_call(
        _make_cnn_kernel(bt),
        out_shape=jax.ShapeDtypeStruct((nt, bt, 128), jnp.float32),
        grid=(nt,),
        in_specs=[
            pl.BlockSpec((None, 4, 7 * bt, 160), lambda i: (i, 0, 0, 0)),
            pl.BlockSpec((2, 160, 288), lambda i: (0, 0, 0)),
            pl.BlockSpec((1, 288), lambda i: (0, 0)),
            pl.BlockSpec((2, 5, 288, 224), lambda i: (0, 0, 0, 0)),
            pl.BlockSpec((1, 224), lambda i: (0, 0)),
            pl.BlockSpec((7, 224, 128), lambda i: (0, 0, 0)),
            pl.BlockSpec((1, 128), lambda i: (0, 0)),
        ],
        out_specs=pl.BlockSpec((None, bt, 128), lambda i: (i, 0, 0)),
        scratch_shapes=[
            pltpu.VMEM((2, 9 * bt, 288), jnp.bfloat16),  # conv2 padded input
            pltpu.VMEM((7 * bt, 224), jnp.float32),      # conv2 running max
        ],
        compiler_params=pltpu.CompilerParams(
            dimension_semantics=("parallel",),
            vmem_limit_bytes=32 * 1024 * 1024),
        cost_estimate=cost,
    )(xg, band1, bias1, band2, bias2, wl3, bl_row)

    return out.reshape(padded, 128)[:bsz]


# --------------------------------- reference ---------------------------------


def reference_forward(x_nchw, params):
    w1, b1, w2, b2, wl, bl = params
    hi = jax.lax.Precision.HIGHEST

    def conv(x, w, b):
        y = jax.lax.conv_general_dilated(
            x, w, window_strides=(1, 1), padding=((2, 2), (2, 2)),
            dimension_numbers=("NCHW", "OIHW", "NCHW"), precision=hi)
        return jax.nn.relu(y + b[None, :, None, None])

    def pool(x):
        return jax.lax.reduce_window(
            x, -jnp.inf, jax.lax.max, (1, 1, 2, 2), (1, 1, 2, 2), "VALID")

    y = pool(conv(x_nchw, w1, b1))
    y = pool(conv(y, w2, b2))
    y = y.reshape(y.shape[0], -1)
    return jnp.dot(y, wl.T, precision=hi) + bl


if __name__ == "__main__":
    key = jax.random.PRNGKey(0)
    k1, k2, k3, k4, k5, k6, kx = jax.random.split(key, 7)

    # deterministic synthetic parameters (shapes from CNN.__init__)
    w1 = 0.10 * jax.random.normal(k1, (16, 1, 5, 5), jnp.float32)
    b1 = 0.10 * jax.random.normal(k2, (16,), jnp.float32)
    w2 = 0.05 * jax.random.normal(k3, (32, 16, 5, 5), jnp.float32)
    b2 = 0.05 * jax.random.normal(k4, (32,), jnp.float32)
    wl = 0.02 * jax.random.normal(k5, (128, 32 * 7 * 7), jnp.float32)
    bl = 0.02 * jax.random.normal(k6, (128,), jnp.float32)
    params = (w1, b1, w2, b2, wl, bl)

    kparams = prepare_cnn_params(params)        # one-time weight repack
    fwd = jax.jit(cnn_forward)

    # small batch (pads to a single 8-image tile)
    x_small = jax.random.normal(kx, (2, 1, 28, 28), jnp.float32)
    out_small = jax.block_until_ready(fwd(x_small, kparams))
    assert out_small.shape == (2, 128) and out_small.dtype == jnp.float32
    ref_small = reference_forward(x_small, params)
    assert jnp.allclose(out_small, ref_small, rtol=2e-2, atol=2e-2), \
        "small-batch mismatch vs reference"

    # larger batch: exercises the 64-image tile, multi-step grid and tail padding
    x_big = jax.random.normal(kx, (130, 1, 28, 28), jnp.float32)
    out_big = jax.block_until_ready(fwd(x_big, kparams))
    assert out_big.shape == (130, 128)
    ref_big = reference_forward(x_big, params)
    assert jnp.allclose(out_big, ref_big, rtol=2e-2, atol=2e-2), \
        "big-batch mismatch vs reference"

    print("KERNEL_OK")
</pallas_src>

<mosaic_0001>
module attributes {stable_mosaic.version = 11 : i64} {
  func.func @kernel(%arg0: i32, %arg1: memref<1x4x56x160xbf16, #tpu.memory_space<vmem>>, %arg2: memref<2x160x288xbf16, #tpu.memory_space<vmem>>, %arg3: memref<1x288xf32, #tpu.memory_space<vmem>>, %arg4: memref<2x5x288x224xbf16, #tpu.memory_space<vmem>>, %arg5: memref<1x224xf32, #tpu.memory_space<vmem>>, %arg6: memref<7x224x128xbf16, #tpu.memory_space<vmem>>, %arg7: memref<1x128xf32, #tpu.memory_space<vmem>>, %arg8: memref<1x8x128xf32, #tpu.memory_space<vmem>>, %arg9: memref<2x72x288xbf16, #tpu.memory_space<vmem>>, %arg10: memref<56x224xf32, #tpu.memory_space<vmem>>) attributes {dimension_semantics = [#tpu.dimension_semantics<parallel>], iteration_bounds = array<i64: 1>, scalar_prefetch = 0 : i64, scratch_operands = 2 : i64, tpu.core_type = #tpu.core_type<tc>, window_params = [{transform_indices = @transform_0, window_bounds = array<i64: 1, 4, 56, 160>}, {pipeline_mode = #tpu.pipeline_mode<synchronous>, transform_indices = @transform_1, window_bounds = array<i64: 2, 160, 288>}, {pipeline_mode = #tpu.pipeline_mode<synchronous>, transform_indices = @transform_2, window_bounds = array<i64: 1, 288>}, {pipeline_mode = #tpu.pipeline_mode<synchronous>, transform_indices = @transform_3, window_bounds = array<i64: 2, 5, 288, 224>}, {pipeline_mode = #tpu.pipeline_mode<synchronous>, transform_indices = @transform_4, window_bounds = array<i64: 1, 224>}, {pipeline_mode = #tpu.pipeline_mode<synchronous>, transform_indices = @transform_5, window_bounds = array<i64: 7, 224, 128>}, {pipeline_mode = #tpu.pipeline_mode<synchronous>, transform_indices = @transform_6, window_bounds = array<i64: 1, 128>}, {transform_indices = @transform_7, window_bounds = array<i64: 1, 8, 128>}]} {
    %cst = arith.constant 0.000000e+00 : bf16
    %0 = vector.broadcast %cst : bf16 to vector<8x288xbf16>
    %c0 = arith.constant 0 : index
    %c0_0 = arith.constant 0 : index
    %c0_1 = arith.constant 0 : index
    %1 = vector.load %arg9[%c0, %c0_0, %c0_1] : memref<2x72x288xbf16, #tpu.memory_space<vmem>>, vector<1x8x288xbf16>
    %2 = vector.shape_cast %1 : vector<1x8x288xbf16> to vector<8x288xbf16>
    %3 = vector.shape_cast %0 : vector<8x288xbf16> to vector<1x8x288xbf16>
    tpu.vector_store %arg9[%c0, %c0_0, %c0_1], %3 {strides = array<i32>} : memref<2x72x288xbf16, #tpu.memory_space<vmem>>, vector<1x8x288xbf16>,
    %c0_2 = arith.constant 0 : index
    %c64 = arith.constant 64 : index
    %c0_3 = arith.constant 0 : index
    %4 = vector.load %arg9[%c0_2, %c64, %c0_3] : memref<2x72x288xbf16, #tpu.memory_space<vmem>>, vector<1x8x288xbf16>
    %5 = vector.shape_cast %4 : vector<1x8x288xbf16> to vector<8x288xbf16>
    %6 = vector.shape_cast %0 : vector<8x288xbf16> to vector<1x8x288xbf16>
    tpu.vector_store %arg9[%c0_2, %c64, %c0_3], %6 {strides = array<i32>} : memref<2x72x288xbf16, #tpu.memory_space<vmem>>, vector<1x8x288xbf16>,
    %c1 = arith.constant 1 : index
    %c0_4 = arith.constant 0 : index
    %c0_5 = arith.constant 0 : index
    %7 = vector.load %arg9[%c1, %c0_4, %c0_5] : memref<2x72x288xbf16, #tpu.memory_space<vmem>>, vector<1x8x288xbf16>
    %8 = vector.shape_cast %7 : vector<1x8x288xbf16> to vector<8x288xbf16>
    %9 = vector.shape_cast %0 : vector<8x288xbf16> to vector<1x8x288xbf16>
    tpu.vector_store %arg9[%c1, %c0_4, %c0_5], %9 {strides = array<i32>} : memref<2x72x288xbf16, #tpu.memory_space<vmem>>, vector<1x8x288xbf16>,
    %c1_6 = arith.constant 1 : index
    %c64_7 = arith.constant 64 : index
    %c0_8 = arith.constant 0 : index
    %10 = vector.load %arg9[%c1_6, %c64_7, %c0_8] : memref<2x72x288xbf16, #tpu.memory_space<vmem>>, vector<1x8x288xbf16>
    %11 = vector.shape_cast %10 : vector<1x8x288xbf16> to vector<8x288xbf16>
    %12 = vector.shape_cast %0 : vector<8x288xbf16> to vector<1x8x288xbf16>
    tpu.vector_store %arg9[%c1_6, %c64_7, %c0_8], %12 {strides = array<i32>} : memref<2x72x288xbf16, #tpu.memory_space<vmem>>, vector<1x8x288xbf16>,
    %c0_9 = arith.constant 0 : index
    %c0_10 = arith.constant 0 : index
    %c0_11 = arith.constant 0 : index
    %c0_12 = arith.constant 0 : index
    %13 = vector.load %arg1[%c0_9, %c0_10, %c0_11, %c0_12] : memref<1x4x56x160xbf16, #tpu.memory_space<vmem>>, vector<1x1x56x160xbf16>
    %14 = vector.shape_cast %13 : vector<1x1x56x160xbf16> to vector<56x160xbf16>
    %c0_13 = arith.constant 0 : index
    %c0_14 = arith.constant 0 : index
    %c0_15 = arith.constant 0 : index
    %15 = vector.load %arg2[%c0_13, %c0_14, %c0_15] : memref<2x160x288xbf16, #tpu.memory_space<vmem>>, vector<1x160x288xbf16>
    %16 = vector.shape_cast %15 : vector<1x160x288xbf16> to vector<160x288xbf16>
    %cst_16 = arith.constant dense<0.000000e+00> : vector<56x288xf32>
    %17 = tpu.matmul %14, %16, %cst_16 {dimension_numbers = #tpu.dot_dimension_numbers<[1], [0], [0], [1], [0, 0, 1, 1], [], []>} : vector<56x160xbf16>, vector<160x288xbf16>, vector<56x288xf32> -> vector<56x288xf32>
    %c1_17 = arith.constant 1 : index
    %c0_18 = arith.constant 0 : index
    %c0_19 = arith.constant 0 : index
    %18 = vector.load %arg2[%c1_17, %c0_18, %c0_19] : memref<2x160x288xbf16, #tpu.memory_space<vmem>>, vector<1x160x288xbf16>
    %19 = vector.shape_cast %18 : vector<1x160x288xbf16> to vector<160x288xbf16>
    %cst_20 = arith.constant dense<0.000000e+00> : vector<56x288xf32>
    %20 = tpu.matmul %14, %19, %cst_20 {dimension_numbers = #tpu.dot_dimension_numbers<[1], [0], [0], [1], [0, 0, 1, 1], [], []>} : vector<56x160xbf16>, vector<160x288xbf16>, vector<56x288xf32> -> vector<56x288xf32>
    %21 = arith.maximumf %17, %20 : vector<56x288xf32>
    %c0_21 = arith.constant 0 : index
    %c1_22 = arith.constant 1 : index
    %c0_23 = arith.constant 0 : index
    %c0_24 = arith.constant 0 : index
    %22 = vector.load %arg1[%c0_21, %c1_22, %c0_23, %c0_24] : memref<1x4x56x160xbf16, #tpu.memory_space<vmem>>, vector<1x1x56x160xbf16>
    %23 = vector.shape_cast %22 : vector<1x1x56x160xbf16> to vector<56x160xbf16>
    %c0_25 = arith.constant 0 : index
    %c0_26 = arith.constant 0 : index
    %c0_27 = arith.constant 0 : index
    %24 = vector.load %arg2[%c0_25, %c0_26, %c0_27] : memref<2x160x288xbf16, #tpu.memory_space<vmem>>, vector<1x160x288xbf16>
    %25 = vector.shape_cast %24 : vector<1x160x288xbf16> to vector<160x288xbf16>
    %cst_28 = arith.constant dense<0.000000e+00> : vector<56x288xf32>
    %26 = tpu.matmul %23, %25, %cst_28 {dimension_numbers = #tpu.dot_dimension_numbers<[1], [0], [0], [1], [0, 0, 1, 1], [], []>} : vector<56x160xbf16>, vector<160x288xbf16>, vector<56x288xf32> -> vector<56x288xf32>
    %27 = arith.maximumf %21, %26 : vector<56x288xf32>
    %c1_29 = arith.constant 1 : index
    %c0_30 = arith.constant 0 : index
    %c0_31 = arith.constant 0 : index
    %28 = vector.load %arg2[%c1_29, %c0_30, %c0_31] : memref<2x160x288xbf16, #tpu.memory_space<vmem>>, vector<1x160x288xbf16>
    %29 = vector.shape_cast %28 : vector<1x160x288xbf16> to vector<160x288xbf16>
    %cst_32 = arith.constant dense<0.000000e+00> : vector<56x288xf32>
    %30 = tpu.matmul %23, %29, %cst_32 {dimension_numbers = #tpu.dot_dimension_numbers<[1], [0], [0], [1], [0, 0, 1, 1], [], []>} : vector<56x160xbf16>, vector<160x288xbf16>, vector<56x288xf32> -> vector<56x288xf32>
    %31 = arith.maximumf %27, %30 : vector<56x288xf32>
    %c0_33 = arith.constant 0 : index
    %c0_34 = arith.constant 0 : index
    %32 = vector.load %arg3[%c0_33, %c0_34] : memref<1x288xf32, #tpu.memory_space<vmem>>, vector<1x288xf32>
    %33 = vector.broadcast %32 : vector<1x288xf32> to vector<56x288xf32>
    %34 = arith.addf %31, %33 : vector<56x288xf32>
    %cst_35 = arith.constant 0.000000e+00 : f32
    %35 = vector.broadcast %cst_35 : f32 to vector<56x288xf32>
    %36 = arith.maximumf %34, %35 : vector<56x288xf32>
    %37 = arith.truncf %36 : vector<56x288xf32> to vector<56x288xbf16>
    %c0_36 = arith.constant 0 : index
    %c8 = arith.constant 8 : index
    %c0_37 = arith.constant 0 : index
    %38 = vector.load %arg9[%c0_36, %c8, %c0_37] : memref<2x72x288xbf16, #tpu.memory_space<vmem>>, vector<1x56x288xbf16>
    %39 = vector.shape_cast %38 : vector<1x56x288xbf16> to vector<56x288xbf16>
    %40 = vector.shape_cast %37 : vector<56x288xbf16> to vector<1x56x288xbf16>
    tpu.vector_store %arg9[%c0_36, %c8, %c0_37], %40 {strides = array<i32>} : memref<2x72x288xbf16, #tpu.memory_space<vmem>>, vector<1x56x288xbf16>,
    %c0_38 = arith.constant 0 : index
    %c2 = arith.constant 2 : index
    %c0_39 = arith.constant 0 : index
    %c0_40 = arith.constant 0 : index
    %41 = vector.load %arg1[%c0_38, %c2, %c0_39, %c0_40] : memref<1x4x56x160xbf16, #tpu.memory_space<vmem>>, vector<1x1x56x160xbf16>
    %42 = vector.shape_cast %41 : vector<1x1x56x160xbf16> to vector<56x160xbf16>
    %c0_41 = arith.constant 0 : index
    %c0_42 = arith.constant 0 : index
    %c0_43 = arith.constant 0 : index
    %43 = vector.load %arg2[%c0_41, %c0_42, %c0_43] : memref<2x160x288xbf16, #tpu.memory_space<vmem>>, vector<1x160x288xbf16>
    %44 = vector.shape_cast %43 : vector<1x160x288xbf16> to vector<160x288xbf16>
    %cst_44 = arith.constant dense<0.000000e+00> : vector<56x288xf32>
    %45 = tpu.matmul %42, %44, %cst_44 {dimension_numbers = #tpu.dot_dimension_numbers<[1], [0], [0], [1], [0, 0, 1, 1], [], []>} : vector<56x160xbf16>, vector<160x288xbf16>, vector<56x288xf32> -> vector<56x288xf32>
    %c1_45 = arith.constant 1 : index
    %c0_46 = arith.constant 0 : index
    %c0_47 = arith.constant 0 : index
    %46 = vector.load %arg2[%c1_45, %c0_46, %c0_47] : memref<2x160x288xbf16, #tpu.memory_space<vmem>>, vector<1x160x288xbf16>
    %47 = vector.shape_cast %46 : vector<1x160x288xbf16> to vector<160x288xbf16>
    %cst_48 = arith.constant dense<0.000000e+00> : vector<56x288xf32>
    %48 = tpu.matmul %42, %47, %cst_48 {dimension_numbers = #tpu.dot_dimension_numbers<[1], [0], [0], [1], [0, 0, 1, 1], [], []>} : vector<56x160xbf16>, vector<160x288xbf16>, vector<56x288xf32> -> vector<56x288xf32>
    %49 = arith.maximumf %45, %48 : vector<56x288xf32>
    %c0_49 = arith.constant 0 : index
    %c3 = arith.constant 3 : index
    %c0_50 = arith.constant 0 : index
    %c0_51 = arith.constant 0 : index
    %50 = vector.load %arg1[%c0_49, %c3, %c0_50, %c0_51] : memref<1x4x56x160xbf16, #tpu.memory_space<vmem>>, vector<1x1x56x160xbf16>
    %51 = vector.shape_cast %50 : vector<1x1x56x160xbf16> to vector<56x160xbf16>
    %c0_52 = arith.constant 0 : index
    %c0_53 = arith.constant 0 : index
    %c0_54 = arith.constant 0 : index
    %52 = vector.load %arg2[%c0_52, %c0_53, %c0_54] : memref<2x160x288xbf16, #tpu.memory_space<vmem>>, vector<1x160x288xbf16>
    %53 = vector.shape_cast %52 : vector<1x160x288xbf16> to vector<160x288xbf16>
    %cst_55 = arith.constant dense<0.000000e+00> : vector<56x288xf32>
    %54 = tpu.matmul %51, %53, %cst_55 {dimension_numbers = #tpu.dot_dimension_numbers<[1], [0], [0], [1], [0, 0, 1, 1], [], []>} : vector<56x160xbf16>, vector<160x288xbf16>, vector<56x288xf32> -> vector<56x288xf32>
    %55 = arith.maximumf %49, %54 : vector<56x288xf32>
    %c1_56 = arith.constant 1 : index
    %c0_57 = arith.constant 0 : index
    %c0_58 = arith.constant 0 : index
    %56 = vector.load %arg2[%c1_56, %c0_57, %c0_58] : memref<2x160x288xbf16, #tpu.memory_space<vmem>>, vector<1x160x288xbf16>
    %57 = vector.shape_cast %56 : vector<1x160x288xbf16> to vector<160x288xbf16>
    %cst_59 = arith.constant dense<0.000000e+00> : vector<56x288xf32>
    %58 = tpu.matmul %51, %57, %cst_59 {dimension_numbers = #tpu.dot_dimension_numbers<[1], [0], [0], [1], [0, 0, 1, 1], [], []>} : vector<56x160xbf16>, vector<160x288xbf16>, vector<56x288xf32> -> vector<56x288xf32>
    %59 = arith.maximumf %55, %58 : vector<56x288xf32>
    %c0_60 = arith.constant 0 : index
    %c0_61 = arith.constant 0 : index
    %60 = vector.load %arg3[%c0_60, %c0_61] : memref<1x288xf32, #tpu.memory_space<vmem>>, vector<1x288xf32>
    %61 = vector.broadcast %60 : vector<1x288xf32> to vector<56x288xf32>
    %62 = arith.addf %59, %61 : vector<56x288xf32>
    %cst_62 = arith.constant 0.000000e+00 : f32
    %63 = vector.broadcast %cst_62 : f32 to vector<56x288xf32>
    %64 = arith.maximumf %62, %63 : vector<56x288xf32>
    %65 = arith.truncf %64 : vector<56x288xf32> to vector<56x288xbf16>
    %c1_63 = arith.constant 1 : index
    %c8_64 = arith.constant 8 : index
    %c0_65 = arith.constant 0 : index
    %66 = vector.load %arg9[%c1_63, %c8_64, %c0_65] : memref<2x72x288xbf16, #tpu.memory_space<vmem>>, vector<1x56x288xbf16>
    %67 = vector.shape_cast %66 : vector<1x56x288xbf16> to vector<56x288xbf16>
    %68 = vector.shape_cast %65 : vector<56x288xbf16> to vector<1x56x288xbf16>
    tpu.vector_store %arg9[%c1_63, %c8_64, %c0_65], %68 {strides = array<i32>} : memref<2x72x288xbf16, #tpu.memory_space<vmem>>, vector<1x56x288xbf16>,
    %c0_66 = arith.constant 0 : index
    %c0_67 = arith.constant 0 : index
    %c0_68 = arith.constant 0 : index
    %69 = vector.load %arg9[%c0_66, %c0_67, %c0_68] : memref<2x72x288xbf16, #tpu.memory_space<vmem>>, vector<1x56x288xbf16>
    %70 = vector.shape_cast %69 : vector<1x56x288xbf16> to vector<56x288xbf16>
    %c0_69 = arith.constant 0 : index
    %c0_70 = arith.constant 0 : index
    %c0_71 = arith.constant 0 : index
    %c0_72 = arith.constant 0 : index
    %71 = vector.load %arg4[%c0_69, %c0_70, %c0_71, %c0_72] : memref<2x5x288x224xbf16, #tpu.memory_space<vmem>>, vector<1x1x288x224xbf16>
    %72 = vector.shape_cast %71 : vector<1x1x288x224xbf16> to vector<288x224xbf16>
    %cst_73 = arith.constant dense<0.000000e+00> : vector<56x224xf32>
    %73 = tpu.matmul %70, %72, %cst_73 {dimension_numbers = #tpu.dot_dimension_numbers<[1], [0], [0], [1], [0, 0, 1, 1], [], []>} : vector<56x288xbf16>, vector<288x224xbf16>, vector<56x224xf32> -> vector<56x224xf32>
    %c1_74 = arith.constant 1 : index
    %c0_75 = arith.constant 0 : index
    %c0_76 = arith.constant 0 : index
    %74 = vector.load %arg9[%c1_74, %c0_75, %c0_76] : memref<2x72x288xbf16, #tpu.memory_space<vmem>>, vector<1x56x288xbf16>
    %75 = vector.shape_cast %74 : vector<1x56x288xbf16> to vector<56x288xbf16>
    %c0_77 = arith.constant 0 : index
    %c1_78 = arith.constant 1 : index
    %c0_79 = arith.constant 0 : index
    %c0_80 = arith.constant 0 : index
    %76 = vector.load %arg4[%c0_77, %c1_78, %c0_79, %c0_80] : memref<2x5x288x224xbf16, #tpu.memory_space<vmem>>, vector<1x1x288x224xbf16>
    %77 = vector.shape_cast %76 : vector<1x1x288x224xbf16> to vector<288x224xbf16>
    %cst_81 = arith.constant dense<0.000000e+00> : vector<56x224xf32>
    %78 = tpu.matmul %75, %77, %cst_81 {dimension_numbers = #tpu.dot_dimension_numbers<[1], [0], [0], [1], [0, 0, 1, 1], [], []>} : vector<56x288xbf16>, vector<288x224xbf16>, vector<56x224xf32> -> vector<56x224xf32>
    %79 = arith.addf %73, %78 : vector<56x224xf32>
    %c0_82 = arith.constant 0 : index
    %c8_83 = arith.constant 8 : index
    %c0_84 = arith.constant 0 : index
    %80 = vector.load %arg9[%c0_82, %c8_83, %c0_84] : memref<2x72x288xbf16, #tpu.memory_space<vmem>>, vector<1x56x288xbf16>
    %81 = vector.shape_cast %80 : vector<1x56x288xbf16> to vector<56x288xbf16>
    %c0_85 = arith.constant 0 : index
    %c2_86 = arith.constant 2 : index
    %c0_87 = arith.constant 0 : index
    %c0_88 = arith.constant 0 : index
    %82 = vector.load %arg4[%c0_85, %c2_86, %c0_87, %c0_88] : memref<2x5x288x224xbf16, #tpu.memory_space<vmem>>, vector<1x1x288x224xbf16>
    %83 = vector.shape_cast %82 : vector<1x1x288x224xbf16> to vector<288x224xbf16>
    %cst_89 = arith.constant dense<0.000000e+00> : vector<56x224xf32>
    %84 = tpu.matmul %81, %83, %cst_89 {dimension_numbers = #tpu.dot_dimension_numbers<[1], [0], [0], [1], [0, 0, 1, 1], [], []>} : vector<56x288xbf16>, vector<288x224xbf16>, vector<56x224xf32> -> vector<56x224xf32>
    %85 = arith.addf %79, %84 : vector<56x224xf32>
    %c1_90 = arith.constant 1 : index
    %c8_91 = arith.constant 8 : index
    %c0_92 = arith.constant 0 : index
    %86 = vector.load %arg9[%c1_90, %c8_91, %c0_92] : memref<2x72x288xbf16, #tpu.memory_space<vmem>>, vector<1x56x288xbf16>
    %87 = vector.shape_cast %86 : vector<1x56x288xbf16> to vector<56x288xbf16>
    %c0_93 = arith.constant 0 : index
    %c3_94 = arith.constant 3 : index
    %c0_95 = arith.constant 0 : index
    %c0_96 = arith.constant 0 : index
    %88 = vector.load %arg4[%c0_93, %c3_94, %c0_95, %c0_96] : memref<2x5x288x224xbf16, #tpu.memory_space<vmem>>, vector<1x1x288x224xbf16>
    %89 = vector.shape_cast %88 : vector<1x1x288x224xbf16> to vector<288x224xbf16>
    %cst_97 = arith.constant dense<0.000000e+00> : vector<56x224xf32>
    %90 = tpu.matmul %87, %89, %cst_97 {dimension_numbers = #tpu.dot_dimension_numbers<[1], [0], [0], [1], [0, 0, 1, 1], [], []>} : vector<56x288xbf16>, vector<288x224xbf16>, vector<56x224xf32> -> vector<56x224xf32>
    %91 = arith.addf %85, %90 : vector<56x224xf32>
    %c0_98 = arith.constant 0 : index
    %c16 = arith.constant 16 : index
    %c0_99 = arith.constant 0 : index
    %92 = vector.load %arg9[%c0_98, %c16, %c0_99] : memref<2x72x288xbf16, #tpu.memory_space<vmem>>, vector<1x56x288xbf16>
    %93 = vector.shape_cast %92 : vector<1x56x288xbf16> to vector<56x288xbf16>
    %c0_100 = arith.constant 0 : index
    %c4 = arith.constant 4 : index
    %c0_101 = arith.constant 0 : index
    %c0_102 = arith.constant 0 : index
    %94 = vector.load %arg4[%c0_100, %c4, %c0_101, %c0_102] : memref<2x5x288x224xbf16, #tpu.memory_space<vmem>>, vector<1x1x288x224xbf16>
    %95 = vector.shape_cast %94 : vector<1x1x288x224xbf16> to vector<288x224xbf16>
    %cst_103 = arith.constant dense<0.000000e+00> : vector<56x224xf32>
    %96 = tpu.matmul %93, %95, %cst_103 {dimension_numbers = #tpu.dot_dimension_numbers<[1], [0], [0], [1], [0, 0, 1, 1], [], []>} : vector<56x288xbf16>, vector<288x224xbf16>, vector<56x224xf32> -> vector<56x224xf32>
    %97 = arith.addf %91, %96 : vector<56x224xf32>
    %c0_104 = arith.constant 0 : index
    %c0_105 = arith.constant 0 : index
    %98 = vector.load %arg10[%c0_104, %c0_105] : memref<56x224xf32, #tpu.memory_space<vmem>>, vector<56x224xf32>
    tpu.vector_store %arg10[%c0_104, %c0_105], %97 {strides = array<i32>} : memref<56x224xf32, #tpu.memory_space<vmem>>, vector<56x224xf32>,
    %c0_106 = arith.constant 0 : index
    %c0_107 = arith.constant 0 : index
    %c0_108 = arith.constant 0 : index
    %99 = vector.load %arg9[%c0_106, %c0_107, %c0_108] : memref<2x72x288xbf16, #tpu.memory_space<vmem>>, vector<1x56x288xbf16>
    %100 = vector.shape_cast %99 : vector<1x56x288xbf16> to vector<56x288xbf16>
    %c1_109 = arith.constant 1 : index
    %c0_110 = arith.constant 0 : index
    %c0_111 = arith.constant 0 : index
    %c0_112 = arith.constant 0 : index
    %101 = vector.load %arg4[%c1_109, %c0_110, %c0_111, %c0_112] : memref<2x5x288x224xbf16, #tpu.memory_space<vmem>>, vector<1x1x288x224xbf16>
    %102 = vector.shape_cast %101 : vector<1x1x288x224xbf16> to vector<288x224xbf16>
    %cst_113 = arith.constant dense<0.000000e+00> : vector<56x224xf32>
    %103 = tpu.matmul %100, %102, %cst_113 {dimension_numbers = #tpu.dot_dimension_numbers<[1], [0], [0], [1], [0, 0, 1, 1], [], []>} : vector<56x288xbf16>, vector<288x224xbf16>, vector<56x224xf32> -> vector<56x224xf32>
    %c1_114 = arith.constant 1 : index
    %c0_115 = arith.constant 0 : index
    %c0_116 = arith.constant 0 : index
    %104 = vector.load %arg9[%c1_114, %c0_115, %c0_116] : memref<2x72x288xbf16, #tpu.memory_space<vmem>>, vector<1x56x288xbf16>
    %105 = vector.shape_cast %104 : vector<1x56x288xbf16> to vector<56x288xbf16>
    %c1_117 = arith.constant 1 : index
    %c1_118 = arith.constant 1 : index
    %c0_119 = arith.constant 0 : index
    %c0_120 = arith.constant 0 : index
    %106 = vector.load %arg4[%c1_117, %c1_118, %c0_119, %c0_120] : memref<2x5x288x224xbf16, #tpu.memory_space<vmem>>, vector<1x1x288x224xbf16>
    %107 = vector.shape_cast %106 : vector<1x1x288x224xbf16> to vector<288x224xbf16>
    %cst_121 = arith.constant dense<0.000000e+00> : vector<56x224xf32>
    %108 = tpu.matmul %105, %107, %cst_121 {dimension_numbers = #tpu.dot_dimension_numbers<[1], [0], [0], [1], [0, 0, 1, 1], [], []>} : vector<56x288xbf16>, vector<288x224xbf16>, vector<56x224xf32> -> vector<56x224xf32>
    %109 = arith.addf %103, %108 : vector<56x224xf32>
    %c0_122 = arith.constant 0 : index
    %c8_123 = arith.constant 8 : index
    %c0_124 = arith.constant 0 : index
    %110 = vector.load %arg9[%c0_122, %c8_123, %c0_124] : memref<2x72x288xbf16, #tpu.memory_space<vmem>>, vector<1x56x288xbf16>
    %111 = vector.shape_cast %110 : vector<1x56x288xbf16> to vector<56x288xbf16>
    %c1_125 = arith.constant 1 : index
    %c2_126 = arith.constant 2 : index
    %c0_127 = arith.constant 0 : index
    %c0_128 = arith.constant 0 : index
    %112 = vector.load %arg4[%c1_125, %c2_126, %c0_127, %c0_128] : memref<2x5x288x224xbf16, #tpu.memory_space<vmem>>, vector<1x1x288x224xbf16>
    %113 = vector.shape_cast %112 : vector<1x1x288x224xbf16> to vector<288x224xbf16>
    %cst_129 = arith.constant dense<0.000000e+00> : vector<56x224xf32>
    %114 = tpu.matmul %111, %113, %cst_129 {dimension_numbers = #tpu.dot_dimension_numbers<[1], [0], [0], [1], [0, 0, 1, 1], [], []>} : vector<56x288xbf16>, vector<288x224xbf16>, vector<56x224xf32> -> vector<56x224xf32>
    %115 = arith.addf %109, %114 : vector<56x224xf32>
    %c1_130 = arith.constant 1 : index
    %c8_131 = arith.constant 8 : index
    %c0_132 = arith.constant 0 : index
    %116 = vector.load %arg9[%c1_130, %c8_131, %c0_132] : memref<2x72x288xbf16, #tpu.memory_space<vmem>>, vector<1x56x288xbf16>
    %117 = vector.shape_cast %116 : vector<1x56x288xbf16> to vector<56x288xbf16>
    %c1_133 = arith.constant 1 : index
    %c3_134 = arith.constant 3 : index
    %c0_135 = arith.constant 0 : index
    %c0_136 = arith.constant 0 : index
    %118 = vector.load %arg4[%c1_133, %c3_134, %c0_135, %c0_136] : memref<2x5x288x224xbf16, #tpu.memory_space<vmem>>, vector<1x1x288x224xbf16>
    %119 = vector.shape_cast %118 : vector<1x1x288x224xbf16> to vector<288x224xbf16>
    %cst_137 = arith.constant dense<0.000000e+00> : vector<56x224xf32>
    %120 = tpu.matmul %117, %119, %cst_137 {dimension_numbers = #tpu.dot_dimension_numbers<[1], [0], [0], [1], [0, 0, 1, 1], [], []>} : vector<56x288xbf16>, vector<288x224xbf16>, vector<56x224xf32> -> vector<56x224xf32>
    %121 = arith.addf %115, %120 : vector<56x224xf32>
    %c0_138 = arith.constant 0 : index
    %c16_139 = arith.constant 16 : index
    %c0_140 = arith.constant 0 : index
    %122 = vector.load %arg9[%c0_138, %c16_139, %c0_140] : memref<2x72x288xbf16, #tpu.memory_space<vmem>>, vector<1x56x288xbf16>
    %123 = vector.shape_cast %122 : vector<1x56x288xbf16> to vector<56x288xbf16>
    %c1_141 = arith.constant 1 : index
    %c4_142 = arith.constant 4 : index
    %c0_143 = arith.constant 0 : index
    %c0_144 = arith.constant 0 : index
    %124 = vector.load %arg4[%c1_141, %c4_142, %c0_143, %c0_144] : memref<2x5x288x224xbf16, #tpu.memory_space<vmem>>, vector<1x1x288x224xbf16>
    %125 = vector.shape_cast %124 : vector<1x1x288x224xbf16> to vector<288x224xbf16>
    %cst_145 = arith.constant dense<0.000000e+00> : vector<56x224xf32>
    %126 = tpu.matmul %123, %125, %cst_145 {dimension_numbers = #tpu.dot_dimension_numbers<[1], [0], [0], [1], [0, 0, 1, 1], [], []>} : vector<56x288xbf16>, vector<288x224xbf16>, vector<56x224xf32> -> vector<56x224xf32>
    %127 = arith.addf %121, %126 : vector<56x224xf32>
    %c0_146 = arith.constant 0 : index
    %c0_147 = arith.constant 0 : index
    %128 = vector.load %arg10[%c0_146, %c0_147] : memref<56x224xf32, #tpu.memory_space<vmem>>, vector<56x224xf32>
    %129 = arith.maximumf %128, %127 : vector<56x224xf32>
    %c0_148 = arith.constant 0 : index
    %c0_149 = arith.constant 0 : index
    %130 = vector.load %arg10[%c0_148, %c0_149] : memref<56x224xf32, #tpu.memory_space<vmem>>, vector<56x224xf32>
    tpu.vector_store %arg10[%c0_148, %c0_149], %129 {strides = array<i32>} : memref<56x224xf32, #tpu.memory_space<vmem>>, vector<56x224xf32>,
    %c1_150 = arith.constant 1 : index
    %c0_151 = arith.constant 0 : index
    %c0_152 = arith.constant 0 : index
    %131 = vector.load %arg9[%c1_150, %c0_151, %c0_152] : memref<2x72x288xbf16, #tpu.memory_space<vmem>>, vector<1x56x288xbf16>
    %132 = vector.shape_cast %131 : vector<1x56x288xbf16> to vector<56x288xbf16>
    %c0_153 = arith.constant 0 : index
    %c0_154 = arith.constant 0 : index
    %c0_155 = arith.constant 0 : index
    %c0_156 = arith.constant 0 : index
    %133 = vector.load %arg4[%c0_153, %c0_154, %c0_155, %c0_156] : memref<2x5x288x224xbf16, #tpu.memory_space<vmem>>, vector<1x1x288x224xbf16>
    %134 = vector.shape_cast %133 : vector<1x1x288x224xbf16> to vector<288x224xbf16>
    %cst_157 = arith.constant dense<0.000000e+00> : vector<56x224xf32>
    %135 = tpu.matmul %132, %134, %cst_157 {dimension_numbers = #tpu.dot_dimension_numbers<[1], [0], [0], [1], [0, 0, 1, 1], [], []>} : vector<56x288xbf16>, vector<288x224xbf16>, vector<56x224xf32> -> vector<56x224xf32>
    %c0_158 = arith.constant 0 : index
    %c8_159 = arith.constant 8 : index
    %c0_160 = arith.constant 0 : index
    %136 = vector.load %arg9[%c0_158, %c8_159, %c0_160] : memref<2x72x288xbf16, #tpu.memory_space<vmem>>, vector<1x56x288xbf16>
    %137 = vector.shape_cast %136 : vector<1x56x288xbf16> to vector<56x288xbf16>
    %c0_161 = arith.constant 0 : index
    %c1_162 = arith.constant 1 : index
    %c0_163 = arith.constant 0 : index
    %c0_164 = arith.constant 0 : index
    %138 = vector.load %arg4[%c0_161, %c1_162, %c0_163, %c0_164] : memref<2x5x288x224xbf16, #tpu.memory_space<vmem>>, vector<1x1x288x224xbf16>
    %139 = vector.shape_cast %138 : vector<1x1x288x224xbf16> to vector<288x224xbf16>
    %cst_165 = arith.constant dense<0.000000e+00> : vector<56x224xf32>
    %140 = tpu.matmul %137, %139, %cst_165 {dimension_numbers = #tpu.dot_dimension_numbers<[1], [0], [0], [1], [0, 0, 1, 1], [], []>} : vector<56x288xbf16>, vector<288x224xbf16>, vector<56x224xf32> -> vector<56x224xf32>
    %141 = arith.addf %135, %140 : vector<56x224xf32>
    %c1_166 = arith.constant 1 : index
    %c8_167 = arith.constant 8 : index
    %c0_168 = arith.constant 0 : index
    %142 = vector.load %arg9[%c1_166, %c8_167, %c0_168] : memref<2x72x288xbf16, #tpu.memory_space<vmem>>, vector<1x56x288xbf16>
    %143 = vector.shape_cast %142 : vector<1x56x288xbf16> to vector<56x288xbf16>
    %c0_169 = arith.constant 0 : index
    %c2_170 = arith.constant 2 : index
    %c0_171 = arith.constant 0 : index
    %c0_172 = arith.constant 0 : index
    %144 = vector.load %arg4[%c0_169, %c2_170, %c0_171, %c0_172] : memref<2x5x288x224xbf16, #tpu.memory_space<vmem>>, vector<1x1x288x224xbf16>
    %145 = vector.shape_cast %144 : vector<1x1x288x224xbf16> to vector<288x224xbf16>
    %cst_173 = arith.constant dense<0.000000e+00> : vector<56x224xf32>
    %146 = tpu.matmul %143, %145, %cst_173 {dimension_numbers = #tpu.dot_dimension_numbers<[1], [0], [0], [1], [0, 0, 1, 1], [], []>} : vector<56x288xbf16>, vector<288x224xbf16>, vector<56x224xf32> -> vector<56x224xf32>
    %147 = arith.addf %141, %146 : vector<56x224xf32>
    %c0_174 = arith.constant 0 : index
    %c16_175 = arith.constant 16 : index
    %c0_176 = arith.constant 0 : index
    %148 = vector.load %arg9[%c0_174, %c16_175, %c0_176] : memref<2x72x288xbf16, #tpu.memory_space<vmem>>, vector<1x56x288xbf16>
    %149 = vector.shape_cast %148 : vector<1x56x288xbf16> to vector<56x288xbf16>
    %c0_177 = arith.constant 0 : index
    %c3_178 = arith.constant 3 : index
    %c0_179 = arith.constant 0 : index
    %c0_180 = arith.constant 0 : index
    %150 = vector.load %arg4[%c0_177, %c3_178, %c0_179, %c0_180] : memref<2x5x288x224xbf16, #tpu.memory_space<vmem>>, vector<1x1x288x224xbf16>
    %151 = vector.shape_cast %150 : vector<1x1x288x224xbf16> to vector<288x224xbf16>
    %cst_181 = arith.constant dense<0.000000e+00> : vector<56x224xf32>
    %152 = tpu.matmul %149, %151, %cst_181 {dimension_numbers = #tpu.dot_dimension_numbers<[1], [0], [0], [1], [0, 0, 1, 1], [], []>} : vector<56x288xbf16>, vector<288x224xbf16>, vector<56x224xf32> -> vector<56x224xf32>
    %153 = arith.addf %147, %152 : vector<56x224xf32>
    %c1_182 = arith.constant 1 : index
    %c16_183 = arith.constant 16 : index
    %c0_184 = arith.constant 0 : index
    %154 = vector.load %arg9[%c1_182, %c16_183, %c0_184] : memref<2x72x288xbf16, #tpu.memory_space<vmem>>, vector<1x56x288xbf16>
    %155 = vector.shape_cast %154 : vector<1x56x288xbf16> to vector<56x288xbf16>
    %c0_185 = arith.constant 0 : index
    %c4_186 = arith.constant 4 : index
    %c0_187 = arith.constant 0 : index
    %c0_188 = arith.constant 0 : index
    %156 = vector.load %arg4[%c0_185, %c4_186, %c0_187, %c0_188] : memref<2x5x288x224xbf16, #tpu.memory_space<vmem>>, vector<1x1x288x224xbf16>
    %157 = vector.shape_cast %156 : vector<1x1x288x224xbf16> to vector<288x224xbf16>
    %cst_189 = arith.constant dense<0.000000e+00> : vector<56x224xf32>
    %158 = tpu.matmul %155, %157, %cst_189 {dimension_numbers = #tpu.dot_dimension_numbers<[1], [0], [0], [1], [0, 0, 1, 1], [], []>} : vector<56x288xbf16>, vector<288x224xbf16>, vector<56x224xf32> -> vector<56x224xf32>
    %159 = arith.addf %153, %158 : vector<56x224xf32>
    %c0_190 = arith.constant 0 : index
    %c0_191 = arith.constant 0 : index
    %160 = vector.load %arg10[%c0_190, %c0_191] : memref<56x224xf32, #tpu.memory_space<vmem>>, vector<56x224xf32>
    %161 = arith.maximumf %160, %159 : vector<56x224xf32>
    %c0_192 = arith.constant 0 : index
    %c0_193 = arith.constant 0 : index
    %162 = vector.load %arg10[%c0_192, %c0_193] : memref<56x224xf32, #tpu.memory_space<vmem>>, vector<56x224xf32>
    tpu.vector_store %arg10[%c0_192, %c0_193], %161 {strides = array<i32>} : memref<56x224xf32, #tpu.memory_space<vmem>>, vector<56x224xf32>,
    %c1_194 = arith.constant 1 : index
    %c0_195 = arith.constant 0 : index
    %c0_196 = arith.constant 0 : index
    %163 = vector.load %arg9[%c1_194, %c0_195, %c0_196] : memref<2x72x288xbf16, #tpu.memory_space<vmem>>, vector<1x56x288xbf16>
    %164 = vector.shape_cast %163 : vector<1x56x288xbf16> to vector<56x288xbf16>
    %c1_197 = arith.constant 1 : index
    %c0_198 = arith.constant 0 : index
    %c0_199 = arith.constant 0 : index
    %c0_200 = arith.constant 0 : index
    %165 = vector.load %arg4[%c1_197, %c0_198, %c0_199, %c0_200] : memref<2x5x288x224xbf16, #tpu.memory_space<vmem>>, vector<1x1x288x224xbf16>
    %166 = vector.shape_cast %165 : vector<1x1x288x224xbf16> to vector<288x224xbf16>
    %cst_201 = arith.constant dense<0.000000e+00> : vector<56x224xf32>
    %167 = tpu.matmul %164, %166, %cst_201 {dimension_numbers = #tpu.dot_dimension_numbers<[1], [0], [0], [1], [0, 0, 1, 1], [], []>} : vector<56x288xbf16>, vector<288x224xbf16>, vector<56x224xf32> -> vector<56x224xf32>
    %c0_202 = arith.constant 0 : index
    %c8_203 = arith.constant 8 : index
    %c0_204 = arith.constant 0 : index
    %168 = vector.load %arg9[%c0_202, %c8_203, %c0_204] : memref<2x72x288xbf16, #tpu.memory_space<vmem>>, vector<1x56x288xbf16>
    %169 = vector.shape_cast %168 : vector<1x56x288xbf16> to vector<56x288xbf16>
    %c1_205 = arith.constant 1 : index
    %c1_206 = arith.constant 1 : index
    %c0_207 = arith.constant 0 : index
    %c0_208 = arith.constant 0 : index
    %170 = vector.load %arg4[%c1_205, %c1_206, %c0_207, %c0_208] : memref<2x5x288x224xbf16, #tpu.memory_space<vmem>>, vector<1x1x288x224xbf16>
    %171 = vector.shape_cast %170 : vector<1x1x288x224xbf16> to vector<288x224xbf16>
    %cst_209 = arith.constant dense<0.000000e+00> : vector<56x224xf32>
    %172 = tpu.matmul %169, %171, %cst_209 {dimension_numbers = #tpu.dot_dimension_numbers<[1], [0], [0], [1], [0, 0, 1, 1], [], []>} : vector<56x288xbf16>, vector<288x224xbf16>, vector<56x224xf32> -> vector<56x224xf32>
    %173 = arith.addf %167, %172 : vector<56x224xf32>
    %c1_210 = arith.constant 1 : index
    %c8_211 = arith.constant 8 : index
    %c0_212 = arith.constant 0 : index
    %174 = vector.load %arg9[%c1_210, %c8_211, %c0_212] : memref<2x72x288xbf16, #tpu.memory_space<vmem>>, vector<1x56x288xbf16>
    %175 = vector.shape_cast %174 : vector<1x56x288xbf16> to vector<56x288xbf16>
    %c1_213 = arith.constant 1 : index
    %c2_214 = arith.constant 2 : index
    %c0_215 = arith.constant 0 : index
    %c0_216 = arith.constant 0 : index
    %176 = vector.load %arg4[%c1_213, %c2_214, %c0_215, %c0_216] : memref<2x5x288x224xbf16, #tpu.memory_space<vmem>>, vector<1x1x288x224xbf16>
    %177 = vector.shape_cast %176 : vector<1x1x288x224xbf16> to vector<288x224xbf16>
    %cst_217 = arith.constant dense<0.000000e+00> : vector<56x224xf32>
    %178 = tpu.matmul %175, %177, %cst_217 {dimension_numbers = #tpu.dot_dimension_numbers<[1], [0], [0], [1], [0, 0, 1, 1], [], []>} : vector<56x288xbf16>, vector<288x224xbf16>, vector<56x224xf32> -> vector<56x224xf32>
    %179 = arith.addf %173, %178 : vector<56x224xf32>
    %c0_218 = arith.constant 0 : index
    %c16_219 = arith.constant 16 : index
    %c0_220 = arith.constant 0 : index
    %180 = vector.load %arg9[%c0_218, %c16_219, %c0_220] : memref<2x72x288xbf16, #tpu.memory_space<vmem>>, vector<1x56x288xbf16>
    %181 = vector.shape_cast %180 : vector<1x56x288xbf16> to vector<56x288xbf16>
    %c1_221 = arith.constant 1 : index
    %c3_222 = arith.constant 3 : index
    %c0_223 = arith.constant 0 : index
    %c0_224 = arith.constant 0 : index
    %182 = vector.load %arg4[%c1_221, %c3_222, %c0_223, %c0_224] : memref<2x5x288x224xbf16, #tpu.memory_space<vmem>>, vector<1x1x288x224xbf16>
    %183 = vector.shape_cast %182 : vector<1x1x288x224xbf16> to vector<288x224xbf16>
    %cst_225 = arith.constant dense<0.000000e+00> : vector<56x224xf32>
    %184 = tpu.matmul %181, %183, %cst_225 {dimension_numbers = #tpu.dot_dimension_numbers<[1], [0], [0], [1], [0, 0, 1, 1], [], []>} : vector<56x288xbf16>, vector<288x224xbf16>, vector<56x224xf32> -> vector<56x224xf32>
    %185 = arith.addf %179, %184 : vector<56x224xf32>
    %c1_226 = arith.constant 1 : index
    %c16_227 = arith.constant 16 : index
    %c0_228 = arith.constant 0 : index
    %186 = vector.load %arg9[%c1_226, %c16_227, %c0_228] : memref<2x72x288xbf16, #tpu.memory_space<vmem>>, vector<1x56x288xbf16>
    %187 = vector.shape_cast %186 : vector<1x56x288xbf16> to vector<56x288xbf16>
    %c1_229 = arith.constant 1 : index
    %c4_230 = arith.constant 4 : index
    %c0_231 = arith.constant 0 : index
    %c0_232 = arith.constant 0 : index
    %188 = vector.load %arg4[%c1_229, %c4_230, %c0_231, %c0_232] : memref<2x5x288x224xbf16, #tpu.memory_space<vmem>>, vector<1x1x288x224xbf16>
    %189 = vector.shape_cast %188 : vector<1x1x288x224xbf16> to vector<288x224xbf16>
    %cst_233 = arith.constant dense<0.000000e+00> : vector<56x224xf32>
    %190 = tpu.matmul %187, %189, %cst_233 {dimension_numbers = #tpu.dot_dimension_numbers<[1], [0], [0], [1], [0, 0, 1, 1], [], []>} : vector<56x288xbf16>, vector<288x224xbf16>, vector<56x224xf32> -> vector<56x224xf32>
    %191 = arith.addf %185, %190 : vector<56x224xf32>
    %c0_234 = arith.constant 0 : index
    %c0_235 = arith.constant 0 : index
    %192 = vector.load %arg10[%c0_234, %c0_235] : memref<56x224xf32, #tpu.memory_space<vmem>>, vector<56x224xf32>
    %193 = arith.maximumf %192, %191 : vector<56x224xf32>
    %c0_236 = arith.constant 0 : index
    %c0_237 = arith.constant 0 : index
    %194 = vector.load %arg10[%c0_236, %c0_237] : memref<56x224xf32, #tpu.memory_space<vmem>>, vector<56x224xf32>
    tpu.vector_store %arg10[%c0_236, %c0_237], %193 {strides = array<i32>} : memref<56x224xf32, #tpu.memory_space<vmem>>, vector<56x224xf32>,
    %c0_238 = arith.constant 0 : index
    %c0_239 = arith.constant 0 : index
    %195 = vector.load %arg10[%c0_238, %c0_239] : memref<56x224xf32, #tpu.memory_space<vmem>>, vector<56x224xf32>
    %c0_240 = arith.constant 0 : index
    %c0_241 = arith.constant 0 : index
    %196 = vector.load %arg5[%c0_240, %c0_241] : memref<1x224xf32, #tpu.memory_space<vmem>>, vector<1x224xf32>
    %197 = vector.broadcast %196 : vector<1x224xf32> to vector<56x224xf32>
    %198 = arith.addf %195, %197 : vector<56x224xf32>
    %cst_242 = arith.constant 0.000000e+00 : f32
    %199 = vector.broadcast %cst_242 : f32 to vector<56x224xf32>
    %200 = arith.maximumf %198, %199 : vector<56x224xf32>
    %201 = arith.truncf %200 : vector<56x224xf32> to vector<56x224xbf16>
    %202 = vector.extract_strided_slice %201 {offsets = [0, 0], sizes = [8, 224], strides = [1, 1]} : vector<56x224xbf16> to vector<8x224xbf16>
    %c0_243 = arith.constant 0 : index
    %c0_244 = arith.constant 0 : index
    %c0_245 = arith.constant 0 : index
    %203 = vector.load %arg6[%c0_243, %c0_244, %c0_245] : memref<7x224x128xbf16, #tpu.memory_space<vmem>>, vector<1x224x128xbf16>
    %204 = vector.shape_cast %203 : vector<1x224x128xbf16> to vector<224x128xbf16>
    %cst_246 = arith.constant dense<0.000000e+00> : vector<8x128xf32>
    %205 = tpu.matmul %202, %204, %cst_246 {dimension_numbers = #tpu.dot_dimension_numbers<[1], [0], [0], [1], [0, 0, 1, 1], [], []>} : vector<8x224xbf16>, vector<224x128xbf16>, vector<8x128xf32> -> vector<8x128xf32>
    %206 = vector.extract_strided_slice %201 {offsets = [8, 0], sizes = [8, 224], strides = [1, 1]} : vector<56x224xbf16> to vector<8x224xbf16>
    %c1_247 = arith.constant 1 : index
    %c0_248 = arith.constant 0 : index
    %c0_249 = arith.constant 0 : index
    %207 = vector.load %arg6[%c1_247, %c0_248, %c0_249] : memref<7x224x128xbf16, #tpu.memory_space<vmem>>, vector<1x224x128xbf16>
    %208 = vector.shape_cast %207 : vector<1x224x128xbf16> to vector<224x128xbf16>
    %cst_250 = arith.constant dense<0.000000e+00> : vector<8x128xf32>
    %209 = tpu.matmul %206, %208, %cst_250 {dimension_numbers = #tpu.dot_dimension_numbers<[1], [0], [0], [1], [0, 0, 1, 1], [], []>} : vector<8x224xbf16>, vector<224x128xbf16>, vector<8x128xf32> -> vector<8x128xf32>
    %210 = arith.addf %205, %209 : vector<8x128xf32>
    %211 = vector.extract_strided_slice %201 {offsets = [16, 0], sizes = [8, 224], strides = [1, 1]} : vector<56x224xbf16> to vector<8x224xbf16>
    %c2_251 = arith.constant 2 : index
    %c0_252 = arith.constant 0 : index
    %c0_253 = arith.constant 0 : index
    %212 = vector.load %arg6[%c2_251, %c0_252, %c0_253] : memref<7x224x128xbf16, #tpu.memory_space<vmem>>, vector<1x224x128xbf16>
    %213 = vector.shape_cast %212 : vector<1x224x128xbf16> to vector<224x128xbf16>
    %cst_254 = arith.constant dense<0.000000e+00> : vector<8x128xf32>
    %214 = tpu.matmul %211, %213, %cst_254 {dimension_numbers = #tpu.dot_dimension_numbers<[1], [0], [0], [1], [0, 0, 1, 1], [], []>} : vector<8x224xbf16>, vector<224x128xbf16>, vector<8x128xf32> -> vector<8x128xf32>
    %215 = arith.addf %210, %214 : vector<8x128xf32>
    %216 = vector.extract_strided_slice %201 {offsets = [24, 0], sizes = [8, 224], strides = [1, 1]} : vector<56x224xbf16> to vector<8x224xbf16>
    %c3_255 = arith.constant 3 : index
    %c0_256 = arith.constant 0 : index
    %c0_257 = arith.constant 0 : index
    %217 = vector.load %arg6[%c3_255, %c0_256, %c0_257] : memref<7x224x128xbf16, #tpu.memory_space<vmem>>, vector<1x224x128xbf16>
    %218 = vector.shape_cast %217 : vector<1x224x128xbf16> to vector<224x128xbf16>
    %cst_258 = arith.constant dense<0.000000e+00> : vector<8x128xf32>
    %219 = tpu.matmul %216, %218, %cst_258 {dimension_numbers = #tpu.dot_dimension_numbers<[1], [0], [0], [1], [0, 0, 1, 1], [], []>} : vector<8x224xbf16>, vector<224x128xbf16>, vector<8x128xf32> -> vector<8x128xf32>
    %220 = arith.addf %215, %219 : vector<8x128xf32>
    %221 = vector.extract_strided_slice %201 {offsets = [32, 0], sizes = [8, 224], strides = [1, 1]} : vector<56x224xbf16> to vector<8x224xbf16>
    %c4_259 = arith.constant 4 : index
    %c0_260 = arith.constant 0 : index
    %c0_261 = arith.constant 0 : index
    %222 = vector.load %arg6[%c4_259, %c0_260, %c0_261] : memref<7x224x128xbf16, #tpu.memory_space<vmem>>, vector<1x224x128xbf16>
    %223 = vector.shape_cast %222 : vector<1x224x128xbf16> to vector<224x128xbf16>
    %cst_262 = arith.constant dense<0.000000e+00> : vector<8x128xf32>
    %224 = tpu.matmul %221, %223, %cst_262 {dimension_numbers = #tpu.dot_dimension_numbers<[1], [0], [0], [1], [0, 0, 1, 1], [], []>} : vector<8x224xbf16>, vector<224x128xbf16>, vector<8x128xf32> -> vector<8x128xf32>
    %225 = arith.addf %220, %224 : vector<8x128xf32>
    %226 = vector.extract_strided_slice %201 {offsets = [40, 0], sizes = [8, 224], strides = [1, 1]} : vector<56x224xbf16> to vector<8x224xbf16>
    %c5 = arith.constant 5 : index
    %c0_263 = arith.constant 0 : index
    %c0_264 = arith.constant 0 : index
    %227 = vector.load %arg6[%c5, %c0_263, %c0_264] : memref<7x224x128xbf16, #tpu.memory_space<vmem>>, vector<1x224x128xbf16>
    %228 = vector.shape_cast %227 : vector<1x224x128xbf16> to vector<224x128xbf16>
    %cst_265 = arith.constant dense<0.000000e+00> : vector<8x128xf32>
    %229 = tpu.matmul %226, %228, %cst_265 {dimension_numbers = #tpu.dot_dimension_numbers<[1], [0], [0], [1], [0, 0, 1, 1], [], []>} : vector<8x224xbf16>, vector<224x128xbf16>, vector<8x128xf32> -> vector<8x128xf32>
    %230 = arith.addf %225, %229 : vector<8x128xf32>
    %231 = vector.extract_strided_slice %201 {offsets = [48, 0], sizes = [8, 224], strides = [1, 1]} : vector<56x224xbf16> to vector<8x224xbf16>
    %c6 = arith.constant 6 : index
    %c0_266 = arith.constant 0 : index
    %c0_267 = arith.constant 0 : index
    %232 = vector.load %arg6[%c6, %c0_266, %c0_267] : memref<7x224x128xbf16, #tpu.memory_space<vmem>>, vector<1x224x128xbf16>
    %233 = vector.shape_cast %232 : vector<1x224x128xbf16> to vector<224x128xbf16>
    %cst_268 = arith.constant dense<0.000000e+00> : vector<8x128xf32>
    %234 = tpu.matmul %231, %233, %cst_268 {dimension_numbers = #tpu.dot_dimension_numbers<[1], [0], [0], [1], [0, 0, 1, 1], [], []>} : vector<8x224xbf16>, vector<224x128xbf16>, vector<8x128xf32> -> vector<8x128xf32>
    %235 = arith.addf %230, %234 : vector<8x128xf32>
    %c0_269 = arith.constant 0 : index
    %c0_270 = arith.constant 0 : index
    %236 = vector.load %arg7[%c0_269, %c0_270] : memref<1x128xf32, #tpu.memory_space<vmem>>, vector<1x128xf32>
    %237 = vector.broadcast %236 : vector<1x128xf32> to vector<8x128xf32>
    %238 = arith.addf %235, %237 : vector<8x128xf32>
    %c0_271 = arith.constant 0 : index
    %c0_272 = arith.constant 0 : index
    %c0_273 = arith.constant 0 : index
    %239 = vector.load %arg8[%c0_271, %c0_272, %c0_273] : memref<1x8x128xf32, #tpu.memory_space<vmem>>, vector<1x8x128xf32>
    %240 = vector.shape_cast %239 : vector<1x8x128xf32> to vector<8x128xf32>
    %241 = vector.shape_cast %238 : vector<8x128xf32> to vector<1x8x128xf32>
    tpu.vector_store %arg8[%c0_271, %c0_272, %c0_273], %241 {strides = array<i32>} : memref<1x8x128xf32, #tpu.memory_space<vmem>>, vector<1x8x128xf32>,
    return
  }
  func.func @transform_0(%arg0: i32) -> (i32, i32, i32, i32) {
    %c0_i32 = arith.constant 0 : i32
    %c0_i32_0 = arith.constant 0 : i32
    %c0_i32_1 = arith.constant 0 : i32
    %c0_i32_2 = arith.constant 0 : i32
    return %arg0, %c0_i32, %c0_i32_0, %c0_i32_1 : i32, i32, i32, i32
  }
  func.func @transform_1(%arg0: i32) -> (i32, i32, i32) {
    %c0_i32 = arith.constant 0 : i32
    %c0_i32_0 = arith.constant 0 : i32
    %c0_i32_1 = arith.constant 0 : i32
    %c0_i32_2 = arith.constant 0 : i32
    return %c0_i32, %c0_i32_0, %c0_i32_1 : i32, i32, i32
  }
  func.func @transform_2(%arg0: i32) -> (i32, i32) {
    %c0_i32 = arith.constant 0 : i32
    %c0_i32_0 = arith.constant 0 : i32
    %c0_i32_1 = arith.constant 0 : i32
    return %c0_i32, %c0_i32_0 : i32, i32
  }
  func.func @transform_3(%arg0: i32) -> (i32, i32, i32, i32) {
    %c0_i32 = arith.constant 0 : i32
    %c0_i32_0 = arith.constant 0 : i32
    %c0_i32_1 = arith.constant 0 : i32
    %c0_i32_2 = arith.constant 0 : i32
    %c0_i32_3 = arith.constant 0 : i32
    return %c0_i32, %c0_i32_0, %c0_i32_1, %c0_i32_2 : i32, i32, i32, i32
  }
  func.func @transform_4(%arg0: i32) -> (i32, i32) {
    %c0_i32 = arith.constant 0 : i32
    %c0_i32_0 = arith.constant 0 : i32
    %c0_i32_1 = arith.constant 0 : i32
    return %c0_i32, %c0_i32_0 : i32, i32
  }
  func.func @transform_5(%arg0: i32) -> (i32, i32, i32) {
    %c0_i32 = arith.constant 0 : i32
    %c0_i32_0 = arith.constant 0 : i32
    %c0_i32_1 = arith.constant 0 : i32
    %c0_i32_2 = arith.constant 0 : i32
    return %c0_i32, %c0_i32_0, %c0_i32_1 : i32, i32, i32
  }
  func.func @transform_6(%arg0: i32) -> (i32, i32) {
    %c0_i32 = arith.constant 0 : i32
    %c0_i32_0 = arith.constant 0 : i32
    %c0_i32_1 = arith.constant 0 : i32
    return %c0_i32, %c0_i32_0 : i32, i32
  }
  func.func @transform_7(%arg0: i32) -> (i32, i32, i32) {
    %c0_i32 = arith.constant 0 : i32
    %c0_i32_0 = arith.constant 0 : i32
    %c0_i32_1 = arith.constant 0 : i32
    return %arg0, %c0_i32, %c0_i32_0 : i32, i32, i32
  }
}

</mosaic_0001>

<llo_original>
// kernel: cnn_forward.1
$region0: #{cnn_forward.1}
  #allocation0 [shape = 'u32[]', space=smem, size = 0x4, offset = 0x4, fixed_abs, tag = 'smem constant byte address 0x4 - core index']
  #allocation1 [shape = 'u32[144,128]{1,0:T(1,128)}', space=vmem, size = 0x12000, scoped, tag = 'internal scratch']
  #allocation2 [shape = 'bf16[2,72,288]{2,1,0:T(8,128)(2,1)}', space=vmem, size = 0x1b000, scoped, tag = 'scratch operand']
  #allocation3 [shape = 'f32[56,224]{1,0:T(8,128)}', space=vmem, size = 0xe000, scoped, tag = 'scratch operand']
  %s0 = inlined_call_operand.vmem [shape: bf16[1,4,56,160], index: 0, kind: input, shape index: {}]
  %s1 = inlined_call_operand.vmem [shape: bf16[2,160,288], index: 1, kind: input, shape index: {}]
  %s2 = inlined_call_operand.vmem [shape: f32[1,288], index: 2, kind: input, shape index: {}]
  %s3 = inlined_call_operand.vmem [shape: bf16[2,5,288,224], index: 3, kind: input, shape index: {}]
  %s4 = inlined_call_operand.vmem [shape: f32[1,224], index: 4, kind: input, shape index: {}]
  %s5 = inlined_call_operand.vmem [shape: bf16[7,224,128], index: 5, kind: input, shape index: {}]
  %s6 = inlined_call_operand.vmem [shape: f32[1,128], index: 6, kind: input, shape index: {}]
  %s7 = inlined_call_operand.vmem [shape: f32[1,8,128], index: 7, kind: output, shape index: {}]
  %s8 = sld [smem:[#allocation0]]
  $region38: #{cnn_forward.1} parent=0
    _
  %s10 = ssub.s32 1, %s8
  %s11 = scalar_select 0, %s10, %s8
  // Predicated region
  $region2: #{cnn_forward.1} parent=0 // pred_check
    _
  $region3: #{cnn_forward.1} parent=0 // pred_check_branch
    %13 = sbr.rel (0) target = $region5
  $region4: #{cnn_forward.1} parent=0 // pred_region
    _
  $region5: #{cnn_forward.1} parent=0 // pred_fallthru
    _
  // Predicated region
  $region6: #{cnn_forward.1} parent=0 // pred_check
    _
  $region7: #{cnn_forward.1} parent=0 // pred_check_branch
    %15 = sbr.rel (0) target = $region9
  $region8: #{cnn_forward.1} parent=0 // pred_region
    _
  $region9: #{cnn_forward.1} parent=0 // pred_fallthru
    _
  // Predicated region
  $region10: #{cnn_forward.1} parent=0 // pred_check
    _
  $region11: #{cnn_forward.1} parent=0 // pred_check_branch
    %17 = sbr.rel (0) target = $region13
  $region12: #{cnn_forward.1} parent=0 // pred_region
    _
  $region13: #{cnn_forward.1} parent=0 // pred_fallthru
    _
  // Predicated region
  $region14: #{cnn_forward.1} parent=0 // pred_check
    _
  $region15: #{cnn_forward.1} parent=0 // pred_check_branch
    %19 = sbr.rel (0) target = $region17
  $region16: #{cnn_forward.1} parent=0 // pred_region
    _
  $region17: #{cnn_forward.1} parent=0 // pred_fallthru
    _
  // Predicated region
  $region18: #{cnn_forward.1} parent=0 // pred_check
    _
  $region19: #{cnn_forward.1} parent=0 // pred_check_branch
    %21 = sbr.rel (0) target = $region21
  $region20: #{cnn_forward.1} parent=0 // pred_region
    _
  $region21: #{cnn_forward.1} parent=0 // pred_fallthru
    _
  // Predicated region
  $region22: #{cnn_forward.1} parent=0 // pred_check
    _
  $region23: #{cnn_forward.1} parent=0 // pred_check_branch
    %23 = sbr.rel (0) target = $region25
  $region24: #{cnn_forward.1} parent=0 // pred_region
    _
  $region25: #{cnn_forward.1} parent=0 // pred_fallthru
    _
  // Predicated region
  $region26: #{cnn_forward.1} parent=0 // pred_check
    _
  $region27: #{cnn_forward.1} parent=0 // pred_check_branch
    %25 = sbr.rel (0) target = $region29
  $region28: #{cnn_forward.1} parent=0 // pred_region
    _
  $region29: #{cnn_forward.1} parent=0 // pred_fallthru
    _
  %27 = vst [vmem:[#allocation2] sm:$0xff] 0
  %vm28 = vcmask 257024
  %29 = vst.msk [vmem:[#allocation2 + $0x8] sm:$0xf] %vm28, 0
  %30 = vst [vmem:[#allocation2 + $0x60] sm:$0xff] 0
  %31 = vst.msk [vmem:[#allocation2 + $0x68] sm:$0xf] %vm28, 0
  %s32 = scalar_lea.vmem [#allocation2], 108
  %33 = vst [vmem:[%s32] sm:$0xff] 0
  %34 = vst.msk [vmem:[%s32 + $0x8] sm:$0xf] %vm28, 0
  %35 = vst [vmem:[%s32 + $0x60] sm:$0xff] 0
  %36 = vst.msk [vmem:[%s32 + $0x68] sm:$0xf] %vm28, 0
  %v37 = vld [vmem:[%s0] sm:$0xff]
  %v38 = vld [vmem:[%s0 + $0x8] sm:$0xff]
  %v39 = vld [vmem:[%s0 + $0x10] sm:$0xff]
  %v40 = vld [vmem:[%s0 + $0x18] sm:$0xff]
  %v41 = vld [vmem:[%s0 + $0x20] sm:$0xff]
  %v42 = vld [vmem:[%s0 + $0x28] sm:$0xff]
  %v43 = vld [vmem:[%s0 + $0x30] sm:$0xff]
  %v44 = vld [vmem:[%s1] sm:$0xff]
  %v45 = vld [vmem:[%s1 + $0x8] sm:$0xf]
  %v46 = vld [vmem:[%s1 + $0xc] sm:$0xff]
  %v47 = vld [vmem:[%s1 + $0x14] sm:$0xf]
  %v48 = vld [vmem:[%s1 + $0x18] sm:$0xff]
  %v49 = vld [vmem:[%s1 + $0x20] sm:$0xf]
  %v50 = vld [vmem:[%s1 + $0x24] sm:$0xff]
  %v51 = vld [vmem:[%s1 + $0x2c] sm:$0xf]
  %v52 = vld [vmem:[%s1 + $0x30] sm:$0xff]
  %v53 = vld [vmem:[%s1 + $0x38] sm:$0xf]
  %v54 = vld [vmem:[%s1 + $0x3c] sm:$0xff]
  %v55 = vld [vmem:[%s1 + $0x44] sm:$0xf]
  %v56 = vld [vmem:[%s1 + $0x48] sm:$0xff]
  %v57 = vld [vmem:[%s1 + $0x50] sm:$0xf]
  %v58 = vld [vmem:[%s1 + $0x54] sm:$0xff]
  %v59 = vld [vmem:[%s1 + $0x5c] sm:$0xf]
  %v60 = vld [vmem:[%s1 + $0x60] sm:$0xff]
  %v61 = vld [vmem:[%s1 + $0x68] sm:$0xf]
  %v62 = vld [vmem:[%s1 + $0x6c] sm:$0xff]
  %v63 = vld [vmem:[%s1 + $0x74] sm:$0xf]
  %v64 = vld [vmem:[%s1 + $0x78] sm:$0xff]
  %v65 = vld [vmem:[%s1 + $0x80] sm:$0xf]
  %v66 = vld [vmem:[%s1 + $0x84] sm:$0xff]
  %v67 = vld [vmem:[%s1 + $0x8c] sm:$0xf]
  %v68 = vld [vmem:[%s1 + $0x90] sm:$0xff]
  %v69 = vld [vmem:[%s1 + $0x98] sm:$0xf]
  %v70 = vld [vmem:[%s1 + $0x9c] sm:$0xff]
  %v71 = vld [vmem:[%s1 + $0xa4] sm:$0xf]
  %v72 = vld [vmem:[%s1 + $0xa8] sm:$0xff]
  %v73 = vld [vmem:[%s1 + $0xb0] sm:$0xf]
  %v74 = vld [vmem:[%s1 + $0xb4] sm:$0xff]
  %v75 = vld [vmem:[%s1 + $0xbc] sm:$0xf]
  %v76 = vld [vmem:[%s1 + $0xc0] sm:$0xff]
  %v77 = vld [vmem:[%s1 + $0xc8] sm:$0xf]
  %v78 = vld [vmem:[%s1 + $0xcc] sm:$0xff]
  %v79 = vld [vmem:[%s1 + $0xd4] sm:$0xf]
  %v80 = vld [vmem:[%s1 + $0xd8] sm:$0xff]
  %v81 = vld [vmem:[%s1 + $0xe0] sm:$0xf]
  %v82 = vld [vmem:[%s1 + $0xe4] sm:$0xff]
  %v83 = vld [vmem:[%s1 + $0xec] sm:$0xf]
  %v91 = vunpack.c.l.b16 %v37
  %v92 = vunpack.c.h.b16 %v37
  %v93 = vunpack.c.l.b16 %v38
  %v94 = vunpack.c.h.b16 %v38
  %v95 = vunpack.c.l.b16 %v39
  %v96 = vunpack.c.h.b16 %v39
  %v97 = vunpack.c.l.b16 %v40
  %v98 = vunpack.c.h.b16 %v40
  %v99 = vunpack.c.l.b16 %v41
  %v100 = vunpack.c.h.b16 %v41
  %v101 = vunpack.c.l.b16 %v42
  %v102 = vunpack.c.h.b16 %v42
  %v103 = vunpack.c.l.b16 %v43
  %v104 = vunpack.c.h.b16 %v43
  %v105 = vpack.c.b16 %v93, %v91
  %v106 = vpack.c.b16 %v94, %v92
  %v107 = vpack.c.b16 %v97, %v95
  %v108 = vpack.c.b16 %v98, %v96
  %v109 = vpack.c.b16 %v101, %v99
  %v110 = vpack.c.b16 %v102, %v100
  %v111 = vpack.c.b16 %v103, %v103
  %v112 = vpack.c.b16 %v104, %v104
  %v157 = vunpack.c.l.b16 %v44
  %v158 = vunpack.c.h.b16 %v44
  %v159 = vunpack.c.l.b16 %v45
  %v160 = vunpack.c.l.b16 %v46
  %v161 = vunpack.c.h.b16 %v46
  %v162 = vunpack.c.l.b16 %v47
  %v163 = vunpack.c.l.b16 %v48
  %v164 = vunpack.c.h.b16 %v48
  %v165 = vunpack.c.l.b16 %v49
  %v166 = vunpack.c.l.b16 %v50
  %v167 = vunpack.c.h.b16 %v50
  %v168 = vunpack.c.l.b16 %v51
  %v169 = vunpack.c.l.b16 %v52
  %v170 = vunpack.c.h.b16 %v52
  %v171 = vunpack.c.l.b16 %v53
  %v172 = vunpack.c.l.b16 %v54
  %v173 = vunpack.c.h.b16 %v54
  %v174 = vunpack.c.l.b16 %v55
  %v175 = vunpack.c.l.b16 %v56
  %v176 = vunpack.c.h.b16 %v56
  %v177 = vunpack.c.l.b16 %v57
  %v178 = vunpack.c.l.b16 %v58
  %v179 = vunpack.c.h.b16 %v58
  %v180 = vunpack.c.l.b16 %v59
  %v181 = vunpack.c.l.b16 %v60
  %v182 = vunpack.c.h.b16 %v60
  %v183 = vunpack.c.l.b16 %v61
  %v184 = vunpack.c.l.b16 %v62
  %v185 = vunpack.c.h.b16 %v62
  %v186 = vunpack.c.l.b16 %v63
  %v187 = vunpack.c.l.b16 %v64
  %v188 = vunpack.c.h.b16 %v64
  %v189 = vunpack.c.l.b16 %v65
  %v190 = vunpack.c.l.b16 %v66
  %v191 = vunpack.c.h.b16 %v66
  %v192 = vunpack.c.l.b16 %v67
  %v193 = vunpack.c.l.b16 %v68
  %v194 = vunpack.c.h.b16 %v68
  %v195 = vunpack.c.l.b16 %v69
  %v196 = vunpack.c.l.b16 %v70
  %v197 = vunpack.c.h.b16 %v70
  %v198 = vunpack.c.l.b16 %v71
  %v199 = vunpack.c.l.b16 %v72
  %v200 = vunpack.c.h.b16 %v72
  %v201 = vunpack.c.l.b16 %v73
  %v202 = vunpack.c.l.b16 %v74
  %v203 = vunpack.c.h.b16 %v74
  %v204 = vunpack.c.l.b16 %v75
  %v205 = vunpack.c.l.b16 %v76
  %v206 = vunpack.c.h.b16 %v76
  %v207 = vunpack.c.l.b16 %v77
  %v208 = vunpack.c.l.b16 %v78
  %v209 = vunpack.c.h.b16 %v78
  %v210 = vunpack.c.l.b16 %v79
  %v211 = vunpack.c.l.b16 %v80
  %v212 = vunpack.c.h.b16 %v80
  %v213 = vunpack.c.l.b16 %v81
  %v214 = vunpack.c.l.b16 %v82
  %v215 = vunpack.c.h.b16 %v82
  %v216 = vunpack.c.l.b16 %v83
  %v217 = vpack.c.b16 %v160, %v157
  %v218 = vpack.c.b16 %v161, %v158
  %v219 = vpack.c.b16 %v162, %v159
  %v220 = vpack.c.b16 %v166, %v163
  %v221 = vpack.c.b16 %v167, %v164
  %v222 = vpack.c.b16 %v168, %v165
  %v223 = vpack.c.b16 %v172, %v169
  %v224 = vpack.c.b16 %v173, %v170
  %v225 = vpack.c.b16 %v174, %v171
  %v226 = vpack.c.b16 %v178, %v175
  %v227 = vpack.c.b16 %v179, %v176
  %v228 = vpack.c.b16 %v180, %v177
  %v229 = vpack.c.b16 %v184, %v181
  %v230 = vpack.c.b16 %v185, %v182
  %v231 = vpack.c.b16 %v186, %v183
  %v232 = vpack.c.b16 %v190, %v187
  %v233 = vpack.c.b16 %v191, %v188
  %v234 = vpack.c.b16 %v192, %v189
  %v235 = vpack.c.b16 %v196, %v193
  %v236 = vpack.c.b16 %v197, %v194
  %v237 = vpack.c.b16 %v198, %v195
  %v238 = vpack.c.b16 %v202, %v199
  %v239 = vpack.c.b16 %v203, %v200
  %v240 = vpack.c.b16 %v204, %v201
  %v241 = vpack.c.b16 %v208, %v205
  %v242 = vpack.c.b16 %v209, %v206
  %v243 = vpack.c.b16 %v210, %v207
  %v244 = vpack.c.b16 %v214, %v211
  %v245 = vpack.c.b16 %v215, %v212
  %v246 = vpack.c.b16 %v216, %v213
  %vm277 = vcmask 261120
  %v279 = vsel %vm277, %v106, 0
  %v282 = vsel %vm277, %v108, 0
  %v285 = vsel %vm277, %v110, 0
  %v288 = vsel %vm277, %v112, 0
  %290 = vmatprep.subr.bf16.mxu0 %v218
  %291 = vmatpush1.bf16.msra.mxu0 %v217
  %292 = vmatprep.subr.bf16.mxu0 %v221
  %293 = vmatpush1.bf16.msra.mxu0 %v220
  %294 = vmatprep.subr.bf16.mxu0 %v224
  %295 = vmatpush1.bf16.msra.mxu0 %v223
  %296 = vmatprep.subr.bf16.mxu0 %v227
  %297 = vmatpush1.bf16.msra.mxu0 %v226
  %298 = vmatprep.subr.bf16.mxu0 %v230
  %299 = vmatpush1.bf16.msra.mxu0 %v229
  %300 = vmatprep.subr.bf16.mxu0 %v233
  %301 = vmatpush1.bf16.msra.mxu0 %v232
  %302 = vmatprep.subr.bf16.mxu0 %v236
  %303 = vmatpush1.bf16.msra.mxu0 %v235
  %304 = vmatprep.subr.bf16.mxu0 %v239
  %305 = vmatpush1.bf16.msra.mxu0 %v238
  %306 = vmatprep.subr.bf16.mxu0 %v242
  %307 = vmatpush1.bf16.msra.mxu0 %v241
  %308 = vmatprep.subr.bf16.mxu0 %v245
  %309 = vmatpush1.bf16.msra.mxu0 %v244
  %310 = vmatprep.subr.bf16.mxu0 0
  %311 = vmatpush1.bf16.msra.mxu0 0
  %312 = vmatprep.subr.bf16.mxu0 0
  %313 = vmatpush1.bf16.msra.mxu0 0
  %314 = vmatprep.subr.bf16.mxu0 0
  %315 = vmatpush1.bf16.msra.mxu0 0
  %316 = vmatprep.subr.bf16.mxu0 0
  %317 = vmatpush1.bf16.msra.mxu0 0
  %318 = vmatprep.subr.bf16.mxu0 0
  %319 = vmatpush1.bf16.msra.mxu0 0
  %320 = vmatprep.subr.bf16.mxu0 0
  %321 = vmatpush1.bf16.msra.mxu0 0
  %322 = vmatprep.mubr.bf16.mxu0 %v279
  %323 = vmatmul.mubr.bf16.gmra.mrb[0].mxu0 %v105
  %v324 = vpop.f32.mrb[0].mxu0
  %v325 = vadd.f32 0.0, %v324
  %v326 = vpop.f32.mrb[0].mxu0
  %v327 = vadd.f32 0.0, %v326
  %v328 = vpop.f32.mrb[0].mxu0
  %v329 = vadd.f32 0.0, %v328
  %v330 = vpop.f32.mrb[0].mxu0
  %v331 = vadd.f32 0.0, %v330
  %332 = vmatprep.mubr.bf16.mxu0 %v282
  %333 = vmatmul.mubr.bf16.gmra.mrb[0].mxu0 %v107
  %v334 = vpop.f32.mrb[0].mxu0
  %v335 = vadd.f32 0.0, %v334
  %v336 = vpop.f32.mrb[0].mxu0
  %v337 = vadd.f32 0.0, %v336
  %v338 = vpop.f32.mrb[0].mxu0
  %v339 = vadd.f32 0.0, %v338
  %v340 = vpop.f32.mrb[0].mxu0
  %v341 = vadd.f32 0.0, %v340
  %342 = vmatprep.mubr.bf16.mxu0 %v285
  %343 = vmatmul.mubr.bf16.gmra.mrb[0].mxu0 %v109
  %v344 = vpop.f32.mrb[0].mxu0
  %v345 = vadd.f32 0.0, %v344
  %v346 = vpop.f32.mrb[0].mxu0
  %v347 = vadd.f32 0.0, %v346
  %v348 = vpop.f32.mrb[0].mxu0
  %v349 = vadd.f32 0.0, %v348
  %v350 = vpop.f32.mrb[0].mxu0
  %v351 = vadd.f32 0.0, %v350
  %352 = vmatprep.mubr.bf16.mxu0 %v288
  %353 = vmatmul.mubr.bf16.gmra.mrb[0].mxu0 %v111
  %v354 = vpop.f32.mrb[0].mxu0
  %v355 = vadd.f32 0.0, %v354
  %v356 = vpop.f32.mrb[0].mxu0
  %v357 = vadd.f32 0.0, %v356
  %v358 = vpop.f32.mrb[0].mxu0
  %v359 = vpop.f32.mrb[0].mxu0
  %360 = vdwg.mxu0
  %361 = vmatprep.subr.bf16.mxu0 0
  %362 = vmatpush1.bf16.msra.mxu0 %v219
  %363 = vmatprep.subr.bf16.mxu0 0
  %364 = vmatpush1.bf16.msra.mxu0 %v222
  %365 = vmatprep.subr.bf16.mxu0 0
  %366 = vmatpush1.bf16.msra.mxu0 %v225
  %367 = vmatprep.subr.bf16.mxu0 0
  %368 = vmatpush1.bf16.msra.mxu0 %v228
  %369 = vmatprep.subr.bf16.mxu0 0
  %370 = vmatpush1.bf16.msra.mxu0 %v231
  %371 = vmatprep.subr.bf16.mxu0 0
  %372 = vmatpush1.bf16.msra.mxu0 %v234
  %373 = vmatprep.subr.bf16.mxu0 0
  %374 = vmatpush1.bf16.msra.mxu0 %v237
  %375 = vmatprep.subr.bf16.mxu0 0
  %376 = vmatpush1.bf16.msra.mxu0 %v240
  %377 = vmatprep.subr.bf16.mxu0 0
  %378 = vmatpush1.bf16.msra.mxu0 %v243
  %379 = vmatprep.subr.bf16.mxu0 0
  %380 = vmatpush1.bf16.msra.mxu0 %v246
  %381 = vmatprep.subr.bf16.mxu0 0
  %382 = vmatpush1.bf16.msra.mxu0 0
  %383 = vmatprep.subr.bf16.mxu0 0
  %384 = vmatpush1.bf16.msra.mxu0 0
  %385 = vmatprep.subr.bf16.mxu0 0
  %386 = vmatpush1.bf16.msra.mxu0 0
  %387 = vmatprep.subr.bf16.mxu0 0
  %388 = vmatpush1.bf16.msra.mxu0 0
  %389 = vmatprep.subr.bf16.mxu0 0
  %390 = vmatpush1.bf16.msra.mxu0 0
  %391 = vmatprep.subr.bf16.mxu0 0
  %392 = vmatpush1.bf16.msra.mxu0 0
  %393 = vmatprep.mubr.bf16.mxu0 %v279
  %394 = vmatmul.mubr.bf16.gmra.mrb[0].mxu0 %v105
  %v395 = vpop.f32.mrb[0].mxu0
  %v396 = vadd.f32 0.0, %v395
  %v397 = vpop.f32.mrb[0].mxu0
  %v398 = vpop.f32.mrb[0].mxu0
  %v399 = vadd.f32 0.0, %v398
  %v400 = vpop.f32.mrb[0].mxu0
  %401 = vmatprep.mubr.bf16.mxu0 %v282
  %402 = vmatmul.mubr.bf16.gmra.mrb[0].mxu0 %v107
  %v403 = vpop.f32.mrb[0].mxu0
  %v404 = vadd.f32 0.0, %v403
  %v405 = vpop.f32.mrb[0].mxu0
  %v406 = vpop.f32.mrb[0].mxu0
  %v407 = vadd.f32 0.0, %v406
  %v408 = vpop.f32.mrb[0].mxu0
  %409 = vmatprep.mubr.bf16.mxu0 %v285
  %410 = vmatmul.mubr.bf16.gmra.mrb[0].mxu0 %v109
  %v411 = vpop.f32.mrb[0].mxu0
  %v412 = vadd.f32 0.0, %v411
  %v413 = vpop.f32.mrb[0].mxu0
  %v414 = vpop.f32.mrb[0].mxu0
  %v415 = vadd.f32 0.0, %v414
  %v416 = vpop.f32.mrb[0].mxu0
  %417 = vmatprep.mubr.bf16.mxu0 %v288
  %418 = vmatmul.mubr.bf16.gmra.mrb[0].mxu0 %v111
  %v419 = vpop.f32.mrb[0].mxu0
  %v420 = vadd.f32 0.0, %v419
  %v421 = vpop.f32.mrb[0].mxu0
  %v422 = vpop.f32.mrb[0].mxu0
  %v423 = vpop.f32.mrb[0].mxu0
  %424 = vdwg.mxu0
  %s425 = scalar_lea.vmem %s1, 240
  %v426 = vld [vmem:[%s425] sm:$0xff]
  %v427 = vld [vmem:[%s425 + $0x8] sm:$0xf]
  %v428 = vld [vmem:[%s425 + $0xc] sm:$0xff]
  %v429 = vld [vmem:[%s425 + $0x14] sm:$0xf]
  %v430 = vld [vmem:[%s425 + $0x18] sm:$0xff]
  %v431 = vld [vmem:[%s425 + $0x20] sm:$0xf]
  %v432 = vld [vmem:[%s425 + $0x24] sm:$0xff]
  %v433 = vld [vmem:[%s425 + $0x2c] sm:$0xf]
  %v434 = vld [vmem:[%s425 + $0x30] sm:$0xff]
  %v435 = vld [vmem:[%s425 + $0x38] sm:$0xf]
  %v436 = vld [vmem:[%s425 + $0x3c] sm:$0xff]
  %v437 = vld [vmem:[%s425 + $0x44] sm:$0xf]
  %v438 = vld [vmem:[%s425 + $0x48] sm:$0xff]
  %v439 = vld [vmem:[%s425 + $0x50] sm:$0xf]
  %v440 = vld [vmem:[%s425 + $0x54] sm:$0xff]
  %v441 = vld [vmem:[%s425 + $0x5c] sm:$0xf]
  %v442 = vld [vmem:[%s425 + $0x60] sm:$0xff]
  %v443 = vld [vmem:[%s425 + $0x68] sm:$0xf]
  %v444 = vld [vmem:[%s425 + $0x6c] sm:$0xff]
  %v445 = vld [vmem:[%s425 + $0x74] sm:$0xf]
  %v446 = vld [vmem:[%s425 + $0x78] sm:$0xff]
  %v447 = vld [vmem:[%s425 + $0x80] sm:$0xf]
  %v448 = vld [vmem:[%s425 + $0x84] sm:$0xff]
  %v449 = vld [vmem:[%s425 + $0x8c] sm:$0xf]
  %v450 = vld [vmem:[%s425 + $0x90] sm:$0xff]
  %v451 = vld [vmem:[%s425 + $0x98] sm:$0xf]
  %v452 = vld [vmem:[%s425 + $0x9c] sm:$0xff]
  %v453 = vld [vmem:[%s425 + $0xa4] sm:$0xf]
  %v454 = vld [vmem:[%s425 + $0xa8] sm:$0xff]
  %v455 = vld [vmem:[%s425 + $0xb0] sm:$0xf]
  %v456 = vld [vmem:[%s425 + $0xb4] sm:$0xff]
  %v457 = vld [vmem:[%s425 + $0xbc] sm:$0xf]
  %v458 = vld [vmem:[%s425 + $0xc0] sm:$0xff]
  %v459 = vld [vmem:[%s425 + $0xc8] sm:$0xf]
  %v460 = vld [vmem:[%s425 + $0xcc] sm:$0xff]
  %v461 = vld [vmem:[%s425 + $0xd4] sm:$0xf]
  %v462 = vld [vmem:[%s425 + $0xd8] sm:$0xff]
  %v463 = vld [vmem:[%s425 + $0xe0] sm:$0xf]
  %v464 = vld [vmem:[%s425 + $0xe4] sm:$0xff]
  %v465 = vld [vmem:[%s425 + $0xec] sm:$0xf]
  %v506 = vunpack.c.l.b16 %v426
  %v507 = vunpack.c.h.b16 %v426
  %v508 = vunpack.c.l.b16 %v427
  %v509 = vunpack.c.l.b16 %v428
  %v510 = vunpack.c.h.b16 %v428
  %v511 = vunpack.c.l.b16 %v429
  %v512 = vunpack.c.l.b16 %v430
  %v513 = vunpack.c.h.b16 %v430
  %v514 = vunpack.c.l.b16 %v431
  %v515 = vunpack.c.l.b16 %v432
  %v516 = vunpack.c.h.b16 %v432
  %v517 = vunpack.c.l.b16 %v433
  %v518 = vunpack.c.l.b16 %v434
  %v519 = vunpack.c.h.b16 %v434
  %v520 = vunpack.c.l.b16 %v435
  %v521 = vunpack.c.l.b16 %v436
  %v522 = vunpack.c.h.b16 %v436
  %v523 = vunpack.c.l.b16 %v437
  %v524 = vunpack.c.l.b16 %v438
  %v525 = vunpack.c.h.b16 %v438
  %v526 = vunpack.c.l.b16 %v439
  %v527 = vunpack.c.l.b16 %v440
  %v528 = vunpack.c.h.b16 %v440
  %v529 = vunpack.c.l.b16 %v441
  %v530 = vunpack.c.l.b16 %v442
  %v531 = vunpack.c.h.b16 %v442
  %v532 = vunpack.c.l.b16 %v443
  %v533 = vunpack.c.l.b16 %v444
  %v534 = vunpack.c.h.b16 %v444
  %v535 = vunpack.c.l.b16 %v445
  %v536 = vunpack.c.l.b16 %v446
  %v537 = vunpack.c.h.b16 %v446
  %v538 = vunpack.c.l.b16 %v447
  %v539 = vunpack.c.l.b16 %v448
  %v540 = vunpack.c.h.b16 %v448
  %v541 = vunpack.c.l.b16 %v449
  %v542 = vunpack.c.l.b16 %v450
  %v543 = vunpack.c.h.b16 %v450
  %v544 = vunpack.c.l.b16 %v451
  %v545 = vunpack.c.l.b16 %v452
  %v546 = vunpack.c.h.b16 %v452
  %v547 = vunpack.c.l.b16 %v453
  %v548 = vunpack.c.l.b16 %v454
  %v549 = vunpack.c.h.b16 %v454
  %v550 = vunpack.c.l.b16 %v455
  %v551 = vunpack.c.l.b16 %v456
  %v552 = vunpack.c.h.b16 %v456
  %v553 = vunpack.c.l.b16 %v457
  %v554 = vunpack.c.l.b16 %v458
  %v555 = vunpack.c.h.b16 %v458
  %v556 = vunpack.c.l.b16 %v459
  %v557 = vunpack.c.l.b16 %v460
  %v558 = vunpack.c.h.b16 %v460
  %v559 = vunpack.c.l.b16 %v461
  %v560 = vunpack.c.l.b16 %v462
  %v561 = vunpack.c.h.b16 %v462
  %v562 = vunpack.c.l.b16 %v463
  %v563 = vunpack.c.l.b16 %v464
  %v564 = vunpack.c.h.b16 %v464
  %v565 = vunpack.c.l.b16 %v465
  %v566 = vpack.c.b16 %v509, %v506
  %v567 = vpack.c.b16 %v510, %v507
  %v568 = vpack.c.b16 %v511, %v508
  %v569 = vpack.c.b16 %v515, %v512
  %v570 = vpack.c.b16 %v516, %v513
  %v571 = vpack.c.b16 %v517, %v514
  %v572 = vpack.c.b16 %v521, %v518
  %v573 = vpack.c.b16 %v522, %v519
  %v574 = vpack.c.b16 %v523, %v520
  %v575 = vpack.c.b16 %v527, %v524
  %v576 = vpack.c.b16 %v528, %v525
  %v577 = vpack.c.b16 %v529, %v526
  %v578 = vpack.c.b16 %v533, %v530
  %v579 = vpack.c.b16 %v534, %v531
  %v580 = vpack.c.b16 %v535, %v532
  %v581 = vpack.c.b16 %v539, %v536
  %v582 = vpack.c.b16 %v540, %v537
  %v583 = vpack.c.b16 %v541, %v538
  %v584 = vpack.c.b16 %v545, %v542
  %v585 = vpack.c.b16 %v546, %v543
  %v586 = vpack.c.b16 %v547, %v544
  %v587 = vpack.c.b16 %v551, %v548
  %v588 = vpack.c.b16 %v552, %v549
  %v589 = vpack.c.b16 %v553, %v550
  %v590 = vpack.c.b16 %v557, %v554
  %v591 = vpack.c.b16 %v558, %v555
  %v592 = vpack.c.b16 %v559, %v556
  %v593 = vpack.c.b16 %v563, %v560
  %v594 = vpack.c.b16 %v564, %v561
  %v595 = vpack.c.b16 %v565, %v562
  %626 = vmatprep.subr.bf16.mxu0 %v567
  %627 = vmatpush1.bf16.msra.mxu0 %v566
  %628 = vmatprep.subr.bf16.mxu0 %v570
  %629 = vmatpush1.bf16.msra.mxu0 %v569
  %630 = vmatprep.subr.bf16.mxu0 %v573
  %631 = vmatpush1.bf16.msra.mxu0 %v572
  %632 = vmatprep.subr.bf16.mxu0 %v576
  %633 = vmatpush1.bf16.msra.mxu0 %v575
  %634 = vmatprep.subr.bf16.mxu0 %v579
  %635 = vmatpush1.bf16.msra.mxu0 %v578
  %636 = vmatprep.subr.bf16.mxu0 %v582
  %637 = vmatpush1.bf16.msra.mxu0 %v581
  %638 = vmatprep.subr.bf16.mxu0 %v585
  %639 = vmatpush1.bf16.msra.mxu0 %v584
  %640 = vmatprep.subr.bf16.mxu0 %v588
  %641 = vmatpush1.bf16.msra.mxu0 %v587
  %642 = vmatprep.subr.bf16.mxu0 %v591
  %643 = vmatpush1.bf16.msra.mxu0 %v590
  %644 = vmatprep.subr.bf16.mxu0 %v594
  %645 = vmatpush1.bf16.msra.mxu0 %v593
  %646 = vmatprep.subr.bf16.mxu0 0
  %647 = vmatpush1.bf16.msra.mxu0 0
  %648 = vmatprep.subr.bf16.mxu0 0
  %649 = vmatpush1.bf16.msra.mxu0 0
  %650 = vmatprep.subr.bf16.mxu0 0
  %651 = vmatpush1.bf16.msra.mxu0 0
  %652 = vmatprep.subr.bf16.mxu0 0
  %653 = vmatpush1.bf16.msra.mxu0 0
  %654 = vmatprep.subr.bf16.mxu0 0
  %655 = vmatpush1.bf16.msra.mxu0 0
  %656 = vmatprep.subr.bf16.mxu0 0
  %657 = vmatpush1.bf16.msra.mxu0 0
  %658 = vmatprep.mubr.bf16.mxu0 %v279
  %659 = vmatmul.mubr.bf16.gmra.mrb[0].mxu0 %v105
  %v660 = vpop.f32.mrb[0].mxu0
  %v661 = vadd.f32 0.0, %v660
  %v662 = vpop.f32.mrb[0].mxu0
  %v663 = vadd.f32 0.0, %v662
  %v664 = vpop.f32.mrb[0].mxu0
  %v665 = vadd.f32 0.0, %v664
  %v666 = vpop.f32.mrb[0].mxu0
  %v667 = vadd.f32 0.0, %v666
  %668 = vmatprep.mubr.bf16.mxu0 %v282
  %669 = vmatmul.mubr.bf16.gmra.mrb[0].mxu0 %v107
  %v670 = vpop.f32.mrb[0].mxu0
  %v671 = vadd.f32 0.0, %v670
  %v672 = vpop.f32.mrb[0].mxu0
  %v673 = vadd.f32 0.0, %v672
  %v674 = vpop.f32.mrb[0].mxu0
  %v675 = vadd.f32 0.0, %v674
  %v676 = vpop.f32.mrb[0].mxu0
  %v677 = vadd.f32 0.0, %v676
  %678 = vmatprep.mubr.bf16.mxu0 %v285
  %679 = vmatmul.mubr.bf16.gmra.mrb[0].mxu0 %v109
  %v680 = vpop.f32.mrb[0].mxu0
  %v681 = vadd.f32 0.0, %v680
  %v682 = vpop.f32.mrb[0].mxu0
  %v683 = vadd.f32 0.0, %v682
  %v684 = vpop.f32.mrb[0].mxu0
  %v685 = vadd.f32 0.0, %v684
  %v686 = vpop.f32.mrb[0].mxu0
  %v687 = vadd.f32 0.0, %v686
  %688 = vmatprep.mubr.bf16.mxu0 %v288
  %689 = vmatmul.mubr.bf16.gmra.mrb[0].mxu0 %v111
  %v690 = vpop.f32.mrb[0].mxu0
  %v691 = vadd.f32 0.0, %v690
  %v692 = vpop.f32.mrb[0].mxu0
  %v693 = vadd.f32 0.0, %v692
  %v694 = vpop.f32.mrb[0].mxu0
  %v695 = vpop.f32.mrb[0].mxu0
  %696 = vdwg.mxu0
  %697 = vmatprep.subr.bf16.mxu0 0
  %698 = vmatpush1.bf16.msra.mxu0 %v568
  %699 = vmatprep.subr.bf16.mxu0 0
  %700 = vmatpush1.bf16.msra.mxu0 %v571
  %701 = vmatprep.subr.bf16.mxu0 0
  %702 = vmatpush1.bf16.msra.mxu0 %v574
  %703 = vmatprep.subr.bf16.mxu0 0
  %704 = vmatpush1.bf16.msra.mxu0 %v577
  %705 = vmatprep.subr.bf16.mxu0 0
  %706 = vmatpush1.bf16.msra.mxu0 %v580
  %707 = vmatprep.subr.bf16.mxu0 0
  %708 = vmatpush1.bf16.msra.mxu0 %v583
  %709 = vmatprep.subr.bf16.mxu0 0
  %710 = vmatpush1.bf16.msra.mxu0 %v586
  %711 = vmatprep.subr.bf16.mxu0 0
  %712 = vmatpush1.bf16.msra.mxu0 %v589
  %713 = vmatprep.subr.bf16.mxu0 0
  %714 = vmatpush1.bf16.msra.mxu0 %v592
  %715 = vmatprep.subr.bf16.mxu0 0
  %716 = vmatpush1.bf16.msra.mxu0 %v595
  %717 = vmatprep.subr.bf16.mxu0 0
  %718 = vmatpush1.bf16.msra.mxu0 0
  %719 = vmatprep.subr.bf16.mxu0 0
  %720 = vmatpush1.bf16.msra.mxu0 0
  %721 = vmatprep.subr.bf16.mxu0 0
  %722 = vmatpush1.bf16.msra.mxu0 0
  %723 = vmatprep.subr.bf16.mxu0 0
  %724 = vmatpush1.bf16.msra.mxu0 0
  %725 = vmatprep.subr.bf16.mxu0 0
  %726 = vmatpush1.bf16.msra.mxu0 0
  %727 = vmatprep.subr.bf16.mxu0 0
  %728 = vmatpush1.bf16.msra.mxu0 0
  %729 = vmatprep.mubr.bf16.mxu0 %v279
  %730 = vmatmul.mubr.bf16.gmra.mrb[0].mxu0 %v105
  %v731 = vpop.f32.mrb[0].mxu0
  %v732 = vadd.f32 0.0, %v731
  %v733 = vpop.f32.mrb[0].mxu0
  %v734 = vpop.f32.mrb[0].mxu0
  %v735 = vadd.f32 0.0, %v734
  %v736 = vpop.f32.mrb[0].mxu0
  %737 = vmatprep.mubr.bf16.mxu0 %v282
  %738 = vmatmul.mubr.bf16.gmra.mrb[0].mxu0 %v107
  %v739 = vpop.f32.mrb[0].mxu0
  %v740 = vadd.f32 0.0, %v739
  %v741 = vpop.f32.mrb[0].mxu0
  %v742 = vpop.f32.mrb[0].mxu0
  %v743 = vadd.f32 0.0, %v742
  %v744 = vpop.f32.mrb[0].mxu0
  %745 = vmatprep.mubr.bf16.mxu0 %v285
  %746 = vmatmul.mubr.bf16.gmra.mrb[0].mxu0 %v109
  %v747 = vpop.f32.mrb[0].mxu0
  %v748 = vadd.f32 0.0, %v747
  %v749 = vpop.f32.mrb[0].mxu0
  %v750 = vpop.f32.mrb[0].mxu0
  %v751 = vadd.f32 0.0, %v750
  %v752 = vpop.f32.mrb[0].mxu0
  %753 = vmatprep.mubr.bf16.mxu0 %v288
  %754 = vmatmul.mubr.bf16.gmra.mrb[0].mxu0 %v111
  %v755 = vpop.f32.mrb[0].mxu0
  %v756 = vadd.f32 0.0, %v755
  %v757 = vpop.f32.mrb[0].mxu0
  %v758 = vpop.f32.mrb[0].mxu0
  %v759 = vpop.f32.mrb[0].mxu0
  %760 = vdwg.mxu0
  %v761 = vmax.f32 %v325, %v661
  %v762 = vmax.f32 %v327, %v663
  %v763 = vmax.f32 %v396, %v732
  %v764 = vmax.f32 %v329, %v665
  %v765 = vmax.f32 %v331, %v667
  %v766 = vmax.f32 %v399, %v735
  %v767 = vmax.f32 %v335, %v671
  %v768 = vmax.f32 %v337, %v673
  %v769 = vmax.f32 %v404, %v740
  %v770 = vmax.f32 %v339, %v675
  %v771 = vmax.f32 %v341, %v677
  %v772 = vmax.f32 %v407, %v743
  %v773 = vmax.f32 %v345, %v681
  %v774 = vmax.f32 %v347, %v683
  %v775 = vmax.f32 %v412, %v748
  %v776 = vmax.f32 %v349, %v685
  %v777 = vmax.f32 %v351, %v687
  %v778 = vmax.f32 %v415, %v751
  %v779 = vmax.f32 %v355, %v691
  %v780 = vmax.f32 %v357, %v693
  %v781 = vmax.f32 %v420, %v756
  %s782 = scalar_lea.vmem %s0, 56
  %v783 = vld [vmem:[%s782] sm:$0xff]
  %v784 = vld [vmem:[%s782 + $0x8] sm:$0xff]
  %v785 = vld [vmem:[%s782 + $0x10] sm:$0xff]
  %v786 = vld [vmem:[%s782 + $0x18] sm:$0xff]
  %v787 = vld [vmem:[%s782 + $0x20] sm:$0xff]
  %v788 = vld [vmem:[%s782 + $0x28] sm:$0xff]
  %v789 = vld [vmem:[%s782 + $0x30] sm:$0xff]
  %v797 = vunpack.c.l.b16 %v783
  %v798 = vunpack.c.h.b16 %v783
  %v799 = vunpack.c.l.b16 %v784
  %v800 = vunpack.c.h.b16 %v784
  %v801 = vunpack.c.l.b16 %v785
  %v802 = vunpack.c.h.b16 %v785
  %v803 = vunpack.c.l.b16 %v786
  %v804 = vunpack.c.h.b16 %v786
  %v805 = vunpack.c.l.b16 %v787
  %v806 = vunpack.c.h.b16 %v787
  %v807 = vunpack.c.l.b16 %v788
  %v808 = vunpack.c.h.b16 %v788
  %v809 = vunpack.c.l.b16 %v789
  %v810 = vunpack.c.h.b16 %v789
  %v811 = vpack.c.b16 %v799, %v797
  %v812 = vpack.c.b16 %v800, %v798
  %v813 = vpack.c.b16 %v803, %v801
  %v814 = vpack.c.b16 %v804, %v802
  %v815 = vpack.c.b16 %v807, %v805
  %v816 = vpack.c.b16 %v808, %v806
  %v817 = vpack.c.b16 %v809, %v809
  %v818 = vpack.c.b16 %v810, %v810
  %v824 = vsel %vm277, %v812, 0
  %v827 = vsel %vm277, %v814, 0
  %v830 = vsel %vm277, %v816, 0
  %v833 = vsel %vm277, %v818, 0
  %835 = vmatprep.subr.bf16.mxu0 %v218
  %836 = vmatpush1.bf16.msra.mxu0 %v217
  %837 = vmatprep.subr.bf16.mxu0 %v221
  %838 = vmatpush1.bf16.msra.mxu0 %v220
  %839 = vmatprep.subr.bf16.mxu0 %v224
  %840 = vmatpush1.bf16.msra.mxu0 %v223
  %841 = vmatprep.subr.bf16.mxu0 %v227
  %842 = vmatpush1.bf16.msra.mxu0 %v226
  %843 = vmatprep.subr.bf16.mxu0 %v230
  %844 = vmatpush1.bf16.msra.mxu0 %v229
  %845 = vmatprep.subr.bf16.mxu0 %v233
  %846 = vmatpush1.bf16.msra.mxu0 %v232
  %847 = vmatprep.subr.bf16.mxu0 %v236
  %848 = vmatpush1.bf16.msra.mxu0 %v235
  %849 = vmatprep.subr.bf16.mxu0 %v239
  %850 = vmatpush1.bf16.msra.mxu0 %v238
  %851 = vmatprep.subr.bf16.mxu0 %v242
  %852 = vmatpush1.bf16.msra.mxu0 %v241
  %853 = vmatprep.subr.bf16.mxu0 %v245
  %854 = vmatpush1.bf16.msra.mxu0 %v244
  %855 = vmatprep.subr.bf16.mxu0 0
  %856 = vmatpush1.bf16.msra.mxu0 0
  %857 = vmatprep.subr.bf16.mxu0 0
  %858 = vmatpush1.bf16.msra.mxu0 0
  %859 = vmatprep.subr.bf16.mxu0 0
  %860 = vmatpush1.bf16.msra.mxu0 0
  %861 = vmatprep.subr.bf16.mxu0 0
  %862 = vmatpush1.bf16.msra.mxu0 0
  %863 = vmatprep.subr.bf16.mxu0 0
  %864 = vmatpush1.bf16.msra.mxu0 0
  %865 = vmatprep.subr.bf16.mxu0 0
  %866 = vmatpush1.bf16.msra.mxu0 0
  %867 = vmatprep.mubr.bf16.mxu0 %v824
  %868 = vmatmul.mubr.bf16.gmra.mrb[0].mxu0 %v811
  %v869 = vpop.f32.mrb[0].mxu0
  %v870 = vadd.f32 0.0, %v869
  %v871 = vpop.f32.mrb[0].mxu0
  %v872 = vadd.f32 0.0, %v871
  %v873 = vpop.f32.mrb[0].mxu0
  %v874 = vadd.f32 0.0, %v873
  %v875 = vpop.f32.mrb[0].mxu0
  %v876 = vadd.f32 0.0, %v875
  %877 = vmatprep.mubr.bf16.mxu0 %v827
  %878 = vmatmul.mubr.bf16.gmra.mrb[0].mxu0 %v813
  %v879 = vpop.f32.mrb[0].mxu0
  %v880 = vadd.f32 0.0, %v879
  %v881 = vpop.f32.mrb[0].mxu0
  %v882 = vadd.f32 0.0, %v881
  %v883 = vpop.f32.mrb[0].mxu0
  %v884 = vadd.f32 0.0, %v883
  %v885 = vpop.f32.mrb[0].mxu0
  %v886 = vadd.f32 0.0, %v885
  %887 = vmatprep.mubr.bf16.mxu0 %v830
  %888 = vmatmul.mubr.bf16.gmra.mrb[0].mxu0 %v815
  %v889 = vpop.f32.mrb[0].mxu0
  %v890 = vadd.f32 0.0, %v889
  %v891 = vpop.f32.mrb[0].mxu0
  %v892 = vadd.f32 0.0, %v891
  %v893 = vpop.f32.mrb[0].mxu0
  %v894 = vadd.f32 0.0, %v893
  %v895 = vpop.f32.mrb[0].mxu0
  %v896 = vadd.f32 0.0, %v895
  %897 = vmatprep.mubr.bf16.mxu0 %v833
  %898 = vmatmul.mubr.bf16.gmra.mrb[0].mxu0 %v817
  %v899 = vpop.f32.mrb[0].mxu0
  %v900 = vadd.f32 0.0, %v899
  %v901 = vpop.f32.mrb[0].mxu0
  %v902 = vadd.f32 0.0, %v901
  %v903 = vpop.f32.mrb[0].mxu0
  %v904 = vpop.f32.mrb[0].mxu0
  %905 = vdwg.mxu0
  %906 = vmatprep.subr.bf16.mxu0 0
  %907 = vmatpush1.bf16.msra.mxu0 %v219
  %908 = vmatprep.subr.bf16.mxu0 0
  %909 = vmatpush1.bf16.msra.mxu0 %v222
  %910 = vmatprep.subr.bf16.mxu0 0
  %911 = vmatpush1.bf16.msra.mxu0 %v225
  %912 = vmatprep.subr.bf16.mxu0 0
  %913 = vmatpush1.bf16.msra.mxu0 %v228
  %914 = vmatprep.subr.bf16.mxu0 0
  %915 = vmatpush1.bf16.msra.mxu0 %v231
  %916 = vmatprep.subr.bf16.mxu0 0
  %917 = vmatpush1.bf16.msra.mxu0 %v234
  %918 = vmatprep.subr.bf16.mxu0 0
  %919 = vmatpush1.bf16.msra.mxu0 %v237
  %920 = vmatprep.subr.bf16.mxu0 0
  %921 = vmatpush1.bf16.msra.mxu0 %v240
  %922 = vmatprep.subr.bf16.mxu0 0
  %923 = vmatpush1.bf16.msra.mxu0 %v243
  %924 = vmatprep.subr.bf16.mxu0 0
  %925 = vmatpush1.bf16.msra.mxu0 %v246
  %926 = vmatprep.subr.bf16.mxu0 0
  %927 = vmatpush1.bf16.msra.mxu0 0
  %928 = vmatprep.subr.bf16.mxu0 0
  %929 = vmatpush1.bf16.msra.mxu0 0
  %930 = vmatprep.subr.bf16.mxu0 0
  %931 = vmatpush1.bf16.msra.mxu0 0
  %932 = vmatprep.subr.bf16.mxu0 0
  %933 = vmatpush1.bf16.msra.mxu0 0
  %934 = vmatprep.subr.bf16.mxu0 0
  %935 = vmatpush1.bf16.msra.mxu0 0
  %936 = vmatprep.subr.bf16.mxu0 0
  %937 = vmatpush1.bf16.msra.mxu0 0
  %938 = vmatprep.mubr.bf16.mxu0 %v824
  %939 = vmatmul.mubr.bf16.gmra.mrb[0].mxu0 %v811
  %v940 = vpop.f32.mrb[0].mxu0
  %v941 = vadd.f32 0.0, %v940
  %v942 = vpop.f32.mrb[0].mxu0
  %v943 = vpop.f32.mrb[0].mxu0
  %v944 = vadd.f32 0.0, %v943
  %v945 = vpop.f32.mrb[0].mxu0
  %946 = vmatprep.mubr.bf16.mxu0 %v827
  %947 = vmatmul.mubr.bf16.gmra.mrb[0].mxu0 %v813
  %v948 = vpop.f32.mrb[0].mxu0
  %v949 = vadd.f32 0.0, %v948
  %v950 = vpop.f32.mrb[0].mxu0
  %v951 = vpop.f32.mrb[0].mxu0
  %v952 = vadd.f32 0.0, %v951
  %v953 = vpop.f32.mrb[0].mxu0
  %954 = vmatprep.mubr.bf16.mxu0 %v830
  %955 = vmatmul.mubr.bf16.gmra.mrb[0].mxu0 %v815
  %v956 = vpop.f32.mrb[0].mxu0
  %v957 = vadd.f32 0.0, %v956
  %v958 = vpop.f32.mrb[0].mxu0
  %v959 = vpop.f32.mrb[0].mxu0
  %v960 = vadd.f32 0.0, %v959
  %v961 = vpop.f32.mrb[0].mxu0
  %962 = vmatprep.mubr.bf16.mxu0 %v833
  %963 = vmatmul.mubr.bf16.gmra.mrb[0].mxu0 %v817
  %v964 = vpop.f32.mrb[0].mxu0
  %v965 = vadd.f32 0.0, %v964
  %v966 = vpop.f32.mrb[0].mxu0
  %v967 = vpop.f32.mrb[0].mxu0
  %v968 = vpop.f32.mrb[0].mxu0
  %969 = vdwg.mxu0
  %v970 = vmax.f32 %v761, %v870
  %v971 = vmax.f32 %v762, %v872
  %v972 = vmax.f32 %v763, %v941
  %v973 = vmax.f32 %v764, %v874
  %v974 = vmax.f32 %v765, %v876
  %v975 = vmax.f32 %v766, %v944
  %v976 = vmax.f32 %v767, %v880
  %v977 = vmax.f32 %v768, %v882
  %v978 = vmax.f32 %v769, %v949
  %v979 = vmax.f32 %v770, %v884
  %v980 = vmax.f32 %v771, %v886
  %v981 = vmax.f32 %v772, %v952
  %v982 = vmax.f32 %v773, %v890
  %v983 = vmax.f32 %v774, %v892
  %v984 = vmax.f32 %v775, %v957
  %v985 = vmax.f32 %v776, %v894
  %v986 = vmax.f32 %v777, %v896
  %v987 = vmax.f32 %v778, %v960
  %v988 = vmax.f32 %v779, %v900
  %v989 = vmax.f32 %v780, %v902
  %v990 = vmax.f32 %v781, %v965
  %991 = vmatprep.subr.bf16.mxu0 %v567
  %992 = vmatpush1.bf16.msra.mxu0 %v566
  %993 = vmatprep.subr.bf16.mxu0 %v570
  %994 = vmatpush1.bf16.msra.mxu0 %v569
  %995 = vmatprep.subr.bf16.mxu0 %v573
  %996 = vmatpush1.bf16.msra.mxu0 %v572
  %997 = vmatprep.subr.bf16.mxu0 %v576
  %998 = vmatpush1.bf16.msra.mxu0 %v575
  %999 = vmatprep.subr.bf16.mxu0 %v579
  %1000 = vmatpush1.bf16.msra.mxu0 %v578
  %1001 = vmatprep.subr.bf16.mxu0 %v582
  %1002 = vmatpush1.bf16.msra.mxu0 %v581
  %1003 = vmatprep.subr.bf16.mxu0 %v585
  %1004 = vmatpush1.bf16.msra.mxu0 %v584
  %1005 = vmatprep.subr.bf16.mxu0 %v588
  %1006 = vmatpush1.bf16.msra.mxu0 %v587
  %1007 = vmatprep.subr.bf16.mxu0 %v591
  %1008 = vmatpush1.bf16.msra.mxu0 %v590
  %1009 = vmatprep.subr.bf16.mxu0 %v594
  %1010 = vmatpush1.bf16.msra.mxu0 %v593
  %1011 = vmatprep.subr.bf16.mxu0 0
  %1012 = vmatpush1.bf16.msra.mxu0 0
  %1013 = vmatprep.subr.bf16.mxu0 0
  %1014 = vmatpush1.bf16.msra.mxu0 0
  %1015 = vmatprep.subr.bf16.mxu0 0
  %1016 = vmatpush1.bf16.msra.mxu0 0
  %1017 = vmatprep.subr.bf16.mxu0 0
  %1018 = vmatpush1.bf16.msra.mxu0 0
  %1019 = vmatprep.subr.bf16.mxu0 0
  %1020 = vmatpush1.bf16.msra.mxu0 0
  %1021 = vmatprep.subr.bf16.mxu0 0
  %1022 = vmatpush1.bf16.msra.mxu0 0
  %1023 = vmatprep.mubr.bf16.mxu0 %v824
  %1024 = vmatmul.mubr.bf16.gmra.mrb[0].mxu0 %v811
  %v1025 = vpop.f32.mrb[0].mxu0
  %v1026 = vadd.f32 0.0, %v1025
  %v1027 = vpop.f32.mrb[0].mxu0
  %v1028 = vadd.f32 0.0, %v1027
  %v1029 = vpop.f32.mrb[0].mxu0
  %v1030 = vadd.f32 0.0, %v1029
  %v1031 = vpop.f32.mrb[0].mxu0
  %v1032 = vadd.f32 0.0, %v1031
  %1033 = vmatprep.mubr.bf16.mxu0 %v827
  %1034 = vmatmul.mubr.bf16.gmra.mrb[0].mxu0 %v813
  %v1035 = vpop.f32.mrb[0].mxu0
  %v1036 = vadd.f32 0.0, %v1035
  %v1037 = vpop.f32.mrb[0].mxu0
  %v1038 = vadd.f32 0.0, %v1037
  %v1039 = vpop.f32.mrb[0].mxu0
  %v1040 = vadd.f32 0.0, %v1039
  %v1041 = vpop.f32.mrb[0].mxu0
  %v1042 = vadd.f32 0.0, %v1041
  %1043 = vmatprep.mubr.bf16.mxu0 %v830
  %1044 = vmatmul.mubr.bf16.gmra.mrb[0].mxu0 %v815
  %v1045 = vpop.f32.mrb[0].mxu0
  %v1046 = vadd.f32 0.0, %v1045
  %v1047 = vpop.f32.mrb[0].mxu0
  %v1048 = vadd.f32 0.0, %v1047
  %v1049 = vpop.f32.mrb[0].mxu0
  %v1050 = vadd.f32 0.0, %v1049
  %v1051 = vpop.f32.mrb[0].mxu0
  %v1052 = vadd.f32 0.0, %v1051
  %1053 = vmatprep.mubr.bf16.mxu0 %v833
  %1054 = vmatmul.mubr.bf16.gmra.mrb[0].mxu0 %v817
  %v1055 = vpop.f32.mrb[0].mxu0
  %v1056 = vadd.f32 0.0, %v1055
  %v1057 = vpop.f32.mrb[0].mxu0
  %v1058 = vadd.f32 0.0, %v1057
  %v1059 = vpop.f32.mrb[0].mxu0
  %v1060 = vpop.f32.mrb[0].mxu0
  %1061 = vdwg.mxu0
  %1062 = vmatprep.subr.bf16.mxu0 0
  %1063 = vmatpush1.bf16.msra.mxu0 %v568
  %1064 = vmatprep.subr.bf16.mxu0 0
  %1065 = vmatpush1.bf16.msra.mxu0 %v571
  %1066 = vmatprep.subr.bf16.mxu0 0
  %1067 = vmatpush1.bf16.msra.mxu0 %v574
  %1068 = vmatprep.subr.bf16.mxu0 0
  %1069 = vmatpush1.bf16.msra.mxu0 %v577
  %1070 = vmatprep.subr.bf16.mxu0 0
  %1071 = vmatpush1.bf16.msra.mxu0 %v580
  %1072 = vmatprep.subr.bf16.mxu0 0
  %1073 = vmatpush1.bf16.msra.mxu0 %v583
  %1074 = vmatprep.subr.bf16.mxu0 0
  %1075 = vmatpush1.bf16.msra.mxu0 %v586
  %1076 = vmatprep.subr.bf16.mxu0 0
  %1077 = vmatpush1.bf16.msra.mxu0 %v589
  %1078 = vmatprep.subr.bf16.mxu0 0
  %1079 = vmatpush1.bf16.msra.mxu0 %v592
  %1080 = vmatprep.subr.bf16.mxu0 0
  %1081 = vmatpush1.bf16.msra.mxu0 %v595
  %1082 = vmatprep.subr.bf16.mxu0 0
  %1083 = vmatpush1.bf16.msra.mxu0 0
  %1084 = vmatprep.subr.bf16.mxu0 0
  %1085 = vmatpush1.bf16.msra.mxu0 0
  %1086 = vmatprep.subr.bf16.mxu0 0
  %1087 = vmatpush1.bf16.msra.mxu0 0
  %1088 = vmatprep.subr.bf16.mxu0 0
  %1089 = vmatpush1.bf16.msra.mxu0 0
  %1090 = vmatprep.subr.bf16.mxu0 0
  %1091 = vmatpush1.bf16.msra.mxu0 0
  %1092 = vmatprep.subr.bf16.mxu0 0
  %1093 = vmatpush1.bf16.msra.mxu0 0
  %1094 = vmatprep.mubr.bf16.mxu0 %v824
  %1095 = vmatmul.mubr.bf16.gmra.mrb[0].mxu0 %v811
  %v1096 = vpop.f32.mrb[0].mxu0
  %v1097 = vadd.f32 0.0, %v1096
  %v1098 = vpop.f32.mrb[0].mxu0
  %v1099 = vpop.f32.mrb[0].mxu0
  %v1100 = vadd.f32 0.0, %v1099
  %v1101 = vpop.f32.mrb[0].mxu0
  %1102 = vmatprep.mubr.bf16.mxu0 %v827
  %1103 = vmatmul.mubr.bf16.gmra.mrb[0].mxu0 %v813
  %v1104 = vpop.f32.mrb[0].mxu0
  %v1105 = vadd.f32 0.0, %v1104
  %v1106 = vpop.f32.mrb[0].mxu0
  %v1107 = vpop.f32.mrb[0].mxu0
  %v1108 = vadd.f32 0.0, %v1107
  %v1109 = vpop.f32.mrb[0].mxu0
  %1110 = vmatprep.mubr.bf16.mxu0 %v830
  %1111 = vmatmul.mubr.bf16.gmra.mrb[0].mxu0 %v815
  %v1112 = vpop.f32.mrb[0].mxu0
  %v1113 = vadd.f32 0.0, %v1112
  %v1114 = vpop.f32.mrb[0].mxu0
  %v1115 = vpop.f32.mrb[0].mxu0
  %v1116 = vadd.f32 0.0, %v1115
  %v1117 = vpop.f32.mrb[0].mxu0
  %1118 = vmatprep.mubr.bf16.mxu0 %v833
  %1119 = vmatmul.mubr.bf16.gmra.mrb[0].mxu0 %v817
  %v1120 = vpop.f32.mrb[0].mxu0
  %v1121 = vadd.f32 0.0, %v1120
  %v1122 = vpop.f32.mrb[0].mxu0
  %v1123 = vpop.f32.mrb[0].mxu0
  %v1124 = vpop.f32.mrb[0].mxu0
  %1125 = vdwg.mxu0
  %v1126 = vmax.f32 %v970, %v1026
  %v1127 = vmax.f32 %v971, %v1028
  %v1128 = vmax.f32 %v972, %v1097
  %v1129 = vmax.f32 %v973, %v1030
  %v1130 = vmax.f32 %v974, %v1032
  %v1131 = vmax.f32 %v975, %v1100
  %v1132 = vmax.f32 %v976, %v1036
  %v1133 = vmax.f32 %v977, %v1038
  %v1134 = vmax.f32 %v978, %v1105
  %v1135 = vmax.f32 %v979, %v1040
  %v1136 = vmax.f32 %v980, %v1042
  %v1137 = vmax.f32 %v981, %v1108
  %v1138 = vmax.f32 %v982, %v1046
  %v1139 = vmax.f32 %v983, %v1048
  %v1140 = vmax.f32 %v984, %v1113
  %v1141 = vmax.f32 %v985, %v1050
  %v1142 = vmax.f32 %v986, %v1052
  %v1143 = vmax.f32 %v987, %v1116
  %v1144 = vmax.f32 %v988, %v1056
  %v1145 = vmax.f32 %v989, %v1058
  %v1146 = vmax.f32 %v990, %v1121
  %v1147 = vld [vmem:[%s2] sm:$0x7]
  %v1149 = vlaneseq
  %v1150 = vshrl.u32 %v1149, 7
  %v1151 = vsub.s32 0, %v1150
  %v1152 = vrot.slane %v1147, %v1151
  %v1153 = vlaneseq
  %v1154 = vshrl.u32 %v1153, 7
  %v1155 = vsub.s32 1, %v1154
  %v1156 = vrot.slane %v1147, %v1155
  %v1157 = vlaneseq
  %v1158 = vshrl.u32 %v1157, 7
  %v1159 = vsub.s32 2, %v1158
  %v1160 = vrot.slane %v1147, %v1159
  %v1164 = vadd.f32 %v1126, %v1152
  %v1165 = vadd.f32 %v1127, %v1156
  %v1166 = vadd.f32 %v1128, %v1160
  %v1167 = vadd.f32 %v1129, %v1152
  %v1168 = vadd.f32 %v1130, %v1156
  %v1169 = vadd.f32 %v1131, %v1160
  %v1170 = vadd.f32 %v1132, %v1152
  %v1171 = vadd.f32 %v1133, %v1156
  %v1172 = vadd.f32 %v1134, %v1160
  %v1173 = vadd.f32 %v1135, %v1152
  %v1174 = vadd.f32 %v1136, %v1156
  %v1175 = vadd.f32 %v1137, %v1160
  %v1176 = vadd.f32 %v1138, %v1152
  %v1177 = vadd.f32 %v1139, %v1156
  %v1178 = vadd.f32 %v1140, %v1160
  %v1179 = vadd.f32 %v1141, %v1152
  %v1180 = vadd.f32 %v1142, %v1156
  %v1181 = vadd.f32 %v1143, %v1160
  %v1182 = vadd.f32 %v1144, %v1152
  %v1183 = vadd.f32 %v1145, %v1156
  %v1184 = vadd.f32 %v1146, %v1160
  %v1185 = vmax.f32 %v1164, 0.0
  %v1186 = vmax.f32 %v1165, 0.0
  %v1187 = vmax.f32 %v1166, 0.0
  %v1188 = vmax.f32 %v1167, 0.0
  %v1189 = vmax.f32 %v1168, 0.0
  %v1190 = vmax.f32 %v1169, 0.0
  %v1191 = vmax.f32 %v1170, 0.0
  %v1192 = vmax.f32 %v1171, 0.0
  %v1193 = vmax.f32 %v1172, 0.0
  %v1194 = vmax.f32 %v1173, 0.0
  %v1195 = vmax.f32 %v1174, 0.0
  %v1196 = vmax.f32 %v1175, 0.0
  %v1197 = vmax.f32 %v1176, 0.0
  %v1198 = vmax.f32 %v1177, 0.0
  %v1199 = vmax.f32 %v1178, 0.0
  %v1200 = vmax.f32 %v1179, 0.0
  %v1201 = vmax.f32 %v1180, 0.0
  %v1202 = vmax.f32 %v1181, 0.0
  %v1203 = vmax.f32 %v1182, 0.0
  %v1204 = vmax.f32 %v1183, 0.0
  %v1205 = vmax.f32 %v1184, 0.0
  %v1206 = vpack.c.bf16 %v1188, %v1185
  %v1207 = vpack.c.bf16 %v1189, %v1186
  %v1208 = vpack.c.bf16 %v1190, %v1187
  %v1209 = vpack.c.bf16 %v1194, %v1191
  %v1210 = vpack.c.bf16 %v1195, %v1192
  %v1211 = vpack.c.bf16 %v1196, %v1193
  %v1212 = vpack.c.bf16 %v1200, %v1197
  %v1213 = vpack.c.bf16 %v1201, %v1198
  %v1214 = vpack.c.bf16 %v1202, %v1199
  %v1215 = vpack.c.bf16 %v1203, %v1203
  %v1216 = vpack.c.bf16 %v1204, %v1204
  %v1217 = vpack.c.bf16 %v1205, %v1205
  %v1230 = vunpack.c.l.b16 %v1206
  %v1231 = vunpack.c.l.b16 %v1207
  %v1232 = vunpack.c.l.b16 %v1208
  %v1233 = vunpack.c.h.b16 %v1206
  %v1234 = vunpack.c.h.b16 %v1207
  %v1235 = vunpack.c.h.b16 %v1208
  %v1236 = vunpack.c.l.b16 %v1209
  %v1237 = vunpack.c.l.b16 %v1210
  %v1238 = vunpack.c.l.b16 %v1211
  %v1239 = vunpack.c.h.b16 %v1209
  %v1240 = vunpack.c.h.b16 %v1210
  %v1241 = vunpack.c.h.b16 %v1211
  %v1242 = vunpack.c.l.b16 %v1212
  %v1243 = vunpack.c.l.b16 %v1213
  %v1244 = vunpack.c.l.b16 %v1214
  %v1245 = vunpack.c.h.b16 %v1212
  %v1246 = vunpack.c.h.b16 %v1213
  %v1247 = vunpack.c.h.b16 %v1214
  %v1248 = vunpack.c.l.b16 %v1215
  %v1249 = vunpack.c.l.b16 %v1216
  %v1250 = vunpack.c.l.b16 %v1217
  %v1251 = vpack.c.b16 %v1231, %v1230
  %v1252 = vpack.c.b16 %v1232, %v1232
  %v1253 = vpack.c.b16 %v1234, %v1233
  %v1254 = vpack.c.b16 %v1235, %v1235
  %v1255 = vpack.c.b16 %v1237, %v1236
  %v1256 = vpack.c.b16 %v1238, %v1238
  %v1257 = vpack.c.b16 %v1240, %v1239
  %v1258 = vpack.c.b16 %v1241, %v1241
  %v1259 = vpack.c.b16 %v1243, %v1242
  %v1260 = vpack.c.b16 %v1244, %v1244
  %v1261 = vpack.c.b16 %v1246, %v1245
  %v1262 = vpack.c.b16 %v1247, %v1247
  %v1263 = vpack.c.b16 %v1249, %v1248
  %v1264 = vpack.c.b16 %v1250, %v1250
  %1279 = vst [vmem:[#allocation2 + $0xc] sm:$0xff] %v1251
  %1280 = vst.msk [vmem:[#allocation2 + $0x14] sm:$0xf] %vm28, %v1252
  %1281 = vst [vmem:[#allocation2 + $0x18] sm:$0xff] %v1253
  %1282 = vst.msk [vmem:[#allocation2 + $0x20] sm:$0xf] %vm28, %v1254
  %1283 = vst [vmem:[#allocation2 + $0x24] sm:$0xff] %v1255
  %1284 = vst.msk [vmem:[#allocation2 + $0x2c] sm:$0xf] %vm28, %v1256
  %1285 = vst [vmem:[#allocation2 + $0x30] sm:$0xff] %v1257
  %1286 = vst.msk [vmem:[#allocation2 + $0x38] sm:$0xf] %vm28, %v1258
  %1287 = vst [vmem:[#allocation2 + $0x3c] sm:$0xff] %v1259
  %1288 = vst.msk [vmem:[#allocation2 + $0x44] sm:$0xf] %vm28, %v1260
  %1289 = vst [vmem:[#allocation2 + $0x48] sm:$0xff] %v1261
  %1290 = vst.msk [vmem:[#allocation2 + $0x50] sm:$0xf] %vm28, %v1262
  %1291 = vst [vmem:[#allocation2 + $0x54] sm:$0xff] %v1263
  %1292 = vst.msk [vmem:[#allocation2 + $0x5c] sm:$0xf] %vm28, %v1264
  %s1293 = scalar_lea.vmem %s0, 112
  %v1294 = vld [vmem:[%s1293] sm:$0xff]
  %v1295 = vld [vmem:[%s1293 + $0x8] sm:$0xff]
  %v1296 = vld [vmem:[%s1293 + $0x10] sm:$0xff]
  %v1297 = vld [vmem:[%s1293 + $0x18] sm:$0xff]
  %v1298 = vld [vmem:[%s1293 + $0x20] sm:$0xff]
  %v1299 = vld [vmem:[%s1293 + $0x28] sm:$0xff]
  %v1300 = vld [vmem:[%s1293 + $0x30] sm:$0xff]
  %v1301 = vld [vmem:[%s1] sm:$0xff]
  %v1302 = vld [vmem:[%s1 + $0x8] sm:$0xf]
  %v1303 = vld [vmem:[%s1 + $0xc] sm:$0xff]
  %v1304 = vld [vmem:[%s1 + $0x14] sm:$0xf]
  %v1305 = vld [vmem:[%s1 + $0x18] sm:$0xff]
  %v1306 = vld [vmem:[%s1 + $0x20] sm:$0xf]
  %v1307 = vld [vmem:[%s1 + $0x24] sm:$0xff]
  %v1308 = vld [vmem:[%s1 + $0x2c] sm:$0xf]
  %v1309 = vld [vmem:[%s1 + $0x30] sm:$0xff]
  %v1310 = vld [vmem:[%s1 + $0x38] sm:$0xf]
  %v1311 = vld [vmem:[%s1 + $0x3c] sm:$0xff]
  %v1312 = vld [vmem:[%s1 + $0x44] sm:$0xf]
  %v1313 = vld [vmem:[%s1 + $0x48] sm:$0xff]
  %v1314 = vld [vmem:[%s1 + $0x50] sm:$0xf]
  %v1315 = vld [vmem:[%s1 + $0x54] sm:$0xff]
  %v1316 = vld [vmem:[%s1 + $0x5c] sm:$0xf]
  %v1317 = vld [vmem:[%s1 + $0x60] sm:$0xff]
  %v1318 = vld [vmem:[%s1 + $0x68] sm:$0xf]
  %v1319 = vld [vmem:[%s1 + $0x6c] sm:$0xff]
  %v1320 = vld [vmem:[%s1 + $0x74] sm:$0xf]
  %v1321 = vld [vmem:[%s1 + $0x78] sm:$0xff]
  %v1322 = vld [vmem:[%s1 + $0x80] sm:$0xf]
  %v1323 = vld [vmem:[%s1 + $0x84] sm:$0xff]
  %v1324 = vld [vmem:[%s1 + $0x8c] sm:$0xf]
  %v1325 = vld [vmem:[%s1 + $0x90] sm:$0xff]
  %v1326 = vld [vmem:[%s1 + $0x98] sm:$0xf]
  %v1327 = vld [vmem:[%s1 + $0x9c] sm:$0xff]
  %v1328 = vld [vmem:[%s1 + $0xa4] sm:$0xf]
  %v1329 = vld [vmem:[%s1 + $0xa8] sm:$0xff]
  %v1330 = vld [vmem:[%s1 + $0xb0] sm:$0xf]
  %v1331 = vld [vmem:[%s1 + $0xb4] sm:$0xff]
  %v1332 = vld [vmem:[%s1 + $0xbc] sm:$0xf]
  %v1333 = vld [vmem:[%s1 + $0xc0] sm:$0xff]
  %v1334 = vld [vmem:[%s1 + $0xc8] sm:$0xf]
  %v1335 = vld [vmem:[%s1 + $0xcc] sm:$0xff]
  %v1336 = vld [vmem:[%s1 + $0xd4] sm:$0xf]
  %v1337 = vld [vmem:[%s1 + $0xd8] sm:$0xff]
  %v1338 = vld [vmem:[%s1 + $0xe0] sm:$0xf]
  %v1339 = vld [vmem:[%s1 + $0xe4] sm:$0xff]
  %v1340 = vld [vmem:[%s1 + $0xec] sm:$0xf]
  %v1348 = vunpack.c.l.b16 %v1294
  %v1349 = vunpack.c.h.b16 %v1294
  %v1350 = vunpack.c.l.b16 %v1295
  %v1351 = vunpack.c.h.b16 %v1295
  %v1352 = vunpack.c.l.b16 %v1296
  %v1353 = vunpack.c.h.b16 %v1296
  %v1354 = vunpack.c.l.b16 %v1297
  %v1355 = vunpack.c.h.b16 %v1297
  %v1356 = vunpack.c.l.b16 %v1298
  %v1357 = vunpack.c.h.b16 %v1298
  %v1358 = vunpack.c.l.b16 %v1299
  %v1359 = vunpack.c.h.b16 %v1299
  %v1360 = vunpack.c.l.b16 %v1300
  %v1361 = vunpack.c.h.b16 %v1300
  %v1362 = vpack.c.b16 %v1350, %v1348
  %v1363 = vpack.c.b16 %v1351, %v1349
  %v1364 = vpack.c.b16 %v1354, %v1352
  %v1365 = vpack.c.b16 %v1355, %v1353
  %v1366 = vpack.c.b16 %v1358, %v1356
  %v1367 = vpack.c.b16 %v1359, %v1357
  %v1368 = vpack.c.b16 %v1360, %v1360
  %v1369 = vpack.c.b16 %v1361, %v1361
  %v1414 = vunpack.c.l.b16 %v1301
  %v1415 = vunpack.c.h.b16 %v1301
  %v1416 = vunpack.c.l.b16 %v1302
  %v1417 = vunpack.c.l.b16 %v1303
  %v1418 = vunpack.c.h.b16 %v1303
  %v1419 = vunpack.c.l.b16 %v1304
  %v1420 = vunpack.c.l.b16 %v1305
  %v1421 = vunpack.c.h.b16 %v1305
  %v1422 = vunpack.c.l.b16 %v1306
  %v1423 = vunpack.c.l.b16 %v1307
  %v1424 = vunpack.c.h.b16 %v1307
  %v1425 = vunpack.c.l.b16 %v1308
  %v1426 = vunpack.c.l.b16 %v1309
  %v1427 = vunpack.c.h.b16 %v1309
  %v1428 = vunpack.c.l.b16 %v1310
  %v1429 = vunpack.c.l.b16 %v1311
  %v1430 = vunpack.c.h.b16 %v1311
  %v1431 = vunpack.c.l.b16 %v1312
  %v1432 = vunpack.c.l.b16 %v1313
  %v1433 = vunpack.c.h.b16 %v1313
  %v1434 = vunpack.c.l.b16 %v1314
  %v1435 = vunpack.c.l.b16 %v1315
  %v1436 = vunpack.c.h.b16 %v1315
  %v1437 = vunpack.c.l.b16 %v1316
  %v1438 = vunpack.c.l.b16 %v1317
  %v1439 = vunpack.c.h.b16 %v1317
  %v1440 = vunpack.c.l.b16 %v1318
  %v1441 = vunpack.c.l.b16 %v1319
  %v1442 = vunpack.c.h.b16 %v1319
  %v1443 = vunpack.c.l.b16 %v1320
  %v1444 = vunpack.c.l.b16 %v1321
  %v1445 = vunpack.c.h.b16 %v1321
  %v1446 = vunpack.c.l.b16 %v1322
  %v1447 = vunpack.c.l.b16 %v1323
  %v1448 = vunpack.c.h.b16 %v1323
  %v1449 = vunpack.c.l.b16 %v1324
  %v1450 = vunpack.c.l.b16 %v1325
  %v1451 = vunpack.c.h.b16 %v1325
  %v1452 = vunpack.c.l.b16 %v1326
  %v1453 = vunpack.c.l.b16 %v1327
  %v1454 = vunpack.c.h.b16 %v1327
  %v1455 = vunpack.c.l.b16 %v1328
  %v1456 = vunpack.c.l.b16 %v1329
  %v1457 = vunpack.c.h.b16 %v1329
  %v1458 = vunpack.c.l.b16 %v1330
  %v1459 = vunpack.c.l.b16 %v1331
  %v1460 = vunpack.c.h.b16 %v1331
  %v1461 = vunpack.c.l.b16 %v1332
  %v1462 = vunpack.c.l.b16 %v1333
  %v1463 = vunpack.c.h.b16 %v1333
  %v1464 = vunpack.c.l.b16 %v1334
  %v1465 = vunpack.c.l.b16 %v1335
  %v1466 = vunpack.c.h.b16 %v1335
  %v1467 = vunpack.c.l.b16 %v1336
  %v1468 = vunpack.c.l.b16 %v1337
  %v1469 = vunpack.c.h.b16 %v1337
  %v1470 = vunpack.c.l.b16 %v1338
  %v1471 = vunpack.c.l.b16 %v1339
  %v1472 = vunpack.c.h.b16 %v1339
  %v1473 = vunpack.c.l.b16 %v1340
  %v1474 = vpack.c.b16 %v1417, %v1414
  %v1475 = vpack.c.b16 %v1418, %v1415
  %v1476 = vpack.c.b16 %v1419, %v1416
  %v1477 = vpack.c.b16 %v1423, %v1420
  %v1478 = vpack.c.b16 %v1424, %v1421
  %v1479 = vpack.c.b16 %v1425, %v1422
  %v1480 = vpack.c.b16 %v1429, %v1426
  %v1481 = vpack.c.b16 %v1430, %v1427
  %v1482 = vpack.c.b16 %v1431, %v1428
  %v1483 = vpack.c.b16 %v1435, %v1432
  %v1484 = vpack.c.b16 %v1436, %v1433
  %v1485 = vpack.c.b16 %v1437, %v1434
  %v1486 = vpack.c.b16 %v1441, %v1438
  %v1487 = vpack.c.b16 %v1442, %v1439
  %v1488 = vpack.c.b16 %v1443, %v1440
  %v1489 = vpack.c.b16 %v1447, %v1444
  %v1490 = vpack.c.b16 %v1448, %v1445
  %v1491 = vpack.c.b16 %v1449, %v1446
  %v1492 = vpack.c.b16 %v1453, %v1450
  %v1493 = vpack.c.b16 %v1454, %v1451
  %v1494 = vpack.c.b16 %v1455, %v1452
  %v1495 = vpack.c.b16 %v1459, %v1456
  %v1496 = vpack.c.b16 %v1460, %v1457
  %v1497 = vpack.c.b16 %v1461, %v1458
  %v1498 = vpack.c.b16 %v1465, %v1462
  %v1499 = vpack.c.b16 %v1466, %v1463
  %v1500 = vpack.c.b16 %v1467, %v1464
  %v1501 = vpack.c.b16 %v1471, %v1468
  %v1502 = vpack.c.b16 %v1472, %v1469
  %v1503 = vpack.c.b16 %v1473, %v1470
  %v1535 = vsel %vm277, %v1363, 0
  %v1538 = vsel %vm277, %v1365, 0
  %v1541 = vsel %vm277, %v1367, 0
  %v1544 = vsel %vm277, %v1369, 0
  %1546 = vmatprep.subr.bf16.mxu0 %v1475
  %1547 = vmatpush1.bf16.msra.mxu0 %v1474
  %1548 = vmatprep.subr.bf16.mxu0 %v1478
  %1549 = vmatpush1.bf16.msra.mxu0 %v1477
  %1550 = vmatprep.subr.bf16.mxu0 %v1481
  %1551 = vmatpush1.bf16.msra.mxu0 %v1480
  %1552 = vmatprep.subr.bf16.mxu0 %v1484
  %1553 = vmatpush1.bf16.msra.mxu0 %v1483
  %1554 = vmatprep.subr.bf16.mxu0 %v1487
  %1555 = vmatpush1.bf16.msra.mxu0 %v1486
  %1556 = vmatprep.subr.bf16.mxu0 %v1490
  %1557 = vmatpush1.bf16.msra.mxu0 %v1489
  %1558 = vmatprep.subr.bf16.mxu0 %v1493
  %1559 = vmatpush1.bf16.msra.mxu0 %v1492
  %1560 = vmatprep.subr.bf16.mxu0 %v1496
  %1561 = vmatpush1.bf16.msra.mxu0 %v1495
  %1562 = vmatprep.subr.bf16.mxu0 %v1499
  %1563 = vmatpush1.bf16.msra.mxu0 %v1498
  %1564 = vmatprep.subr.bf16.mxu0 %v1502
  %1565 = vmatpush1.bf16.msra.mxu0 %v1501
  %1566 = vmatprep.subr.bf16.mxu0 0
  %1567 = vmatpush1.bf16.msra.mxu0 0
  %1568 = vmatprep.subr.bf16.mxu0 0
  %1569 = vmatpush1.bf16.msra.mxu0 0
  %1570 = vmatprep.subr.bf16.mxu0 0
  %1571 = vmatpush1.bf16.msra.mxu0 0
  %1572 = vmatprep.subr.bf16.mxu0 0
  %1573 = vmatpush1.bf16.msra.mxu0 0
  %1574 = vmatprep.subr.bf16.mxu0 0
  %1575 = vmatpush1.bf16.msra.mxu0 0
  %1576 = vmatprep.subr.bf16.mxu0 0
  %1577 = vmatpush1.bf16.msra.mxu0 0
  %1578 = vmatprep.mubr.bf16.mxu0 %v1535
  %1579 = vmatmul.mubr.bf16.gmra.mrb[0].mxu0 %v1362
  %v1580 = vpop.f32.mrb[0].mxu0
  %v1581 = vadd.f32 0.0, %v1580
  %v1582 = vpop.f32.mrb[0].mxu0
  %v1583 = vadd.f32 0.0, %v1582
  %v1584 = vpop.f32.mrb[0].mxu0
  %v1585 = vadd.f32 0.0, %v1584
  %v1586 = vpop.f32.mrb[0].mxu0
  %v1587 = vadd.f32 0.0, %v1586
  %1588 = vmatprep.mubr.bf16.mxu0 %v1538
  %1589 = vmatmul.mubr.bf16.gmra.mrb[0].mxu0 %v1364
  %v1590 = vpop.f32.mrb[0].mxu0
  %v1591 = vadd.f32 0.0, %v1590
  %v1592 = vpop.f32.mrb[0].mxu0
  %v1593 = vadd.f32 0.0, %v1592
  %v1594 = vpop.f32.mrb[0].mxu0
  %v1595 = vadd.f32 0.0, %v1594
  %v1596 = vpop.f32.mrb[0].mxu0
  %v1597 = vadd.f32 0.0, %v1596
  %1598 = vmatprep.mubr.bf16.mxu0 %v1541
  %1599 = vmatmul.mubr.bf16.gmra.mrb[0].mxu0 %v1366
  %v1600 = vpop.f32.mrb[0].mxu0
  %v1601 = vadd.f32 0.0, %v1600
  %v1602 = vpop.f32.mrb[0].mxu0
  %v1603 = vadd.f32 0.0, %v1602
  %v1604 = vpop.f32.mrb[0].mxu0
  %v1605 = vadd.f32 0.0, %v1604
  %v1606 = vpop.f32.mrb[0].mxu0
  %v1607 = vadd.f32 0.0, %v1606
  %1608 = vmatprep.mubr.bf16.mxu0 %v1544
  %1609 = vmatmul.mubr.bf16.gmra.mrb[0].mxu0 %v1368
  %v1610 = vpop.f32.mrb[0].mxu0
  %v1611 = vadd.f32 0.0, %v1610
  %v1612 = vpop.f32.mrb[0].mxu0
  %v1613 = vadd.f32 0.0, %v1612
  %v1614 = vpop.f32.mrb[0].mxu0
  %v1615 = vpop.f32.mrb[0].mxu0
  %1616 = vdwg.mxu0
  %1617 = vmatprep.subr.bf16.mxu0 0
  %1618 = vmatpush1.bf16.msra.mxu0 %v1476
  %1619 = vmatprep.subr.bf16.mxu0 0
  %1620 = vmatpush1.bf16.msra.mxu0 %v1479
  %1621 = vmatprep.subr.bf16.mxu0 0
  %1622 = vmatpush1.bf16.msra.mxu0 %v1482
  %1623 = vmatprep.subr.bf16.mxu0 0
  %1624 = vmatpush1.bf16.msra.mxu0 %v1485
  %1625 = vmatprep.subr.bf16.mxu0 0
  %1626 = vmatpush1.bf16.msra.mxu0 %v1488
  %1627 = vmatprep.subr.bf16.mxu0 0
  %1628 = vmatpush1.bf16.msra.mxu0 %v1491
  %1629 = vmatprep.subr.bf16.mxu0 0
  %1630 = vmatpush1.bf16.msra.mxu0 %v1494
  %1631 = vmatprep.subr.bf16.mxu0 0
  %1632 = vmatpush1.bf16.msra.mxu0 %v1497
  %1633 = vmatprep.subr.bf16.mxu0 0
  %1634 = vmatpush1.bf16.msra.mxu0 %v1500
  %1635 = vmatprep.subr.bf16.mxu0 0
  %1636 = vmatpush1.bf16.msra.mxu0 %v1503
  %1637 = vmatprep.subr.bf16.mxu0 0
  %1638 = vmatpush1.bf16.msra.mxu0 0
  %1639 = vmatprep.subr.bf16.mxu0 0
  %1640 = vmatpush1.bf16.msra.mxu0 0
  %1641 = vmatprep.subr.bf16.mxu0 0
  %1642 = vmatpush1.bf16.msra.mxu0 0
  %1643 = vmatprep.subr.bf16.mxu0 0
  %1644 = vmatpush1.bf16.msra.mxu0 0
  %1645 = vmatprep.subr.bf16.mxu0 0
  %1646 = vmatpush1.bf16.msra.mxu0 0
  %1647 = vmatprep.subr.bf16.mxu0 0
  %1648 = vmatpush1.bf16.msra.mxu0 0
  %1649 = vmatprep.mubr.bf16.mxu0 %v1535
  %1650 = vmatmul.mubr.bf16.gmra.mrb[0].mxu0 %v1362
  %v1651 = vpop.f32.mrb[0].mxu0
  %v1652 = vadd.f32 0.0, %v1651
  %v1653 = vpop.f32.mrb[0].mxu0
  %v1654 = vpop.f32.mrb[0].mxu0
  %v1655 = vadd.f32 0.0, %v1654
  %v1656 = vpop.f32.mrb[0].mxu0
  %1657 = vmatprep.mubr.bf16.mxu0 %v1538
  %1658 = vmatmul.mubr.bf16.gmra.mrb[0].mxu0 %v1364
  %v1659 = vpop.f32.mrb[0].mxu0
  %v1660 = vadd.f32 0.0, %v1659
  %v1661 = vpop.f32.mrb[0].mxu0
  %v1662 = vpop.f32.mrb[0].mxu0
  %v1663 = vadd.f32 0.0, %v1662
  %v1664 = vpop.f32.mrb[0].mxu0
  %1665 = vmatprep.mubr.bf16.mxu0 %v1541
  %1666 = vmatmul.mubr.bf16.gmra.mrb[0].mxu0 %v1366
  %v1667 = vpop.f32.mrb[0].mxu0
  %v1668 = vadd.f32 0.0, %v1667
  %v1669 = vpop.f32.mrb[0].mxu0
  %v1670 = vpop.f32.mrb[0].mxu0
  %v1671 = vadd.f32 0.0, %v1670
  %v1672 = vpop.f32.mrb[0].mxu0
  %1673 = vmatprep.mubr.bf16.mxu0 %v1544
  %1674 = vmatmul.mubr.bf16.gmra.mrb[0].mxu0 %v1368
  %v1675 = vpop.f32.mrb[0].mxu0
  %v1676 = vadd.f32 0.0, %v1675
  %v1677 = vpop.f32.mrb[0].mxu0
  %v1678 = vpop.f32.mrb[0].mxu0
  %v1679 = vpop.f32.mrb[0].mxu0
  %1680 = vdwg.mxu0
  %v1681 = vld [vmem:[%s425] sm:$0xff]
  %v1682 = vld [vmem:[%s425 + $0x8] sm:$0xf]
  %v1683 = vld [vmem:[%s425 + $0xc] sm:$0xff]
  %v1684 = vld [vmem:[%s425 + $0x14] sm:$0xf]
  %v1685 = vld [vmem:[%s425 + $0x18] sm:$0xff]
  %v1686 = vld [vmem:[%s425 + $0x20] sm:$0xf]
  %v1687 = vld [vmem:[%s425 + $0x24] sm:$0xff]
  %v1688 = vld [vmem:[%s425 + $0x2c] sm:$0xf]
  %v1689 = vld [vmem:[%s425 + $0x30] sm:$0xff]
  %v1690 = vld [vmem:[%s425 + $0x38] sm:$0xf]
  %v1691 = vld [vmem:[%s425 + $0x3c] sm:$0xff]
  %v1692 = vld [vmem:[%s425 + $0x44] sm:$0xf]
  %v1693 = vld [vmem:[%s425 + $0x48] sm:$0xff]
  %v1694 = vld [vmem:[%s425 + $0x50] sm:$0xf]
  %v1695 = vld [vmem:[%s425 + $0x54] sm:$0xff]
  %v1696 = vld [vmem:[%s425 + $0x5c] sm:$0xf]
  %v1697 = vld [vmem:[%s425 + $0x60] sm:$0xff]
  %v1698 = vld [vmem:[%s425 + $0x68] sm:$0xf]
  %v1699 = vld [vmem:[%s425 + $0x6c] sm:$0xff]
  %v1700 = vld [vmem:[%s425 + $0x74] sm:$0xf]
  %v1701 = vld [vmem:[%s425 + $0x78] sm:$0xff]
  %v1702 = vld [vmem:[%s425 + $0x80] sm:$0xf]
  %v1703 = vld [vmem:[%s425 + $0x84] sm:$0xff]
  %v1704 = vld [vmem:[%s425 + $0x8c] sm:$0xf]
  %v1705 = vld [vmem:[%s425 + $0x90] sm:$0xff]
  %v1706 = vld [vmem:[%s425 + $0x98] sm:$0xf]
  %v1707 = vld [vmem:[%s425 + $0x9c] sm:$0xff]
  %v1708 = vld [vmem:[%s425 + $0xa4] sm:$0xf]
  %v1709 = vld [vmem:[%s425 + $0xa8] sm:$0xff]
  %v1710 = vld [vmem:[%s425 + $0xb0] sm:$0xf]
  %v1711 = vld [vmem:[%s425 + $0xb4] sm:$0xff]
  %v1712 = vld [vmem:[%s425 + $0xbc] sm:$0xf]
  %v1713 = vld [vmem:[%s425 + $0xc0] sm:$0xff]
  %v1714 = vld [vmem:[%s425 + $0xc8] sm:$0xf]
  %v1715 = vld [vmem:[%s425 + $0xcc] sm:$0xff]
  %v1716 = vld [vmem:[%s425 + $0xd4] sm:$0xf]
  %v1717 = vld [vmem:[%s425 + $0xd8] sm:$0xff]
  %v1718 = vld [vmem:[%s425 + $0xe0] sm:$0xf]
  %v1719 = vld [vmem:[%s425 + $0xe4] sm:$0xff]
  %v1720 = vld [vmem:[%s425 + $0xec] sm:$0xf]
  %v1761 = vunpack.c.l.b16 %v1681
  %v1762 = vunpack.c.h.b16 %v1681
  %v1763 = vunpack.c.l.b16 %v1682
  %v1764 = vunpack.c.l.b16 %v1683
  %v1765 = vunpack.c.h.b16 %v1683
  %v1766 = vunpack.c.l.b16 %v1684
  %v1767 = vunpack.c.l.b16 %v1685
  %v1768 = vunpack.c.h.b16 %v1685
  %v1769 = vunpack.c.l.b16 %v1686
  %v1770 = vunpack.c.l.b16 %v1687
  %v1771 = vunpack.c.h.b16 %v1687
  %v1772 = vunpack.c.l.b16 %v1688
  %v1773 = vunpack.c.l.b16 %v1689
  %v1774 = vunpack.c.h.b16 %v1689
  %v1775 = vunpack.c.l.b16 %v1690
  %v1776 = vunpack.c.l.b16 %v1691
  %v1777 = vunpack.c.h.b16 %v1691
  %v1778 = vunpack.c.l.b16 %v1692
  %v1779 = vunpack.c.l.b16 %v1693
  %v1780 = vunpack.c.h.b16 %v1693
  %v1781 = vunpack.c.l.b16 %v1694
  %v1782 = vunpack.c.l.b16 %v1695
  %v1783 = vunpack.c.h.b16 %v1695
  %v1784 = vunpack.c.l.b16 %v1696
  %v1785 = vunpack.c.l.b16 %v1697
  %v1786 = vunpack.c.h.b16 %v1697
  %v1787 = vunpack.c.l.b16 %v1698
  %v1788 = vunpack.c.l.b16 %v1699
  %v1789 = vunpack.c.h.b16 %v1699
  %v1790 = vunpack.c.l.b16 %v1700
  %v1791 = vunpack.c.l.b16 %v1701
  %v1792 = vunpack.c.h.b16 %v1701
  %v1793 = vunpack.c.l.b16 %v1702
  %v1794 = vunpack.c.l.b16 %v1703
  %v1795 = vunpack.c.h.b16 %v1703
  %v1796 = vunpack.c.l.b16 %v1704
  %v1797 = vunpack.c.l.b16 %v1705
  %v1798 = vunpack.c.h.b16 %v1705
  %v1799 = vunpack.c.l.b16 %v1706
  %v1800 = vunpack.c.l.b16 %v1707
  %v1801 = vunpack.c.h.b16 %v1707
  %v1802 = vunpack.c.l.b16 %v1708
  %v1803 = vunpack.c.l.b16 %v1709
  %v1804 = vunpack.c.h.b16 %v1709
  %v1805 = vunpack.c.l.b16 %v1710
  %v1806 = vunpack.c.l.b16 %v1711
  %v1807 = vunpack.c.h.b16 %v1711
  %v1808 = vunpack.c.l.b16 %v1712
  %v1809 = vunpack.c.l.b16 %v1713
  %v1810 = vunpack.c.h.b16 %v1713
  %v1811 = vunpack.c.l.b16 %v1714
  %v1812 = vunpack.c.l.b16 %v1715
  %v1813 = vunpack.c.h.b16 %v1715
  %v1814 = vunpack.c.l.b16 %v1716
  %v1815 = vunpack.c.l.b16 %v1717
  %v1816 = vunpack.c.h.b16 %v1717
  %v1817 = vunpack.c.l.b16 %v1718
  %v1818 = vunpack.c.l.b16 %v1719
  %v1819 = vunpack.c.h.b16 %v1719
  %v1820 = vunpack.c.l.b16 %v1720
  %v1821 = vpack.c.b16 %v1764, %v1761
  %v1822 = vpack.c.b16 %v1765, %v1762
  %v1823 = vpack.c.b16 %v1766, %v1763
  %v1824 = vpack.c.b16 %v1770, %v1767
  %v1825 = vpack.c.b16 %v1771, %v1768
  %v1826 = vpack.c.b16 %v1772, %v1769
  %v1827 = vpack.c.b16 %v1776, %v1773
  %v1828 = vpack.c.b16 %v1777, %v1774
  %v1829 = vpack.c.b16 %v1778, %v1775
  %v1830 = vpack.c.b16 %v1782, %v1779
  %v1831 = vpack.c.b16 %v1783, %v1780
  %v1832 = vpack.c.b16 %v1784, %v1781
  %v1833 = vpack.c.b16 %v1788, %v1785
  %v1834 = vpack.c.b16 %v1789, %v1786
  %v1835 = vpack.c.b16 %v1790, %v1787
  %v1836 = vpack.c.b16 %v1794, %v1791
  %v1837 = vpack.c.b16 %v1795, %v1792
  %v1838 = vpack.c.b16 %v1796, %v1793
  %v1839 = vpack.c.b16 %v1800, %v1797
  %v1840 = vpack.c.b16 %v1801, %v1798
  %v1841 = vpack.c.b16 %v1802, %v1799
  %v1842 = vpack.c.b16 %v1806, %v1803
  %v1843 = vpack.c.b16 %v1807, %v1804
  %v1844 = vpack.c.b16 %v1808, %v1805
  %v1845 = vpack.c.b16 %v1812, %v1809
  %v1846 = vpack.c.b16 %v1813, %v1810
  %v1847 = vpack.c.b16 %v1814, %v1811
  %v1848 = vpack.c.b16 %v1818, %v1815
  %v1849 = vpack.c.b16 %v1819, %v1816
  %v1850 = vpack.c.b16 %v1820, %v1817
  %1881 = vmatprep.subr.bf16.mxu0 %v1822
  %1882 = vmatpush1.bf16.msra.mxu0 %v1821
  %1883 = vmatprep.subr.bf16.mxu0 %v1825
  %1884 = vmatpush1.bf16.msra.mxu0 %v1824
  %1885 = vmatprep.subr.bf16.mxu0 %v1828
  %1886 = vmatpush1.bf16.msra.mxu0 %v1827
  %1887 = vmatprep.subr.bf16.mxu0 %v1831
  %1888 = vmatpush1.bf16.msra.mxu0 %v1830
  %1889 = vmatprep.subr.bf16.mxu0 %v1834
  %1890 = vmatpush1.bf16.msra.mxu0 %v1833
  %1891 = vmatprep.subr.bf16.mxu0 %v1837
  %1892 = vmatpush1.bf16.msra.mxu0 %v1836
  %1893 = vmatprep.subr.bf16.mxu0 %v1840
  %1894 = vmatpush1.bf16.msra.mxu0 %v1839
  %1895 = vmatprep.subr.bf16.mxu0 %v1843
  %1896 = vmatpush1.bf16.msra.mxu0 %v1842
  %1897 = vmatprep.subr.bf16.mxu0 %v1846
  %1898 = vmatpush1.bf16.msra.mxu0 %v1845
  %1899 = vmatprep.subr.bf16.mxu0 %v1849
  %1900 = vmatpush1.bf16.msra.mxu0 %v1848
  %1901 = vmatprep.subr.bf16.mxu0 0
  %1902 = vmatpush1.bf16.msra.mxu0 0
  %1903 = vmatprep.subr.bf16.mxu0 0
  %1904 = vmatpush1.bf16.msra.mxu0 0
  %1905 = vmatprep.subr.bf16.mxu0 0
  %1906 = vmatpush1.bf16.msra.mxu0 0
  %1907 = vmatprep.subr.bf16.mxu0 0
  %1908 = vmatpush1.bf16.msra.mxu0 0
  %1909 = vmatprep.subr.bf16.mxu0 0
  %1910 = vmatpush1.bf16.msra.mxu0 0
  %1911 = vmatprep.subr.bf16.mxu0 0
  %1912 = vmatpush1.bf16.msra.mxu0 0
  %1913 = vmatprep.mubr.bf16.mxu0 %v1535
  %1914 = vmatmul.mubr.bf16.gmra.mrb[0].mxu0 %v1362
  %v1915 = vpop.f32.mrb[0].mxu0
  %v1916 = vadd.f32 0.0, %v1915
  %v1917 = vpop.f32.mrb[0].mxu0
  %v1918 = vadd.f32 0.0, %v1917
  %v1919 = vpop.f32.mrb[0].mxu0
  %v1920 = vadd.f32 0.0, %v1919
  %v1921 = vpop.f32.mrb[0].mxu0
  %v1922 = vadd.f32 0.0, %v1921
  %1923 = vmatprep.mubr.bf16.mxu0 %v1538
  %1924 = vmatmul.mubr.bf16.gmra.mrb[0].mxu0 %v1364
  %v1925 = vpop.f32.mrb[0].mxu0
  %v1926 = vadd.f32 0.0, %v1925
  %v1927 = vpop.f32.mrb[0].mxu0
  %v1928 = vadd.f32 0.0, %v1927
  %v1929 = vpop.f32.mrb[0].mxu0
  %v1930 = vadd.f32 0.0, %v1929
  %v1931 = vpop.f32.mrb[0].mxu0
  %v1932 = vadd.f32 0.0, %v1931
  %1933 = vmatprep.mubr.bf16.mxu0 %v1541
  %1934 = vmatmul.mubr.bf16.gmra.mrb[0].mxu0 %v1366
  %v1935 = vpop.f32.mrb[0].mxu0
  %v1936 = vadd.f32 0.0, %v1935
  %v1937 = vpop.f32.mrb[0].mxu0
  %v1938 = vadd.f32 0.0, %v1937
  %v1939 = vpop.f32.mrb[0].mxu0
  %v1940 = vadd.f32 0.0, %v1939
  %v1941 = vpop.f32.mrb[0].mxu0
  %v1942 = vadd.f32 0.0, %v1941
  %1943 = vmatprep.mubr.bf16.mxu0 %v1544
  %1944 = vmatmul.mubr.bf16.gmra.mrb[0].mxu0 %v1368
  %v1945 = vpop.f32.mrb[0].mxu0
  %v1946 = vadd.f32 0.0, %v1945
  %v1947 = vpop.f32.mrb[0].mxu0
  %v1948 = vadd.f32 0.0, %v1947
  %v1949 = vpop.f32.mrb[0].mxu0
  %v1950 = vpop.f32.mrb[0].mxu0
  %1951 = vdwg.mxu0
  %1952 = vmatprep.subr.bf16.mxu0 0
  %1953 = vmatpush1.bf16.msra.mxu0 %v1823
  %1954 = vmatprep.subr.bf16.mxu0 0
  %1955 = vmatpush1.bf16.msra.mxu0 %v1826
  %1956 = vmatprep.subr.bf16.mxu0 0
  %1957 = vmatpush1.bf16.msra.mxu0 %v1829
  %1958 = vmatprep.subr.bf16.mxu0 0
  %1959 = vmatpush1.bf16.msra.mxu0 %v1832
  %1960 = vmatprep.subr.bf16.mxu0 0
  %1961 = vmatpush1.bf16.msra.mxu0 %v1835
  %1962 = vmatprep.subr.bf16.mxu0 0
  %1963 = vmatpush1.bf16.msra.mxu0 %v1838
  %1964 = vmatprep.subr.bf16.mxu0 0
  %1965 = vmatpush1.bf16.msra.mxu0 %v1841
  %1966 = vmatprep.subr.bf16.mxu0 0
  %1967 = vmatpush1.bf16.msra.mxu0 %v1844
  %1968 = vmatprep.subr.bf16.mxu0 0
  %1969 = vmatpush1.bf16.msra.mxu0 %v1847
  %1970 = vmatprep.subr.bf16.mxu0 0
  %1971 = vmatpush1.bf16.msra.mxu0 %v1850
  %1972 = vmatprep.subr.bf16.mxu0 0
  %1973 = vmatpush1.bf16.msra.mxu0 0
  %1974 = vmatprep.subr.bf16.mxu0 0
  %1975 = vmatpush1.bf16.msra.mxu0 0
  %1976 = vmatprep.subr.bf16.mxu0 0
  %1977 = vmatpush1.bf16.msra.mxu0 0
  %1978 = vmatprep.subr.bf16.mxu0 0
  %1979 = vmatpush1.bf16.msra.mxu0 0
  %1980 = vmatprep.subr.bf16.mxu0 0
  %1981 = vmatpush1.bf16.msra.mxu0 0
  %1982 = vmatprep.subr.bf16.mxu0 0
  %1983 = vmatpush1.bf16.msra.mxu0 0
  %1984 = vmatprep.mubr.bf16.mxu0 %v1535
  %1985 = vmatmul.mubr.bf16.gmra.mrb[0].mxu0 %v1362
  %v1986 = vpop.f32.mrb[0].mxu0
  %v1987 = vadd.f32 0.0, %v1986
  %v1988 = vpop.f32.mrb[0].mxu0
  %v1989 = vpop.f32.mrb[0].mxu0
  %v1990 = vadd.f32 0.0, %v1989
  %v1991 = vpop.f32.mrb[0].mxu0
  %1992 = vmatprep.mubr.bf16.mxu0 %v1538
  %1993 = vmatmul.mubr.bf16.gmra.mrb[0].mxu0 %v1364
  %v1994 = vpop.f32.mrb[0].mxu0
  %v1995 = vadd.f32 0.0, %v1994
  %v1996 = vpop.f32.mrb[0].mxu0
  %v1997 = vpop.f32.mrb[0].mxu0
  %v1998 = vadd.f32 0.0, %v1997
  %v1999 = vpop.f32.mrb[0].mxu0
  %2000 = vmatprep.mubr.bf16.mxu0 %v1541
  %2001 = vmatmul.mubr.bf16.gmra.mrb[0].mxu0 %v1366
  %v2002 = vpop.f32.mrb[0].mxu0
  %v2003 = vadd.f32 0.0, %v2002
  %v2004 = vpop.f32.mrb[0].mxu0
  %v2005 = vpop.f32.mrb[0].mxu0
  %v2006 = vadd.f32 0.0, %v2005
  %v2007 = vpop.f32.mrb[0].mxu0
  %2008 = vmatprep.mubr.bf16.mxu0 %v1544
  %2009 = vmatmul.mubr.bf16.gmra.mrb[0].mxu0 %v1368
  %v2010 = vpop.f32.mrb[0].mxu0
  %v2011 = vadd.f32 0.0, %v2010
  %v2012 = vpop.f32.mrb[0].mxu0
  %v2013 = vpop.f32.mrb[0].mxu0
  %v2014 = vpop.f32.mrb[0].mxu0
  %2015 = vdwg.mxu0
  %v2016 = vmax.f32 %v1581, %v1916
  %v2017 = vmax.f32 %v1583, %v1918
  %v2018 = vmax.f32 %v1652, %v1987
  %v2019 = vmax.f32 %v1585, %v1920
  %v2020 = vmax.f32 %v1587, %v1922
  %v2021 = vmax.f32 %v1655, %v1990
  %v2022 = vmax.f32 %v1591, %v1926
  %v2023 = vmax.f32 %v1593, %v1928
  %v2024 = vmax.f32 %v1660, %v1995
  %v2025 = vmax.f32 %v1595, %v1930
  %v2026 = vmax.f32 %v1597, %v1932
  %v2027 = vmax.f32 %v1663, %v1998
  %v2028 = vmax.f32 %v1601, %v1936
  %v2029 = vmax.f32 %v1603, %v1938
  %v2030 = vmax.f32 %v1668, %v2003
  %v2031 = vmax.f32 %v1605, %v1940
  %v2032 = vmax.f32 %v1607, %v1942
  %v2033 = vmax.f32 %v1671, %v2006
  %v2034 = vmax.f32 %v1611, %v1946
  %v2035 = vmax.f32 %v1613, %v1948
  %v2036 = vmax.f32 %v1676, %v2011
  %s2037 = scalar_lea.vmem %s0, 168
  %v2038 = vld [vmem:[%s2037] sm:$0xff]
  %v2039 = vld [vmem:[%s2037 + $0x8] sm:$0xff]
  %v2040 = vld [vmem:[%s2037 + $0x10] sm:$0xff]
  %v2041 = vld [vmem:[%s2037 + $0x18] sm:$0xff]
  %v2042 = vld [vmem:[%s2037 + $0x20] sm:$0xff]
  %v2043 = vld [vmem:[%s2037 + $0x28] sm:$0xff]
  %v2044 = vld [vmem:[%s2037 + $0x30] sm:$0xff]
  %v2052 = vunpack.c.l.b16 %v2038
  %v2053 = vunpack.c.h.b16 %v2038
  %v2054 = vunpack.c.l.b16 %v2039
  %v2055 = vunpack.c.h.b16 %v2039
  %v2056 = vunpack.c.l.b16 %v2040
  %v2057 = vunpack.c.h.b16 %v2040
  %v2058 = vunpack.c.l.b16 %v2041
  %v2059 = vunpack.c.h.b16 %v2041
  %v2060 = vunpack.c.l.b16 %v2042
  %v2061 = vunpack.c.h.b16 %v2042
  %v2062 = vunpack.c.l.b16 %v2043
  %v2063 = vunpack.c.h.b16 %v2043
  %v2064 = vunpack.c.l.b16 %v2044
  %v2065 = vunpack.c.h.b16 %v2044
  %v2066 = vpack.c.b16 %v2054, %v2052
  %v2067 = vpack.c.b16 %v2055, %v2053
  %v2068 = vpack.c.b16 %v2058, %v2056
  %v2069 = vpack.c.b16 %v2059, %v2057
  %v2070 = vpack.c.b16 %v2062, %v2060
  %v2071 = vpack.c.b16 %v2063, %v2061
  %v2072 = vpack.c.b16 %v2064, %v2064
  %v2073 = vpack.c.b16 %v2065, %v2065
  %v2079 = vsel %vm277, %v2067, 0
  %v2082 = vsel %vm277, %v2069, 0
  %v2085 = vsel %vm277, %v2071, 0
  %v2088 = vsel %vm277, %v2073, 0
  %2090 = vmatprep.subr.bf16.mxu0 %v1475
  %2091 = vmatpush1.bf16.msra.mxu0 %v1474
  %2092 = vmatprep.subr.bf16.mxu0 %v1478
  %2093 = vmatpush1.bf16.msra.mxu0 %v1477
  %2094 = vmatprep.subr.bf16.mxu0 %v1481
  %2095 = vmatpush1.bf16.msra.mxu0 %v1480
  %2096 = vmatprep.subr.bf16.mxu0 %v1484
  %2097 = vmatpush1.bf16.msra.mxu0 %v1483
  %2098 = vmatprep.subr.bf16.mxu0 %v1487
  %2099 = vmatpush1.bf16.msra.mxu0 %v1486
  %2100 = vmatprep.subr.bf16.mxu0 %v1490
  %2101 = vmatpush1.bf16.msra.mxu0 %v1489
  %2102 = vmatprep.subr.bf16.mxu0 %v1493
  %2103 = vmatpush1.bf16.msra.mxu0 %v1492
  %2104 = vmatprep.subr.bf16.mxu0 %v1496
  %2105 = vmatpush1.bf16.msra.mxu0 %v1495
  %2106 = vmatprep.subr.bf16.mxu0 %v1499
  %2107 = vmatpush1.bf16.msra.mxu0 %v1498
  %2108 = vmatprep.subr.bf16.mxu0 %v1502
  %2109 = vmatpush1.bf16.msra.mxu0 %v1501
  %2110 = vmatprep.subr.bf16.mxu0 0
  %2111 = vmatpush1.bf16.msra.mxu0 0
  %2112 = vmatprep.subr.bf16.mxu0 0
  %2113 = vmatpush1.bf16.msra.mxu0 0
  %2114 = vmatprep.subr.bf16.mxu0 0
  %2115 = vmatpush1.bf16.msra.mxu0 0
  %2116 = vmatprep.subr.bf16.mxu0 0
  %2117 = vmatpush1.bf16.msra.mxu0 0
  %2118 = vmatprep.subr.bf16.mxu0 0
  %2119 = vmatpush1.bf16.msra.mxu0 0
  %2120 = vmatprep.subr.bf16.mxu0 0
  %2121 = vmatpush1.bf16.msra.mxu0 0
  %2122 = vmatprep.mubr.bf16.mxu0 %v2079
  %2123 = vmatmul.mubr.bf16.gmra.mrb[0].mxu0 %v2066
  %v2124 = vpop.f32.mrb[0].mxu0
  %v2125 = vadd.f32 0.0, %v2124
  %v2126 = vpop.f32.mrb[0].mxu0
  %v2127 = vadd.f32 0.0, %v2126
  %v2128 = vpop.f32.mrb[0].mxu0
  %v2129 = vadd.f32 0.0, %v2128
  %v2130 = vpop.f32.mrb[0].mxu0
  %v2131 = vadd.f32 0.0, %v2130
  %2132 = vmatprep.mubr.bf16.mxu0 %v2082
  %2133 = vmatmul.mubr.bf16.gmra.mrb[0].mxu0 %v2068
  %v2134 = vpop.f32.mrb[0].mxu0
  %v2135 = vadd.f32 0.0, %v2134
  %v2136 = vpop.f32.mrb[0].mxu0
  %v2137 = vadd.f32 0.0, %v2136
  %v2138 = vpop.f32.mrb[0].mxu0
  %v2139 = vadd.f32 0.0, %v2138
  %v2140 = vpop.f32.mrb[0].mxu0
  %v2141 = vadd.f32 0.0, %v2140
  %2142 = vmatprep.mubr.bf16.mxu0 %v2085
  %2143 = vmatmul.mubr.bf16.gmra.mrb[0].mxu0 %v2070
  %v2144 = vpop.f32.mrb[0].mxu0
  %v2145 = vadd.f32 0.0, %v2144
  %v2146 = vpop.f32.mrb[0].mxu0
  %v2147 = vadd.f32 0.0, %v2146
  %v2148 = vpop.f32.mrb[0].mxu0
  %v2149 = vadd.f32 0.0, %v2148
  %v2150 = vpop.f32.mrb[0].mxu0
  %v2151 = vadd.f32 0.0, %v2150
  %2152 = vmatprep.mubr.bf16.mxu0 %v2088
  %2153 = vmatmul.mubr.bf16.gmra.mrb[0].mxu0 %v2072
  %v2154 = vpop.f32.mrb[0].mxu0
  %v2155 = vadd.f32 0.0, %v2154
  %v2156 = vpop.f32.mrb[0].mxu0
  %v2157 = vadd.f32 0.0, %v2156
  %v2158 = vpop.f32.mrb[0].mxu0
  %v2159 = vpop.f32.mrb[0].mxu0
  %2160 = vdwg.mxu0
  %2161 = vmatprep.subr.bf16.mxu0 0
  %2162 = vmatpush1.bf16.msra.mxu0 %v1476
  %2163 = vmatprep.subr.bf16.mxu0 0
  %2164 = vmatpush1.bf16.msra.mxu0 %v1479
  %2165 = vmatprep.subr.bf16.mxu0 0
  %2166 = vmatpush1.bf16.msra.mxu0 %v1482
  %2167 = vmatprep.subr.bf16.mxu0 0
  %2168 = vmatpush1.bf16.msra.mxu0 %v1485
  %2169 = vmatprep.subr.bf16.mxu0 0
  %2170 = vmatpush1.bf16.msra.mxu0 %v1488
  %2171 = vmatprep.subr.bf16.mxu0 0
  %2172 = vmatpush1.bf16.msra.mxu0 %v1491
  %2173 = vmatprep.subr.bf16.mxu0 0
  %2174 = vmatpush1.bf16.msra.mxu0 %v1494
  %2175 = vmatprep.subr.bf16.mxu0 0
  %2176 = vmatpush1.bf16.msra.mxu0 %v1497
  %2177 = vmatprep.subr.bf16.mxu0 0
  %2178 = vmatpush1.bf16.msra.mxu0 %v1500
  %2179 = vmatprep.subr.bf16.mxu0 0
  %2180 = vmatpush1.bf16.msra.mxu0 %v1503
  %2181 = vmatprep.subr.bf16.mxu0 0
  %2182 = vmatpush1.bf16.msra.mxu0 0
  %2183 = vmatprep.subr.bf16.mxu0 0
  %2184 = vmatpush1.bf16.msra.mxu0 0
  %2185 = vmatprep.subr.bf16.mxu0 0
  %2186 = vmatpush1.bf16.msra.mxu0 0
  %2187 = vmatprep.subr.bf16.mxu0 0
  %2188 = vmatpush1.bf16.msra.mxu0 0
  %2189 = vmatprep.subr.bf16.mxu0 0
  %2190 = vmatpush1.bf16.msra.mxu0 0
  %2191 = vmatprep.subr.bf16.mxu0 0
  %2192 = vmatpush1.bf16.msra.mxu0 0
  %2193 = vmatprep.mubr.bf16.mxu0 %v2079
  %2194 = vmatmul.mubr.bf16.gmra.mrb[0].mxu0 %v2066
  %v2195 = vpop.f32.mrb[0].mxu0
  %v2196 = vadd.f32 0.0, %v2195
  %v2197 = vpop.f32.mrb[0].mxu0
  %v2198 = vpop.f32.mrb[0].mxu0
  %v2199 = vadd.f32 0.0, %v2198
  %v2200 = vpop.f32.mrb[0].mxu0
  %2201 = vmatprep.mubr.bf16.mxu0 %v2082
  %2202 = vmatmul.mubr.bf16.gmra.mrb[0].mxu0 %v2068
  %v2203 = vpop.f32.mrb[0].mxu0
  %v2204 = vadd.f32 0.0, %v2203
  %v2205 = vpop.f32.mrb[0].mxu0
  %v2206 = vpop.f32.mrb[0].mxu0
  %v2207 = vadd.f32 0.0, %v2206
  %v2208 = vpop.f32.mrb[0].mxu0
  %2209 = vmatprep.mubr.bf16.mxu0 %v2085
  %2210 = vmatmul.mubr.bf16.gmra.mrb[0].mxu0 %v2070
  %v2211 = vpop.f32.mrb[0].mxu0
  %v2212 = vadd.f32 0.0, %v2211
  %v2213 = vpop.f32.mrb[0].mxu0
  %v2214 = vpop.f32.mrb[0].mxu0
  %v2215 = vadd.f32 0.0, %v2214
  %v2216 = vpop.f32.mrb[0].mxu0
  %2217 = vmatprep.mubr.bf16.mxu0 %v2088
  %2218 = vmatmul.mubr.bf16.gmra.mrb[0].mxu0 %v2072
  %v2219 = vpop.f32.mrb[0].mxu0
  %v2220 = vadd.f32 0.0, %v2219
  %v2221 = vpop.f32.mrb[0].mxu0
  %v2222 = vpop.f32.mrb[0].mxu0
  %v2223 = vpop.f32.mrb[0].mxu0
  %2224 = vdwg.mxu0
  %v2225 = vmax.f32 %v2016, %v2125
  %v2226 = vmax.f32 %v2017, %v2127
  %v2227 = vmax.f32 %v2018, %v2196
  %v2228 = vmax.f32 %v2019, %v2129
  %v2229 = vmax.f32 %v2020, %v2131
  %v2230 = vmax.f32 %v2021, %v2199
  %v2231 = vmax.f32 %v2022, %v2135
  %v2232 = vmax.f32 %v2023, %v2137
  %v2233 = vmax.f32 %v2024, %v2204
  %v2234 = vmax.f32 %v2025, %v2139
  %v2235 = vmax.f32 %v2026, %v2141
  %v2236 = vmax.f32 %v2027, %v2207
  %v2237 = vmax.f32 %v2028, %v2145
  %v2238 = vmax.f32 %v2029, %v2147
  %v2239 = vmax.f32 %v2030, %v2212
  %v2240 = vmax.f32 %v2031, %v2149
  %v2241 = vmax.f32 %v2032, %v2151
  %v2242 = vmax.f32 %v2033, %v2215
  %v2243 = vmax.f32 %v2034, %v2155
  %v2244 = vmax.f32 %v2035, %v2157
  %v2245 = vmax.f32 %v2036, %v2220
  %2246 = vmatprep.subr.bf16.mxu0 %v1822
  %2247 = vmatpush1.bf16.msra.mxu0 %v1821
  %2248 = vmatprep.subr.bf16.mxu0 %v1825
  %2249 = vmatpush1.bf16.msra.mxu0 %v1824
  %2250 = vmatprep.subr.bf16.mxu0 %v1828
  %2251 = vmatpush1.bf16.msra.mxu0 %v1827
  %2252 = vmatprep.subr.bf16.mxu0 %v1831
  %2253 = vmatpush1.bf16.msra.mxu0 %v1830
  %2254 = vmatprep.subr.bf16.mxu0 %v1834
  %2255 = vmatpush1.bf16.msra.mxu0 %v1833
  %2256 = vmatprep.subr.bf16.mxu0 %v1837
  %2257 = vmatpush1.bf16.msra.mxu0 %v1836
  %2258 = vmatprep.subr.bf16.mxu0 %v1840
  %2259 = vmatpush1.bf16.msra.mxu0 %v1839
  %2260 = vmatprep.subr.bf16.mxu0 %v1843
  %2261 = vmatpush1.bf16.msra.mxu0 %v1842
  %2262 = vmatprep.subr.bf16.mxu0 %v1846
  %2263 = vmatpush1.bf16.msra.mxu0 %v1845
  %2264 = vmatprep.subr.bf16.mxu0 %v1849
  %2265 = vmatpush1.bf16.msra.mxu0 %v1848
  %2266 = vmatprep.subr.bf16.mxu0 0
  %2267 = vmatpush1.bf16.msra.mxu0 0
  %2268 = vmatprep.subr.bf16.mxu0 0
  %2269 = vmatpush1.bf16.msra.mxu0 0
  %2270 = vmatprep.subr.bf16.mxu0 0
  %2271 = vmatpush1.bf16.msra.mxu0 0
  %2272 = vmatprep.subr.bf16.mxu0 0
  %2273 = vmatpush1.bf16.msra.mxu0 0
  %2274 = vmatprep.subr.bf16.mxu0 0
  %2275 = vmatpush1.bf16.msra.mxu0 0
  %2276 = vmatprep.subr.bf16.mxu0 0
  %2277 = vmatpush1.bf16.msra.mxu0 0
  %2278 = vmatprep.mubr.bf16.mxu0 %v2079
  %2279 = vmatmul.mubr.bf16.gmra.mrb[0].mxu0 %v2066
  %v2280 = vpop.f32.mrb[0].mxu0
  %v2281 = vadd.f32 0.0, %v2280
  %v2282 = vpop.f32.mrb[0].mxu0
  %v2283 = vadd.f32 0.0, %v2282
  %v2284 = vpop.f32.mrb[0].mxu0
  %v2285 = vadd.f32 0.0, %v2284
  %v2286 = vpop.f32.mrb[0].mxu0
  %v2287 = vadd.f32 0.0, %v2286
  %2288 = vmatprep.mubr.bf16.mxu0 %v2082
  %2289 = vmatmul.mubr.bf16.gmra.mrb[0].mxu0 %v2068
  %v2290 = vpop.f32.mrb[0].mxu0
  %v2291 = vadd.f32 0.0, %v2290
  %v2292 = vpop.f32.mrb[0].mxu0
  %v2293 = vadd.f32 0.0, %v2292
  %v2294 = vpop.f32.mrb[0].mxu0
  %v2295 = vadd.f32 0.0, %v2294
  %v2296 = vpop.f32.mrb[0].mxu0
  %v2297 = vadd.f32 0.0, %v2296
  %2298 = vmatprep.mubr.bf16.mxu0 %v2085
  %2299 = vmatmul.mubr.bf16.gmra.mrb[0].mxu0 %v2070
  %v2300 = vpop.f32.mrb[0].mxu0
  %v2301 = vadd.f32 0.0, %v2300
  %v2302 = vpop.f32.mrb[0].mxu0
  %v2303 = vadd.f32 0.0, %v2302
  %v2304 = vpop.f32.mrb[0].mxu0
  %v2305 = vadd.f32 0.0, %v2304
  %v2306 = vpop.f32.mrb[0].mxu0
  %v2307 = vadd.f32 0.0, %v2306
  %2308 = vmatprep.mubr.bf16.mxu0 %v2088
  %2309 = vmatmul.mubr.bf16.gmra.mrb[0].mxu0 %v2072
  %v2310 = vpop.f32.mrb[0].mxu0
  %v2311 = vadd.f32 0.0, %v2310
  %v2312 = vpop.f32.mrb[0].mxu0
  %v2313 = vadd.f32 0.0, %v2312
  %v2314 = vpop.f32.mrb[0].mxu0
  %v2315 = vpop.f32.mrb[0].mxu0
  %2316 = vdwg.mxu0
  %2317 = vmatprep.subr.bf16.mxu0 0
  %2318 = vmatpush1.bf16.msra.mxu0 %v1823
  %2319 = vmatprep.subr.bf16.mxu0 0
  %2320 = vmatpush1.bf16.msra.mxu0 %v1826
  %2321 = vmatprep.subr.bf16.mxu0 0
  %2322 = vmatpush1.bf16.msra.mxu0 %v1829
  %2323 = vmatprep.subr.bf16.mxu0 0
  %2324 = vmatpush1.bf16.msra.mxu0 %v1832
  %2325 = vmatprep.subr.bf16.mxu0 0
  %2326 = vmatpush1.bf16.msra.mxu0 %v1835
  %2327 = vmatprep.subr.bf16.mxu0 0
  %2328 = vmatpush1.bf16.msra.mxu0 %v1838
  %2329 = vmatprep.subr.bf16.mxu0 0
  %2330 = vmatpush1.bf16.msra.mxu0 %v1841
  %2331 = vmatprep.subr.bf16.mxu0 0
  %2332 = vmatpush1.bf16.msra.mxu0 %v1844
  %2333 = vmatprep.subr.bf16.mxu0 0
  %2334 = vmatpush1.bf16.msra.mxu0 %v1847
  %2335 = vmatprep.subr.bf16.mxu0 0
  %2336 = vmatpush1.bf16.msra.mxu0 %v1850
  %2337 = vmatprep.subr.bf16.mxu0 0
  %2338 = vmatpush1.bf16.msra.mxu0 0
  %2339 = vmatprep.subr.bf16.mxu0 0
  %2340 = vmatpush1.bf16.msra.mxu0 0
  %2341 = vmatprep.subr.bf16.mxu0 0
  %2342 = vmatpush1.bf16.msra.mxu0 0
  %2343 = vmatprep.subr.bf16.mxu0 0
  %2344 = vmatpush1.bf16.msra.mxu0 0
  %2345 = vmatprep.subr.bf16.mxu0 0
  %2346 = vmatpush1.bf16.msra.mxu0 0
  %2347 = vmatprep.subr.bf16.mxu0 0
  %2348 = vmatpush1.bf16.msra.mxu0 0
  %2349 = vmatprep.mubr.bf16.mxu0 %v2079
  %2350 = vmatmul.mubr.bf16.gmra.mrb[0].mxu0 %v2066
  %v2351 = vpop.f32.mrb[0].mxu0
  %v2352 = vadd.f32 0.0, %v2351
  %v2353 = vpop.f32.mrb[0].mxu0
  %v2354 = vpop.f32.mrb[0].mxu0
  %v2355 = vadd.f32 0.0, %v2354
  %v2356 = vpop.f32.mrb[0].mxu0
  %2357 = vmatprep.mubr.bf16.mxu0 %v2082
  %2358 = vmatmul.mubr.bf16.gmra.mrb[0].mxu0 %v2068
  %v2359 = vpop.f32.mrb[0].mxu0
  %v2360 = vadd.f32 0.0, %v2359
  %v2361 = vpop.f32.mrb[0].mxu0
  %v2362 = vpop.f32.mrb[0].mxu0
  %v2363 = vadd.f32 0.0, %v2362
  %v2364 = vpop.f32.mrb[0].mxu0
  %2365 = vmatprep.mubr.bf16.mxu0 %v2085
  %2366 = vmatmul.mubr.bf16.gmra.mrb[0].mxu0 %v2070
  %v2367 = vpop.f32.mrb[0].mxu0
  %v2368 = vadd.f32 0.0, %v2367
  %v2369 = vpop.f32.mrb[0].mxu0
  %v2370 = vpop.f32.mrb[0].mxu0
  %v2371 = vadd.f32 0.0, %v2370
  %v2372 = vpop.f32.mrb[0].mxu0
  %2373 = vmatprep.mubr.bf16.mxu0 %v2088
  %2374 = vmatmul.mubr.bf16.gmra.mrb[0].mxu0 %v2072
  %v2375 = vpop.f32.mrb[0].mxu0
  %v2376 = vadd.f32 0.0, %v2375
  %v2377 = vpop.f32.mrb[0].mxu0
  %v2378 = vpop.f32.mrb[0].mxu0
  %v2379 = vpop.f32.mrb[0].mxu0
  %2380 = vdwg.mxu0
  %v2381 = vmax.f32 %v2225, %v2281
  %v2382 = vmax.f32 %v2226, %v2283
  %v2383 = vmax.f32 %v2227, %v2352
  %v2384 = vmax.f32 %v2228, %v2285
  %v2385 = vmax.f32 %v2229, %v2287
  %v2386 = vmax.f32 %v2230, %v2355
  %v2387 = vmax.f32 %v2231, %v2291
  %v2388 = vmax.f32 %v2232, %v2293
  %v2389 = vmax.f32 %v2233, %v2360
  %v2390 = vmax.f32 %v2234, %v2295
  %v2391 = vmax.f32 %v2235, %v2297
  %v2392 = vmax.f32 %v2236, %v2363
  %v2393 = vmax.f32 %v2237, %v2301
  %v2394 = vmax.f32 %v2238, %v2303
  %v2395 = vmax.f32 %v2239, %v2368
  %v2396 = vmax.f32 %v2240, %v2305
  %v2397 = vmax.f32 %v2241, %v2307
  %v2398 = vmax.f32 %v2242, %v2371
  %v2399 = vmax.f32 %v2243, %v2311
  %v2400 = vmax.f32 %v2244, %v2313
  %v2401 = vmax.f32 %v2245, %v2376
  %v2402 = vld [vmem:[%s2] sm:$0x7]
  %v2404 = vlaneseq
  %v2405 = vshrl.u32 %v2404, 7
  %v2406 = vsub.s32 0, %v2405
  %v2407 = vrot.slane %v2402, %v2406
  %v2408 = vlaneseq
  %v2409 = vshrl.u32 %v2408, 7
  %v2410 = vsub.s32 1, %v2409
  %v2411 = vrot.slane %v2402, %v2410
  %v2412 = vlaneseq
  %v2413 = vshrl.u32 %v2412, 7
  %v2414 = vsub.s32 2, %v2413
  %v2415 = vrot.slane %v2402, %v2414
  %v2419 = vadd.f32 %v2381, %v2407
  %v2420 = vadd.f32 %v2382, %v2411
  %v2421 = vadd.f32 %v2383, %v2415
  %v2422 = vadd.f32 %v2384, %v2407
  %v2423 = vadd.f32 %v2385, %v2411
  %v2424 = vadd.f32 %v2386, %v2415
  %v2425 = vadd.f32 %v2387, %v2407
  %v2426 = vadd.f32 %v2388, %v2411
  %v2427 = vadd.f32 %v2389, %v2415
  %v2428 = vadd.f32 %v2390, %v2407
  %v2429 = vadd.f32 %v2391, %v2411
  %v2430 = vadd.f32 %v2392, %v2415
  %v2431 = vadd.f32 %v2393, %v2407
  %v2432 = vadd.f32 %v2394, %v2411
  %v2433 = vadd.f32 %v2395, %v2415
  %v2434 = vadd.f32 %v2396, %v2407
  %v2435 = vadd.f32 %v2397, %v2411
  %v2436 = vadd.f32 %v2398, %v2415
  %v2437 = vadd.f32 %v2399, %v2407
  %v2438 = vadd.f32 %v2400, %v2411
  %v2439 = vadd.f32 %v2401, %v2415
  %v2440 = vmax.f32 %v2419, 0.0
  %v2441 = vmax.f32 %v2420, 0.0
  %v2442 = vmax.f32 %v2421, 0.0
  %v2443 = vmax.f32 %v2422, 0.0
  %v2444 = vmax.f32 %v2423, 0.0
  %v2445 = vmax.f32 %v2424, 0.0
  %v2446 = vmax.f32 %v2425, 0.0
  %v2447 = vmax.f32 %v2426, 0.0
  %v2448 = vmax.f32 %v2427, 0.0
  %v2449 = vmax.f32 %v2428, 0.0
  %v2450 = vmax.f32 %v2429, 0.0
  %v2451 = vmax.f32 %v2430, 0.0
  %v2452 = vmax.f32 %v2431, 0.0
  %v2453 = vmax.f32 %v2432, 0.0
  %v2454 = vmax.f32 %v2433, 0.0
  %v2455 = vmax.f32 %v2434, 0.0
  %v2456 = vmax.f32 %v2435, 0.0
  %v2457 = vmax.f32 %v2436, 0.0
  %v2458 = vmax.f32 %v2437, 0.0
  %v2459 = vmax.f32 %v2438, 0.0
  %v2460 = vmax.f32 %v2439, 0.0
  %v2461 = vpack.c.bf16 %v2443, %v2440
  %v2462 = vpack.c.bf16 %v2444, %v2441
  %v2463 = vpack.c.bf16 %v2445, %v2442
  %v2464 = vpack.c.bf16 %v2449, %v2446
  %v2465 = vpack.c.bf16 %v2450, %v2447
  %v2466 = vpack.c.bf16 %v2451, %v2448
  %v2467 = vpack.c.bf16 %v2455, %v2452
  %v2468 = vpack.c.bf16 %v2456, %v2453
  %v2469 = vpack.c.bf16 %v2457, %v2454
  %v2470 = vpack.c.bf16 %v2458, %v2458
  %v2471 = vpack.c.bf16 %v2459, %v2459
  %v2472 = vpack.c.bf16 %v2460, %v2460
  %v2485 = vunpack.c.l.b16 %v2461
  %v2486 = vunpack.c.l.b16 %v2462
  %v2487 = vunpack.c.l.b16 %v2463
  %v2488 = vunpack.c.h.b16 %v2461
  %v2489 = vunpack.c.h.b16 %v2462
  %v2490 = vunpack.c.h.b16 %v2463
  %v2491 = vunpack.c.l.b16 %v2464
  %v2492 = vunpack.c.l.b16 %v2465
  %v2493 = vunpack.c.l.b16 %v2466
  %v2494 = vunpack.c.h.b16 %v2464
  %v2495 = vunpack.c.h.b16 %v2465
  %v2496 = vunpack.c.h.b16 %v2466
  %v2497 = vunpack.c.l.b16 %v2467
  %v2498 = vunpack.c.l.b16 %v2468
  %v2499 = vunpack.c.l.b16 %v2469
  %v2500 = vunpack.c.h.b16 %v2467
  %v2501 = vunpack.c.h.b16 %v2468
  %v2502 = vunpack.c.h.b16 %v2469
  %v2503 = vunpack.c.l.b16 %v2470
  %v2504 = vunpack.c.l.b16 %v2471
  %v2505 = vunpack.c.l.b16 %v2472
  %v2506 = vpack.c.b16 %v2486, %v2485
  %v2507 = vpack.c.b16 %v2487, %v2487
  %v2508 = vpack.c.b16 %v2489, %v2488
  %v2509 = vpack.c.b16 %v2490, %v2490
  %v2510 = vpack.c.b16 %v2492, %v2491
  %v2511 = vpack.c.b16 %v2493, %v2493
  %v2512 = vpack.c.b16 %v2495, %v2494
  %v2513 = vpack.c.b16 %v2496, %v2496
  %v2514 = vpack.c.b16 %v2498, %v2497
  %v2515 = vpack.c.b16 %v2499, %v2499
  %v2516 = vpack.c.b16 %v2501, %v2500
  %v2517 = vpack.c.b16 %v2502, %v2502
  %v2518 = vpack.c.b16 %v2504, %v2503
  %v2519 = vpack.c.b16 %v2505, %v2505
  %2534 = vst [vmem:[%s32 + $0xc] sm:$0xff] %v2506
  %2535 = vst.msk [vmem:[%s32 + $0x14] sm:$0xf] %vm28, %v2507
  %2536 = vst [vmem:[%s32 + $0x18] sm:$0xff] %v2508
  %2537 = vst.msk [vmem:[%s32 + $0x20] sm:$0xf] %vm28, %v2509
  %2538 = vst [vmem:[%s32 + $0x24] sm:$0xff] %v2510
  %2539 = vst.msk [vmem:[%s32 + $0x2c] sm:$0xf] %vm28, %v2511
  %2540 = vst [vmem:[%s32 + $0x30] sm:$0xff] %v2512
  %2541 = vst.msk [vmem:[%s32 + $0x38] sm:$0xf] %vm28, %v2513
  %2542 = vst [vmem:[%s32 + $0x3c] sm:$0xff] %v2514
  %2543 = vst.msk [vmem:[%s32 + $0x44] sm:$0xf] %vm28, %v2515
  %2544 = vst [vmem:[%s32 + $0x48] sm:$0xff] %v2516
  %2545 = vst.msk [vmem:[%s32 + $0x50] sm:$0xf] %vm28, %v2517
  %2546 = vst [vmem:[%s32 + $0x54] sm:$0xff] %v2518
  %2547 = vst.msk [vmem:[%s32 + $0x5c] sm:$0xf] %vm28, %v2519
  %v2548 = vld [vmem:[#allocation2] sm:$0xff]
  %v2549 = vld [vmem:[#allocation2 + $0x8] sm:$0xf]
  %v2550 = vld [vmem:[#allocation2 + $0xc] sm:$0xff]
  %v2551 = vld [vmem:[#allocation2 + $0x14] sm:$0xf]
  %v2552 = vld [vmem:[#allocation2 + $0x18] sm:$0xff]
  %v2553 = vld [vmem:[#allocation2 + $0x20] sm:$0xf]
  %v2554 = vld [vmem:[#allocation2 + $0x24] sm:$0xff]
  %v2555 = vld [vmem:[#allocation2 + $0x2c] sm:$0xf]
  %v2556 = vld [vmem:[#allocation2 + $0x30] sm:$0xff]
  %v2557 = vld [vmem:[#allocation2 + $0x38] sm:$0xf]
  %v2558 = vld [vmem:[#allocation2 + $0x3c] sm:$0xff]
  %v2559 = vld [vmem:[#allocation2 + $0x44] sm:$0xf]
  %v2560 = vld [vmem:[#allocation2 + $0x48] sm:$0xff]
  %v2561 = vld [vmem:[#allocation2 + $0x50] sm:$0xf]
  %v2562 = vld [vmem:[%s3] sm:$0xff]
  %v2563 = vld [vmem:[%s3 + $0x8] sm:$0xff]
  %v2564 = vld [vmem:[%s3 + $0x10] sm:$0xff]
  %v2565 = vld [vmem:[%s3 + $0x18] sm:$0xff]
  %v2566 = vld [vmem:[%s3 + $0x20] sm:$0xff]
  %v2567 = vld [vmem:[%s3 + $0x28] sm:$0xff]
  %v2568 = vld [vmem:[%s3 + $0x30] sm:$0xff]
  %v2569 = vld [vmem:[%s3 + $0x38] sm:$0xff]
  %v2570 = vld [vmem:[%s3 + $0x40] sm:$0xff]
  %v2571 = vld [vmem:[%s3 + $0x48] sm:$0xff]
  %v2572 = vld [vmem:[%s3 + $0x50] sm:$0xff]
  %v2573 = vld [vmem:[%s3 + $0x58] sm:$0xff]
  %v2574 = vld [vmem:[%s3 + $0x60] sm:$0xff]
  %v2575 = vld [vmem:[%s3 + $0x68] sm:$0xff]
  %v2576 = vld [vmem:[%s3 + $0x70] sm:$0xff]
  %v2577 = vld [vmem:[%s3 + $0x78] sm:$0xff]
  %v2578 = vld [vmem:[%s3 + $0x80] sm:$0xff]
  %v2579 = vld [vmem:[%s3 + $0x88] sm:$0xff]
  %v2580 = vld [vmem:[%s3 + $0x90] sm:$0xff]
  %v2581 = vld [vmem:[%s3 + $0x98] sm:$0xff]
  %v2582 = vld [vmem:[%s3 + $0xa0] sm:$0xff]
  %v2583 = vld [vmem:[%s3 + $0xa8] sm:$0xff]
  %v2584 = vld [vmem:[%s3 + $0xb0] sm:$0xff]
  %v2585 = vld [vmem:[%s3 + $0xb8] sm:$0xff]
  %v2586 = vld [vmem:[%s3 + $0xc0] sm:$0xff]
  %v2587 = vld [vmem:[%s3 + $0xc8] sm:$0xff]
  %v2588 = vld [vmem:[%s3 + $0xd0] sm:$0xff]
  %v2589 = vld [vmem:[%s3 + $0xd8] sm:$0xff]
  %v2590 = vld [vmem:[%s3 + $0xe0] sm:$0xff]
  %v2591 = vld [vmem:[%s3 + $0xe8] sm:$0xff]
  %v2592 = vld [vmem:[%s3 + $0xf0] sm:$0xff]
  %v2593 = vld [vmem:[%s3 + $0xf8] sm:$0xff]
  %v2594 = vld [vmem:[%s3 + $0x100] sm:$0xff]
  %v2595 = vld [vmem:[%s3 + $0x108] sm:$0xff]
  %v2596 = vld [vmem:[%s3 + $0x110] sm:$0xff]
  %v2597 = vld [vmem:[%s3 + $0x118] sm:$0xff]
  %v2598 = vld [vmem:[%s32] sm:$0xff]
  %v2599 = vld [vmem:[%s32 + $0x8] sm:$0xf]
  %v2600 = vld [vmem:[%s32 + $0xc] sm:$0xff]
  %v2601 = vld [vmem:[%s32 + $0x14] sm:$0xf]
  %v2602 = vld [vmem:[%s32 + $0x18] sm:$0xff]
  %v2603 = vld [vmem:[%s32 + $0x20] sm:$0xf]
  %v2604 = vld [vmem:[%s32 + $0x24] sm:$0xff]
  %v2605 = vld [vmem:[%s32 + $0x2c] sm:$0xf]
  %v2606 = vld [vmem:[%s32 + $0x30] sm:$0xff]
  %v2607 = vld [vmem:[%s32 + $0x38] sm:$0xf]
  %v2608 = vld [vmem:[%s32 + $0x3c] sm:$0xff]
  %v2609 = vld [vmem:[%s32 + $0x44] sm:$0xf]
  %v2610 = vld [vmem:[%s32 + $0x48] sm:$0xff]
  %v2611 = vld [vmem:[%s32 + $0x50] sm:$0xf]
  %s2612 = scalar_lea.vmem %s3, 288
  %v2613 = vld [vmem:[%s2612] sm:$0xff]
  %v2614 = vld [vmem:[%s2612 + $0x8] sm:$0xff]
  %v2615 = vld [vmem:[%s2612 + $0x10] sm:$0xff]
  %v2616 = vld [vmem:[%s2612 + $0x18] sm:$0xff]
  %v2617 = vld [vmem:[%s2612 + $0x20] sm:$0xff]
  %v2618 = vld [vmem:[%s2612 + $0x28] sm:$0xff]
  %v2619 = vld [vmem:[%s2612 + $0x30] sm:$0xff]
  %v2620 = vld [vmem:[%s2612 + $0x38] sm:$0xff]
  %v2621 = vld [vmem:[%s2612 + $0x40] sm:$0xff]
  %v2622 = vld [vmem:[%s2612 + $0x48] sm:$0xff]
  %v2623 = vld [vmem:[%s2612 + $0x50] sm:$0xff]
  %v2624 = vld [vmem:[%s2612 + $0x58] sm:$0xff]
  %v2625 = vld [vmem:[%s2612 + $0x60] sm:$0xff]
  %v2626 = vld [vmem:[%s2612 + $0x68] sm:$0xff]
  %v2627 = vld [vmem:[%s2612 + $0x70] sm:$0xff]
  %v2628 = vld [vmem:[%s2612 + $0x78] sm:$0xff]
  %v2629 = vld [vmem:[%s2612 + $0x80] sm:$0xff]
  %v2630 = vld [vmem:[%s2612 + $0x88] sm:$0xff]
  %v2631 = vld [vmem:[%s2612 + $0x90] sm:$0xff]
  %v2632 = vld [vmem:[%s2612 + $0x98] sm:$0xff]
  %v2633 = vld [vmem:[%s2612 + $0xa0] sm:$0xff]
  %v2634 = vld [vmem:[%s2612 + $0xa8] sm:$0xff]
  %v2635 = vld [vmem:[%s2612 + $0xb0] sm:$0xff]
  %v2636 = vld [vmem:[%s2612 + $0xb8] sm:$0xff]
  %v2637 = vld [vmem:[%s2612 + $0xc0] sm:$0xff]
  %v2638 = vld [vmem:[%s2612 + $0xc8] sm:$0xff]
  %v2639 = vld [vmem:[%s2612 + $0xd0] sm:$0xff]
  %v2640 = vld [vmem:[%s2612 + $0xd8] sm:$0xff]
  %v2641 = vld [vmem:[%s2612 + $0xe0] sm:$0xff]
  %v2642 = vld [vmem:[%s2612 + $0xe8] sm:$0xff]
  %v2643 = vld [vmem:[%s2612 + $0xf0] sm:$0xff]
  %v2644 = vld [vmem:[%s2612 + $0xf8] sm:$0xff]
  %v2645 = vld [vmem:[%s2612 + $0x100] sm:$0xff]
  %v2646 = vld [vmem:[%s2612 + $0x108] sm:$0xff]
  %v2647 = vld [vmem:[%s2612 + $0x110] sm:$0xff]
  %v2648 = vld [vmem:[%s2612 + $0x118] sm:$0xff]
  %v2663 = vunpack.c.l.b16 %v2598
  %v2664 = vunpack.c.h.b16 %v2598
  %v2665 = vunpack.c.l.b16 %v2599
  %v2666 = vunpack.c.l.b16 %v2600
  %v2667 = vunpack.c.h.b16 %v2600
  %v2668 = vunpack.c.l.b16 %v2601
  %v2669 = vunpack.c.l.b16 %v2602
  %v2670 = vunpack.c.h.b16 %v2602
  %v2671 = vunpack.c.l.b16 %v2603
  %v2672 = vunpack.c.l.b16 %v2604
  %v2673 = vunpack.c.h.b16 %v2604
  %v2674 = vunpack.c.l.b16 %v2605
  %v2675 = vunpack.c.l.b16 %v2606
  %v2676 = vunpack.c.h.b16 %v2606
  %v2677 = vunpack.c.l.b16 %v2607
  %v2678 = vunpack.c.l.b16 %v2608
  %v2679 = vunpack.c.h.b16 %v2608
  %v2680 = vunpack.c.l.b16 %v2609
  %v2681 = vunpack.c.l.b16 %v2610
  %v2682 = vunpack.c.h.b16 %v2610
  %v2683 = vunpack.c.l.b16 %v2611
  %v2684 = vpack.c.b16 %v2666, %v2663
  %v2685 = vpack.c.b16 %v2667, %v2664
  %v2686 = vpack.c.b16 %v2668, %v2665
  %v2687 = vpack.c.b16 %v2672, %v2669
  %v2688 = vpack.c.b16 %v2673, %v2670
  %v2689 = vpack.c.b16 %v2674, %v2671
  %v2690 = vpack.c.b16 %v2678, %v2675
  %v2691 = vpack.c.b16 %v2679, %v2676
  %v2692 = vpack.c.b16 %v2680, %v2677
  %v2693 = vpack.c.b16 %v2681, %v2681
  %v2694 = vpack.c.b16 %v2682, %v2682
  %v2695 = vpack.c.b16 %v2683, %v2683
  %v2740 = vunpack.c.l.b16 %v2613
  %v2741 = vunpack.c.h.b16 %v2613
  %v2742 = vunpack.c.l.b16 %v2614
  %v2743 = vunpack.c.h.b16 %v2614
  %v2744 = vunpack.c.l.b16 %v2615
  %v2745 = vunpack.c.h.b16 %v2615
  %v2746 = vunpack.c.l.b16 %v2616
  %v2747 = vunpack.c.h.b16 %v2616
  %v2748 = vunpack.c.l.b16 %v2617
  %v2749 = vunpack.c.h.b16 %v2617
  %v2750 = vunpack.c.l.b16 %v2618
  %v2751 = vunpack.c.h.b16 %v2618
  %v2752 = vunpack.c.l.b16 %v2619
  %v2753 = vunpack.c.h.b16 %v2619
  %v2754 = vunpack.c.l.b16 %v2620
  %v2755 = vunpack.c.h.b16 %v2620
  %v2756 = vunpack.c.l.b16 %v2621
  %v2757 = vunpack.c.h.b16 %v2621
  %v2758 = vunpack.c.l.b16 %v2622
  %v2759 = vunpack.c.h.b16 %v2622
  %v2760 = vunpack.c.l.b16 %v2623
  %v2761 = vunpack.c.h.b16 %v2623
  %v2762 = vunpack.c.l.b16 %v2624
  %v2763 = vunpack.c.h.b16 %v2624
  %v2764 = vunpack.c.l.b16 %v2625
  %v2765 = vunpack.c.h.b16 %v2625
  %v2766 = vunpack.c.l.b16 %v2626
  %v2767 = vunpack.c.h.b16 %v2626
  %v2768 = vunpack.c.l.b16 %v2627
  %v2769 = vunpack.c.h.b16 %v2627
  %v2770 = vunpack.c.l.b16 %v2628
  %v2771 = vunpack.c.h.b16 %v2628
  %v2772 = vunpack.c.l.b16 %v2629
  %v2773 = vunpack.c.h.b16 %v2629
  %v2774 = vunpack.c.l.b16 %v2630
  %v2775 = vunpack.c.h.b16 %v2630
  %v2776 = vunpack.c.l.b16 %v2631
  %v2777 = vunpack.c.h.b16 %v2631
  %v2778 = vunpack.c.l.b16 %v2632
  %v2779 = vunpack.c.h.b16 %v2632
  %v2780 = vunpack.c.l.b16 %v2633
  %v2781 = vunpack.c.h.b16 %v2633
  %v2782 = vunpack.c.l.b16 %v2634
  %v2783 = vunpack.c.h.b16 %v2634
  %v2784 = vunpack.c.l.b16 %v2635
  %v2785 = vunpack.c.h.b16 %v2635
  %v2786 = vunpack.c.l.b16 %v2636
  %v2787 = vunpack.c.h.b16 %v2636
  %v2788 = vunpack.c.l.b16 %v2637
  %v2789 = vunpack.c.h.b16 %v2637
  %v2790 = vunpack.c.l.b16 %v2638
  %v2791 = vunpack.c.h.b16 %v2638
  %v2792 = vunpack.c.l.b16 %v2639
  %v2793 = vunpack.c.h.b16 %v2639
  %v2794 = vunpack.c.l.b16 %v2640
  %v2795 = vunpack.c.h.b16 %v2640
  %v2796 = vunpack.c.l.b16 %v2641
  %v2797 = vunpack.c.h.b16 %v2641
  %v2798 = vunpack.c.l.b16 %v2642
  %v2799 = vunpack.c.h.b16 %v2642
  %v2800 = vunpack.c.l.b16 %v2643
  %v2801 = vunpack.c.h.b16 %v2643
  %v2802 = vunpack.c.l.b16 %v2644
  %v2803 = vunpack.c.h.b16 %v2644
  %v2804 = vunpack.c.l.b16 %v2645
  %v2805 = vunpack.c.h.b16 %v2645
  %v2806 = vunpack.c.l.b16 %v2646
  %v2807 = vunpack.c.h.b16 %v2646
  %v2808 = vunpack.c.l.b16 %v2647
  %v2809 = vunpack.c.h.b16 %v2647
  %v2810 = vunpack.c.l.b16 %v2648
  %v2811 = vunpack.c.h.b16 %v2648
  %v2812 = vpack.c.b16 %v2742, %v2740
  %v2813 = vpack.c.b16 %v2743, %v2741
  %v2814 = vpack.c.b16 %v2746, %v2744
  %v2815 = vpack.c.b16 %v2747, %v2745
  %v2816 = vpack.c.b16 %v2750, %v2748
  %v2817 = vpack.c.b16 %v2751, %v2749
  %v2818 = vpack.c.b16 %v2754, %v2752
  %v2819 = vpack.c.b16 %v2755, %v2753
  %v2820 = vpack.c.b16 %v2758, %v2756
  %v2821 = vpack.c.b16 %v2759, %v2757
  %v2822 = vpack.c.b16 %v2762, %v2760
  %v2823 = vpack.c.b16 %v2763, %v2761
  %v2824 = vpack.c.b16 %v2766, %v2764
  %v2825 = vpack.c.b16 %v2767, %v2765
  %v2826 = vpack.c.b16 %v2770, %v2768
  %v2827 = vpack.c.b16 %v2771, %v2769
  %v2828 = vpack.c.b16 %v2774, %v2772
  %v2829 = vpack.c.b16 %v2775, %v2773
  %v2830 = vpack.c.b16 %v2778, %v2776
  %v2831 = vpack.c.b16 %v2779, %v2777
  %v2832 = vpack.c.b16 %v2782, %v2780
  %v2833 = vpack.c.b16 %v2783, %v2781
  %v2834 = vpack.c.b16 %v2786, %v2784
  %v2835 = vpack.c.b16 %v2787, %v2785
  %v2836 = vpack.c.b16 %v2790, %v2788
  %v2837 = vpack.c.b16 %v2791, %v2789
  %v2838 = vpack.c.b16 %v2794, %v2792
  %v2839 = vpack.c.b16 %v2795, %v2793
  %v2840 = vpack.c.b16 %v2798, %v2796
  %v2841 = vpack.c.b16 %v2799, %v2797
  %v2842 = vpack.c.b16 %v2802, %v2800
  %v2843 = vpack.c.b16 %v2803, %v2801
  %v2844 = vpack.c.b16 %v2806, %v2804
  %v2845 = vpack.c.b16 %v2807, %v2805
  %v2846 = vpack.c.b16 %v2810, %v2808
  %v2847 = vpack.c.b16 %v2811, %v2809
  %v2885 = vsel %vm277, %v2686, 0
  %v2888 = vsel %vm277, %v2689, 0
  %v2891 = vsel %vm277, %v2692, 0
  %v2894 = vsel %vm277, %v2695, 0
  %2896 = vmatprep.subr.bf16.mxu0 %v2813
  %2897 = vmatpush1.bf16.msra.mxu0 %v2812
  %2898 = vmatprep.subr.bf16.mxu0 %v2815
  %2899 = vmatpush1.bf16.msra.mxu0 %v2814
  %2900 = vmatprep.subr.bf16.mxu0 %v2817
  %2901 = vmatpush1.bf16.msra.mxu0 %v2816
  %2902 = vmatprep.subr.bf16.mxu0 %v2819
  %2903 = vmatpush1.bf16.msra.mxu0 %v2818
  %2904 = vmatprep.subr.bf16.mxu0 %v2821
  %2905 = vmatpush1.bf16.msra.mxu0 %v2820
  %2906 = vmatprep.subr.bf16.mxu0 %v2823
  %2907 = vmatpush1.bf16.msra.mxu0 %v2822
  %2908 = vmatprep.subr.bf16.mxu0 %v2825
  %2909 = vmatpush1.bf16.msra.mxu0 %v2824
  %2910 = vmatprep.subr.bf16.mxu0 %v2827
  %2911 = vmatpush1.bf16.msra.mxu0 %v2826
  %2912 = vmatprep.subr.bf16.mxu0 %v2829
  %2913 = vmatpush1.bf16.msra.mxu0 %v2828
  %2914 = vmatprep.subr.bf16.mxu0 %v2831
  %2915 = vmatpush1.bf16.msra.mxu0 %v2830
  %2916 = vmatprep.subr.bf16.mxu0 %v2833
  %2917 = vmatpush1.bf16.msra.mxu0 %v2832
  %2918 = vmatprep.subr.bf16.mxu0 %v2835
  %2919 = vmatpush1.bf16.msra.mxu0 %v2834
  %2920 = vmatprep.subr.bf16.mxu0 %v2837
  %2921 = vmatpush1.bf16.msra.mxu0 %v2836
  %2922 = vmatprep.subr.bf16.mxu0 %v2839
  %2923 = vmatpush1.bf16.msra.mxu0 %v2838
  %2924 = vmatprep.subr.bf16.mxu0 %v2841
  %2925 = vmatpush1.bf16.msra.mxu0 %v2840
  %2926 = vmatprep.subr.bf16.mxu0 %v2843
  %2927 = vmatpush1.bf16.msra.mxu0 %v2842
  %2928 = vmatprep.mubr.bf16.mxu0 %v2685
  %2929 = vmatmul.mubr.bf16.gmra.mrb[0].mxu0 %v2684
  %v2930 = vpop.f32.mrb[0].mxu0
  %v2931 = vadd.f32 0.0, %v2930
  %v2932 = vpop.f32.mrb[0].mxu0
  %v2933 = vadd.f32 0.0, %v2932
  %v2934 = vpop.f32.mrb[0].mxu0
  %v2935 = vadd.f32 0.0, %v2934
  %v2936 = vpop.f32.mrb[0].mxu0
  %v2937 = vadd.f32 0.0, %v2936
  %2938 = vmatprep.mubr.bf16.mxu0 %v2688
  %2939 = vmatmul.mubr.bf16.gmra.mrb[0].mxu0 %v2687
  %v2940 = vpop.f32.mrb[0].mxu0
  %v2941 = vadd.f32 0.0, %v2940
  %v2942 = vpop.f32.mrb[0].mxu0
  %v2943 = vadd.f32 0.0, %v2942
  %v2944 = vpop.f32.mrb[0].mxu0
  %v2945 = vadd.f32 0.0, %v2944
  %v2946 = vpop.f32.mrb[0].mxu0
  %v2947 = vadd.f32 0.0, %v2946
  %2948 = vmatprep.mubr.bf16.mxu0 %v2691
  %2949 = vmatmul.mubr.bf16.gmra.mrb[0].mxu0 %v2690
  %v2950 = vpop.f32.mrb[0].mxu0
  %v2951 = vadd.f32 0.0, %v2950
  %v2952 = vpop.f32.mrb[0].mxu0
  %v2953 = vadd.f32 0.0, %v2952
  %v2954 = vpop.f32.mrb[0].mxu0
  %v2955 = vadd.f32 0.0, %v2954
  %v2956 = vpop.f32.mrb[0].mxu0
  %v2957 = vadd.f32 0.0, %v2956
  %2958 = vmatprep.mubr.bf16.mxu0 %v2694
  %2959 = vmatmul.mubr.bf16.gmra.mrb[0].mxu0 %v2693
  %v2960 = vpop.f32.mrb[0].mxu0
  %v2961 = vadd.f32 0.0, %v2960
  %v2962 = vpop.f32.mrb[0].mxu0
  %v2963 = vadd.f32 0.0, %v2962
  %v2964 = vpop.f32.mrb[0].mxu0
  %v2965 = vpop.f32.mrb[0].mxu0
  %2966 = vdwg.mxu0
  %2967 = vmatprep.subr.bf16.mxu0 %v2845
  %2968 = vmatpush1.bf16.msra.mxu0 %v2844
  %2969 = vmatprep.subr.bf16.mxu0 %v2847
  %2970 = vmatpush1.bf16.msra.mxu0 %v2846
  %2971 = vmatprep.subr.bf16.mxu0 0
  %2972 = vmatpush1.bf16.msra.mxu0 0
  %2973 = vmatprep.subr.bf16.mxu0 0
  %2974 = vmatpush1.bf16.msra.mxu0 0
  %2975 = vmatprep.subr.bf16.mxu0 0
  %2976 = vmatpush1.bf16.msra.mxu0 0
  %2977 = vmatprep.subr.bf16.mxu0 0
  %2978 = vmatpush1.bf16.msra.mxu0 0
  %2979 = vmatprep.subr.bf16.mxu0 0
  %2980 = vmatpush1.bf16.msra.mxu0 0
  %2981 = vmatprep.subr.bf16.mxu0 0
  %2982 = vmatpush1.bf16.msra.mxu0 0
  %2983 = vmatprep.subr.bf16.mxu0 0
  %2984 = vmatpush1.bf16.msra.mxu0 0
  %2985 = vmatprep.subr.bf16.mxu0 0
  %2986 = vmatpush1.bf16.msra.mxu0 0
  %2987 = vmatprep.subr.bf16.mxu0 0
  %2988 = vmatpush1.bf16.msra.mxu0 0
  %2989 = vmatprep.subr.bf16.mxu0 0
  %2990 = vmatpush1.bf16.msra.mxu0 0
  %2991 = vmatprep.subr.bf16.mxu0 0
  %2992 = vmatpush1.bf16.msra.mxu0 0
  %2993 = vmatprep.subr.bf16.mxu0 0
  %2994 = vmatpush1.bf16.msra.mxu0 0
  %2995 = vmatprep.subr.bf16.mxu0 0
  %2996 = vmatpush1.bf16.msra.mxu0 0
  %2997 = vmatprep.subr.bf16.mxu0 0
  %2998 = vmatpush1.bf16.msra.mxu0 0
  %2999 = vmatprep.mubr.bf16.mxu0 0
  %3000 = vmatmul.mubr.bf16.gmra.mrb[0].mxu0 %v2885
  %v3001 = vpop.f32.mrb[0].mxu0
  %v3002 = vadd.f32 %v2931, %v3001
  %v3003 = vpop.f32.mrb[0].mxu0
  %v3004 = vadd.f32 %v2933, %v3003
  %v3005 = vpop.f32.mrb[0].mxu0
  %v3006 = vadd.f32 %v2935, %v3005
  %v3007 = vpop.f32.mrb[0].mxu0
  %v3008 = vadd.f32 %v2937, %v3007
  %3009 = vmatprep.mubr.bf16.mxu0 0
  %3010 = vmatmul.mubr.bf16.gmra.mrb[0].mxu0 %v2888
  %v3011 = vpop.f32.mrb[0].mxu0
  %v3012 = vadd.f32 %v2941, %v3011
  %v3013 = vpop.f32.mrb[0].mxu0
  %v3014 = vadd.f32 %v2943, %v3013
  %v3015 = vpop.f32.mrb[0].mxu0
  %v3016 = vadd.f32 %v2945, %v3015
  %v3017 = vpop.f32.mrb[0].mxu0
  %v3018 = vadd.f32 %v2947, %v3017
  %3019 = vmatprep.mubr.bf16.mxu0 0
  %3020 = vmatmul.mubr.bf16.gmra.mrb[0].mxu0 %v2891
  %v3021 = vpop.f32.mrb[0].mxu0
  %v3022 = vadd.f32 %v2951, %v3021
  %v3023 = vpop.f32.mrb[0].mxu0
  %v3024 = vadd.f32 %v2953, %v3023
  %v3025 = vpop.f32.mrb[0].mxu0
  %v3026 = vadd.f32 %v2955, %v3025
  %v3027 = vpop.f32.mrb[0].mxu0
  %v3028 = vadd.f32 %v2957, %v3027
  %3029 = vmatprep.mubr.bf16.mxu0 0
  %3030 = vmatmul.mubr.bf16.gmra.mrb[0].mxu0 %v2894
  %v3031 = vpop.f32.mrb[0].mxu0
  %v3032 = vadd.f32 %v2961, %v3031
  %v3033 = vpop.f32.mrb[0].mxu0
  %v3034 = vadd.f32 %v2963, %v3033
  %v3035 = vpop.f32.mrb[0].mxu0
  %v3036 = vpop.f32.mrb[0].mxu0
  %3037 = vdwg.mxu0
  %v3052 = vunpack.c.l.b16 %v2548
  %v3053 = vunpack.c.h.b16 %v2548
  %v3054 = vunpack.c.l.b16 %v2549
  %v3055 = vunpack.c.l.b16 %v2550
  %v3056 = vunpack.c.h.b16 %v2550
  %v3057 = vunpack.c.l.b16 %v2551
  %v3058 = vunpack.c.l.b16 %v2552
  %v3059 = vunpack.c.h.b16 %v2552
  %v3060 = vunpack.c.l.b16 %v2553
  %v3061 = vunpack.c.l.b16 %v2554
  %v3062 = vunpack.c.h.b16 %v2554
  %v3063 = vunpack.c.l.b16 %v2555
  %v3064 = vunpack.c.l.b16 %v2556
  %v3065 = vunpack.c.h.b16 %v2556
  %v3066 = vunpack.c.l.b16 %v2557
  %v3067 = vunpack.c.l.b16 %v2558
  %v3068 = vunpack.c.h.b16 %v2558
  %v3069 = vunpack.c.l.b16 %v2559
  %v3070 = vunpack.c.l.b16 %v2560
  %v3071 = vunpack.c.h.b16 %v2560
  %v3072 = vunpack.c.l.b16 %v2561
  %v3073 = vpack.c.b16 %v3055, %v3052
  %v3074 = vpack.c.b16 %v3056, %v3053
  %v3075 = vpack.c.b16 %v3057, %v3054
  %v3076 = vpack.c.b16 %v3061, %v3058
  %v3077 = vpack.c.b16 %v3062, %v3059
  %v3078 = vpack.c.b16 %v3063, %v3060
  %v3079 = vpack.c.b16 %v3067, %v3064
  %v3080 = vpack.c.b16 %v3068, %v3065
  %v3081 = vpack.c.b16 %v3069, %v3066
  %v3082 = vpack.c.b16 %v3070, %v3070
  %v3083 = vpack.c.b16 %v3071, %v3071
  %v3084 = vpack.c.b16 %v3072, %v3072
  %v3129 = vunpack.c.l.b16 %v2562
  %v3130 = vunpack.c.h.b16 %v2562
  %v3131 = vunpack.c.l.b16 %v2563
  %v3132 = vunpack.c.h.b16 %v2563
  %v3133 = vunpack.c.l.b16 %v2564
  %v3134 = vunpack.c.h.b16 %v2564
  %v3135 = vunpack.c.l.b16 %v2565
  %v3136 = vunpack.c.h.b16 %v2565
  %v3137 = vunpack.c.l.b16 %v2566
  %v3138 = vunpack.c.h.b16 %v2566
  %v3139 = vunpack.c.l.b16 %v2567
  %v3140 = vunpack.c.h.b16 %v2567
  %v3141 = vunpack.c.l.b16 %v2568
  %v3142 = vunpack.c.h.b16 %v2568
  %v3143 = vunpack.c.l.b16 %v2569
  %v3144 = vunpack.c.h.b16 %v2569
  %v3145 = vunpack.c.l.b16 %v2570
  %v3146 = vunpack.c.h.b16 %v2570
  %v3147 = vunpack.c.l.b16 %v2571
  %v3148 = vunpack.c.h.b16 %v2571
  %v3149 = vunpack.c.l.b16 %v2572
  %v3150 = vunpack.c.h.b16 %v2572
  %v3151 = vunpack.c.l.b16 %v2573
  %v3152 = vunpack.c.h.b16 %v2573
  %v3153 = vunpack.c.l.b16 %v2574
  %v3154 = vunpack.c.h.b16 %v2574
  %v3155 = vunpack.c.l.b16 %v2575
  %v3156 = vunpack.c.h.b16 %v2575
  %v3157 = vunpack.c.l.b16 %v2576
  %v3158 = vunpack.c.h.b16 %v2576
  %v3159 = vunpack.c.l.b16 %v2577
  %v3160 = vunpack.c.h.b16 %v2577
  %v3161 = vunpack.c.l.b16 %v2578
  %v3162 = vunpack.c.h.b16 %v2578
  %v3163 = vunpack.c.l.b16 %v2579
  %v3164 = vunpack.c.h.b16 %v2579
  %v3165 = vunpack.c.l.b16 %v2580
  %v3166 = vunpack.c.h.b16 %v2580
  %v3167 = vunpack.c.l.b16 %v2581
  %v3168 = vunpack.c.h.b16 %v2581
  %v3169 = vunpack.c.l.b16 %v2582
  %v3170 = vunpack.c.h.b16 %v2582
  %v3171 = vunpack.c.l.b16 %v2583
  %v3172 = vunpack.c.h.b16 %v2583
  %v3173 = vunpack.c.l.b16 %v2584
  %v3174 = vunpack.c.h.b16 %v2584
  %v3175 = vunpack.c.l.b16 %v2585
  %v3176 = vunpack.c.h.b16 %v2585
  %v3177 = vunpack.c.l.b16 %v2586
  %v3178 = vunpack.c.h.b16 %v2586
  %v3179 = vunpack.c.l.b16 %v2587
  %v3180 = vunpack.c.h.b16 %v2587
  %v3181 = vunpack.c.l.b16 %v2588
  %v3182 = vunpack.c.h.b16 %v2588
  %v3183 = vunpack.c.l.b16 %v2589
  %v3184 = vunpack.c.h.b16 %v2589
  %v3185 = vunpack.c.l.b16 %v2590
  %v3186 = vunpack.c.h.b16 %v2590
  %v3187 = vunpack.c.l.b16 %v2591
  %v3188 = vunpack.c.h.b16 %v2591
  %v3189 = vunpack.c.l.b16 %v2592
  %v3190 = vunpack.c.h.b16 %v2592
  %v3191 = vunpack.c.l.b16 %v2593
  %v3192 = vunpack.c.h.b16 %v2593
  %v3193 = vunpack.c.l.b16 %v2594
  %v3194 = vunpack.c.h.b16 %v2594
  %v3195 = vunpack.c.l.b16 %v2595
  %v3196 = vunpack.c.h.b16 %v2595
  %v3197 = vunpack.c.l.b16 %v2596
  %v3198 = vunpack.c.h.b16 %v2596
  %v3199 = vunpack.c.l.b16 %v2597
  %v3200 = vunpack.c.h.b16 %v2597
  %v3201 = vpack.c.b16 %v3131, %v3129
  %v3202 = vpack.c.b16 %v3132, %v3130
  %v3203 = vpack.c.b16 %v3135, %v3133
  %v3204 = vpack.c.b16 %v3136, %v3134
  %v3205 = vpack.c.b16 %v3139, %v3137
  %v3206 = vpack.c.b16 %v3140, %v3138
  %v3207 = vpack.c.b16 %v3143, %v3141
  %v3208 = vpack.c.b16 %v3144, %v3142
  %v3209 = vpack.c.b16 %v3147, %v3145
  %v3210 = vpack.c.b16 %v3148, %v3146
  %v3211 = vpack.c.b16 %v3151, %v3149
  %v3212 = vpack.c.b16 %v3152, %v3150
  %v3213 = vpack.c.b16 %v3155, %v3153
  %v3214 = vpack.c.b16 %v3156, %v3154
  %v3215 = vpack.c.b16 %v3159, %v3157
  %v3216 = vpack.c.b16 %v3160, %v3158
  %v3217 = vpack.c.b16 %v3163, %v3161
  %v3218 = vpack.c.b16 %v3164, %v3162
  %v3219 = vpack.c.b16 %v3167, %v3165
  %v3220 = vpack.c.b16 %v3168, %v3166
  %v3221 = vpack.c.b16 %v3171, %v3169
  %v3222 = vpack.c.b16 %v3172, %v3170
  %v3223 = vpack.c.b16 %v3175, %v3173
  %v3224 = vpack.c.b16 %v3176, %v3174
  %v3225 = vpack.c.b16 %v3179, %v3177
  %v3226 = vpack.c.b16 %v3180, %v3178
  %v3227 = vpack.c.b16 %v3183, %v3181
  %v3228 = vpack.c.b16 %v3184, %v3182
  %v3229 = vpack.c.b16 %v3187, %v3185
  %v3230 = vpack.c.b16 %v3188, %v3186
  %v3231 = vpack.c.b16 %v3191, %v3189
  %v3232 = vpack.c.b16 %v3192, %v3190
  %v3233 = vpack.c.b16 %v3195, %v3193
  %v3234 = vpack.c.b16 %v3196, %v3194
  %v3235 = vpack.c.b16 %v3199, %v3197
  %v3236 = vpack.c.b16 %v3200, %v3198
  %v3274 = vsel %vm277, %v3075, 0
  %v3277 = vsel %vm277, %v3078, 0
  %v3280 = vsel %vm277, %v3081, 0
  %v3283 = vsel %vm277, %v3084, 0
  %3285 = vmatprep.subr.bf16.mxu0 %v3202
  %3286 = vmatpush1.bf16.msra.mxu0 %v3201
  %3287 = vmatprep.subr.bf16.mxu0 %v3204
  %3288 = vmatpush1.bf16.msra.mxu0 %v3203
  %3289 = vmatprep.subr.bf16.mxu0 %v3206
  %3290 = vmatpush1.bf16.msra.mxu0 %v3205
  %3291 = vmatprep.subr.bf16.mxu0 %v3208
  %3292 = vmatpush1.bf16.msra.mxu0 %v3207
  %3293 = vmatprep.subr.bf16.mxu0 %v3210
  %3294 = vmatpush1.bf16.msra.mxu0 %v3209
  %3295 = vmatprep.subr.bf16.mxu0 %v3212
  %3296 = vmatpush1.bf16.msra.mxu0 %v3211
  %3297 = vmatprep.subr.bf16.mxu0 %v3214
  %3298 = vmatpush1.bf16.msra.mxu0 %v3213
  %3299 = vmatprep.subr.bf16.mxu0 %v3216
  %3300 = vmatpush1.bf16.msra.mxu0 %v3215
  %3301 = vmatprep.subr.bf16.mxu0 %v3218
  %3302 = vmatpush1.bf16.msra.mxu0 %v3217
  %3303 = vmatprep.subr.bf16.mxu0 %v3220
  %3304 = vmatpush1.bf16.msra.mxu0 %v3219
  %3305 = vmatprep.subr.bf16.mxu0 %v3222
  %3306 = vmatpush1.bf16.msra.mxu0 %v3221
  %3307 = vmatprep.subr.bf16.mxu0 %v3224
  %3308 = vmatpush1.bf16.msra.mxu0 %v3223
  %3309 = vmatprep.subr.bf16.mxu0 %v3226
  %3310 = vmatpush1.bf16.msra.mxu0 %v3225
  %3311 = vmatprep.subr.bf16.mxu0 %v3228
  %3312 = vmatpush1.bf16.msra.mxu0 %v3227
  %3313 = vmatprep.subr.bf16.mxu0 %v3230
  %3314 = vmatpush1.bf16.msra.mxu0 %v3229
  %3315 = vmatprep.subr.bf16.mxu0 %v3232
  %3316 = vmatpush1.bf16.msra.mxu0 %v3231
  %3317 = vmatprep.mubr.bf16.mxu0 %v3074
  %3318 = vmatmul.mubr.bf16.gmra.mrb[0].mxu0 %v3073
  %v3319 = vpop.f32.mrb[0].mxu0
  %v3320 = vadd.f32 %v3002, %v3319
  %v3321 = vpop.f32.mrb[0].mxu0
  %v3322 = vadd.f32 %v3004, %v3321
  %v3323 = vpop.f32.mrb[0].mxu0
  %v3324 = vadd.f32 %v3006, %v3323
  %v3325 = vpop.f32.mrb[0].mxu0
  %v3326 = vadd.f32 %v3008, %v3325
  %3327 = vmatprep.mubr.bf16.mxu0 %v3077
  %3328 = vmatmul.mubr.bf16.gmra.mrb[0].mxu0 %v3076
  %v3329 = vpop.f32.mrb[0].mxu0
  %v3330 = vadd.f32 %v3012, %v3329
  %v3331 = vpop.f32.mrb[0].mxu0
  %v3332 = vadd.f32 %v3014, %v3331
  %v3333 = vpop.f32.mrb[0].mxu0
  %v3334 = vadd.f32 %v3016, %v3333
  %v3335 = vpop.f32.mrb[0].mxu0
  %v3336 = vadd.f32 %v3018, %v3335
  %3337 = vmatprep.mubr.bf16.mxu0 %v3080
  %3338 = vmatmul.mubr.bf16.gmra.mrb[0].mxu0 %v3079
  %v3339 = vpop.f32.mrb[0].mxu0
  %v3340 = vadd.f32 %v3022, %v3339
  %v3341 = vpop.f32.mrb[0].mxu0
  %v3342 = vadd.f32 %v3024, %v3341
  %v3343 = vpop.f32.mrb[0].mxu0
  %v3344 = vadd.f32 %v3026, %v3343
  %v3345 = vpop.f32.mrb[0].mxu0
  %v3346 = vadd.f32 %v3028, %v3345
  %3347 = vmatprep.mubr.bf16.mxu0 %v3083
  %3348 = vmatmul.mubr.bf16.gmra.mrb[0].mxu0 %v3082
  %v3349 = vpop.f32.mrb[0].mxu0
  %v3350 = vadd.f32 %v3032, %v3349
  %v3351 = vpop.f32.mrb[0].mxu0
  %v3352 = vadd.f32 %v3034, %v3351
  %v3353 = vpop.f32.mrb[0].mxu0
  %v3354 = vpop.f32.mrb[0].mxu0
  %3355 = vdwg.mxu0
  %3356 = vmatprep.subr.bf16.mxu0 %v3234
  %3357 = vmatpush1.bf16.msra.mxu0 %v3233
  %3358 = vmatprep.subr.bf16.mxu0 %v3236
  %3359 = vmatpush1.bf16.msra.mxu0 %v3235
  %3360 = vmatprep.subr.bf16.mxu0 0
  %3361 = vmatpush1.bf16.msra.mxu0 0
  %3362 = vmatprep.subr.bf16.mxu0 0
  %3363 = vmatpush1.bf16.msra.mxu0 0
  %3364 = vmatprep.subr.bf16.mxu0 0
  %3365 = vmatpush1.bf16.msra.mxu0 0
  %3366 = vmatprep.subr.bf16.mxu0 0
  %3367 = vmatpush1.bf16.msra.mxu0 0
  %3368 = vmatprep.subr.bf16.mxu0 0
  %3369 = vmatpush1.bf16.msra.mxu0 0
  %3370 = vmatprep.subr.bf16.mxu0 0
  %3371 = vmatpush1.bf16.msra.mxu0 0
  %3372 = vmatprep.subr.bf16.mxu0 0
  %3373 = vmatpush1.bf16.msra.mxu0 0
  %3374 = vmatprep.subr.bf16.mxu0 0
  %3375 = vmatpush1.bf16.msra.mxu0 0
  %3376 = vmatprep.subr.bf16.mxu0 0
  %3377 = vmatpush1.bf16.msra.mxu0 0
  %3378 = vmatprep.subr.bf16.mxu0 0
  %3379 = vmatpush1.bf16.msra.mxu0 0
  %3380 = vmatprep.subr.bf16.mxu0 0
  %3381 = vmatpush1.bf16.msra.mxu0 0
  %3382 = vmatprep.subr.bf16.mxu0 0
  %3383 = vmatpush1.bf16.msra.mxu0 0
  %3384 = vmatprep.subr.bf16.mxu0 0
  %3385 = vmatpush1.bf16.msra.mxu0 0
  %3386 = vmatprep.subr.bf16.mxu0 0
  %3387 = vmatpush1.bf16.msra.mxu0 0
  %3388 = vmatprep.mubr.bf16.mxu0 0
  %3389 = vmatmul.mubr.bf16.gmra.mrb[0].mxu0 %v3274
  %v3390 = vpop.f32.mrb[0].mxu0
  %v3391 = vadd.f32 %v3320, %v3390
  %v3392 = vpop.f32.mrb[0].mxu0
  %v3393 = vadd.f32 %v3322, %v3392
  %v3394 = vpop.f32.mrb[0].mxu0
  %v3395 = vadd.f32 %v3324, %v3394
  %v3396 = vpop.f32.mrb[0].mxu0
  %v3397 = vadd.f32 %v3326, %v3396
  %3398 = vmatprep.mubr.bf16.mxu0 0
  %3399 = vmatmul.mubr.bf16.gmra.mrb[0].mxu0 %v3277
  %v3400 = vpop.f32.mrb[0].mxu0
  %v3401 = vadd.f32 %v3330, %v3400
  %v3402 = vpop.f32.mrb[0].mxu0
  %v3403 = vadd.f32 %v3332, %v3402
  %v3404 = vpop.f32.mrb[0].mxu0
  %v3405 = vadd.f32 %v3334, %v3404
  %v3406 = vpop.f32.mrb[0].mxu0
  %v3407 = vadd.f32 %v3336, %v3406
  %3408 = vmatprep.mubr.bf16.mxu0 0
  %3409 = vmatmul.mubr.bf16.gmra.mrb[0].mxu0 %v3280
  %v3410 = vpop.f32.mrb[0].mxu0
  %v3411 = vadd.f32 %v3340, %v3410
  %v3412 = vpop.f32.mrb[0].mxu0
  %v3413 = vadd.f32 %v3342, %v3412
  %v3414 = vpop.f32.mrb[0].mxu0
  %v3415 = vadd.f32 %v3344, %v3414
  %v3416 = vpop.f32.mrb[0].mxu0
  %v3417 = vadd.f32 %v3346, %v3416
  %3418 = vmatprep.mubr.bf16.mxu0 0
  %3419 = vmatmul.mubr.bf16.gmra.mrb[0].mxu0 %v3283
  %v3420 = vpop.f32.mrb[0].mxu0
  %v3421 = vadd.f32 %v3350, %v3420
  %v3422 = vpop.f32.mrb[0].mxu0
  %v3423 = vadd.f32 %v3352, %v3422
  %v3424 = vpop.f32.mrb[0].mxu0
  %v3425 = vpop.f32.mrb[0].mxu0
  %3426 = vdwg.mxu0
  %v3427 = vld [vmem:[#allocation2 + $0xc] sm:$0xff]
  %v3428 = vld [vmem:[#allocation2 + $0x14] sm:$0xf]
  %v3429 = vld [vmem:[#allocation2 + $0x18] sm:$0xff]
  %v3430 = vld [vmem:[#allocation2 + $0x20] sm:$0xf]
  %v3431 = vld [vmem:[#allocation2 + $0x24] sm:$0xff]
  %v3432 = vld [vmem:[#allocation2 + $0x2c] sm:$0xf]
  %v3433 = vld [vmem:[#allocation2 + $0x30] sm:$0xff]
  %v3434 = vld [vmem:[#allocation2 + $0x38] sm:$0xf]
  %v3435 = vld [vmem:[#allocation2 + $0x3c] sm:$0xff]
  %v3436 = vld [vmem:[#allocation2 + $0x44] sm:$0xf]
  %v3437 = vld [vmem:[#allocation2 + $0x48] sm:$0xff]
  %v3438 = vld [vmem:[#allocation2 + $0x50] sm:$0xf]
  %v3439 = vld [vmem:[#allocation2 + $0x54] sm:$0xff]
  %v3440 = vld [vmem:[#allocation2 + $0x5c] sm:$0xf]
  %s3441 = scalar_lea.vmem %s3, 576
  %v3442 = vld [vmem:[%s3441] sm:$0xff]
  %v3443 = vld [vmem:[%s3441 + $0x8] sm:$0xff]
  %v3444 = vld [vmem:[%s3441 + $0x10] sm:$0xff]
  %v3445 = vld [vmem:[%s3441 + $0x18] sm:$0xff]
  %v3446 = vld [vmem:[%s3441 + $0x20] sm:$0xff]
  %v3447 = vld [vmem:[%s3441 + $0x28] sm:$0xff]
  %v3448 = vld [vmem:[%s3441 + $0x30] sm:$0xff]
  %v3449 = vld [vmem:[%s3441 + $0x38] sm:$0xff]
  %v3450 = vld [vmem:[%s3441 + $0x40] sm:$0xff]
  %v3451 = vld [vmem:[%s3441 + $0x48] sm:$0xff]
  %v3452 = vld [vmem:[%s3441 + $0x50] sm:$0xff]
  %v3453 = vld [vmem:[%s3441 + $0x58] sm:$0xff]
  %v3454 = vld [vmem:[%s3441 + $0x60] sm:$0xff]
  %v3455 = vld [vmem:[%s3441 + $0x68] sm:$0xff]
  %v3456 = vld [vmem:[%s3441 + $0x70] sm:$0xff]
  %v3457 = vld [vmem:[%s3441 + $0x78] sm:$0xff]
  %v3458 = vld [vmem:[%s3441 + $0x80] sm:$0xff]
  %v3459 = vld [vmem:[%s3441 + $0x88] sm:$0xff]
  %v3460 = vld [vmem:[%s3441 + $0x90] sm:$0xff]
  %v3461 = vld [vmem:[%s3441 + $0x98] sm:$0xff]
  %v3462 = vld [vmem:[%s3441 + $0xa0] sm:$0xff]
  %v3463 = vld [vmem:[%s3441 + $0xa8] sm:$0xff]
  %v3464 = vld [vmem:[%s3441 + $0xb0] sm:$0xff]
  %v3465 = vld [vmem:[%s3441 + $0xb8] sm:$0xff]
  %v3466 = vld [vmem:[%s3441 + $0xc0] sm:$0xff]
  %v3467 = vld [vmem:[%s3441 + $0xc8] sm:$0xff]
  %v3468 = vld [vmem:[%s3441 + $0xd0] sm:$0xff]
  %v3469 = vld [vmem:[%s3441 + $0xd8] sm:$0xff]
  %v3470 = vld [vmem:[%s3441 + $0xe0] sm:$0xff]
  %v3471 = vld [vmem:[%s3441 + $0xe8] sm:$0xff]
  %v3472 = vld [vmem:[%s3441 + $0xf0] sm:$0xff]
  %v3473 = vld [vmem:[%s3441 + $0xf8] sm:$0xff]
  %v3474 = vld [vmem:[%s3441 + $0x100] sm:$0xff]
  %v3475 = vld [vmem:[%s3441 + $0x108] sm:$0xff]
  %v3476 = vld [vmem:[%s3441 + $0x110] sm:$0xff]
  %v3477 = vld [vmem:[%s3441 + $0x118] sm:$0xff]
  %v3492 = vunpack.c.l.b16 %v3427
  %v3493 = vunpack.c.h.b16 %v3427
  %v3494 = vunpack.c.l.b16 %v3428
  %v3495 = vunpack.c.l.b16 %v3429
  %v3496 = vunpack.c.h.b16 %v3429
  %v3497 = vunpack.c.l.b16 %v3430
  %v3498 = vunpack.c.l.b16 %v3431
  %v3499 = vunpack.c.h.b16 %v3431
  %v3500 = vunpack.c.l.b16 %v3432
  %v3501 = vunpack.c.l.b16 %v3433
  %v3502 = vunpack.c.h.b16 %v3433
  %v3503 = vunpack.c.l.b16 %v3434
  %v3504 = vunpack.c.l.b16 %v3435
  %v3505 = vunpack.c.h.b16 %v3435
  %v3506 = vunpack.c.l.b16 %v3436
  %v3507 = vunpack.c.l.b16 %v3437
  %v3508 = vunpack.c.h.b16 %v3437
  %v3509 = vunpack.c.l.b16 %v3438
  %v3510 = vunpack.c.l.b16 %v3439
  %v3511 = vunpack.c.h.b16 %v3439
  %v3512 = vunpack.c.l.b16 %v3440
  %v3513 = vpack.c.b16 %v3495, %v3492
  %v3514 = vpack.c.b16 %v3496, %v3493
  %v3515 = vpack.c.b16 %v3497, %v3494
  %v3516 = vpack.c.b16 %v3501, %v3498
  %v3517 = vpack.c.b16 %v3502, %v3499
  %v3518 = vpack.c.b16 %v3503, %v3500
  %v3519 = vpack.c.b16 %v3507, %v3504
  %v3520 = vpack.c.b16 %v3508, %v3505
  %v3521 = vpack.c.b16 %v3509, %v3506
  %v3522 = vpack.c.b16 %v3510, %v3510
  %v3523 = vpack.c.b16 %v3511, %v3511
  %v3524 = vpack.c.b16 %v3512, %v3512
  %v3569 = vunpack.c.l.b16 %v3442
  %v3570 = vunpack.c.h.b16 %v3442
  %v3571 = vunpack.c.l.b16 %v3443
  %v3572 = vunpack.c.h.b16 %v3443
  %v3573 = vunpack.c.l.b16 %v3444
  %v3574 = vunpack.c.h.b16 %v3444
  %v3575 = vunpack.c.l.b16 %v3445
  %v3576 = vunpack.c.h.b16 %v3445
  %v3577 = vunpack.c.l.b16 %v3446
  %v3578 = vunpack.c.h.b16 %v3446
  %v3579 = vunpack.c.l.b16 %v3447
  %v3580 = vunpack.c.h.b16 %v3447
  %v3581 = vunpack.c.l.b16 %v3448
  %v3582 = vunpack.c.h.b16 %v3448
  %v3583 = vunpack.c.l.b16 %v3449
  %v3584 = vunpack.c.h.b16 %v3449
  %v3585 = vunpack.c.l.b16 %v3450
  %v3586 = vunpack.c.h.b16 %v3450
  %v3587 = vunpack.c.l.b16 %v3451
  %v3588 = vunpack.c.h.b16 %v3451
  %v3589 = vunpack.c.l.b16 %v3452
  %v3590 = vunpack.c.h.b16 %v3452
  %v3591 = vunpack.c.l.b16 %v3453
  %v3592 = vunpack.c.h.b16 %v3453
  %v3593 = vunpack.c.l.b16 %v3454
  %v3594 = vunpack.c.h.b16 %v3454
  %v3595 = vunpack.c.l.b16 %v3455
  %v3596 = vunpack.c.h.b16 %v3455
  %v3597 = vunpack.c.l.b16 %v3456
  %v3598 = vunpack.c.h.b16 %v3456
  %v3599 = vunpack.c.l.b16 %v3457
  %v3600 = vunpack.c.h.b16 %v3457
  %v3601 = vunpack.c.l.b16 %v3458
  %v3602 = vunpack.c.h.b16 %v3458
  %v3603 = vunpack.c.l.b16 %v3459
  %v3604 = vunpack.c.h.b16 %v3459
  %v3605 = vunpack.c.l.b16 %v3460
  %v3606 = vunpack.c.h.b16 %v3460
  %v3607 = vunpack.c.l.b16 %v3461
  %v3608 = vunpack.c.h.b16 %v3461
  %v3609 = vunpack.c.l.b16 %v3462
  %v3610 = vunpack.c.h.b16 %v3462
  %v3611 = vunpack.c.l.b16 %v3463
  %v3612 = vunpack.c.h.b16 %v3463
  %v3613 = vunpack.c.l.b16 %v3464
  %v3614 = vunpack.c.h.b16 %v3464
  %v3615 = vunpack.c.l.b16 %v3465
  %v3616 = vunpack.c.h.b16 %v3465
  %v3617 = vunpack.c.l.b16 %v3466
  %v3618 = vunpack.c.h.b16 %v3466
  %v3619 = vunpack.c.l.b16 %v3467
  %v3620 = vunpack.c.h.b16 %v3467
  %v3621 = vunpack.c.l.b16 %v3468
  %v3622 = vunpack.c.h.b16 %v3468
  %v3623 = vunpack.c.l.b16 %v3469
  %v3624 = vunpack.c.h.b16 %v3469
  %v3625 = vunpack.c.l.b16 %v3470
  %v3626 = vunpack.c.h.b16 %v3470
  %v3627 = vunpack.c.l.b16 %v3471
  %v3628 = vunpack.c.h.b16 %v3471
  %v3629 = vunpack.c.l.b16 %v3472
  %v3630 = vunpack.c.h.b16 %v3472
  %v3631 = vunpack.c.l.b16 %v3473
  %v3632 = vunpack.c.h.b16 %v3473
  %v3633 = vunpack.c.l.b16 %v3474
  %v3634 = vunpack.c.h.b16 %v3474
  %v3635 = vunpack.c.l.b16 %v3475
  %v3636 = vunpack.c.h.b16 %v3475
  %v3637 = vunpack.c.l.b16 %v3476
  %v3638 = vunpack.c.h.b16 %v3476
  %v3639 = vunpack.c.l.b16 %v3477
  %v3640 = vunpack.c.h.b16 %v3477
  %v3641 = vpack.c.b16 %v3571, %v3569
  %v3642 = vpack.c.b16 %v3572, %v3570
  %v3643 = vpack.c.b16 %v3575, %v3573
  %v3644 = vpack.c.b16 %v3576, %v3574
  %v3645 = vpack.c.b16 %v3579, %v3577
  %v3646 = vpack.c.b16 %v3580, %v3578
  %v3647 = vpack.c.b16 %v3583, %v3581
  %v3648 = vpack.c.b16 %v3584, %v3582
  %v3649 = vpack.c.b16 %v3587, %v3585
  %v3650 = vpack.c.b16 %v3588, %v3586
  %v3651 = vpack.c.b16 %v3591, %v3589
  %v3652 = vpack.c.b16 %v3592, %v3590
  %v3653 = vpack.c.b16 %v3595, %v3593
  %v3654 = vpack.c.b16 %v3596, %v3594
  %v3655 = vpack.c.b16 %v3599, %v3597
  %v3656 = vpack.c.b16 %v3600, %v3598
  %v3657 = vpack.c.b16 %v3603, %v3601
  %v3658 = vpack.c.b16 %v3604, %v3602
  %v3659 = vpack.c.b16 %v3607, %v3605
  %v3660 = vpack.c.b16 %v3608, %v3606
  %v3661 = vpack.c.b16 %v3611, %v3609
  %v3662 = vpack.c.b16 %v3612, %v3610
  %v3663 = vpack.c.b16 %v3615, %v3613
  %v3664 = vpack.c.b16 %v3616, %v3614
  %v3665 = vpack.c.b16 %v3619, %v3617
  %v3666 = vpack.c.b16 %v3620, %v3618
  %v3667 = vpack.c.b16 %v3623, %v3621
  %v3668 = vpack.c.b16 %v3624, %v3622
  %v3669 = vpack.c.b16 %v3627, %v3625
  %v3670 = vpack.c.b16 %v3628, %v3626
  %v3671 = vpack.c.b16 %v3631, %v3629
  %v3672 = vpack.c.b16 %v3632, %v3630
  %v3673 = vpack.c.b16 %v3635, %v3633
  %v3674 = vpack.c.b16 %v3636, %v3634
  %v3675 = vpack.c.b16 %v3639, %v3637
  %v3676 = vpack.c.b16 %v3640, %v3638
  %v3714 = vsel %vm277, %v3515, 0
  %v3717 = vsel %vm277, %v3518, 0
  %v3720 = vsel %vm277, %v3521, 0
  %v3723 = vsel %vm277, %v3524, 0
  %3725 = vmatprep.subr.bf16.mxu0 %v3642
  %3726 = vmatpush1.bf16.msra.mxu0 %v3641
  %3727 = vmatprep.subr.bf16.mxu0 %v3644
  %3728 = vmatpush1.bf16.msra.mxu0 %v3643
  %3729 = vmatprep.subr.bf16.mxu0 %v3646
  %3730 = vmatpush1.bf16.msra.mxu0 %v3645
  %3731 = vmatprep.subr.bf16.mxu0 %v3648
  %3732 = vmatpush1.bf16.msra.mxu0 %v3647
  %3733 = vmatprep.subr.bf16.mxu0 %v3650
  %3734 = vmatpush1.bf16.msra.mxu0 %v3649
  %3735 = vmatprep.subr.bf16.mxu0 %v3652
  %3736 = vmatpush1.bf16.msra.mxu0 %v3651
  %3737 = vmatprep.subr.bf16.mxu0 %v3654
  %3738 = vmatpush1.bf16.msra.mxu0 %v3653
  %3739 = vmatprep.subr.bf16.mxu0 %v3656
  %3740 = vmatpush1.bf16.msra.mxu0 %v3655
  %3741 = vmatprep.subr.bf16.mxu0 %v3658
  %3742 = vmatpush1.bf16.msra.mxu0 %v3657
  %3743 = vmatprep.subr.bf16.mxu0 %v3660
  %3744 = vmatpush1.bf16.msra.mxu0 %v3659
  %3745 = vmatprep.subr.bf16.mxu0 %v3662
  %3746 = vmatpush1.bf16.msra.mxu0 %v3661
  %3747 = vmatprep.subr.bf16.mxu0 %v3664
  %3748 = vmatpush1.bf16.msra.mxu0 %v3663
  %3749 = vmatprep.subr.bf16.mxu0 %v3666
  %3750 = vmatpush1.bf16.msra.mxu0 %v3665
  %3751 = vmatprep.subr.bf16.mxu0 %v3668
  %3752 = vmatpush1.bf16.msra.mxu0 %v3667
  %3753 = vmatprep.subr.bf16.mxu0 %v3670
  %3754 = vmatpush1.bf16.msra.mxu0 %v3669
  %3755 = vmatprep.subr.bf16.mxu0 %v3672
  %3756 = vmatpush1.bf16.msra.mxu0 %v3671
  %3757 = vmatprep.mubr.bf16.mxu0 %v3514
  %3758 = vmatmul.mubr.bf16.gmra.mrb[0].mxu0 %v3513
  %v3759 = vpop.f32.mrb[0].mxu0
  %v3760 = vadd.f32 0.0, %v3759
  %v3761 = vpop.f32.mrb[0].mxu0
  %v3762 = vadd.f32 0.0, %v3761
  %v3763 = vpop.f32.mrb[0].mxu0
  %v3764 = vadd.f32 0.0, %v3763
  %v3765 = vpop.f32.mrb[0].mxu0
  %v3766 = vadd.f32 0.0, %v3765
  %3767 = vmatprep.mubr.bf16.mxu0 %v3517
  %3768 = vmatmul.mubr.bf16.gmra.mrb[0].mxu0 %v3516
  %v3769 = vpop.f32.mrb[0].mxu0
  %v3770 = vadd.f32 0.0, %v3769
  %v3771 = vpop.f32.mrb[0].mxu0
  %v3772 = vadd.f32 0.0, %v3771
  %v3773 = vpop.f32.mrb[0].mxu0
  %v3774 = vadd.f32 0.0, %v3773
  %v3775 = vpop.f32.mrb[0].mxu0
  %v3776 = vadd.f32 0.0, %v3775
  %3777 = vmatprep.mubr.bf16.mxu0 %v3520
  %3778 = vmatmul.mubr.bf16.gmra.mrb[0].mxu0 %v3519
  %v3779 = vpop.f32.mrb[0].mxu0
  %v3780 = vadd.f32 0.0, %v3779
  %v3781 = vpop.f32.mrb[0].mxu0
  %v3782 = vadd.f32 0.0, %v3781
  %v3783 = vpop.f32.mrb[0].mxu0
  %v3784 = vadd.f32 0.0, %v3783
  %v3785 = vpop.f32.mrb[0].mxu0
  %v3786 = vadd.f32 0.0, %v3785
  %3787 = vmatprep.mubr.bf16.mxu0 %v3523
  %3788 = vmatmul.mubr.bf16.gmra.mrb[0].mxu0 %v3522
  %v3789 = vpop.f32.mrb[0].mxu0
  %v3790 = vadd.f32 0.0, %v3789
  %v3791 = vpop.f32.mrb[0].mxu0
  %v3792 = vadd.f32 0.0, %v3791
  %v3793 = vpop.f32.mrb[0].mxu0
  %v3794 = vpop.f32.mrb[0].mxu0
  %3795 = vdwg.mxu0
  %3796 = vmatprep.subr.bf16.mxu0 %v3674
  %3797 = vmatpush1.bf16.msra.mxu0 %v3673
  %3798 = vmatprep.subr.bf16.mxu0 %v3676
  %3799 = vmatpush1.bf16.msra.mxu0 %v3675
  %3800 = vmatprep.subr.bf16.mxu0 0
  %3801 = vmatpush1.bf16.msra.mxu0 0
  %3802 = vmatprep.subr.bf16.mxu0 0
  %3803 = vmatpush1.bf16.msra.mxu0 0
  %3804 = vmatprep.subr.bf16.mxu0 0
  %3805 = vmatpush1.bf16.msra.mxu0 0
  %3806 = vmatprep.subr.bf16.mxu0 0
  %3807 = vmatpush1.bf16.msra.mxu0 0
  %3808 = vmatprep.subr.bf16.mxu0 0
  %3809 = vmatpush1.bf16.msra.mxu0 0
  %3810 = vmatprep.subr.bf16.mxu0 0
  %3811 = vmatpush1.bf16.msra.mxu0 0
  %3812 = vmatprep.subr.bf16.mxu0 0
  %3813 = vmatpush1.bf16.msra.mxu0 0
  %3814 = vmatprep.subr.bf16.mxu0 0
  %3815 = vmatpush1.bf16.msra.mxu0 0
  %3816 = vmatprep.subr.bf16.mxu0 0
  %3817 = vmatpush1.bf16.msra.mxu0 0
  %3818 = vmatprep.subr.bf16.mxu0 0
  %3819 = vmatpush1.bf16.msra.mxu0 0
  %3820 = vmatprep.subr.bf16.mxu0 0
  %3821 = vmatpush1.bf16.msra.mxu0 0
  %3822 = vmatprep.subr.bf16.mxu0 0
  %3823 = vmatpush1.bf16.msra.mxu0 0
  %3824 = vmatprep.subr.bf16.mxu0 0
  %3825 = vmatpush1.bf16.msra.mxu0 0
  %3826 = vmatprep.subr.bf16.mxu0 0
  %3827 = vmatpush1.bf16.msra.mxu0 0
  %3828 = vmatprep.mubr.bf16.mxu0 0
  %3829 = vmatmul.mubr.bf16.gmra.mrb[0].mxu0 %v3714
  %v3830 = vpop.f32.mrb[0].mxu0
  %v3831 = vadd.f32 %v3760, %v3830
  %v3832 = vpop.f32.mrb[0].mxu0
  %v3833 = vadd.f32 %v3762, %v3832
  %v3834 = vpop.f32.mrb[0].mxu0
  %v3835 = vadd.f32 %v3764, %v3834
  %v3836 = vpop.f32.mrb[0].mxu0
  %v3837 = vadd.f32 %v3766, %v3836
  %3838 = vmatprep.mubr.bf16.mxu0 0
  %3839 = vmatmul.mubr.bf16.gmra.mrb[0].mxu0 %v3717
  %v3840 = vpop.f32.mrb[0].mxu0
  %v3841 = vadd.f32 %v3770, %v3840
  %v3842 = vpop.f32.mrb[0].mxu0
  %v3843 = vadd.f32 %v3772, %v3842
  %v3844 = vpop.f32.mrb[0].mxu0
  %v3845 = vadd.f32 %v3774, %v3844
  %v3846 = vpop.f32.mrb[0].mxu0
  %v3847 = vadd.f32 %v3776, %v3846
  %3848 = vmatprep.mubr.bf16.mxu0 0
  %3849 = vmatmul.mubr.bf16.gmra.mrb[0].mxu0 %v3720
  %v3850 = vpop.f32.mrb[0].mxu0
  %v3851 = vadd.f32 %v3780, %v3850
  %v3852 = vpop.f32.mrb[0].mxu0
  %v3853 = vadd.f32 %v3782, %v3852
  %v3854 = vpop.f32.mrb[0].mxu0
  %v3855 = vadd.f32 %v3784, %v3854
  %v3856 = vpop.f32.mrb[0].mxu0
  %v3857 = vadd.f32 %v3786, %v3856
  %3858 = vmatprep.mubr.bf16.mxu0 0
  %3859 = vmatmul.mubr.bf16.gmra.mrb[0].mxu0 %v3723
  %v3860 = vpop.f32.mrb[0].mxu0
  %v3861 = vadd.f32 %v3790, %v3860
  %v3862 = vpop.f32.mrb[0].mxu0
  %v3863 = vadd.f32 %v3792, %v3862
  %v3864 = vpop.f32.mrb[0].mxu0
  %v3865 = vpop.f32.mrb[0].mxu0
  %3866 = vdwg.mxu0
  %v3867 = vadd.f32 %v3391, %v3831
  %v3868 = vadd.f32 %v3393, %v3833
  %v3869 = vadd.f32 %v3395, %v3835
  %v3870 = vadd.f32 %v3397, %v3837
  %v3871 = vadd.f32 %v3401, %v3841
  %v3872 = vadd.f32 %v3403, %v3843
  %v3873 = vadd.f32 %v3405, %v3845
  %v3874 = vadd.f32 %v3407, %v3847
  %v3875 = vadd.f32 %v3411, %v3851
  %v3876 = vadd.f32 %v3413, %v3853
  %v3877 = vadd.f32 %v3415, %v3855
  %v3878 = vadd.f32 %v3417, %v3857
  %v3879 = vadd.f32 %v3421, %v3861
  %v3880 = vadd.f32 %v3423, %v3863
  %v3881 = vld [vmem:[%s32 + $0xc] sm:$0xff]
  %v3882 = vld [vmem:[%s32 + $0x14] sm:$0xf]
  %v3883 = vld [vmem:[%s32 + $0x18] sm:$0xff]
  %v3884 = vld [vmem:[%s32 + $0x20] sm:$0xf]
  %v3885 = vld [vmem:[%s32 + $0x24] sm:$0xff]
  %v3886 = vld [vmem:[%s32 + $0x2c] sm:$0xf]
  %v3887 = vld [vmem:[%s32 + $0x30] sm:$0xff]
  %v3888 = vld [vmem:[%s32 + $0x38] sm:$0xf]
  %v3889 = vld [vmem:[%s32 + $0x3c] sm:$0xff]
  %v3890 = vld [vmem:[%s32 + $0x44] sm:$0xf]
  %v3891 = vld [vmem:[%s32 + $0x48] sm:$0xff]
  %v3892 = vld [vmem:[%s32 + $0x50] sm:$0xf]
  %v3893 = vld [vmem:[%s32 + $0x54] sm:$0xff]
  %v3894 = vld [vmem:[%s32 + $0x5c] sm:$0xf]
  %s3895 = scalar_lea.vmem %s3, 864
  %v3896 = vld [vmem:[%s3895] sm:$0xff]
  %v3897 = vld [vmem:[%s3895 + $0x8] sm:$0xff]
  %v3898 = vld [vmem:[%s3895 + $0x10] sm:$0xff]
  %v3899 = vld [vmem:[%s3895 + $0x18] sm:$0xff]
  %v3900 = vld [vmem:[%s3895 + $0x20] sm:$0xff]
  %v3901 = vld [vmem:[%s3895 + $0x28] sm:$0xff]
  %v3902 = vld [vmem:[%s3895 + $0x30] sm:$0xff]
  %v3903 = vld [vmem:[%s3895 + $0x38] sm:$0xff]
  %v3904 = vld [vmem:[%s3895 + $0x40] sm:$0xff]
  %v3905 = vld [vmem:[%s3895 + $0x48] sm:$0xff]
  %v3906 = vld [vmem:[%s3895 + $0x50] sm:$0xff]
  %v3907 = vld [vmem:[%s3895 + $0x58] sm:$0xff]
  %v3908 = vld [vmem:[%s3895 + $0x60] sm:$0xff]
  %v3909 = vld [vmem:[%s3895 + $0x68] sm:$0xff]
  %v3910 = vld [vmem:[%s3895 + $0x70] sm:$0xff]
  %v3911 = vld [vmem:[%s3895 + $0x78] sm:$0xff]
  %v3912 = vld [vmem:[%s3895 + $0x80] sm:$0xff]
  %v3913 = vld [vmem:[%s3895 + $0x88] sm:$0xff]
  %v3914 = vld [vmem:[%s3895 + $0x90] sm:$0xff]
  %v3915 = vld [vmem:[%s3895 + $0x98] sm:$0xff]
  %v3916 = vld [vmem:[%s3895 + $0xa0] sm:$0xff]
  %v3917 = vld [vmem:[%s3895 + $0xa8] sm:$0xff]
  %v3918 = vld [vmem:[%s3895 + $0xb0] sm:$0xff]
  %v3919 = vld [vmem:[%s3895 + $0xb8] sm:$0xff]
  %v3920 = vld [vmem:[%s3895 + $0xc0] sm:$0xff]
  %v3921 = vld [vmem:[%s3895 + $0xc8] sm:$0xff]
  %v3922 = vld [vmem:[%s3895 + $0xd0] sm:$0xff]
  %v3923 = vld [vmem:[%s3895 + $0xd8] sm:$0xff]
  %v3924 = vld [vmem:[%s3895 + $0xe0] sm:$0xff]
  %v3925 = vld [vmem:[%s3895 + $0xe8] sm:$0xff]
  %v3926 = vld [vmem:[%s3895 + $0xf0] sm:$0xff]
  %v3927 = vld [vmem:[%s3895 + $0xf8] sm:$0xff]
  %v3928 = vld [vmem:[%s3895 + $0x100] sm:$0xff]
  %v3929 = vld [vmem:[%s3895 + $0x108] sm:$0xff]
  %v3930 = vld [vmem:[%s3895 + $0x110] sm:$0xff]
  %v3931 = vld [vmem:[%s3895 + $0x118] sm:$0xff]
  %v3946 = vunpack.c.l.b16 %v3881
  %v3947 = vunpack.c.h.b16 %v3881
  %v3948 = vunpack.c.l.b16 %v3882
  %v3949 = vunpack.c.l.b16 %v3883
  %v3950 = vunpack.c.h.b16 %v3883
  %v3951 = vunpack.c.l.b16 %v3884
  %v3952 = vunpack.c.l.b16 %v3885
  %v3953 = vunpack.c.h.b16 %v3885
  %v3954 = vunpack.c.l.b16 %v3886
  %v3955 = vunpack.c.l.b16 %v3887
  %v3956 = vunpack.c.h.b16 %v3887
  %v3957 = vunpack.c.l.b16 %v3888
  %v3958 = vunpack.c.l.b16 %v3889
  %v3959 = vunpack.c.h.b16 %v3889
  %v3960 = vunpack.c.l.b16 %v3890
  %v3961 = vunpack.c.l.b16 %v3891
  %v3962 = vunpack.c.h.b16 %v3891
  %v3963 = vunpack.c.l.b16 %v3892
  %v3964 = vunpack.c.l.b16 %v3893
  %v3965 = vunpack.c.h.b16 %v3893
  %v3966 = vunpack.c.l.b16 %v3894
  %v3967 = vpack.c.b16 %v3949, %v3946
  %v3968 = vpack.c.b16 %v3950, %v3947
  %v3969 = vpack.c.b16 %v3951, %v3948
  %v3970 = vpack.c.b16 %v3955, %v3952
  %v3971 = vpack.c.b16 %v3956, %v3953
  %v3972 = vpack.c.b16 %v3957, %v3954
  %v3973 = vpack.c.b16 %v3961, %v3958
  %v3974 = vpack.c.b16 %v3962, %v3959
  %v3975 = vpack.c.b16 %v3963, %v3960
  %v3976 = vpack.c.b16 %v3964, %v3964
  %v3977 = vpack.c.b16 %v3965, %v3965
  %v3978 = vpack.c.b16 %v3966, %v3966
  %v4023 = vunpack.c.l.b16 %v3896
  %v4024 = vunpack.c.h.b16 %v3896
  %v4025 = vunpack.c.l.b16 %v3897
  %v4026 = vunpack.c.h.b16 %v3897
  %v4027 = vunpack.c.l.b16 %v3898
  %v4028 = vunpack.c.h.b16 %v3898
  %v4029 = vunpack.c.l.b16 %v3899
  %v4030 = vunpack.c.h.b16 %v3899
  %v4031 = vunpack.c.l.b16 %v3900
  %v4032 = vunpack.c.h.b16 %v3900
  %v4033 = vunpack.c.l.b16 %v3901
  %v4034 = vunpack.c.h.b16 %v3901
  %v4035 = vunpack.c.l.b16 %v3902
  %v4036 = vunpack.c.h.b16 %v3902
  %v4037 = vunpack.c.l.b16 %v3903
  %v4038 = vunpack.c.h.b16 %v3903
  %v4039 = vunpack.c.l.b16 %v3904
  %v4040 = vunpack.c.h.b16 %v3904
  %v4041 = vunpack.c.l.b16 %v3905
  %v4042 = vunpack.c.h.b16 %v3905
  %v4043 = vunpack.c.l.b16 %v3906
  %v4044 = vunpack.c.h.b16 %v3906
  %v4045 = vunpack.c.l.b16 %v3907
  %v4046 = vunpack.c.h.b16 %v3907
  %v4047 = vunpack.c.l.b16 %v3908
  %v4048 = vunpack.c.h.b16 %v3908
  %v4049 = vunpack.c.l.b16 %v3909
  %v4050 = vunpack.c.h.b16 %v3909
  %v4051 = vunpack.c.l.b16 %v3910
  %v4052 = vunpack.c.h.b16 %v3910
  %v4053 = vunpack.c.l.b16 %v3911
  %v4054 = vunpack.c.h.b16 %v3911
  %v4055 = vunpack.c.l.b16 %v3912
  %v4056 = vunpack.c.h.b16 %v3912
  %v4057 = vunpack.c.l.b16 %v3913
  %v4058 = vunpack.c.h.b16 %v3913
  %v4059 = vunpack.c.l.b16 %v3914
  %v4060 = vunpack.c.h.b16 %v3914
  %v4061 = vunpack.c.l.b16 %v3915
  %v4062 = vunpack.c.h.b16 %v3915
  %v4063 = vunpack.c.l.b16 %v3916
  %v4064 = vunpack.c.h.b16 %v3916
  %v4065 = vunpack.c.l.b16 %v3917
  %v4066 = vunpack.c.h.b16 %v3917
  %v4067 = vunpack.c.l.b16 %v3918
  %v4068 = vunpack.c.h.b16 %v3918
  %v4069 = vunpack.c.l.b16 %v3919
  %v4070 = vunpack.c.h.b16 %v3919
  %v4071 = vunpack.c.l.b16 %v3920
  %v4072 = vunpack.c.h.b16 %v3920
  %v4073 = vunpack.c.l.b16 %v3921
  %v4074 = vunpack.c.h.b16 %v3921
  %v4075 = vunpack.c.l.b16 %v3922
  %v4076 = vunpack.c.h.b16 %v3922
  %v4077 = vunpack.c.l.b16 %v3923
  %v4078 = vunpack.c.h.b16 %v3923
  %v4079 = vunpack.c.l.b16 %v3924
  %v4080 = vunpack.c.h.b16 %v3924
  %v4081 = vunpack.c.l.b16 %v3925
  %v4082 = vunpack.c.h.b16 %v3925
  %v4083 = vunpack.c.l.b16 %v3926
  %v4084 = vunpack.c.h.b16 %v3926
  %v4085 = vunpack.c.l.b16 %v3927
  %v4086 = vunpack.c.h.b16 %v3927
  %v4087 = vunpack.c.l.b16 %v3928
  %v4088 = vunpack.c.h.b16 %v3928
  %v4089 = vunpack.c.l.b16 %v3929
  %v4090 = vunpack.c.h.b16 %v3929
  %v4091 = vunpack.c.l.b16 %v3930
  %v4092 = vunpack.c.h.b16 %v3930
  %v4093 = vunpack.c.l.b16 %v3931
  %v4094 = vunpack.c.h.b16 %v3931
  %v4095 = vpack.c.b16 %v4025, %v4023
  %v4096 = vpack.c.b16 %v4026, %v4024
  %v4097 = vpack.c.b16 %v4029, %v4027
  %v4098 = vpack.c.b16 %v4030, %v4028
  %v4099 = vpack.c.b16 %v4033, %v4031
  %v4100 = vpack.c.b16 %v4034, %v4032
  %v4101 = vpack.c.b16 %v4037, %v4035
  %v4102 = vpack.c.b16 %v4038, %v4036
  %v4103 = vpack.c.b16 %v4041, %v4039
  %v4104 = vpack.c.b16 %v4042, %v4040
  %v4105 = vpack.c.b16 %v4045, %v4043
  %v4106 = vpack.c.b16 %v4046, %v4044
  %v4107 = vpack.c.b16 %v4049, %v4047
  %v4108 = vpack.c.b16 %v4050, %v4048
  %v4109 = vpack.c.b16 %v4053, %v4051
  %v4110 = vpack.c.b16 %v4054, %v4052
  %v4111 = vpack.c.b16 %v4057, %v4055
  %v4112 = vpack.c.b16 %v4058, %v4056
  %v4113 = vpack.c.b16 %v4061, %v4059
  %v4114 = vpack.c.b16 %v4062, %v4060
  %v4115 = vpack.c.b16 %v4065, %v4063
  %v4116 = vpack.c.b16 %v4066, %v4064
  %v4117 = vpack.c.b16 %v4069, %v4067
  %v4118 = vpack.c.b16 %v4070, %v4068
  %v4119 = vpack.c.b16 %v4073, %v4071
  %v4120 = vpack.c.b16 %v4074, %v4072
  %v4121 = vpack.c.b16 %v4077, %v4075
  %v4122 = vpack.c.b16 %v4078, %v4076
  %v4123 = vpack.c.b16 %v4081, %v4079
  %v4124 = vpack.c.b16 %v4082, %v4080
  %v4125 = vpack.c.b16 %v4085, %v4083
  %v4126 = vpack.c.b16 %v4086, %v4084
  %v4127 = vpack.c.b16 %v4089, %v4087
  %v4128 = vpack.c.b16 %v4090, %v4088
  %v4129 = vpack.c.b16 %v4093, %v4091
  %v4130 = vpack.c.b16 %v4094, %v4092
  %v4168 = vsel %vm277, %v3969, 0
  %v4171 = vsel %vm277, %v3972, 0
  %v4174 = vsel %vm277, %v3975, 0
  %v4177 = vsel %vm277, %v3978, 0
  %4179 = vmatprep.subr.bf16.mxu0 %v4096
  %4180 = vmatpush1.bf16.msra.mxu0 %v4095
  %4181 = vmatprep.subr.bf16.mxu0 %v4098
  %4182 = vmatpush1.bf16.msra.mxu0 %v4097
  %4183 = vmatprep.subr.bf16.mxu0 %v4100
  %4184 = vmatpush1.bf16.msra.mxu0 %v4099
  %4185 = vmatprep.subr.bf16.mxu0 %v4102
  %4186 = vmatpush1.bf16.msra.mxu0 %v4101
  %4187 = vmatprep.subr.bf16.mxu0 %v4104
  %4188 = vmatpush1.bf16.msra.mxu0 %v4103
  %4189 = vmatprep.subr.bf16.mxu0 %v4106
  %4190 = vmatpush1.bf16.msra.mxu0 %v4105
  %4191 = vmatprep.subr.bf16.mxu0 %v4108
  %4192 = vmatpush1.bf16.msra.mxu0 %v4107
  %4193 = vmatprep.subr.bf16.mxu0 %v4110
  %4194 = vmatpush1.bf16.msra.mxu0 %v4109
  %4195 = vmatprep.subr.bf16.mxu0 %v4112
  %4196 = vmatpush1.bf16.msra.mxu0 %v4111
  %4197 = vmatprep.subr.bf16.mxu0 %v4114
  %4198 = vmatpush1.bf16.msra.mxu0 %v4113
  %4199 = vmatprep.subr.bf16.mxu0 %v4116
  %4200 = vmatpush1.bf16.msra.mxu0 %v4115
  %4201 = vmatprep.subr.bf16.mxu0 %v4118
  %4202 = vmatpush1.bf16.msra.mxu0 %v4117
  %4203 = vmatprep.subr.bf16.mxu0 %v4120
  %4204 = vmatpush1.bf16.msra.mxu0 %v4119
  %4205 = vmatprep.subr.bf16.mxu0 %v4122
  %4206 = vmatpush1.bf16.msra.mxu0 %v4121
  %4207 = vmatprep.subr.bf16.mxu0 %v4124
  %4208 = vmatpush1.bf16.msra.mxu0 %v4123
  %4209 = vmatprep.subr.bf16.mxu0 %v4126
  %4210 = vmatpush1.bf16.msra.mxu0 %v4125
  %4211 = vmatprep.mubr.bf16.mxu0 %v3968
  %4212 = vmatmul.mubr.bf16.gmra.mrb[0].mxu0 %v3967
  %v4213 = vpop.f32.mrb[0].mxu0
  %v4214 = vadd.f32 0.0, %v4213
  %v4215 = vpop.f32.mrb[0].mxu0
  %v4216 = vadd.f32 0.0, %v4215
  %v4217 = vpop.f32.mrb[0].mxu0
  %v4218 = vadd.f32 0.0, %v4217
  %v4219 = vpop.f32.mrb[0].mxu0
  %v4220 = vadd.f32 0.0, %v4219
  %4221 = vmatprep.mubr.bf16.mxu0 %v3971
  %4222 = vmatmul.mubr.bf16.gmra.mrb[0].mxu0 %v3970
  %v4223 = vpop.f32.mrb[0].mxu0
  %v4224 = vadd.f32 0.0, %v4223
  %v4225 = vpop.f32.mrb[0].mxu0
  %v4226 = vadd.f32 0.0, %v4225
  %v4227 = vpop.f32.mrb[0].mxu0
  %v4228 = vadd.f32 0.0, %v4227
  %v4229 = vpop.f32.mrb[0].mxu0
  %v4230 = vadd.f32 0.0, %v4229
  %4231 = vmatprep.mubr.bf16.mxu0 %v3974
  %4232 = vmatmul.mubr.bf16.gmra.mrb[0].mxu0 %v3973
  %v4233 = vpop.f32.mrb[0].mxu0
  %v4234 = vadd.f32 0.0, %v4233
  %v4235 = vpop.f32.mrb[0].mxu0
  %v4236 = vadd.f32 0.0, %v4235
  %v4237 = vpop.f32.mrb[0].mxu0
  %v4238 = vadd.f32 0.0, %v4237
  %v4239 = vpop.f32.mrb[0].mxu0
  %v4240 = vadd.f32 0.0, %v4239
  %4241 = vmatprep.mubr.bf16.mxu0 %v3977
  %4242 = vmatmul.mubr.bf16.gmra.mrb[0].mxu0 %v3976
  %v4243 = vpop.f32.mrb[0].mxu0
  %v4244 = vadd.f32 0.0, %v4243
  %v4245 = vpop.f32.mrb[0].mxu0
  %v4246 = vadd.f32 0.0, %v4245
  %v4247 = vpop.f32.mrb[0].mxu0
  %v4248 = vpop.f32.mrb[0].mxu0
  %4249 = vdwg.mxu0
  %4250 = vmatprep.subr.bf16.mxu0 %v4128
  %4251 = vmatpush1.bf16.msra.mxu0 %v4127
  %4252 = vmatprep.subr.bf16.mxu0 %v4130
  %4253 = vmatpush1.bf16.msra.mxu0 %v4129
  %4254 = vmatprep.subr.bf16.mxu0 0
  %4255 = vmatpush1.bf16.msra.mxu0 0
  %4256 = vmatprep.subr.bf16.mxu0 0
  %4257 = vmatpush1.bf16.msra.mxu0 0
  %4258 = vmatprep.subr.bf16.mxu0 0
  %4259 = vmatpush1.bf16.msra.mxu0 0
  %4260 = vmatprep.subr.bf16.mxu0 0
  %4261 = vmatpush1.bf16.msra.mxu0 0
  %4262 = vmatprep.subr.bf16.mxu0 0
  %4263 = vmatpush1.bf16.msra.mxu0 0
  %4264 = vmatprep.subr.bf16.mxu0 0
  %4265 = vmatpush1.bf16.msra.mxu0 0
  %4266 = vmatprep.subr.bf16.mxu0 0
  %4267 = vmatpush1.bf16.msra.mxu0 0
  %4268 = vmatprep.subr.bf16.mxu0 0
  %4269 = vmatpush1.bf16.msra.mxu0 0
  %4270 = vmatprep.subr.bf16.mxu0 0
  %4271 = vmatpush1.bf16.msra.mxu0 0
  %4272 = vmatprep.subr.bf16.mxu0 0
  %4273 = vmatpush1.bf16.msra.mxu0 0
  %4274 = vmatprep.subr.bf16.mxu0 0
  %4275 = vmatpush1.bf16.msra.mxu0 0
  %4276 = vmatprep.subr.bf16.mxu0 0
  %4277 = vmatpush1.bf16.msra.mxu0 0
  %4278 = vmatprep.subr.bf16.mxu0 0
  %4279 = vmatpush1.bf16.msra.mxu0 0
  %4280 = vmatprep.subr.bf16.mxu0 0
  %4281 = vmatpush1.bf16.msra.mxu0 0
  %4282 = vmatprep.mubr.bf16.mxu0 0
  %4283 = vmatmul.mubr.bf16.gmra.mrb[0].mxu0 %v4168
  %v4284 = vpop.f32.mrb[0].mxu0
  %v4285 = vadd.f32 %v4214, %v4284
  %v4286 = vpop.f32.mrb[0].mxu0
  %v4287 = vadd.f32 %v4216, %v4286
  %v4288 = vpop.f32.mrb[0].mxu0
  %v4289 = vadd.f32 %v4218, %v4288
  %v4290 = vpop.f32.mrb[0].mxu0
  %v4291 = vadd.f32 %v4220, %v4290
  %4292 = vmatprep.mubr.bf16.mxu0 0
  %4293 = vmatmul.mubr.bf16.gmra.mrb[0].mxu0 %v4171
  %v4294 = vpop.f32.mrb[0].mxu0
  %v4295 = vadd.f32 %v4224, %v4294
  %v4296 = vpop.f32.mrb[0].mxu0
  %v4297 = vadd.f32 %v4226, %v4296
  %v4298 = vpop.f32.mrb[0].mxu0
  %v4299 = vadd.f32 %v4228, %v4298
  %v4300 = vpop.f32.mrb[0].mxu0
  %v4301 = vadd.f32 %v4230, %v4300
  %4302 = vmatprep.mubr.bf16.mxu0 0
  %4303 = vmatmul.mubr.bf16.gmra.mrb[0].mxu0 %v4174
  %v4304 = vpop.f32.mrb[0].mxu0
  %v4305 = vadd.f32 %v4234, %v4304
  %v4306 = vpop.f32.mrb[0].mxu0
  %v4307 = vadd.f32 %v4236, %v4306
  %v4308 = vpop.f32.mrb[0].mxu0
  %v4309 = vadd.f32 %v4238, %v4308
  %v4310 = vpop.f32.mrb[0].mxu0
  %v4311 = vadd.f32 %v4240, %v4310
  %4312 = vmatprep.mubr.bf16.mxu0 0
  %4313 = vmatmul.mubr.bf16.gmra.mrb[0].mxu0 %v4177
  %v4314 = vpop.f32.mrb[0].mxu0
  %v4315 = vadd.f32 %v4244, %v4314
  %v4316 = vpop.f32.mrb[0].mxu0
  %v4317 = vadd.f32 %v4246, %v4316
  %v4318 = vpop.f32.mrb[0].mxu0
  %v4319 = vpop.f32.mrb[0].mxu0
  %4320 = vdwg.mxu0
  %v4321 = vadd.f32 %v3867, %v4285
  %v4322 = vadd.f32 %v3868, %v4287
  %v4323 = vadd.f32 %v3869, %v4289
  %v4324 = vadd.f32 %v3870, %v4291
  %v4325 = vadd.f32 %v3871, %v4295
  %v4326 = vadd.f32 %v3872, %v4297
  %v4327 = vadd.f32 %v3873, %v4299
  %v4328 = vadd.f32 %v3874, %v4301
  %v4329 = vadd.f32 %v3875, %v4305
  %v4330 = vadd.f32 %v3876, %v4307
  %v4331 = vadd.f32 %v3877, %v4309
  %v4332 = vadd.f32 %v3878, %v4311
  %v4333 = vadd.f32 %v3879, %v4315
  %v4334 = vadd.f32 %v3880, %v4317
  %v4335 = vld [vmem:[#allocation2 + $0x18] sm:$0xff]
  %v4336 = vld [vmem:[#allocation2 + $0x20] sm:$0xf]
  %v4337 = vld [vmem:[#allocation2 + $0x24] sm:$0xff]
  %v4338 = vld [vmem:[#allocation2 + $0x2c] sm:$0xf]
  %v4339 = vld [vmem:[#allocation2 + $0x30] sm:$0xff]
  %v4340 = vld [vmem:[#allocation2 + $0x38] sm:$0xf]
  %v4341 = vld [vmem:[#allocation2 + $0x3c] sm:$0xff]
  %v4342 = vld [vmem:[#allocation2 + $0x44] sm:$0xf]
  %v4343 = vld [vmem:[#allocation2 + $0x48] sm:$0xff]
  %v4344 = vld [vmem:[#allocation2 + $0x50] sm:$0xf]
  %v4345 = vld [vmem:[#allocation2 + $0x54] sm:$0xff]
  %v4346 = vld [vmem:[#allocation2 + $0x5c] sm:$0xf]
  %v4347 = vld [vmem:[#allocation2 + $0x60] sm:$0xff]
  %v4348 = vld [vmem:[#allocation2 + $0x68] sm:$0xf]
  %s4349 = scalar_lea.vmem %s3, 1152
  %v4350 = vld [vmem:[%s4349] sm:$0xff]
  %v4351 = vld [vmem:[%s4349 + $0x8] sm:$0xff]
  %v4352 = vld [vmem:[%s4349 + $0x10] sm:$0xff]
  %v4353 = vld [vmem:[%s4349 + $0x18] sm:$0xff]
  %v4354 = vld [vmem:[%s4349 + $0x20] sm:$0xff]
  %v4355 = vld [vmem:[%s4349 + $0x28] sm:$0xff]
  %v4356 = vld [vmem:[%s4349 + $0x30] sm:$0xff]
  %v4357 = vld [vmem:[%s4349 + $0x38] sm:$0xff]
  %v4358 = vld [vmem:[%s4349 + $0x40] sm:$0xff]
  %v4359 = vld [vmem:[%s4349 + $0x48] sm:$0xff]
  %v4360 = vld [vmem:[%s4349 + $0x50] sm:$0xff]
  %v4361 = vld [vmem:[%s4349 + $0x58] sm:$0xff]
  %v4362 = vld [vmem:[%s4349 + $0x60] sm:$0xff]
  %v4363 = vld [vmem:[%s4349 + $0x68] sm:$0xff]
  %v4364 = vld [vmem:[%s4349 + $0x70] sm:$0xff]
  %v4365 = vld [vmem:[%s4349 + $0x78] sm:$0xff]
  %v4366 = vld [vmem:[%s4349 + $0x80] sm:$0xff]
  %v4367 = vld [vmem:[%s4349 + $0x88] sm:$0xff]
  %v4368 = vld [vmem:[%s4349 + $0x90] sm:$0xff]
  %v4369 = vld [vmem:[%s4349 + $0x98] sm:$0xff]
  %v4370 = vld [vmem:[%s4349 + $0xa0] sm:$0xff]
  %v4371 = vld [vmem:[%s4349 + $0xa8] sm:$0xff]
  %v4372 = vld [vmem:[%s4349 + $0xb0] sm:$0xff]
  %v4373 = vld [vmem:[%s4349 + $0xb8] sm:$0xff]
  %v4374 = vld [vmem:[%s4349 + $0xc0] sm:$0xff]
  %v4375 = vld [vmem:[%s4349 + $0xc8] sm:$0xff]
  %v4376 = vld [vmem:[%s4349 + $0xd0] sm:$0xff]
  %v4377 = vld [vmem:[%s4349 + $0xd8] sm:$0xff]
  %v4378 = vld [vmem:[%s4349 + $0xe0] sm:$0xff]
  %v4379 = vld [vmem:[%s4349 + $0xe8] sm:$0xff]
  %v4380 = vld [vmem:[%s4349 + $0xf0] sm:$0xff]
  %v4381 = vld [vmem:[%s4349 + $0xf8] sm:$0xff]
  %v4382 = vld [vmem:[%s4349 + $0x100] sm:$0xff]
  %v4383 = vld [vmem:[%s4349 + $0x108] sm:$0xff]
  %v4384 = vld [vmem:[%s4349 + $0x110] sm:$0xff]
  %v4385 = vld [vmem:[%s4349 + $0x118] sm:$0xff]
  %v4400 = vunpack.c.l.b16 %v4335
  %v4401 = vunpack.c.h.b16 %v4335
  %v4402 = vunpack.c.l.b16 %v4336
  %v4403 = vunpack.c.l.b16 %v4337
  %v4404 = vunpack.c.h.b16 %v4337
  %v4405 = vunpack.c.l.b16 %v4338
  %v4406 = vunpack.c.l.b16 %v4339
  %v4407 = vunpack.c.h.b16 %v4339
  %v4408 = vunpack.c.l.b16 %v4340
  %v4409 = vunpack.c.l.b16 %v4341
  %v4410 = vunpack.c.h.b16 %v4341
  %v4411 = vunpack.c.l.b16 %v4342
  %v4412 = vunpack.c.l.b16 %v4343
  %v4413 = vunpack.c.h.b16 %v4343
  %v4414 = vunpack.c.l.b16 %v4344
  %v4415 = vunpack.c.l.b16 %v4345
  %v4416 = vunpack.c.h.b16 %v4345
  %v4417 = vunpack.c.l.b16 %v4346
  %v4418 = vunpack.c.l.b16 %v4347
  %v4419 = vunpack.c.h.b16 %v4347
  %v4420 = vunpack.c.l.b16 %v4348
  %v4421 = vpack.c.b16 %v4403, %v4400
  %v4422 = vpack.c.b16 %v4404, %v4401
  %v4423 = vpack.c.b16 %v4405, %v4402
  %v4424 = vpack.c.b16 %v4409, %v4406
  %v4425 = vpack.c.b16 %v4410, %v4407
  %v4426 = vpack.c.b16 %v4411, %v4408
  %v4427 = vpack.c.b16 %v4415, %v4412
  %v4428 = vpack.c.b16 %v4416, %v4413
  %v4429 = vpack.c.b16 %v4417, %v4414
  %v4430 = vpack.c.b16 %v4418, %v4418
  %v4431 = vpack.c.b16 %v4419, %v4419
  %v4432 = vpack.c.b16 %v4420, %v4420
  %v4477 = vunpack.c.l.b16 %v4350
  %v4478 = vunpack.c.h.b16 %v4350
  %v4479 = vunpack.c.l.b16 %v4351
  %v4480 = vunpack.c.h.b16 %v4351
  %v4481 = vunpack.c.l.b16 %v4352
  %v4482 = vunpack.c.h.b16 %v4352
  %v4483 = vunpack.c.l.b16 %v4353
  %v4484 = vunpack.c.h.b16 %v4353
  %v4485 = vunpack.c.l.b16 %v4354
  %v4486 = vunpack.c.h.b16 %v4354
  %v4487 = vunpack.c.l.b16 %v4355
  %v4488 = vunpack.c.h.b16 %v4355
  %v4489 = vunpack.c.l.b16 %v4356
  %v4490 = vunpack.c.h.b16 %v4356
  %v4491 = vunpack.c.l.b16 %v4357
  %v4492 = vunpack.c.h.b16 %v4357
  %v4493 = vunpack.c.l.b16 %v4358
  %v4494 = vunpack.c.h.b16 %v4358
  %v4495 = vunpack.c.l.b16 %v4359
  %v4496 = vunpack.c.h.b16 %v4359
  %v4497 = vunpack.c.l.b16 %v4360
  %v4498 = vunpack.c.h.b16 %v4360
  %v4499 = vunpack.c.l.b16 %v4361
  %v4500 = vunpack.c.h.b16 %v4361
  %v4501 = vunpack.c.l.b16 %v4362
  %v4502 = vunpack.c.h.b16 %v4362
  %v4503 = vunpack.c.l.b16 %v4363
  %v4504 = vunpack.c.h.b16 %v4363
  %v4505 = vunpack.c.l.b16 %v4364
  %v4506 = vunpack.c.h.b16 %v4364
  %v4507 = vunpack.c.l.b16 %v4365
  %v4508 = vunpack.c.h.b16 %v4365
  %v4509 = vunpack.c.l.b16 %v4366
  %v4510 = vunpack.c.h.b16 %v4366
  %v4511 = vunpack.c.l.b16 %v4367
  %v4512 = vunpack.c.h.b16 %v4367
  %v4513 = vunpack.c.l.b16 %v4368
  %v4514 = vunpack.c.h.b16 %v4368
  %v4515 = vunpack.c.l.b16 %v4369
  %v4516 = vunpack.c.h.b16 %v4369
  %v4517 = vunpack.c.l.b16 %v4370
  %v4518 = vunpack.c.h.b16 %v4370
  %v4519 = vunpack.c.l.b16 %v4371
  %v4520 = vunpack.c.h.b16 %v4371
  %v4521 = vunpack.c.l.b16 %v4372
  %v4522 = vunpack.c.h.b16 %v4372
  %v4523 = vunpack.c.l.b16 %v4373
  %v4524 = vunpack.c.h.b16 %v4373
  %v4525 = vunpack.c.l.b16 %v4374
  %v4526 = vunpack.c.h.b16 %v4374
  %v4527 = vunpack.c.l.b16 %v4375
  %v4528 = vunpack.c.h.b16 %v4375
  %v4529 = vunpack.c.l.b16 %v4376
  %v4530 = vunpack.c.h.b16 %v4376
  %v4531 = vunpack.c.l.b16 %v4377
  %v4532 = vunpack.c.h.b16 %v4377
  %v4533 = vunpack.c.l.b16 %v4378
  %v4534 = vunpack.c.h.b16 %v4378
  %v4535 = vunpack.c.l.b16 %v4379
  %v4536 = vunpack.c.h.b16 %v4379
  %v4537 = vunpack.c.l.b16 %v4380
  %v4538 = vunpack.c.h.b16 %v4380
  %v4539 = vunpack.c.l.b16 %v4381
  %v4540 = vunpack.c.h.b16 %v4381
  %v4541 = vunpack.c.l.b16 %v4382
  %v4542 = vunpack.c.h.b16 %v4382
  %v4543 = vunpack.c.l.b16 %v4383
  %v4544 = vunpack.c.h.b16 %v4383
  %v4545 = vunpack.c.l.b16 %v4384
  %v4546 = vunpack.c.h.b16 %v4384
  %v4547 = vunpack.c.l.b16 %v4385
  %v4548 = vunpack.c.h.b16 %v4385
  %v4549 = vpack.c.b16 %v4479, %v4477
  %v4550 = vpack.c.b16 %v4480, %v4478
  %v4551 = vpack.c.b16 %v4483, %v4481
  %v4552 = vpack.c.b16 %v4484, %v4482
  %v4553 = vpack.c.b16 %v4487, %v4485
  %v4554 = vpack.c.b16 %v4488, %v4486
  %v4555 = vpack.c.b16 %v4491, %v4489
  %v4556 = vpack.c.b16 %v4492, %v4490
  %v4557 = vpack.c.b16 %v4495, %v4493
  %v4558 = vpack.c.b16 %v4496, %v4494
  %v4559 = vpack.c.b16 %v4499, %v4497
  %v4560 = vpack.c.b16 %v4500, %v4498
  %v4561 = vpack.c.b16 %v4503, %v4501
  %v4562 = vpack.c.b16 %v4504, %v4502
  %v4563 = vpack.c.b16 %v4507, %v4505
  %v4564 = vpack.c.b16 %v4508, %v4506
  %v4565 = vpack.c.b16 %v4511, %v4509
  %v4566 = vpack.c.b16 %v4512, %v4510
  %v4567 = vpack.c.b16 %v4515, %v4513
  %v4568 = vpack.c.b16 %v4516, %v4514
  %v4569 = vpack.c.b16 %v4519, %v4517
  %v4570 = vpack.c.b16 %v4520, %v4518
  %v4571 = vpack.c.b16 %v4523, %v4521
  %v4572 = vpack.c.b16 %v4524, %v4522
  %v4573 = vpack.c.b16 %v4527, %v4525
  %v4574 = vpack.c.b16 %v4528, %v4526
  %v4575 = vpack.c.b16 %v4531, %v4529
  %v4576 = vpack.c.b16 %v4532, %v4530
  %v4577 = vpack.c.b16 %v4535, %v4533
  %v4578 = vpack.c.b16 %v4536, %v4534
  %v4579 = vpack.c.b16 %v4539, %v4537
  %v4580 = vpack.c.b16 %v4540, %v4538
  %v4581 = vpack.c.b16 %v4543, %v4541
  %v4582 = vpack.c.b16 %v4544, %v4542
  %v4583 = vpack.c.b16 %v4547, %v4545
  %v4584 = vpack.c.b16 %v4548, %v4546
  %v4622 = vsel %vm277, %v4423, 0
  %v4625 = vsel %vm277, %v4426, 0
  %v4628 = vsel %vm277, %v4429, 0
  %v4631 = vsel %vm277, %v4432, 0
  %4633 = vmatprep.subr.bf16.mxu0 %v4550
  %4634 = vmatpush1.bf16.msra.mxu0 %v4549
  %4635 = vmatprep.subr.bf16.mxu0 %v4552
  %4636 = vmatpush1.bf16.msra.mxu0 %v4551
  %4637 = vmatprep.subr.bf16.mxu0 %v4554
  %4638 = vmatpush1.bf16.msra.mxu0 %v4553
  %4639 = vmatprep.subr.bf16.mxu0 %v4556
  %4640 = vmatpush1.bf16.msra.mxu0 %v4555
  %4641 = vmatprep.subr.bf16.mxu0 %v4558
  %4642 = vmatpush1.bf16.msra.mxu0 %v4557
  %4643 = vmatprep.subr.bf16.mxu0 %v4560
  %4644 = vmatpush1.bf16.msra.mxu0 %v4559
  %4645 = vmatprep.subr.bf16.mxu0 %v4562
  %4646 = vmatpush1.bf16.msra.mxu0 %v4561
  %4647 = vmatprep.subr.bf16.mxu0 %v4564
  %4648 = vmatpush1.bf16.msra.mxu0 %v4563
  %4649 = vmatprep.subr.bf16.mxu0 %v4566
  %4650 = vmatpush1.bf16.msra.mxu0 %v4565
  %4651 = vmatprep.subr.bf16.mxu0 %v4568
  %4652 = vmatpush1.bf16.msra.mxu0 %v4567
  %4653 = vmatprep.subr.bf16.mxu0 %v4570
  %4654 = vmatpush1.bf16.msra.mxu0 %v4569
  %4655 = vmatprep.subr.bf16.mxu0 %v4572
  %4656 = vmatpush1.bf16.msra.mxu0 %v4571
  %4657 = vmatprep.subr.bf16.mxu0 %v4574
  %4658 = vmatpush1.bf16.msra.mxu0 %v4573
  %4659 = vmatprep.subr.bf16.mxu0 %v4576
  %4660 = vmatpush1.bf16.msra.mxu0 %v4575
  %4661 = vmatprep.subr.bf16.mxu0 %v4578
  %4662 = vmatpush1.bf16.msra.mxu0 %v4577
  %4663 = vmatprep.subr.bf16.mxu0 %v4580
  %4664 = vmatpush1.bf16.msra.mxu0 %v4579
  %4665 = vmatprep.mubr.bf16.mxu0 %v4422
  %4666 = vmatmul.mubr.bf16.gmra.mrb[0].mxu0 %v4421
  %v4667 = vpop.f32.mrb[0].mxu0
  %v4668 = vadd.f32 0.0, %v4667
  %v4669 = vpop.f32.mrb[0].mxu0
  %v4670 = vadd.f32 0.0, %v4669
  %v4671 = vpop.f32.mrb[0].mxu0
  %v4672 = vadd.f32 0.0, %v4671
  %v4673 = vpop.f32.mrb[0].mxu0
  %v4674 = vadd.f32 0.0, %v4673
  %4675 = vmatprep.mubr.bf16.mxu0 %v4425
  %4676 = vmatmul.mubr.bf16.gmra.mrb[0].mxu0 %v4424
  %v4677 = vpop.f32.mrb[0].mxu0
  %v4678 = vadd.f32 0.0, %v4677
  %v4679 = vpop.f32.mrb[0].mxu0
  %v4680 = vadd.f32 0.0, %v4679
  %v4681 = vpop.f32.mrb[0].mxu0
  %v4682 = vadd.f32 0.0, %v4681
  %v4683 = vpop.f32.mrb[0].mxu0
  %v4684 = vadd.f32 0.0, %v4683
  %4685 = vmatprep.mubr.bf16.mxu0 %v4428
  %4686 = vmatmul.mubr.bf16.gmra.mrb[0].mxu0 %v4427
  %v4687 = vpop.f32.mrb[0].mxu0
  %v4688 = vadd.f32 0.0, %v4687
  %v4689 = vpop.f32.mrb[0].mxu0
  %v4690 = vadd.f32 0.0, %v4689
  %v4691 = vpop.f32.mrb[0].mxu0
  %v4692 = vadd.f32 0.0, %v4691
  %v4693 = vpop.f32.mrb[0].mxu0
  %v4694 = vadd.f32 0.0, %v4693
  %4695 = vmatprep.mubr.bf16.mxu0 %v4431
  %4696 = vmatmul.mubr.bf16.gmra.mrb[0].mxu0 %v4430
  %v4697 = vpop.f32.mrb[0].mxu0
  %v4698 = vadd.f32 0.0, %v4697
  %v4699 = vpop.f32.mrb[0].mxu0
  %v4700 = vadd.f32 0.0, %v4699
  %v4701 = vpop.f32.mrb[0].mxu0
  %v4702 = vpop.f32.mrb[0].mxu0
  %4703 = vdwg.mxu0
  %4704 = vmatprep.subr.bf16.mxu0 %v4582
  %4705 = vmatpush1.bf16.msra.mxu0 %v4581
  %4706 = vmatprep.subr.bf16.mxu0 %v4584
  %4707 = vmatpush1.bf16.msra.mxu0 %v4583
  %4708 = vmatprep.subr.bf16.mxu0 0
  %4709 = vmatpush1.bf16.msra.mxu0 0
  %4710 = vmatprep.subr.bf16.mxu0 0
  %4711 = vmatpush1.bf16.msra.mxu0 0
  %4712 = vmatprep.subr.bf16.mxu0 0
  %4713 = vmatpush1.bf16.msra.mxu0 0
  %4714 = vmatprep.subr.bf16.mxu0 0
  %4715 = vmatpush1.bf16.msra.mxu0 0
  %4716 = vmatprep.subr.bf16.mxu0 0
  %4717 = vmatpush1.bf16.msra.mxu0 0
  %4718 = vmatprep.subr.bf16.mxu0 0
  %4719 = vmatpush1.bf16.msra.mxu0 0
  %4720 = vmatprep.subr.bf16.mxu0 0
  %4721 = vmatpush1.bf16.msra.mxu0 0
  %4722 = vmatprep.subr.bf16.mxu0 0
  %4723 = vmatpush1.bf16.msra.mxu0 0
  %4724 = vmatprep.subr.bf16.mxu0 0
  %4725 = vmatpush1.bf16.msra.mxu0 0
  %4726 = vmatprep.subr.bf16.mxu0 0
  %4727 = vmatpush1.bf16.msra.mxu0 0
  %4728 = vmatprep.subr.bf16.mxu0 0
  %4729 = vmatpush1.bf16.msra.mxu0 0
  %4730 = vmatprep.subr.bf16.mxu0 0
  %4731 = vmatpush1.bf16.msra.mxu0 0
  %4732 = vmatprep.subr.bf16.mxu0 0
  %4733 = vmatpush1.bf16.msra.mxu0 0
  %4734 = vmatprep.subr.bf16.mxu0 0
  %4735 = vmatpush1.bf16.msra.mxu0 0
  %4736 = vmatprep.mubr.bf16.mxu0 0
  %4737 = vmatmul.mubr.bf16.gmra.mrb[0].mxu0 %v4622
  %v4738 = vpop.f32.mrb[0].mxu0
  %v4739 = vadd.f32 %v4668, %v4738
  %v4740 = vpop.f32.mrb[0].mxu0
  %v4741 = vadd.f32 %v4670, %v4740
  %v4742 = vpop.f32.mrb[0].mxu0
  %v4743 = vadd.f32 %v4672, %v4742
  %v4744 = vpop.f32.mrb[0].mxu0
  %v4745 = vadd.f32 %v4674, %v4744
  %4746 = vmatprep.mubr.bf16.mxu0 0
  %4747 = vmatmul.mubr.bf16.gmra.mrb[0].mxu0 %v4625
  %v4748 = vpop.f32.mrb[0].mxu0
  %v4749 = vadd.f32 %v4678, %v4748
  %v4750 = vpop.f32.mrb[0].mxu0
  %v4751 = vadd.f32 %v4680, %v4750
  %v4752 = vpop.f32.mrb[0].mxu0
  %v4753 = vadd.f32 %v4682, %v4752
  %v4754 = vpop.f32.mrb[0].mxu0
  %v4755 = vadd.f32 %v4684, %v4754
  %4756 = vmatprep.mubr.bf16.mxu0 0
  %4757 = vmatmul.mubr.bf16.gmra.mrb[0].mxu0 %v4628
  %v4758 = vpop.f32.mrb[0].mxu0
  %v4759 = vadd.f32 %v4688, %v4758
  %v4760 = vpop.f32.mrb[0].mxu0
  %v4761 = vadd.f32 %v4690, %v4760
  %v4762 = vpop.f32.mrb[0].mxu0
  %v4763 = vadd.f32 %v4692, %v4762
  %v4764 = vpop.f32.mrb[0].mxu0
  %v4765 = vadd.f32 %v4694, %v4764
  %4766 = vmatprep.mubr.bf16.mxu0 0
  %4767 = vmatmul.mubr.bf16.gmra.mrb[0].mxu0 %v4631
  %v4768 = vpop.f32.mrb[0].mxu0
  %v4769 = vadd.f32 %v4698, %v4768
  %v4770 = vpop.f32.mrb[0].mxu0
  %v4771 = vadd.f32 %v4700, %v4770
  %v4772 = vpop.f32.mrb[0].mxu0
  %v4773 = vpop.f32.mrb[0].mxu0
  %4774 = vdwg.mxu0
  %v4775 = vadd.f32 %v4321, %v4739
  %v4776 = vadd.f32 %v4322, %v4741
  %v4777 = vadd.f32 %v4323, %v4743
  %v4778 = vadd.f32 %v4324, %v4745
  %v4779 = vadd.f32 %v4325, %v4749
  %v4780 = vadd.f32 %v4326, %v4751
  %v4781 = vadd.f32 %v4327, %v4753
  %v4782 = vadd.f32 %v4328, %v4755
  %v4783 = vadd.f32 %v4329, %v4759
  %v4784 = vadd.f32 %v4330, %v4761
  %v4785 = vadd.f32 %v4331, %v4763
  %v4786 = vadd.f32 %v4332, %v4765
  %v4787 = vadd.f32 %v4333, %v4769
  %v4788 = vadd.f32 %v4334, %v4771
  %4789 = vst [vmem:[#allocation3] sm:$0xff] %v4775
  %vm4790 = vcmask 785408
  %4791 = vst.msk [vmem:[#allocation3 + $0x8] sm:$0xff] %vm4790, %v4776
  %4792 = vst [vmem:[#allocation3 + $0x10] sm:$0xff] %v4777
  %4793 = vst.msk [vmem:[#allocation3 + $0x18] sm:$0xff] %vm4790, %v4778
  %4794 = vst [vmem:[#allocation3 + $0x20] sm:$0xff] %v4779
  %4795 = vst.msk [vmem:[#allocation3 + $0x28] sm:$0xff] %vm4790, %v4780
  %4796 = vst [vmem:[#allocation3 + $0x30] sm:$0xff] %v4781
  %4797 = vst.msk [vmem:[#allocation3 + $0x38] sm:$0xff] %vm4790, %v4782
  %4798 = vst [vmem:[#allocation3 + $0x40] sm:$0xff] %v4783
  %4799 = vst.msk [vmem:[#allocation3 + $0x48] sm:$0xff] %vm4790, %v4784
  %4800 = vst [vmem:[#allocation3 + $0x50] sm:$0xff] %v4785
  %4801 = vst.msk [vmem:[#allocation3 + $0x58] sm:$0xff] %vm4790, %v4786
  %4802 = vst [vmem:[#allocation3 + $0x60] sm:$0xff] %v4787
  %4803 = vst.msk [vmem:[#allocation3 + $0x68] sm:$0xff] %vm4790, %v4788
  %v4804 = vld [vmem:[#allocation2] sm:$0xff]
  %v4805 = vld [vmem:[#allocation2 + $0x8] sm:$0xf]
  %v4806 = vld [vmem:[#allocation2 + $0xc] sm:$0xff]
  %v4807 = vld [vmem:[#allocation2 + $0x14] sm:$0xf]
  %v4808 = vld [vmem:[#allocation2 + $0x18] sm:$0xff]
  %v4809 = vld [vmem:[#allocation2 + $0x20] sm:$0xf]
  %v4810 = vld [vmem:[#allocation2 + $0x24] sm:$0xff]
  %v4811 = vld [vmem:[#allocation2 + $0x2c] sm:$0xf]
  %v4812 = vld [vmem:[#allocation2 + $0x30] sm:$0xff]
  %v4813 = vld [vmem:[#allocation2 + $0x38] sm:$0xf]
  %v4814 = vld [vmem:[#allocation2 + $0x3c] sm:$0xff]
  %v4815 = vld [vmem:[#allocation2 + $0x44] sm:$0xf]
  %v4816 = vld [vmem:[#allocation2 + $0x48] sm:$0xff]
  %v4817 = vld [vmem:[#allocation2 + $0x50] sm:$0xf]
  %s4818 = scalar_lea.vmem %s3, 1440
  %v4819 = vld [vmem:[%s4818] sm:$0xff]
  %v4820 = vld [vmem:[%s4818 + $0x8] sm:$0xff]
  %v4821 = vld [vmem:[%s4818 + $0x10] sm:$0xff]
  %v4822 = vld [vmem:[%s4818 + $0x18] sm:$0xff]
  %v4823 = vld [vmem:[%s4818 + $0x20] sm:$0xff]
  %v4824 = vld [vmem:[%s4818 + $0x28] sm:$0xff]
  %v4825 = vld [vmem:[%s4818 + $0x30] sm:$0xff]
  %v4826 = vld [vmem:[%s4818 + $0x38] sm:$0xff]
  %v4827 = vld [vmem:[%s4818 + $0x40] sm:$0xff]
  %v4828 = vld [vmem:[%s4818 + $0x48] sm:$0xff]
  %v4829 = vld [vmem:[%s4818 + $0x50] sm:$0xff]
  %v4830 = vld [vmem:[%s4818 + $0x58] sm:$0xff]
  %v4831 = vld [vmem:[%s4818 + $0x60] sm:$0xff]
  %v4832 = vld [vmem:[%s4818 + $0x68] sm:$0xff]
  %v4833 = vld [vmem:[%s4818 + $0x70] sm:$0xff]
  %v4834 = vld [vmem:[%s4818 + $0x78] sm:$0xff]
  %v4835 = vld [vmem:[%s4818 + $0x80] sm:$0xff]
  %v4836 = vld [vmem:[%s4818 + $0x88] sm:$0xff]
  %v4837 = vld [vmem:[%s4818 + $0x90] sm:$0xff]
  %v4838 = vld [vmem:[%s4818 + $0x98] sm:$0xff]
  %v4839 = vld [vmem:[%s4818 + $0xa0] sm:$0xff]
  %v4840 = vld [vmem:[%s4818 + $0xa8] sm:$0xff]
  %v4841 = vld [vmem:[%s4818 + $0xb0] sm:$0xff]
  %v4842 = vld [vmem:[%s4818 + $0xb8] sm:$0xff]
  %v4843 = vld [vmem:[%s4818 + $0xc0] sm:$0xff]
  %v4844 = vld [vmem:[%s4818 + $0xc8] sm:$0xff]
  %v4845 = vld [vmem:[%s4818 + $0xd0] sm:$0xff]
  %v4846 = vld [vmem:[%s4818 + $0xd8] sm:$0xff]
  %v4847 = vld [vmem:[%s4818 + $0xe0] sm:$0xff]
  %v4848 = vld [vmem:[%s4818 + $0xe8] sm:$0xff]
  %v4849 = vld [vmem:[%s4818 + $0xf0] sm:$0xff]
  %v4850 = vld [vmem:[%s4818 + $0xf8] sm:$0xff]
  %v4851 = vld [vmem:[%s4818 + $0x100] sm:$0xff]
  %v4852 = vld [vmem:[%s4818 + $0x108] sm:$0xff]
  %v4853 = vld [vmem:[%s4818 + $0x110] sm:$0xff]
  %v4854 = vld [vmem:[%s4818 + $0x118] sm:$0xff]
  %v4855 = vld [vmem:[%s32] sm:$0xff]
  %v4856 = vld [vmem:[%s32 + $0x8] sm:$0xf]
  %v4857 = vld [vmem:[%s32 + $0xc] sm:$0xff]
  %v4858 = vld [vmem:[%s32 + $0x14] sm:$0xf]
  %v4859 = vld [vmem:[%s32 + $0x18] sm:$0xff]
  %v4860 = vld [vmem:[%s32 + $0x20] sm:$0xf]
  %v4861 = vld [vmem:[%s32 + $0x24] sm:$0xff]
  %v4862 = vld [vmem:[%s32 + $0x2c] sm:$0xf]
  %v4863 = vld [vmem:[%s32 + $0x30] sm:$0xff]
  %v4864 = vld [vmem:[%s32 + $0x38] sm:$0xf]
  %v4865 = vld [vmem:[%s32 + $0x3c] sm:$0xff]
  %v4866 = vld [vmem:[%s32 + $0x44] sm:$0xf]
  %v4867 = vld [vmem:[%s32 + $0x48] sm:$0xff]
  %v4868 = vld [vmem:[%s32 + $0x50] sm:$0xf]
  %s4869 = scalar_lea.vmem %s3, 1728
  %v4870 = vld [vmem:[%s4869] sm:$0xff]
  %v4871 = vld [vmem:[%s4869 + $0x8] sm:$0xff]
  %v4872 = vld [vmem:[%s4869 + $0x10] sm:$0xff]
  %v4873 = vld [vmem:[%s4869 + $0x18] sm:$0xff]
  %v4874 = vld [vmem:[%s4869 + $0x20] sm:$0xff]
  %v4875 = vld [vmem:[%s4869 + $0x28] sm:$0xff]
  %v4876 = vld [vmem:[%s4869 + $0x30] sm:$0xff]
  %v4877 = vld [vmem:[%s4869 + $0x38] sm:$0xff]
  %v4878 = vld [vmem:[%s4869 + $0x40] sm:$0xff]
  %v4879 = vld [vmem:[%s4869 + $0x48] sm:$0xff]
  %v4880 = vld [vmem:[%s4869 + $0x50] sm:$0xff]
  %v4881 = vld [vmem:[%s4869 + $0x58] sm:$0xff]
  %v4882 = vld [vmem:[%s4869 + $0x60] sm:$0xff]
  %v4883 = vld [vmem:[%s4869 + $0x68] sm:$0xff]
  %v4884 = vld [vmem:[%s4869 + $0x70] sm:$0xff]
  %v4885 = vld [vmem:[%s4869 + $0x78] sm:$0xff]
  %v4886 = vld [vmem:[%s4869 + $0x80] sm:$0xff]
  %v4887 = vld [vmem:[%s4869 + $0x88] sm:$0xff]
  %v4888 = vld [vmem:[%s4869 + $0x90] sm:$0xff]
  %v4889 = vld [vmem:[%s4869 + $0x98] sm:$0xff]
  %v4890 = vld [vmem:[%s4869 + $0xa0] sm:$0xff]
  %v4891 = vld [vmem:[%s4869 + $0xa8] sm:$0xff]
  %v4892 = vld [vmem:[%s4869 + $0xb0] sm:$0xff]
  %v4893 = vld [vmem:[%s4869 + $0xb8] sm:$0xff]
  %v4894 = vld [vmem:[%s4869 + $0xc0] sm:$0xff]
  %v4895 = vld [vmem:[%s4869 + $0xc8] sm:$0xff]
  %v4896 = vld [vmem:[%s4869 + $0xd0] sm:$0xff]
  %v4897 = vld [vmem:[%s4869 + $0xd8] sm:$0xff]
  %v4898 = vld [vmem:[%s4869 + $0xe0] sm:$0xff]
  %v4899 = vld [vmem:[%s4869 + $0xe8] sm:$0xff]
  %v4900 = vld [vmem:[%s4869 + $0xf0] sm:$0xff]
  %v4901 = vld [vmem:[%s4869 + $0xf8] sm:$0xff]
  %v4902 = vld [vmem:[%s4869 + $0x100] sm:$0xff]
  %v4903 = vld [vmem:[%s4869 + $0x108] sm:$0xff]
  %v4904 = vld [vmem:[%s4869 + $0x110] sm:$0xff]
  %v4905 = vld [vmem:[%s4869 + $0x118] sm:$0xff]
  %v4920 = vunpack.c.l.b16 %v4855
  %v4921 = vunpack.c.h.b16 %v4855
  %v4922 = vunpack.c.l.b16 %v4856
  %v4923 = vunpack.c.l.b16 %v4857
  %v4924 = vunpack.c.h.b16 %v4857
  %v4925 = vunpack.c.l.b16 %v4858
  %v4926 = vunpack.c.l.b16 %v4859
  %v4927 = vunpack.c.h.b16 %v4859
  %v4928 = vunpack.c.l.b16 %v4860
  %v4929 = vunpack.c.l.b16 %v4861
  %v4930 = vunpack.c.h.b16 %v4861
  %v4931 = vunpack.c.l.b16 %v4862
  %v4932 = vunpack.c.l.b16 %v4863
  %v4933 = vunpack.c.h.b16 %v4863
  %v4934 = vunpack.c.l.b16 %v4864
  %v4935 = vunpack.c.l.b16 %v4865
  %v4936 = vunpack.c.h.b16 %v4865
  %v4937 = vunpack.c.l.b16 %v4866
  %v4938 = vunpack.c.l.b16 %v4867
  %v4939 = vunpack.c.h.b16 %v4867
  %v4940 = vunpack.c.l.b16 %v4868
  %v4941 = vpack.c.b16 %v4923, %v4920
  %v4942 = vpack.c.b16 %v4924, %v4921
  %v4943 = vpack.c.b16 %v4925, %v4922
  %v4944 = vpack.c.b16 %v4929, %v4926
  %v4945 = vpack.c.b16 %v4930, %v4927
  %v4946 = vpack.c.b16 %v4931, %v4928
  %v4947 = vpack.c.b16 %v4935, %v4932
  %v4948 = vpack.c.b16 %v4936, %v4933
  %v4949 = vpack.c.b16 %v4937, %v4934
  %v4950 = vpack.c.b16 %v4938, %v4938
  %v4951 = vpack.c.b16 %v4939, %v4939
  %v4952 = vpack.c.b16 %v4940, %v4940
  %v4997 = vunpack.c.l.b16 %v4870
  %v4998 = vunpack.c.h.b16 %v4870
  %v4999 = vunpack.c.l.b16 %v4871
  %v5000 = vunpack.c.h.b16 %v4871
  %v5001 = vunpack.c.l.b16 %v4872
  %v5002 = vunpack.c.h.b16 %v4872
  %v5003 = vunpack.c.l.b16 %v4873
  %v5004 = vunpack.c.h.b16 %v4873
  %v5005 = vunpack.c.l.b16 %v4874
  %v5006 = vunpack.c.h.b16 %v4874
  %v5007 = vunpack.c.l.b16 %v4875
  %v5008 = vunpack.c.h.b16 %v4875
  %v5009 = vunpack.c.l.b16 %v4876
  %v5010 = vunpack.c.h.b16 %v4876
  %v5011 = vunpack.c.l.b16 %v4877
  %v5012 = vunpack.c.h.b16 %v4877
  %v5013 = vunpack.c.l.b16 %v4878
  %v5014 = vunpack.c.h.b16 %v4878
  %v5015 = vunpack.c.l.b16 %v4879
  %v5016 = vunpack.c.h.b16 %v4879
  %v5017 = vunpack.c.l.b16 %v4880
  %v5018 = vunpack.c.h.b16 %v4880
  %v5019 = vunpack.c.l.b16 %v4881
  %v5020 = vunpack.c.h.b16 %v4881
  %v5021 = vunpack.c.l.b16 %v4882
  %v5022 = vunpack.c.h.b16 %v4882
  %v5023 = vunpack.c.l.b16 %v4883
  %v5024 = vunpack.c.h.b16 %v4883
  %v5025 = vunpack.c.l.b16 %v4884
  %v5026 = vunpack.c.h.b16 %v4884
  %v5027 = vunpack.c.l.b16 %v4885
  %v5028 = vunpack.c.h.b16 %v4885
  %v5029 = vunpack.c.l.b16 %v4886
  %v5030 = vunpack.c.h.b16 %v4886
  %v5031 = vunpack.c.l.b16 %v4887
  %v5032 = vunpack.c.h.b16 %v4887
  %v5033 = vunpack.c.l.b16 %v4888
  %v5034 = vunpack.c.h.b16 %v4888
  %v5035 = vunpack.c.l.b16 %v4889
  %v5036 = vunpack.c.h.b16 %v4889
  %v5037 = vunpack.c.l.b16 %v4890
  %v5038 = vunpack.c.h.b16 %v4890
  %v5039 = vunpack.c.l.b16 %v4891
  %v5040 = vunpack.c.h.b16 %v4891
  %v5041 = vunpack.c.l.b16 %v4892
  %v5042 = vunpack.c.h.b16 %v4892
  %v5043 = vunpack.c.l.b16 %v4893
  %v5044 = vunpack.c.h.b16 %v4893
  %v5045 = vunpack.c.l.b16 %v4894
  %v5046 = vunpack.c.h.b16 %v4894
  %v5047 = vunpack.c.l.b16 %v4895
  %v5048 = vunpack.c.h.b16 %v4895
  %v5049 = vunpack.c.l.b16 %v4896
  %v5050 = vunpack.c.h.b16 %v4896
  %v5051 = vunpack.c.l.b16 %v4897
  %v5052 = vunpack.c.h.b16 %v4897
  %v5053 = vunpack.c.l.b16 %v4898
  %v5054 = vunpack.c.h.b16 %v4898
  %v5055 = vunpack.c.l.b16 %v4899
  %v5056 = vunpack.c.h.b16 %v4899
  %v5057 = vunpack.c.l.b16 %v4900
  %v5058 = vunpack.c.h.b16 %v4900
  %v5059 = vunpack.c.l.b16 %v4901
  %v5060 = vunpack.c.h.b16 %v4901
  %v5061 = vunpack.c.l.b16 %v4902
  %v5062 = vunpack.c.h.b16 %v4902
  %v5063 = vunpack.c.l.b16 %v4903
  %v5064 = vunpack.c.h.b16 %v4903
  %v5065 = vunpack.c.l.b16 %v4904
  %v5066 = vunpack.c.h.b16 %v4904
  %v5067 = vunpack.c.l.b16 %v4905
  %v5068 = vunpack.c.h.b16 %v4905
  %v5069 = vpack.c.b16 %v4999, %v4997
  %v5070 = vpack.c.b16 %v5000, %v4998
  %v5071 = vpack.c.b16 %v5003, %v5001
  %v5072 = vpack.c.b16 %v5004, %v5002
  %v5073 = vpack.c.b16 %v5007, %v5005
  %v5074 = vpack.c.b16 %v5008, %v5006
  %v5075 = vpack.c.b16 %v5011, %v5009
  %v5076 = vpack.c.b16 %v5012, %v5010
  %v5077 = vpack.c.b16 %v5015, %v5013
  %v5078 = vpack.c.b16 %v5016, %v5014
  %v5079 = vpack.c.b16 %v5019, %v5017
  %v5080 = vpack.c.b16 %v5020, %v5018
  %v5081 = vpack.c.b16 %v5023, %v5021
  %v5082 = vpack.c.b16 %v5024, %v5022
  %v5083 = vpack.c.b16 %v5027, %v5025
  %v5084 = vpack.c.b16 %v5028, %v5026
  %v5085 = vpack.c.b16 %v5031, %v5029
  %v5086 = vpack.c.b16 %v5032, %v5030
  %v5087 = vpack.c.b16 %v5035, %v5033
  %v5088 = vpack.c.b16 %v5036, %v5034
  %v5089 = vpack.c.b16 %v5039, %v5037
  %v5090 = vpack.c.b16 %v5040, %v5038
  %v5091 = vpack.c.b16 %v5043, %v5041
  %v5092 = vpack.c.b16 %v5044, %v5042
  %v5093 = vpack.c.b16 %v5047, %v5045
  %v5094 = vpack.c.b16 %v5048, %v5046
  %v5095 = vpack.c.b16 %v5051, %v5049
  %v5096 = vpack.c.b16 %v5052, %v5050
  %v5097 = vpack.c.b16 %v5055, %v5053
  %v5098 = vpack.c.b16 %v5056, %v5054
  %v5099 = vpack.c.b16 %v5059, %v5057
  %v5100 = vpack.c.b16 %v5060, %v5058
  %v5101 = vpack.c.b16 %v5063, %v5061
  %v5102 = vpack.c.b16 %v5064, %v5062
  %v5103 = vpack.c.b16 %v5067, %v5065
  %v5104 = vpack.c.b16 %v5068, %v5066
  %v5142 = vsel %vm277, %v4943, 0
  %v5145 = vsel %vm277, %v4946, 0
  %v5148 = vsel %vm277, %v4949, 0
  %v5151 = vsel %vm277, %v4952, 0
  %5153 = vmatprep.subr.bf16.mxu0 %v5070
  %5154 = vmatpush1.bf16.msra.mxu0 %v5069
  %5155 = vmatprep.subr.bf16.mxu0 %v5072
  %5156 = vmatpush1.bf16.msra.mxu0 %v5071
  %5157 = vmatprep.subr.bf16.mxu0 %v5074
  %5158 = vmatpush1.bf16.msra.mxu0 %v5073
  %5159 = vmatprep.subr.bf16.mxu0 %v5076
  %5160 = vmatpush1.bf16.msra.mxu0 %v5075
  %5161 = vmatprep.subr.bf16.mxu0 %v5078
  %5162 = vmatpush1.bf16.msra.mxu0 %v5077
  %5163 = vmatprep.subr.bf16.mxu0 %v5080
  %5164 = vmatpush1.bf16.msra.mxu0 %v5079
  %5165 = vmatprep.subr.bf16.mxu0 %v5082
  %5166 = vmatpush1.bf16.msra.mxu0 %v5081
  %5167 = vmatprep.subr.bf16.mxu0 %v5084
  %5168 = vmatpush1.bf16.msra.mxu0 %v5083
  %5169 = vmatprep.subr.bf16.mxu0 %v5086
  %5170 = vmatpush1.bf16.msra.mxu0 %v5085
  %5171 = vmatprep.subr.bf16.mxu0 %v5088
  %5172 = vmatpush1.bf16.msra.mxu0 %v5087
  %5173 = vmatprep.subr.bf16.mxu0 %v5090
  %5174 = vmatpush1.bf16.msra.mxu0 %v5089
  %5175 = vmatprep.subr.bf16.mxu0 %v5092
  %5176 = vmatpush1.bf16.msra.mxu0 %v5091
  %5177 = vmatprep.subr.bf16.mxu0 %v5094
  %5178 = vmatpush1.bf16.msra.mxu0 %v5093
  %5179 = vmatprep.subr.bf16.mxu0 %v5096
  %5180 = vmatpush1.bf16.msra.mxu0 %v5095
  %5181 = vmatprep.subr.bf16.mxu0 %v5098
  %5182 = vmatpush1.bf16.msra.mxu0 %v5097
  %5183 = vmatprep.subr.bf16.mxu0 %v5100
  %5184 = vmatpush1.bf16.msra.mxu0 %v5099
  %5185 = vmatprep.mubr.bf16.mxu0 %v4942
  %5186 = vmatmul.mubr.bf16.gmra.mrb[0].mxu0 %v4941
  %v5187 = vpop.f32.mrb[0].mxu0
  %v5188 = vadd.f32 0.0, %v5187
  %v5189 = vpop.f32.mrb[0].mxu0
  %v5190 = vadd.f32 0.0, %v5189
  %v5191 = vpop.f32.mrb[0].mxu0
  %v5192 = vadd.f32 0.0, %v5191
  %v5193 = vpop.f32.mrb[0].mxu0
  %v5194 = vadd.f32 0.0, %v5193
  %5195 = vmatprep.mubr.bf16.mxu0 %v4945
  %5196 = vmatmul.mubr.bf16.gmra.mrb[0].mxu0 %v4944
  %v5197 = vpop.f32.mrb[0].mxu0
  %v5198 = vadd.f32 0.0, %v5197
  %v5199 = vpop.f32.mrb[0].mxu0
  %v5200 = vadd.f32 0.0, %v5199
  %v5201 = vpop.f32.mrb[0].mxu0
  %v5202 = vadd.f32 0.0, %v5201
  %v5203 = vpop.f32.mrb[0].mxu0
  %v5204 = vadd.f32 0.0, %v5203
  %5205 = vmatprep.mubr.bf16.mxu0 %v4948
  %5206 = vmatmul.mubr.bf16.gmra.mrb[0].mxu0 %v4947
  %v5207 = vpop.f32.mrb[0].mxu0
  %v5208 = vadd.f32 0.0, %v5207
  %v5209 = vpop.f32.mrb[0].mxu0
  %v5210 = vadd.f32 0.0, %v5209
  %v5211 = vpop.f32.mrb[0].mxu0
  %v5212 = vadd.f32 0.0, %v5211
  %v5213 = vpop.f32.mrb[0].mxu0
  %v5214 = vadd.f32 0.0, %v5213
  %5215 = vmatprep.mubr.bf16.mxu0 %v4951
  %5216 = vmatmul.mubr.bf16.gmra.mrb[0].mxu0 %v4950
  %v5217 = vpop.f32.mrb[0].mxu0
  %v5218 = vadd.f32 0.0, %v5217
  %v5219 = vpop.f32.mrb[0].mxu0
  %v5220 = vadd.f32 0.0, %v5219
  %v5221 = vpop.f32.mrb[0].mxu0
  %v5222 = vpop.f32.mrb[0].mxu0
  %5223 = vdwg.mxu0
  %5224 = vmatprep.subr.bf16.mxu0 %v5102
  %5225 = vmatpush1.bf16.msra.mxu0 %v5101
  %5226 = vmatprep.subr.bf16.mxu0 %v5104
  %5227 = vmatpush1.bf16.msra.mxu0 %v5103
  %5228 = vmatprep.subr.bf16.mxu0 0
  %5229 = vmatpush1.bf16.msra.mxu0 0
  %5230 = vmatprep.subr.bf16.mxu0 0
  %5231 = vmatpush1.bf16.msra.mxu0 0
  %5232 = vmatprep.subr.bf16.mxu0 0
  %5233 = vmatpush1.bf16.msra.mxu0 0
  %5234 = vmatprep.subr.bf16.mxu0 0
  %5235 = vmatpush1.bf16.msra.mxu0 0
  %5236 = vmatprep.subr.bf16.mxu0 0
  %5237 = vmatpush1.bf16.msra.mxu0 0
  %5238 = vmatprep.subr.bf16.mxu0 0
  %5239 = vmatpush1.bf16.msra.mxu0 0
  %5240 = vmatprep.subr.bf16.mxu0 0
  %5241 = vmatpush1.bf16.msra.mxu0 0
  %5242 = vmatprep.subr.bf16.mxu0 0
  %5243 = vmatpush1.bf16.msra.mxu0 0
  %5244 = vmatprep.subr.bf16.mxu0 0
  %5245 = vmatpush1.bf16.msra.mxu0 0
  %5246 = vmatprep.subr.bf16.mxu0 0
  %5247 = vmatpush1.bf16.msra.mxu0 0
  %5248 = vmatprep.subr.bf16.mxu0 0
  %5249 = vmatpush1.bf16.msra.mxu0 0
  %5250 = vmatprep.subr.bf16.mxu0 0
  %5251 = vmatpush1.bf16.msra.mxu0 0
  %5252 = vmatprep.subr.bf16.mxu0 0
  %5253 = vmatpush1.bf16.msra.mxu0 0
  %5254 = vmatprep.subr.bf16.mxu0 0
  %5255 = vmatpush1.bf16.msra.mxu0 0
  %5256 = vmatprep.mubr.bf16.mxu0 0
  %5257 = vmatmul.mubr.bf16.gmra.mrb[0].mxu0 %v5142
  %v5258 = vpop.f32.mrb[0].mxu0
  %v5259 = vadd.f32 %v5188, %v5258
  %v5260 = vpop.f32.mrb[0].mxu0
  %v5261 = vadd.f32 %v5190, %v5260
  %v5262 = vpop.f32.mrb[0].mxu0
  %v5263 = vadd.f32 %v5192, %v5262
  %v5264 = vpop.f32.mrb[0].mxu0
  %v5265 = vadd.f32 %v5194, %v5264
  %5266 = vmatprep.mubr.bf16.mxu0 0
  %5267 = vmatmul.mubr.bf16.gmra.mrb[0].mxu0 %v5145
  %v5268 = vpop.f32.mrb[0].mxu0
  %v5269 = vadd.f32 %v5198, %v5268
  %v5270 = vpop.f32.mrb[0].mxu0
  %v5271 = vadd.f32 %v5200, %v5270
  %v5272 = vpop.f32.mrb[0].mxu0
  %v5273 = vadd.f32 %v5202, %v5272
  %v5274 = vpop.f32.mrb[0].mxu0
  %v5275 = vadd.f32 %v5204, %v5274
  %5276 = vmatprep.mubr.bf16.mxu0 0
  %5277 = vmatmul.mubr.bf16.gmra.mrb[0].mxu0 %v5148
  %v5278 = vpop.f32.mrb[0].mxu0
  %v5279 = vadd.f32 %v5208, %v5278
  %v5280 = vpop.f32.mrb[0].mxu0
  %v5281 = vadd.f32 %v5210, %v5280
  %v5282 = vpop.f32.mrb[0].mxu0
  %v5283 = vadd.f32 %v5212, %v5282
  %v5284 = vpop.f32.mrb[0].mxu0
  %v5285 = vadd.f32 %v5214, %v5284
  %5286 = vmatprep.mubr.bf16.mxu0 0
  %5287 = vmatmul.mubr.bf16.gmra.mrb[0].mxu0 %v5151
  %v5288 = vpop.f32.mrb[0].mxu0
  %v5289 = vadd.f32 %v5218, %v5288
  %v5290 = vpop.f32.mrb[0].mxu0
  %v5291 = vadd.f32 %v5220, %v5290
  %v5292 = vpop.f32.mrb[0].mxu0
  %v5293 = vpop.f32.mrb[0].mxu0
  %5294 = vdwg.mxu0
  %v5309 = vunpack.c.l.b16 %v4804
  %v5310 = vunpack.c.h.b16 %v4804
  %v5311 = vunpack.c.l.b16 %v4805
  %v5312 = vunpack.c.l.b16 %v4806
  %v5313 = vunpack.c.h.b16 %v4806
  %v5314 = vunpack.c.l.b16 %v4807
  %v5315 = vunpack.c.l.b16 %v4808
  %v5316 = vunpack.c.h.b16 %v4808
  %v5317 = vunpack.c.l.b16 %v4809
  %v5318 = vunpack.c.l.b16 %v4810
  %v5319 = vunpack.c.h.b16 %v4810
  %v5320 = vunpack.c.l.b16 %v4811
  %v5321 = vunpack.c.l.b16 %v4812
  %v5322 = vunpack.c.h.b16 %v4812
  %v5323 = vunpack.c.l.b16 %v4813
  %v5324 = vunpack.c.l.b16 %v4814
  %v5325 = vunpack.c.h.b16 %v4814
  %v5326 = vunpack.c.l.b16 %v4815
  %v5327 = vunpack.c.l.b16 %v4816
  %v5328 = vunpack.c.h.b16 %v4816
  %v5329 = vunpack.c.l.b16 %v4817
  %v5330 = vpack.c.b16 %v5312, %v5309
  %v5331 = vpack.c.b16 %v5313, %v5310
  %v5332 = vpack.c.b16 %v5314, %v5311
  %v5333 = vpack.c.b16 %v5318, %v5315
  %v5334 = vpack.c.b16 %v5319, %v5316
  %v5335 = vpack.c.b16 %v5320, %v5317
  %v5336 = vpack.c.b16 %v5324, %v5321
  %v5337 = vpack.c.b16 %v5325, %v5322
  %v5338 = vpack.c.b16 %v5326, %v5323
  %v5339 = vpack.c.b16 %v5327, %v5327
  %v5340 = vpack.c.b16 %v5328, %v5328
  %v5341 = vpack.c.b16 %v5329, %v5329
  %v5386 = vunpack.c.l.b16 %v4819
  %v5387 = vunpack.c.h.b16 %v4819
  %v5388 = vunpack.c.l.b16 %v4820
  %v5389 = vunpack.c.h.b16 %v4820
  %v5390 = vunpack.c.l.b16 %v4821
  %v5391 = vunpack.c.h.b16 %v4821
  %v5392 = vunpack.c.l.b16 %v4822
  %v5393 = vunpack.c.h.b16 %v4822
  %v5394 = vunpack.c.l.b16 %v4823
  %v5395 = vunpack.c.h.b16 %v4823
  %v5396 = vunpack.c.l.b16 %v4824
  %v5397 = vunpack.c.h.b16 %v4824
  %v5398 = vunpack.c.l.b16 %v4825
  %v5399 = vunpack.c.h.b16 %v4825
  %v5400 = vunpack.c.l.b16 %v4826
  %v5401 = vunpack.c.h.b16 %v4826
  %v5402 = vunpack.c.l.b16 %v4827
  %v5403 = vunpack.c.h.b16 %v4827
  %v5404 = vunpack.c.l.b16 %v4828
  %v5405 = vunpack.c.h.b16 %v4828
  %v5406 = vunpack.c.l.b16 %v4829
  %v5407 = vunpack.c.h.b16 %v4829
  %v5408 = vunpack.c.l.b16 %v4830
  %v5409 = vunpack.c.h.b16 %v4830
  %v5410 = vunpack.c.l.b16 %v4831
  %v5411 = vunpack.c.h.b16 %v4831
  %v5412 = vunpack.c.l.b16 %v4832
  %v5413 = vunpack.c.h.b16 %v4832
  %v5414 = vunpack.c.l.b16 %v4833
  %v5415 = vunpack.c.h.b16 %v4833
  %v5416 = vunpack.c.l.b16 %v4834
  %v5417 = vunpack.c.h.b16 %v4834
  %v5418 = vunpack.c.l.b16 %v4835
  %v5419 = vunpack.c.h.b16 %v4835
  %v5420 = vunpack.c.l.b16 %v4836
  %v5421 = vunpack.c.h.b16 %v4836
  %v5422 = vunpack.c.l.b16 %v4837
  %v5423 = vunpack.c.h.b16 %v4837
  %v5424 = vunpack.c.l.b16 %v4838
  %v5425 = vunpack.c.h.b16 %v4838
  %v5426 = vunpack.c.l.b16 %v4839
  %v5427 = vunpack.c.h.b16 %v4839
  %v5428 = vunpack.c.l.b16 %v4840
  %v5429 = vunpack.c.h.b16 %v4840
  %v5430 = vunpack.c.l.b16 %v4841
  %v5431 = vunpack.c.h.b16 %v4841
  %v5432 = vunpack.c.l.b16 %v4842
  %v5433 = vunpack.c.h.b16 %v4842
  %v5434 = vunpack.c.l.b16 %v4843
  %v5435 = vunpack.c.h.b16 %v4843
  %v5436 = vunpack.c.l.b16 %v4844
  %v5437 = vunpack.c.h.b16 %v4844
  %v5438 = vunpack.c.l.b16 %v4845
  %v5439 = vunpack.c.h.b16 %v4845
  %v5440 = vunpack.c.l.b16 %v4846
  %v5441 = vunpack.c.h.b16 %v4846
  %v5442 = vunpack.c.l.b16 %v4847
  %v5443 = vunpack.c.h.b16 %v4847
  %v5444 = vunpack.c.l.b16 %v4848
  %v5445 = vunpack.c.h.b16 %v4848
  %v5446 = vunpack.c.l.b16 %v4849
  %v5447 = vunpack.c.h.b16 %v4849
  %v5448 = vunpack.c.l.b16 %v4850
  %v5449 = vunpack.c.h.b16 %v4850
  %v5450 = vunpack.c.l.b16 %v4851
  %v5451 = vunpack.c.h.b16 %v4851
  %v5452 = vunpack.c.l.b16 %v4852
  %v5453 = vunpack.c.h.b16 %v4852
  %v5454 = vunpack.c.l.b16 %v4853
  %v5455 = vunpack.c.h.b16 %v4853
  %v5456 = vunpack.c.l.b16 %v4854
  %v5457 = vunpack.c.h.b16 %v4854
  %v5458 = vpack.c.b16 %v5388, %v5386
  %v5459 = vpack.c.b16 %v5389, %v5387
  %v5460 = vpack.c.b16 %v5392, %v5390
  %v5461 = vpack.c.b16 %v5393, %v5391
  %v5462 = vpack.c.b16 %v5396, %v5394
  %v5463 = vpack.c.b16 %v5397, %v5395
  %v5464 = vpack.c.b16 %v5400, %v5398
  %v5465 = vpack.c.b16 %v5401, %v5399
  %v5466 = vpack.c.b16 %v5404, %v5402
  %v5467 = vpack.c.b16 %v5405, %v5403
  %v5468 = vpack.c.b16 %v5408, %v5406
  %v5469 = vpack.c.b16 %v5409, %v5407
  %v5470 = vpack.c.b16 %v5412, %v5410
  %v5471 = vpack.c.b16 %v5413, %v5411
  %v5472 = vpack.c.b16 %v5416, %v5414
  %v5473 = vpack.c.b16 %v5417, %v5415
  %v5474 = vpack.c.b16 %v5420, %v5418
  %v5475 = vpack.c.b16 %v5421, %v5419
  %v5476 = vpack.c.b16 %v5424, %v5422
  %v5477 = vpack.c.b16 %v5425, %v5423
  %v5478 = vpack.c.b16 %v5428, %v5426
  %v5479 = vpack.c.b16 %v5429, %v5427
  %v5480 = vpack.c.b16 %v5432, %v5430
  %v5481 = vpack.c.b16 %v5433, %v5431
  %v5482 = vpack.c.b16 %v5436, %v5434
  %v5483 = vpack.c.b16 %v5437, %v5435
  %v5484 = vpack.c.b16 %v5440, %v5438
  %v5485 = vpack.c.b16 %v5441, %v5439
  %v5486 = vpack.c.b16 %v5444, %v5442
  %v5487 = vpack.c.b16 %v5445, %v5443
  %v5488 = vpack.c.b16 %v5448, %v5446
  %v5489 = vpack.c.b16 %v5449, %v5447
  %v5490 = vpack.c.b16 %v5452, %v5450
  %v5491 = vpack.c.b16 %v5453, %v5451
  %v5492 = vpack.c.b16 %v5456, %v5454
  %v5493 = vpack.c.b16 %v5457, %v5455
  %v5531 = vsel %vm277, %v5332, 0
  %v5534 = vsel %vm277, %v5335, 0
  %v5537 = vsel %vm277, %v5338, 0
  %v5540 = vsel %vm277, %v5341, 0
  %5542 = vmatprep.subr.bf16.mxu0 %v5459
  %5543 = vmatpush1.bf16.msra.mxu0 %v5458
  %5544 = vmatprep.subr.bf16.mxu0 %v5461
  %5545 = vmatpush1.bf16.msra.mxu0 %v5460
  %5546 = vmatprep.subr.bf16.mxu0 %v5463
  %5547 = vmatpush1.bf16.msra.mxu0 %v5462
  %5548 = vmatprep.subr.bf16.mxu0 %v5465
  %5549 = vmatpush1.bf16.msra.mxu0 %v5464
  %5550 = vmatprep.subr.bf16.mxu0 %v5467
  %5551 = vmatpush1.bf16.msra.mxu0 %v5466
  %5552 = vmatprep.subr.bf16.mxu0 %v5469
  %5553 = vmatpush1.bf16.msra.mxu0 %v5468
  %5554 = vmatprep.subr.bf16.mxu0 %v5471
  %5555 = vmatpush1.bf16.msra.mxu0 %v5470
  %5556 = vmatprep.subr.bf16.mxu0 %v5473
  %5557 = vmatpush1.bf16.msra.mxu0 %v5472
  %5558 = vmatprep.subr.bf16.mxu0 %v5475
  %5559 = vmatpush1.bf16.msra.mxu0 %v5474
  %5560 = vmatprep.subr.bf16.mxu0 %v5477
  %5561 = vmatpush1.bf16.msra.mxu0 %v5476
  %5562 = vmatprep.subr.bf16.mxu0 %v5479
  %5563 = vmatpush1.bf16.msra.mxu0 %v5478
  %5564 = vmatprep.subr.bf16.mxu0 %v5481
  %5565 = vmatpush1.bf16.msra.mxu0 %v5480
  %5566 = vmatprep.subr.bf16.mxu0 %v5483
  %5567 = vmatpush1.bf16.msra.mxu0 %v5482
  %5568 = vmatprep.subr.bf16.mxu0 %v5485
  %5569 = vmatpush1.bf16.msra.mxu0 %v5484
  %5570 = vmatprep.subr.bf16.mxu0 %v5487
  %5571 = vmatpush1.bf16.msra.mxu0 %v5486
  %5572 = vmatprep.subr.bf16.mxu0 %v5489
  %5573 = vmatpush1.bf16.msra.mxu0 %v5488
  %5574 = vmatprep.mubr.bf16.mxu0 %v5331
  %5575 = vmatmul.mubr.bf16.gmra.mrb[0].mxu0 %v5330
  %v5576 = vpop.f32.mrb[0].mxu0
  %v5577 = vadd.f32 %v5259, %v5576
  %v5578 = vpop.f32.mrb[0].mxu0
  %v5579 = vadd.f32 %v5261, %v5578
  %v5580 = vpop.f32.mrb[0].mxu0
  %v5581 = vadd.f32 %v5263, %v5580
  %v5582 = vpop.f32.mrb[0].mxu0
  %v5583 = vadd.f32 %v5265, %v5582
  %5584 = vmatprep.mubr.bf16.mxu0 %v5334
  %5585 = vmatmul.mubr.bf16.gmra.mrb[0].mxu0 %v5333
  %v5586 = vpop.f32.mrb[0].mxu0
  %v5587 = vadd.f32 %v5269, %v5586
  %v5588 = vpop.f32.mrb[0].mxu0
  %v5589 = vadd.f32 %v5271, %v5588
  %v5590 = vpop.f32.mrb[0].mxu0
  %v5591 = vadd.f32 %v5273, %v5590
  %v5592 = vpop.f32.mrb[0].mxu0
  %v5593 = vadd.f32 %v5275, %v5592
  %5594 = vmatprep.mubr.bf16.mxu0 %v5337
  %5595 = vmatmul.mubr.bf16.gmra.mrb[0].mxu0 %v5336
  %v5596 = vpop.f32.mrb[0].mxu0
  %v5597 = vadd.f32 %v5279, %v5596
  %v5598 = vpop.f32.mrb[0].mxu0
  %v5599 = vadd.f32 %v5281, %v5598
  %v5600 = vpop.f32.mrb[0].mxu0
  %v5601 = vadd.f32 %v5283, %v5600
  %v5602 = vpop.f32.mrb[0].mxu0
  %v5603 = vadd.f32 %v5285, %v5602
  %5604 = vmatprep.mubr.bf16.mxu0 %v5340
  %5605 = vmatmul.mubr.bf16.gmra.mrb[0].mxu0 %v5339
  %v5606 = vpop.f32.mrb[0].mxu0
  %v5607 = vadd.f32 %v5289, %v5606
  %v5608 = vpop.f32.mrb[0].mxu0
  %v5609 = vadd.f32 %v5291, %v5608
  %v5610 = vpop.f32.mrb[0].mxu0
  %v5611 = vpop.f32.mrb[0].mxu0
  %5612 = vdwg.mxu0
  %5613 = vmatprep.subr.bf16.mxu0 %v5491
  %5614 = vmatpush1.bf16.msra.mxu0 %v5490
  %5615 = vmatprep.subr.bf16.mxu0 %v5493
  %5616 = vmatpush1.bf16.msra.mxu0 %v5492
  %5617 = vmatprep.subr.bf16.mxu0 0
  %5618 = vmatpush1.bf16.msra.mxu0 0
  %5619 = vmatprep.subr.bf16.mxu0 0
  %5620 = vmatpush1.bf16.msra.mxu0 0
  %5621 = vmatprep.subr.bf16.mxu0 0
  %5622 = vmatpush1.bf16.msra.mxu0 0
  %5623 = vmatprep.subr.bf16.mxu0 0
  %5624 = vmatpush1.bf16.msra.mxu0 0
  %5625 = vmatprep.subr.bf16.mxu0 0
  %5626 = vmatpush1.bf16.msra.mxu0 0
  %5627 = vmatprep.subr.bf16.mxu0 0
  %5628 = vmatpush1.bf16.msra.mxu0 0
  %5629 = vmatprep.subr.bf16.mxu0 0
  %5630 = vmatpush1.bf16.msra.mxu0 0
  %5631 = vmatprep.subr.bf16.mxu0 0
  %5632 = vmatpush1.bf16.msra.mxu0 0
  %5633 = vmatprep.subr.bf16.mxu0 0
  %5634 = vmatpush1.bf16.msra.mxu0 0
  %5635 = vmatprep.subr.bf16.mxu0 0
  %5636 = vmatpush1.bf16.msra.mxu0 0
  %5637 = vmatprep.subr.bf16.mxu0 0
  %5638 = vmatpush1.bf16.msra.mxu0 0
  %5639 = vmatprep.subr.bf16.mxu0 0
  %5640 = vmatpush1.bf16.msra.mxu0 0
  %5641 = vmatprep.subr.bf16.mxu0 0
  %5642 = vmatpush1.bf16.msra.mxu0 0
  %5643 = vmatprep.subr.bf16.mxu0 0
  %5644 = vmatpush1.bf16.msra.mxu0 0
  %5645 = vmatprep.mubr.bf16.mxu0 0
  %5646 = vmatmul.mubr.bf16.gmra.mrb[0].mxu0 %v5531
  %v5647 = vpop.f32.mrb[0].mxu0
  %v5648 = vadd.f32 %v5577, %v5647
  %v5649 = vpop.f32.mrb[0].mxu0
  %v5650 = vadd.f32 %v5579, %v5649
  %v5651 = vpop.f32.mrb[0].mxu0
  %v5652 = vadd.f32 %v5581, %v5651
  %v5653 = vpop.f32.mrb[0].mxu0
  %v5654 = vadd.f32 %v5583, %v5653
  %5655 = vmatprep.mubr.bf16.mxu0 0
  %5656 = vmatmul.mubr.bf16.gmra.mrb[0].mxu0 %v5534
  %v5657 = vpop.f32.mrb[0].mxu0
  %v5658 = vadd.f32 %v5587, %v5657
  %v5659 = vpop.f32.mrb[0].mxu0
  %v5660 = vadd.f32 %v5589, %v5659
  %v5661 = vpop.f32.mrb[0].mxu0
  %v5662 = vadd.f32 %v5591, %v5661
  %v5663 = vpop.f32.mrb[0].mxu0
  %v5664 = vadd.f32 %v5593, %v5663
  %5665 = vmatprep.mubr.bf16.mxu0 0
  %5666 = vmatmul.mubr.bf16.gmra.mrb[0].mxu0 %v5537
  %v5667 = vpop.f32.mrb[0].mxu0
  %v5668 = vadd.f32 %v5597, %v5667
  %v5669 = vpop.f32.mrb[0].mxu0
  %v5670 = vadd.f32 %v5599, %v5669
  %v5671 = vpop.f32.mrb[0].mxu0
  %v5672 = vadd.f32 %v5601, %v5671
  %v5673 = vpop.f32.mrb[0].mxu0
  %v5674 = vadd.f32 %v5603, %v5673
  %5675 = vmatprep.mubr.bf16.mxu0 0
  %5676 = vmatmul.mubr.bf16.gmra.mrb[0].mxu0 %v5540
  %v5677 = vpop.f32.mrb[0].mxu0
  %v5678 = vadd.f32 %v5607, %v5677
  %v5679 = vpop.f32.mrb[0].mxu0
  %v5680 = vadd.f32 %v5609, %v5679
  %v5681 = vpop.f32.mrb[0].mxu0
  %v5682 = vpop.f32.mrb[0].mxu0
  %5683 = vdwg.mxu0
  %v5684 = vld [vmem:[#allocation2 + $0xc] sm:$0xff]
  %v5685 = vld [vmem:[#allocation2 + $0x14] sm:$0xf]
  %v5686 = vld [vmem:[#allocation2 + $0x18] sm:$0xff]
  %v5687 = vld [vmem:[#allocation2 + $0x20] sm:$0xf]
  %v5688 = vld [vmem:[#allocation2 + $0x24] sm:$0xff]
  %v5689 = vld [vmem:[#allocation2 + $0x2c] sm:$0xf]
  %v5690 = vld [vmem:[#allocation2 + $0x30] sm:$0xff]
  %v5691 = vld [vmem:[#allocation2 + $0x38] sm:$0xf]
  %v5692 = vld [vmem:[#allocation2 + $0x3c] sm:$0xff]
  %v5693 = vld [vmem:[#allocation2 + $0x44] sm:$0xf]
  %v5694 = vld [vmem:[#allocation2 + $0x48] sm:$0xff]
  %v5695 = vld [vmem:[#allocation2 + $0x50] sm:$0xf]
  %v5696 = vld [vmem:[#allocation2 + $0x54] sm:$0xff]
  %v5697 = vld [vmem:[#allocation2 + $0x5c] sm:$0xf]
  %s5698 = scalar_lea.vmem %s3, 2016
  %v5699 = vld [vmem:[%s5698] sm:$0xff]
  %v5700 = vld [vmem:[%s5698 + $0x8] sm:$0xff]
  %v5701 = vld [vmem:[%s5698 + $0x10] sm:$0xff]
  %v5702 = vld [vmem:[%s5698 + $0x18] sm:$0xff]
  %v5703 = vld [vmem:[%s5698 + $0x20] sm:$0xff]
  %v5704 = vld [vmem:[%s5698 + $0x28] sm:$0xff]
  %v5705 = vld [vmem:[%s5698 + $0x30] sm:$0xff]
  %v5706 = vld [vmem:[%s5698 + $0x38] sm:$0xff]
  %v5707 = vld [vmem:[%s5698 + $0x40] sm:$0xff]
  %v5708 = vld [vmem:[%s5698 + $0x48] sm:$0xff]
  %v5709 = vld [vmem:[%s5698 + $0x50] sm:$0xff]
  %v5710 = vld [vmem:[%s5698 + $0x58] sm:$0xff]
  %v5711 = vld [vmem:[%s5698 + $0x60] sm:$0xff]
  %v5712 = vld [vmem:[%s5698 + $0x68] sm:$0xff]
  %v5713 = vld [vmem:[%s5698 + $0x70] sm:$0xff]
  %v5714 = vld [vmem:[%s5698 + $0x78] sm:$0xff]
  %v5715 = vld [vmem:[%s5698 + $0x80] sm:$0xff]
  %v5716 = vld [vmem:[%s5698 + $0x88] sm:$0xff]
  %v5717 = vld [vmem:[%s5698 + $0x90] sm:$0xff]
  %v5718 = vld [vmem:[%s5698 + $0x98] sm:$0xff]
  %v5719 = vld [vmem:[%s5698 + $0xa0] sm:$0xff]
  %v5720 = vld [vmem:[%s5698 + $0xa8] sm:$0xff]
  %v5721 = vld [vmem:[%s5698 + $0xb0] sm:$0xff]
  %v5722 = vld [vmem:[%s5698 + $0xb8] sm:$0xff]
  %v5723 = vld [vmem:[%s5698 + $0xc0] sm:$0xff]
  %v5724 = vld [vmem:[%s5698 + $0xc8] sm:$0xff]
  %v5725 = vld [vmem:[%s5698 + $0xd0] sm:$0xff]
  %v5726 = vld [vmem:[%s5698 + $0xd8] sm:$0xff]
  %v5727 = vld [vmem:[%s5698 + $0xe0] sm:$0xff]
  %v5728 = vld [vmem:[%s5698 + $0xe8] sm:$0xff]
  %v5729 = vld [vmem:[%s5698 + $0xf0] sm:$0xff]
  %v5730 = vld [vmem:[%s5698 + $0xf8] sm:$0xff]
  %v5731 = vld [vmem:[%s5698 + $0x100] sm:$0xff]
  %v5732 = vld [vmem:[%s5698 + $0x108] sm:$0xff]
  %v5733 = vld [vmem:[%s5698 + $0x110] sm:$0xff]
  %v5734 = vld [vmem:[%s5698 + $0x118] sm:$0xff]
  %v5749 = vunpack.c.l.b16 %v5684
  %v5750 = vunpack.c.h.b16 %v5684
  %v5751 = vunpack.c.l.b16 %v5685
  %v5752 = vunpack.c.l.b16 %v5686
  %v5753 = vunpack.c.h.b16 %v5686
  %v5754 = vunpack.c.l.b16 %v5687
  %v5755 = vunpack.c.l.b16 %v5688
  %v5756 = vunpack.c.h.b16 %v5688
  %v5757 = vunpack.c.l.b16 %v5689
  %v5758 = vunpack.c.l.b16 %v5690
  %v5759 = vunpack.c.h.b16 %v5690
  %v5760 = vunpack.c.l.b16 %v5691
  %v5761 = vunpack.c.l.b16 %v5692
  %v5762 = vunpack.c.h.b16 %v5692
  %v5763 = vunpack.c.l.b16 %v5693
  %v5764 = vunpack.c.l.b16 %v5694
  %v5765 = vunpack.c.h.b16 %v5694
  %v5766 = vunpack.c.l.b16 %v5695
  %v5767 = vunpack.c.l.b16 %v5696
  %v5768 = vunpack.c.h.b16 %v5696
  %v5769 = vunpack.c.l.b16 %v5697
  %v5770 = vpack.c.b16 %v5752, %v5749
  %v5771 = vpack.c.b16 %v5753, %v5750
  %v5772 = vpack.c.b16 %v5754, %v5751
  %v5773 = vpack.c.b16 %v5758, %v5755
  %v5774 = vpack.c.b16 %v5759, %v5756
  %v5775 = vpack.c.b16 %v5760, %v5757
  %v5776 = vpack.c.b16 %v5764, %v5761
  %v5777 = vpack.c.b16 %v5765, %v5762
  %v5778 = vpack.c.b16 %v5766, %v5763
  %v5779 = vpack.c.b16 %v5767, %v5767
  %v5780 = vpack.c.b16 %v5768, %v5768
  %v5781 = vpack.c.b16 %v5769, %v5769
  %v5826 = vunpack.c.l.b16 %v5699
  %v5827 = vunpack.c.h.b16 %v5699
  %v5828 = vunpack.c.l.b16 %v5700
  %v5829 = vunpack.c.h.b16 %v5700
  %v5830 = vunpack.c.l.b16 %v5701
  %v5831 = vunpack.c.h.b16 %v5701
  %v5832 = vunpack.c.l.b16 %v5702
  %v5833 = vunpack.c.h.b16 %v5702
  %v5834 = vunpack.c.l.b16 %v5703
  %v5835 = vunpack.c.h.b16 %v5703
  %v5836 = vunpack.c.l.b16 %v5704
  %v5837 = vunpack.c.h.b16 %v5704
  %v5838 = vunpack.c.l.b16 %v5705
  %v5839 = vunpack.c.h.b16 %v5705
  %v5840 = vunpack.c.l.b16 %v5706
  %v5841 = vunpack.c.h.b16 %v5706
  %v5842 = vunpack.c.l.b16 %v5707
  %v5843 = vunpack.c.h.b16 %v5707
  %v5844 = vunpack.c.l.b16 %v5708
  %v5845 = vunpack.c.h.b16 %v5708
  %v5846 = vunpack.c.l.b16 %v5709
  %v5847 = vunpack.c.h.b16 %v5709
  %v5848 = vunpack.c.l.b16 %v5710
  %v5849 = vunpack.c.h.b16 %v5710
  %v5850 = vunpack.c.l.b16 %v5711
  %v5851 = vunpack.c.h.b16 %v5711
  %v5852 = vunpack.c.l.b16 %v5712
  %v5853 = vunpack.c.h.b16 %v5712
  %v5854 = vunpack.c.l.b16 %v5713
  %v5855 = vunpack.c.h.b16 %v5713
  %v5856 = vunpack.c.l.b16 %v5714
  %v5857 = vunpack.c.h.b16 %v5714
  %v5858 = vunpack.c.l.b16 %v5715
  %v5859 = vunpack.c.h.b16 %v5715
  %v5860 = vunpack.c.l.b16 %v5716
  %v5861 = vunpack.c.h.b16 %v5716
  %v5862 = vunpack.c.l.b16 %v5717
  %v5863 = vunpack.c.h.b16 %v5717
  %v5864 = vunpack.c.l.b16 %v5718
  %v5865 = vunpack.c.h.b16 %v5718
  %v5866 = vunpack.c.l.b16 %v5719
  %v5867 = vunpack.c.h.b16 %v5719
  %v5868 = vunpack.c.l.b16 %v5720
  %v5869 = vunpack.c.h.b16 %v5720
  %v5870 = vunpack.c.l.b16 %v5721
  %v5871 = vunpack.c.h.b16 %v5721
  %v5872 = vunpack.c.l.b16 %v5722
  %v5873 = vunpack.c.h.b16 %v5722
  %v5874 = vunpack.c.l.b16 %v5723
  %v5875 = vunpack.c.h.b16 %v5723
  %v5876 = vunpack.c.l.b16 %v5724
  %v5877 = vunpack.c.h.b16 %v5724
  %v5878 = vunpack.c.l.b16 %v5725
  %v5879 = vunpack.c.h.b16 %v5725
  %v5880 = vunpack.c.l.b16 %v5726
  %v5881 = vunpack.c.h.b16 %v5726
  %v5882 = vunpack.c.l.b16 %v5727
  %v5883 = vunpack.c.h.b16 %v5727
  %v5884 = vunpack.c.l.b16 %v5728
  %v5885 = vunpack.c.h.b16 %v5728
  %v5886 = vunpack.c.l.b16 %v5729
  %v5887 = vunpack.c.h.b16 %v5729
  %v5888 = vunpack.c.l.b16 %v5730
  %v5889 = vunpack.c.h.b16 %v5730
  %v5890 = vunpack.c.l.b16 %v5731
  %v5891 = vunpack.c.h.b16 %v5731
  %v5892 = vunpack.c.l.b16 %v5732
  %v5893 = vunpack.c.h.b16 %v5732
  %v5894 = vunpack.c.l.b16 %v5733
  %v5895 = vunpack.c.h.b16 %v5733
  %v5896 = vunpack.c.l.b16 %v5734
  %v5897 = vunpack.c.h.b16 %v5734
  %v5898 = vpack.c.b16 %v5828, %v5826
  %v5899 = vpack.c.b16 %v5829, %v5827
  %v5900 = vpack.c.b16 %v5832, %v5830
  %v5901 = vpack.c.b16 %v5833, %v5831
  %v5902 = vpack.c.b16 %v5836, %v5834
  %v5903 = vpack.c.b16 %v5837, %v5835
  %v5904 = vpack.c.b16 %v5840, %v5838
  %v5905 = vpack.c.b16 %v5841, %v5839
  %v5906 = vpack.c.b16 %v5844, %v5842
  %v5907 = vpack.c.b16 %v5845, %v5843
  %v5908 = vpack.c.b16 %v5848, %v5846
  %v5909 = vpack.c.b16 %v5849, %v5847
  %v5910 = vpack.c.b16 %v5852, %v5850
  %v5911 = vpack.c.b16 %v5853, %v5851
  %v5912 = vpack.c.b16 %v5856, %v5854
  %v5913 = vpack.c.b16 %v5857, %v5855
  %v5914 = vpack.c.b16 %v5860, %v5858
  %v5915 = vpack.c.b16 %v5861, %v5859
  %v5916 = vpack.c.b16 %v5864, %v5862
  %v5917 = vpack.c.b16 %v5865, %v5863
  %v5918 = vpack.c.b16 %v5868, %v5866
  %v5919 = vpack.c.b16 %v5869, %v5867
  %v5920 = vpack.c.b16 %v5872, %v5870
  %v5921 = vpack.c.b16 %v5873, %v5871
  %v5922 = vpack.c.b16 %v5876, %v5874
  %v5923 = vpack.c.b16 %v5877, %v5875
  %v5924 = vpack.c.b16 %v5880, %v5878
  %v5925 = vpack.c.b16 %v5881, %v5879
  %v5926 = vpack.c.b16 %v5884, %v5882
  %v5927 = vpack.c.b16 %v5885, %v5883
  %v5928 = vpack.c.b16 %v5888, %v5886
  %v5929 = vpack.c.b16 %v5889, %v5887
  %v5930 = vpack.c.b16 %v5892, %v5890
  %v5931 = vpack.c.b16 %v5893, %v5891
  %v5932 = vpack.c.b16 %v5896, %v5894
  %v5933 = vpack.c.b16 %v5897, %v5895
  %v5971 = vsel %vm277, %v5772, 0
  %v5974 = vsel %vm277, %v5775, 0
  %v5977 = vsel %vm277, %v5778, 0
  %v5980 = vsel %vm277, %v5781, 0
  %5982 = vmatprep.subr.bf16.mxu0 %v5899
  %5983 = vmatpush1.bf16.msra.mxu0 %v5898
  %5984 = vmatprep.subr.bf16.mxu0 %v5901
  %5985 = vmatpush1.bf16.msra.mxu0 %v5900
  %5986 = vmatprep.subr.bf16.mxu0 %v5903
  %5987 = vmatpush1.bf16.msra.mxu0 %v5902
  %5988 = vmatprep.subr.bf16.mxu0 %v5905
  %5989 = vmatpush1.bf16.msra.mxu0 %v5904
  %5990 = vmatprep.subr.bf16.mxu0 %v5907
  %5991 = vmatpush1.bf16.msra.mxu0 %v5906
  %5992 = vmatprep.subr.bf16.mxu0 %v5909
  %5993 = vmatpush1.bf16.msra.mxu0 %v5908
  %5994 = vmatprep.subr.bf16.mxu0 %v5911
  %5995 = vmatpush1.bf16.msra.mxu0 %v5910
  %5996 = vmatprep.subr.bf16.mxu0 %v5913
  %5997 = vmatpush1.bf16.msra.mxu0 %v5912
  %5998 = vmatprep.subr.bf16.mxu0 %v5915
  %5999 = vmatpush1.bf16.msra.mxu0 %v5914
  %6000 = vmatprep.subr.bf16.mxu0 %v5917
  %6001 = vmatpush1.bf16.msra.mxu0 %v5916
  %6002 = vmatprep.subr.bf16.mxu0 %v5919
  %6003 = vmatpush1.bf16.msra.mxu0 %v5918
  %6004 = vmatprep.subr.bf16.mxu0 %v5921
  %6005 = vmatpush1.bf16.msra.mxu0 %v5920
  %6006 = vmatprep.subr.bf16.mxu0 %v5923
  %6007 = vmatpush1.bf16.msra.mxu0 %v5922
  %6008 = vmatprep.subr.bf16.mxu0 %v5925
  %6009 = vmatpush1.bf16.msra.mxu0 %v5924
  %6010 = vmatprep.subr.bf16.mxu0 %v5927
  %6011 = vmatpush1.bf16.msra.mxu0 %v5926
  %6012 = vmatprep.subr.bf16.mxu0 %v5929
  %6013 = vmatpush1.bf16.msra.mxu0 %v5928
  %6014 = vmatprep.mubr.bf16.mxu0 %v5771
  %6015 = vmatmul.mubr.bf16.gmra.mrb[0].mxu0 %v5770
  %v6016 = vpop.f32.mrb[0].mxu0
  %v6017 = vadd.f32 0.0, %v6016
  %v6018 = vpop.f32.mrb[0].mxu0
  %v6019 = vadd.f32 0.0, %v6018
  %v6020 = vpop.f32.mrb[0].mxu0
  %v6021 = vadd.f32 0.0, %v6020
  %v6022 = vpop.f32.mrb[0].mxu0
  %v6023 = vadd.f32 0.0, %v6022
  %6024 = vmatprep.mubr.bf16.mxu0 %v5774
  %6025 = vmatmul.mubr.bf16.gmra.mrb[0].mxu0 %v5773
  %v6026 = vpop.f32.mrb[0].mxu0
  %v6027 = vadd.f32 0.0, %v6026
  %v6028 = vpop.f32.mrb[0].mxu0
  %v6029 = vadd.f32 0.0, %v6028
  %v6030 = vpop.f32.mrb[0].mxu0
  %v6031 = vadd.f32 0.0, %v6030
  %v6032 = vpop.f32.mrb[0].mxu0
  %v6033 = vadd.f32 0.0, %v6032
  %6034 = vmatprep.mubr.bf16.mxu0 %v5777
  %6035 = vmatmul.mubr.bf16.gmra.mrb[0].mxu0 %v5776
  %v6036 = vpop.f32.mrb[0].mxu0
  %v6037 = vadd.f32 0.0, %v6036
  %v6038 = vpop.f32.mrb[0].mxu0
  %v6039 = vadd.f32 0.0, %v6038
  %v6040 = vpop.f32.mrb[0].mxu0
  %v6041 = vadd.f32 0.0, %v6040
  %v6042 = vpop.f32.mrb[0].mxu0
  %v6043 = vadd.f32 0.0, %v6042
  %6044 = vmatprep.mubr.bf16.mxu0 %v5780
  %6045 = vmatmul.mubr.bf16.gmra.mrb[0].mxu0 %v5779
  %v6046 = vpop.f32.mrb[0].mxu0
  %v6047 = vadd.f32 0.0, %v6046
  %v6048 = vpop.f32.mrb[0].mxu0
  %v6049 = vadd.f32 0.0, %v6048
  %v6050 = vpop.f32.mrb[0].mxu0
  %v6051 = vpop.f32.mrb[0].mxu0
  %6052 = vdwg.mxu0
  %6053 = vmatprep.subr.bf16.mxu0 %v5931
  %6054 = vmatpush1.bf16.msra.mxu0 %v5930
  %6055 = vmatprep.subr.bf16.mxu0 %v5933
  %6056 = vmatpush1.bf16.msra.mxu0 %v5932
  %6057 = vmatprep.subr.bf16.mxu0 0
  %6058 = vmatpush1.bf16.msra.mxu0 0
  %6059 = vmatprep.subr.bf16.mxu0 0
  %6060 = vmatpush1.bf16.msra.mxu0 0
  %6061 = vmatprep.subr.bf16.mxu0 0
  %6062 = vmatpush1.bf16.msra.mxu0 0
  %6063 = vmatprep.subr.bf16.mxu0 0
  %6064 = vmatpush1.bf16.msra.mxu0 0
  %6065 = vmatprep.subr.bf16.mxu0 0
  %6066 = vmatpush1.bf16.msra.mxu0 0
  %6067 = vmatprep.subr.bf16.mxu0 0
  %6068 = vmatpush1.bf16.msra.mxu0 0
  %6069 = vmatprep.subr.bf16.mxu0 0
  %6070 = vmatpush1.bf16.msra.mxu0 0
  %6071 = vmatprep.subr.bf16.mxu0 0
  %6072 = vmatpush1.bf16.msra.mxu0 0
  %6073 = vmatprep.subr.bf16.mxu0 0
  %6074 = vmatpush1.bf16.msra.mxu0 0
  %6075 = vmatprep.subr.bf16.mxu0 0
  %6076 = vmatpush1.bf16.msra.mxu0 0
  %6077 = vmatprep.subr.bf16.mxu0 0
  %6078 = vmatpush1.bf16.msra.mxu0 0
  %6079 = vmatprep.subr.bf16.mxu0 0
  %6080 = vmatpush1.bf16.msra.mxu0 0
  %6081 = vmatprep.subr.bf16.mxu0 0
  %6082 = vmatpush1.bf16.msra.mxu0 0
  %6083 = vmatprep.subr.bf16.mxu0 0
  %6084 = vmatpush1.bf16.msra.mxu0 0
  %6085 = vmatprep.mubr.bf16.mxu0 0
  %6086 = vmatmul.mubr.bf16.gmra.mrb[0].mxu0 %v5971
  %v6087 = vpop.f32.mrb[0].mxu0
  %v6088 = vadd.f32 %v6017, %v6087
  %v6089 = vpop.f32.mrb[0].mxu0
  %v6090 = vadd.f32 %v6019, %v6089
  %v6091 = vpop.f32.mrb[0].mxu0
  %v6092 = vadd.f32 %v6021, %v6091
  %v6093 = vpop.f32.mrb[0].mxu0
  %v6094 = vadd.f32 %v6023, %v6093
  %6095 = vmatprep.mubr.bf16.mxu0 0
  %6096 = vmatmul.mubr.bf16.gmra.mrb[0].mxu0 %v5974
  %v6097 = vpop.f32.mrb[0].mxu0
  %v6098 = vadd.f32 %v6027, %v6097
  %v6099 = vpop.f32.mrb[0].mxu0
  %v6100 = vadd.f32 %v6029, %v6099
  %v6101 = vpop.f32.mrb[0].mxu0
  %v6102 = vadd.f32 %v6031, %v6101
  %v6103 = vpop.f32.mrb[0].mxu0
  %v6104 = vadd.f32 %v6033, %v6103
  %6105 = vmatprep.mubr.bf16.mxu0 0
  %6106 = vmatmul.mubr.bf16.gmra.mrb[0].mxu0 %v5977
  %v6107 = vpop.f32.mrb[0].mxu0
  %v6108 = vadd.f32 %v6037, %v6107
  %v6109 = vpop.f32.mrb[0].mxu0
  %v6110 = vadd.f32 %v6039, %v6109
  %v6111 = vpop.f32.mrb[0].mxu0
  %v6112 = vadd.f32 %v6041, %v6111
  %v6113 = vpop.f32.mrb[0].mxu0
  %v6114 = vadd.f32 %v6043, %v6113
  %6115 = vmatprep.mubr.bf16.mxu0 0
  %6116 = vmatmul.mubr.bf16.gmra.mrb[0].mxu0 %v5980
  %v6117 = vpop.f32.mrb[0].mxu0
  %v6118 = vadd.f32 %v6047, %v6117
  %v6119 = vpop.f32.mrb[0].mxu0
  %v6120 = vadd.f32 %v6049, %v6119
  %v6121 = vpop.f32.mrb[0].mxu0
  %v6122 = vpop.f32.mrb[0].mxu0
  %6123 = vdwg.mxu0
  %v6124 = vadd.f32 %v5648, %v6088
  %v6125 = vadd.f32 %v5650, %v6090
  %v6126 = vadd.f32 %v5652, %v6092
  %v6127 = vadd.f32 %v5654, %v6094
  %v6128 = vadd.f32 %v5658, %v6098
  %v6129 = vadd.f32 %v5660, %v6100
  %v6130 = vadd.f32 %v5662, %v6102
  %v6131 = vadd.f32 %v5664, %v6104
  %v6132 = vadd.f32 %v5668, %v6108
  %v6133 = vadd.f32 %v5670, %v6110
  %v6134 = vadd.f32 %v5672, %v6112
  %v6135 = vadd.f32 %v5674, %v6114
  %v6136 = vadd.f32 %v5678, %v6118
  %v6137 = vadd.f32 %v5680, %v6120
  %v6138 = vld [vmem:[%s32 + $0xc] sm:$0xff]
  %v6139 = vld [vmem:[%s32 + $0x14] sm:$0xf]
  %v6140 = vld [vmem:[%s32 + $0x18] sm:$0xff]
  %v6141 = vld [vmem:[%s32 + $0x20] sm:$0xf]
  %v6142 = vld [vmem:[%s32 + $0x24] sm:$0xff]
  %v6143 = vld [vmem:[%s32 + $0x2c] sm:$0xf]
  %v6144 = vld [vmem:[%s32 + $0x30] sm:$0xff]
  %v6145 = vld [vmem:[%s32 + $0x38] sm:$0xf]
  %v6146 = vld [vmem:[%s32 + $0x3c] sm:$0xff]
  %v6147 = vld [vmem:[%s32 + $0x44] sm:$0xf]
  %v6148 = vld [vmem:[%s32 + $0x48] sm:$0xff]
  %v6149 = vld [vmem:[%s32 + $0x50] sm:$0xf]
  %v6150 = vld [vmem:[%s32 + $0x54] sm:$0xff]
  %v6151 = vld [vmem:[%s32 + $0x5c] sm:$0xf]
  %s6152 = scalar_lea.vmem %s3, 2304
  %v6153 = vld [vmem:[%s6152] sm:$0xff]
  %v6154 = vld [vmem:[%s6152 + $0x8] sm:$0xff]
  %v6155 = vld [vmem:[%s6152 + $0x10] sm:$0xff]
  %v6156 = vld [vmem:[%s6152 + $0x18] sm:$0xff]
  %v6157 = vld [vmem:[%s6152 + $0x20] sm:$0xff]
  %v6158 = vld [vmem:[%s6152 + $0x28] sm:$0xff]
  %v6159 = vld [vmem:[%s6152 + $0x30] sm:$0xff]
  %v6160 = vld [vmem:[%s6152 + $0x38] sm:$0xff]
  %v6161 = vld [vmem:[%s6152 + $0x40] sm:$0xff]
  %v6162 = vld [vmem:[%s6152 + $0x48] sm:$0xff]
  %v6163 = vld [vmem:[%s6152 + $0x50] sm:$0xff]
  %v6164 = vld [vmem:[%s6152 + $0x58] sm:$0xff]
  %v6165 = vld [vmem:[%s6152 + $0x60] sm:$0xff]
  %v6166 = vld [vmem:[%s6152 + $0x68] sm:$0xff]
  %v6167 = vld [vmem:[%s6152 + $0x70] sm:$0xff]
  %v6168 = vld [vmem:[%s6152 + $0x78] sm:$0xff]
  %v6169 = vld [vmem:[%s6152 + $0x80] sm:$0xff]
  %v6170 = vld [vmem:[%s6152 + $0x88] sm:$0xff]
  %v6171 = vld [vmem:[%s6152 + $0x90] sm:$0xff]
  %v6172 = vld [vmem:[%s6152 + $0x98] sm:$0xff]
  %v6173 = vld [vmem:[%s6152 + $0xa0] sm:$0xff]
  %v6174 = vld [vmem:[%s6152 + $0xa8] sm:$0xff]
  %v6175 = vld [vmem:[%s6152 + $0xb0] sm:$0xff]
  %v6176 = vld [vmem:[%s6152 + $0xb8] sm:$0xff]
  %v6177 = vld [vmem:[%s6152 + $0xc0] sm:$0xff]
  %v6178 = vld [vmem:[%s6152 + $0xc8] sm:$0xff]
  %v6179 = vld [vmem:[%s6152 + $0xd0] sm:$0xff]
  %v6180 = vld [vmem:[%s6152 + $0xd8] sm:$0xff]
  %v6181 = vld [vmem:[%s6152 + $0xe0] sm:$0xff]
  %v6182 = vld [vmem:[%s6152 + $0xe8] sm:$0xff]
  %v6183 = vld [vmem:[%s6152 + $0xf0] sm:$0xff]
  %v6184 = vld [vmem:[%s6152 + $0xf8] sm:$0xff]
  %v6185 = vld [vmem:[%s6152 + $0x100] sm:$0xff]
  %v6186 = vld [vmem:[%s6152 + $0x108] sm:$0xff]
  %v6187 = vld [vmem:[%s6152 + $0x110] sm:$0xff]
  %v6188 = vld [vmem:[%s6152 + $0x118] sm:$0xff]
  %v6203 = vunpack.c.l.b16 %v6138
  %v6204 = vunpack.c.h.b16 %v6138
  %v6205 = vunpack.c.l.b16 %v6139
  %v6206 = vunpack.c.l.b16 %v6140
  %v6207 = vunpack.c.h.b16 %v6140
  %v6208 = vunpack.c.l.b16 %v6141
  %v6209 = vunpack.c.l.b16 %v6142
  %v6210 = vunpack.c.h.b16 %v6142
  %v6211 = vunpack.c.l.b16 %v6143
  %v6212 = vunpack.c.l.b16 %v6144
  %v6213 = vunpack.c.h.b16 %v6144
  %v6214 = vunpack.c.l.b16 %v6145
  %v6215 = vunpack.c.l.b16 %v6146
  %v6216 = vunpack.c.h.b16 %v6146
  %v6217 = vunpack.c.l.b16 %v6147
  %v6218 = vunpack.c.l.b16 %v6148
  %v6219 = vunpack.c.h.b16 %v6148
  %v6220 = vunpack.c.l.b16 %v6149
  %v6221 = vunpack.c.l.b16 %v6150
  %v6222 = vunpack.c.h.b16 %v6150
  %v6223 = vunpack.c.l.b16 %v6151
  %v6224 = vpack.c.b16 %v6206, %v6203
  %v6225 = vpack.c.b16 %v6207, %v6204
  %v6226 = vpack.c.b16 %v6208, %v6205
  %v6227 = vpack.c.b16 %v6212, %v6209
  %v6228 = vpack.c.b16 %v6213, %v6210
  %v6229 = vpack.c.b16 %v6214, %v6211
  %v6230 = vpack.c.b16 %v6218, %v6215
  %v6231 = vpack.c.b16 %v6219, %v6216
  %v6232 = vpack.c.b16 %v6220, %v6217
  %v6233 = vpack.c.b16 %v6221, %v6221
  %v6234 = vpack.c.b16 %v6222, %v6222
  %v6235 = vpack.c.b16 %v6223, %v6223
  %v6280 = vunpack.c.l.b16 %v6153
  %v6281 = vunpack.c.h.b16 %v6153
  %v6282 = vunpack.c.l.b16 %v6154
  %v6283 = vunpack.c.h.b16 %v6154
  %v6284 = vunpack.c.l.b16 %v6155
  %v6285 = vunpack.c.h.b16 %v6155
  %v6286 = vunpack.c.l.b16 %v6156
  %v6287 = vunpack.c.h.b16 %v6156
  %v6288 = vunpack.c.l.b16 %v6157
  %v6289 = vunpack.c.h.b16 %v6157
  %v6290 = vunpack.c.l.b16 %v6158
  %v6291 = vunpack.c.h.b16 %v6158
  %v6292 = vunpack.c.l.b16 %v6159
  %v6293 = vunpack.c.h.b16 %v6159
  %v6294 = vunpack.c.l.b16 %v6160
  %v6295 = vunpack.c.h.b16 %v6160
  %v6296 = vunpack.c.l.b16 %v6161
  %v6297 = vunpack.c.h.b16 %v6161
  %v6298 = vunpack.c.l.b16 %v6162
  %v6299 = vunpack.c.h.b16 %v6162
  %v6300 = vunpack.c.l.b16 %v6163
  %v6301 = vunpack.c.h.b16 %v6163
  %v6302 = vunpack.c.l.b16 %v6164
  %v6303 = vunpack.c.h.b16 %v6164
  %v6304 = vunpack.c.l.b16 %v6165
  %v6305 = vunpack.c.h.b16 %v6165
  %v6306 = vunpack.c.l.b16 %v6166
  %v6307 = vunpack.c.h.b16 %v6166
  %v6308 = vunpack.c.l.b16 %v6167
  %v6309 = vunpack.c.h.b16 %v6167
  %v6310 = vunpack.c.l.b16 %v6168
  %v6311 = vunpack.c.h.b16 %v6168
  %v6312 = vunpack.c.l.b16 %v6169
  %v6313 = vunpack.c.h.b16 %v6169
  %v6314 = vunpack.c.l.b16 %v6170
  %v6315 = vunpack.c.h.b16 %v6170
  %v6316 = vunpack.c.l.b16 %v6171
  %v6317 = vunpack.c.h.b16 %v6171
  %v6318 = vunpack.c.l.b16 %v6172
  %v6319 = vunpack.c.h.b16 %v6172
  %v6320 = vunpack.c.l.b16 %v6173
  %v6321 = vunpack.c.h.b16 %v6173
  %v6322 = vunpack.c.l.b16 %v6174
  %v6323 = vunpack.c.h.b16 %v6174
  %v6324 = vunpack.c.l.b16 %v6175
  %v6325 = vunpack.c.h.b16 %v6175
  %v6326 = vunpack.c.l.b16 %v6176
  %v6327 = vunpack.c.h.b16 %v6176
  %v6328 = vunpack.c.l.b16 %v6177
  %v6329 = vunpack.c.h.b16 %v6177
  %v6330 = vunpack.c.l.b16 %v6178
  %v6331 = vunpack.c.h.b16 %v6178
  %v6332 = vunpack.c.l.b16 %v6179
  %v6333 = vunpack.c.h.b16 %v6179
  %v6334 = vunpack.c.l.b16 %v6180
  %v6335 = vunpack.c.h.b16 %v6180
  %v6336 = vunpack.c.l.b16 %v6181
  %v6337 = vunpack.c.h.b16 %v6181
  %v6338 = vunpack.c.l.b16 %v6182
  %v6339 = vunpack.c.h.b16 %v6182
  %v6340 = vunpack.c.l.b16 %v6183
  %v6341 = vunpack.c.h.b16 %v6183
  %v6342 = vunpack.c.l.b16 %v6184
  %v6343 = vunpack.c.h.b16 %v6184
  %v6344 = vunpack.c.l.b16 %v6185
  %v6345 = vunpack.c.h.b16 %v6185
  %v6346 = vunpack.c.l.b16 %v6186
  %v6347 = vunpack.c.h.b16 %v6186
  %v6348 = vunpack.c.l.b16 %v6187
  %v6349 = vunpack.c.h.b16 %v6187
  %v6350 = vunpack.c.l.b16 %v6188
  %v6351 = vunpack.c.h.b16 %v6188
  %v6352 = vpack.c.b16 %v6282, %v6280
  %v6353 = vpack.c.b16 %v6283, %v6281
  %v6354 = vpack.c.b16 %v6286, %v6284
  %v6355 = vpack.c.b16 %v6287, %v6285
  %v6356 = vpack.c.b16 %v6290, %v6288
  %v6357 = vpack.c.b16 %v6291, %v6289
  %v6358 = vpack.c.b16 %v6294, %v6292
  %v6359 = vpack.c.b16 %v6295, %v6293
  %v6360 = vpack.c.b16 %v6298, %v6296
  %v6361 = vpack.c.b16 %v6299, %v6297
  %v6362 = vpack.c.b16 %v6302, %v6300
  %v6363 = vpack.c.b16 %v6303, %v6301
  %v6364 = vpack.c.b16 %v6306, %v6304
  %v6365 = vpack.c.b16 %v6307, %v6305
  %v6366 = vpack.c.b16 %v6310, %v6308
  %v6367 = vpack.c.b16 %v6311, %v6309
  %v6368 = vpack.c.b16 %v6314, %v6312
  %v6369 = vpack.c.b16 %v6315, %v6313
  %v6370 = vpack.c.b16 %v6318, %v6316
  %v6371 = vpack.c.b16 %v6319, %v6317
  %v6372 = vpack.c.b16 %v6322, %v6320
  %v6373 = vpack.c.b16 %v6323, %v6321
  %v6374 = vpack.c.b16 %v6326, %v6324
  %v6375 = vpack.c.b16 %v6327, %v6325
  %v6376 = vpack.c.b16 %v6330, %v6328
  %v6377 = vpack.c.b16 %v6331, %v6329
  %v6378 = vpack.c.b16 %v6334, %v6332
  %v6379 = vpack.c.b16 %v6335, %v6333
  %v6380 = vpack.c.b16 %v6338, %v6336
  %v6381 = vpack.c.b16 %v6339, %v6337
  %v6382 = vpack.c.b16 %v6342, %v6340
  %v6383 = vpack.c.b16 %v6343, %v6341
  %v6384 = vpack.c.b16 %v6346, %v6344
  %v6385 = vpack.c.b16 %v6347, %v6345
  %v6386 = vpack.c.b16 %v6350, %v6348
  %v6387 = vpack.c.b16 %v6351, %v6349
  %v6425 = vsel %vm277, %v6226, 0
  %v6428 = vsel %vm277, %v6229, 0
  %v6431 = vsel %vm277, %v6232, 0
  %v6434 = vsel %vm277, %v6235, 0
  %6436 = vmatprep.subr.bf16.mxu0 %v6353
  %6437 = vmatpush1.bf16.msra.mxu0 %v6352
  %6438 = vmatprep.subr.bf16.mxu0 %v6355
  %6439 = vmatpush1.bf16.msra.mxu0 %v6354
  %6440 = vmatprep.subr.bf16.mxu0 %v6357
  %6441 = vmatpush1.bf16.msra.mxu0 %v6356
  %6442 = vmatprep.subr.bf16.mxu0 %v6359
  %6443 = vmatpush1.bf16.msra.mxu0 %v6358
  %6444 = vmatprep.subr.bf16.mxu0 %v6361
  %6445 = vmatpush1.bf16.msra.mxu0 %v6360
  %6446 = vmatprep.subr.bf16.mxu0 %v6363
  %6447 = vmatpush1.bf16.msra.mxu0 %v6362
  %6448 = vmatprep.subr.bf16.mxu0 %v6365
  %6449 = vmatpush1.bf16.msra.mxu0 %v6364
  %6450 = vmatprep.subr.bf16.mxu0 %v6367
  %6451 = vmatpush1.bf16.msra.mxu0 %v6366
  %6452 = vmatprep.subr.bf16.mxu0 %v6369
  %6453 = vmatpush1.bf16.msra.mxu0 %v6368
  %6454 = vmatprep.subr.bf16.mxu0 %v6371
  %6455 = vmatpush1.bf16.msra.mxu0 %v6370
  %6456 = vmatprep.subr.bf16.mxu0 %v6373
  %6457 = vmatpush1.bf16.msra.mxu0 %v6372
  %6458 = vmatprep.subr.bf16.mxu0 %v6375
  %6459 = vmatpush1.bf16.msra.mxu0 %v6374
  %6460 = vmatprep.subr.bf16.mxu0 %v6377
  %6461 = vmatpush1.bf16.msra.mxu0 %v6376
  %6462 = vmatprep.subr.bf16.mxu0 %v6379
  %6463 = vmatpush1.bf16.msra.mxu0 %v6378
  %6464 = vmatprep.subr.bf16.mxu0 %v6381
  %6465 = vmatpush1.bf16.msra.mxu0 %v6380
  %6466 = vmatprep.subr.bf16.mxu0 %v6383
  %6467 = vmatpush1.bf16.msra.mxu0 %v6382
  %6468 = vmatprep.mubr.bf16.mxu0 %v6225
  %6469 = vmatmul.mubr.bf16.gmra.mrb[0].mxu0 %v6224
  %v6470 = vpop.f32.mrb[0].mxu0
  %v6471 = vadd.f32 0.0, %v6470
  %v6472 = vpop.f32.mrb[0].mxu0
  %v6473 = vadd.f32 0.0, %v6472
  %v6474 = vpop.f32.mrb[0].mxu0
  %v6475 = vadd.f32 0.0, %v6474
  %v6476 = vpop.f32.mrb[0].mxu0
  %v6477 = vadd.f32 0.0, %v6476
  %6478 = vmatprep.mubr.bf16.mxu0 %v6228
  %6479 = vmatmul.mubr.bf16.gmra.mrb[0].mxu0 %v6227
  %v6480 = vpop.f32.mrb[0].mxu0
  %v6481 = vadd.f32 0.0, %v6480
  %v6482 = vpop.f32.mrb[0].mxu0
  %v6483 = vadd.f32 0.0, %v6482
  %v6484 = vpop.f32.mrb[0].mxu0
  %v6485 = vadd.f32 0.0, %v6484
  %v6486 = vpop.f32.mrb[0].mxu0
  %v6487 = vadd.f32 0.0, %v6486
  %6488 = vmatprep.mubr.bf16.mxu0 %v6231
  %6489 = vmatmul.mubr.bf16.gmra.mrb[0].mxu0 %v6230
  %v6490 = vpop.f32.mrb[0].mxu0
  %v6491 = vadd.f32 0.0, %v6490
  %v6492 = vpop.f32.mrb[0].mxu0
  %v6493 = vadd.f32 0.0, %v6492
  %v6494 = vpop.f32.mrb[0].mxu0
  %v6495 = vadd.f32 0.0, %v6494
  %v6496 = vpop.f32.mrb[0].mxu0
  %v6497 = vadd.f32 0.0, %v6496
  %6498 = vmatprep.mubr.bf16.mxu0 %v6234
  %6499 = vmatmul.mubr.bf16.gmra.mrb[0].mxu0 %v6233
  %v6500 = vpop.f32.mrb[0].mxu0
  %v6501 = vadd.f32 0.0, %v6500
  %v6502 = vpop.f32.mrb[0].mxu0
  %v6503 = vadd.f32 0.0, %v6502
  %v6504 = vpop.f32.mrb[0].mxu0
  %v6505 = vpop.f32.mrb[0].mxu0
  %6506 = vdwg.mxu0
  %6507 = vmatprep.subr.bf16.mxu0 %v6385
  %6508 = vmatpush1.bf16.msra.mxu0 %v6384
  %6509 = vmatprep.subr.bf16.mxu0 %v6387
  %6510 = vmatpush1.bf16.msra.mxu0 %v6386
  %6511 = vmatprep.subr.bf16.mxu0 0
  %6512 = vmatpush1.bf16.msra.mxu0 0
  %6513 = vmatprep.subr.bf16.mxu0 0
  %6514 = vmatpush1.bf16.msra.mxu0 0
  %6515 = vmatprep.subr.bf16.mxu0 0
  %6516 = vmatpush1.bf16.msra.mxu0 0
  %6517 = vmatprep.subr.bf16.mxu0 0
  %6518 = vmatpush1.bf16.msra.mxu0 0
  %6519 = vmatprep.subr.bf16.mxu0 0
  %6520 = vmatpush1.bf16.msra.mxu0 0
  %6521 = vmatprep.subr.bf16.mxu0 0
  %6522 = vmatpush1.bf16.msra.mxu0 0
  %6523 = vmatprep.subr.bf16.mxu0 0
  %6524 = vmatpush1.bf16.msra.mxu0 0
  %6525 = vmatprep.subr.bf16.mxu0 0
  %6526 = vmatpush1.bf16.msra.mxu0 0
  %6527 = vmatprep.subr.bf16.mxu0 0
  %6528 = vmatpush1.bf16.msra.mxu0 0
  %6529 = vmatprep.subr.bf16.mxu0 0
  %6530 = vmatpush1.bf16.msra.mxu0 0
  %6531 = vmatprep.subr.bf16.mxu0 0
  %6532 = vmatpush1.bf16.msra.mxu0 0
  %6533 = vmatprep.subr.bf16.mxu0 0
  %6534 = vmatpush1.bf16.msra.mxu0 0
  %6535 = vmatprep.subr.bf16.mxu0 0
  %6536 = vmatpush1.bf16.msra.mxu0 0
  %6537 = vmatprep.subr.bf16.mxu0 0
  %6538 = vmatpush1.bf16.msra.mxu0 0
  %6539 = vmatprep.mubr.bf16.mxu0 0
  %6540 = vmatmul.mubr.bf16.gmra.mrb[0].mxu0 %v6425
  %v6541 = vpop.f32.mrb[0].mxu0
  %v6542 = vadd.f32 %v6471, %v6541
  %v6543 = vpop.f32.mrb[0].mxu0
  %v6544 = vadd.f32 %v6473, %v6543
  %v6545 = vpop.f32.mrb[0].mxu0
  %v6546 = vadd.f32 %v6475, %v6545
  %v6547 = vpop.f32.mrb[0].mxu0
  %v6548 = vadd.f32 %v6477, %v6547
  %6549 = vmatprep.mubr.bf16.mxu0 0
  %6550 = vmatmul.mubr.bf16.gmra.mrb[0].mxu0 %v6428
  %v6551 = vpop.f32.mrb[0].mxu0
  %v6552 = vadd.f32 %v6481, %v6551
  %v6553 = vpop.f32.mrb[0].mxu0
  %v6554 = vadd.f32 %v6483, %v6553
  %v6555 = vpop.f32.mrb[0].mxu0
  %v6556 = vadd.f32 %v6485, %v6555
  %v6557 = vpop.f32.mrb[0].mxu0
  %v6558 = vadd.f32 %v6487, %v6557
  %6559 = vmatprep.mubr.bf16.mxu0 0
  %6560 = vmatmul.mubr.bf16.gmra.mrb[0].mxu0 %v6431
  %v6561 = vpop.f32.mrb[0].mxu0
  %v6562 = vadd.f32 %v6491, %v6561
  %v6563 = vpop.f32.mrb[0].mxu0
  %v6564 = vadd.f32 %v6493, %v6563
  %v6565 = vpop.f32.mrb[0].mxu0
  %v6566 = vadd.f32 %v6495, %v6565
  %v6567 = vpop.f32.mrb[0].mxu0
  %v6568 = vadd.f32 %v6497, %v6567
  %6569 = vmatprep.mubr.bf16.mxu0 0
  %6570 = vmatmul.mubr.bf16.gmra.mrb[0].mxu0 %v6434
  %v6571 = vpop.f32.mrb[0].mxu0
  %v6572 = vadd.f32 %v6501, %v6571
  %v6573 = vpop.f32.mrb[0].mxu0
  %v6574 = vadd.f32 %v6503, %v6573
  %v6575 = vpop.f32.mrb[0].mxu0
  %v6576 = vpop.f32.mrb[0].mxu0
  %6577 = vdwg.mxu0
  %v6578 = vadd.f32 %v6124, %v6542
  %v6579 = vadd.f32 %v6125, %v6544
  %v6580 = vadd.f32 %v6126, %v6546
  %v6581 = vadd.f32 %v6127, %v6548
  %v6582 = vadd.f32 %v6128, %v6552
  %v6583 = vadd.f32 %v6129, %v6554
  %v6584 = vadd.f32 %v6130, %v6556
  %v6585 = vadd.f32 %v6131, %v6558
  %v6586 = vadd.f32 %v6132, %v6562
  %v6587 = vadd.f32 %v6133, %v6564
  %v6588 = vadd.f32 %v6134, %v6566
  %v6589 = vadd.f32 %v6135, %v6568
  %v6590 = vadd.f32 %v6136, %v6572
  %v6591 = vadd.f32 %v6137, %v6574
  %v6592 = vld [vmem:[#allocation2 + $0x18] sm:$0xff]
  %v6593 = vld [vmem:[#allocation2 + $0x20] sm:$0xf]
  %v6594 = vld [vmem:[#allocation2 + $0x24] sm:$0xff]
  %v6595 = vld [vmem:[#allocation2 + $0x2c] sm:$0xf]
  %v6596 = vld [vmem:[#allocation2 + $0x30] sm:$0xff]
  %v6597 = vld [vmem:[#allocation2 + $0x38] sm:$0xf]
  %v6598 = vld [vmem:[#allocation2 + $0x3c] sm:$0xff]
  %v6599 = vld [vmem:[#allocation2 + $0x44] sm:$0xf]
  %v6600 = vld [vmem:[#allocation2 + $0x48] sm:$0xff]
  %v6601 = vld [vmem:[#allocation2 + $0x50] sm:$0xf]
  %v6602 = vld [vmem:[#allocation2 + $0x54] sm:$0xff]
  %v6603 = vld [vmem:[#allocation2 + $0x5c] sm:$0xf]
  %v6604 = vld [vmem:[#allocation2 + $0x60] sm:$0xff]
  %v6605 = vld [vmem:[#allocation2 + $0x68] sm:$0xf]
  %s6606 = scalar_lea.vmem %s3, 2592
  %v6607 = vld [vmem:[%s6606] sm:$0xff]
  %v6608 = vld [vmem:[%s6606 + $0x8] sm:$0xff]
  %v6609 = vld [vmem:[%s6606 + $0x10] sm:$0xff]
  %v6610 = vld [vmem:[%s6606 + $0x18] sm:$0xff]
  %v6611 = vld [vmem:[%s6606 + $0x20] sm:$0xff]
  %v6612 = vld [vmem:[%s6606 + $0x28] sm:$0xff]
  %v6613 = vld [vmem:[%s6606 + $0x30] sm:$0xff]
  %v6614 = vld [vmem:[%s6606 + $0x38] sm:$0xff]
  %v6615 = vld [vmem:[%s6606 + $0x40] sm:$0xff]
  %v6616 = vld [vmem:[%s6606 + $0x48] sm:$0xff]
  %v6617 = vld [vmem:[%s6606 + $0x50] sm:$0xff]
  %v6618 = vld [vmem:[%s6606 + $0x58] sm:$0xff]
  %v6619 = vld [vmem:[%s6606 + $0x60] sm:$0xff]
  %v6620 = vld [vmem:[%s6606 + $0x68] sm:$0xff]
  %v6621 = vld [vmem:[%s6606 + $0x70] sm:$0xff]
  %v6622 = vld [vmem:[%s6606 + $0x78] sm:$0xff]
  %v6623 = vld [vmem:[%s6606 + $0x80] sm:$0xff]
  %v6624 = vld [vmem:[%s6606 + $0x88] sm:$0xff]
  %v6625 = vld [vmem:[%s6606 + $0x90] sm:$0xff]
  %v6626 = vld [vmem:[%s6606 + $0x98] sm:$0xff]
  %v6627 = vld [vmem:[%s6606 + $0xa0] sm:$0xff]
  %v6628 = vld [vmem:[%s6606 + $0xa8] sm:$0xff]
  %v6629 = vld [vmem:[%s6606 + $0xb0] sm:$0xff]
  %v6630 = vld [vmem:[%s6606 + $0xb8] sm:$0xff]
  %v6631 = vld [vmem:[%s6606 + $0xc0] sm:$0xff]
  %v6632 = vld [vmem:[%s6606 + $0xc8] sm:$0xff]
  %v6633 = vld [vmem:[%s6606 + $0xd0] sm:$0xff]
  %v6634 = vld [vmem:[%s6606 + $0xd8] sm:$0xff]
  %v6635 = vld [vmem:[%s6606 + $0xe0] sm:$0xff]
  %v6636 = vld [vmem:[%s6606 + $0xe8] sm:$0xff]
  %v6637 = vld [vmem:[%s6606 + $0xf0] sm:$0xff]
  %v6638 = vld [vmem:[%s6606 + $0xf8] sm:$0xff]
  %v6639 = vld [vmem:[%s6606 + $0x100] sm:$0xff]
  %v6640 = vld [vmem:[%s6606 + $0x108] sm:$0xff]
  %v6641 = vld [vmem:[%s6606 + $0x110] sm:$0xff]
  %v6642 = vld [vmem:[%s6606 + $0x118] sm:$0xff]
  %v6657 = vunpack.c.l.b16 %v6592
  %v6658 = vunpack.c.h.b16 %v6592
  %v6659 = vunpack.c.l.b16 %v6593
  %v6660 = vunpack.c.l.b16 %v6594
  %v6661 = vunpack.c.h.b16 %v6594
  %v6662 = vunpack.c.l.b16 %v6595
  %v6663 = vunpack.c.l.b16 %v6596
  %v6664 = vunpack.c.h.b16 %v6596
  %v6665 = vunpack.c.l.b16 %v6597
  %v6666 = vunpack.c.l.b16 %v6598
  %v6667 = vunpack.c.h.b16 %v6598
  %v6668 = vunpack.c.l.b16 %v6599
  %v6669 = vunpack.c.l.b16 %v6600
  %v6670 = vunpack.c.h.b16 %v6600
  %v6671 = vunpack.c.l.b16 %v6601
  %v6672 = vunpack.c.l.b16 %v6602
  %v6673 = vunpack.c.h.b16 %v6602
  %v6674 = vunpack.c.l.b16 %v6603
  %v6675 = vunpack.c.l.b16 %v6604
  %v6676 = vunpack.c.h.b16 %v6604
  %v6677 = vunpack.c.l.b16 %v6605
  %v6678 = vpack.c.b16 %v6660, %v6657
  %v6679 = vpack.c.b16 %v6661, %v6658
  %v6680 = vpack.c.b16 %v6662, %v6659
  %v6681 = vpack.c.b16 %v6666, %v6663
  %v6682 = vpack.c.b16 %v6667, %v6664
  %v6683 = vpack.c.b16 %v6668, %v6665
  %v6684 = vpack.c.b16 %v6672, %v6669
  %v6685 = vpack.c.b16 %v6673, %v6670
  %v6686 = vpack.c.b16 %v6674, %v6671
  %v6687 = vpack.c.b16 %v6675, %v6675
  %v6688 = vpack.c.b16 %v6676, %v6676
  %v6689 = vpack.c.b16 %v6677, %v6677
  %v6734 = vunpack.c.l.b16 %v6607
  %v6735 = vunpack.c.h.b16 %v6607
  %v6736 = vunpack.c.l.b16 %v6608
  %v6737 = vunpack.c.h.b16 %v6608
  %v6738 = vunpack.c.l.b16 %v6609
  %v6739 = vunpack.c.h.b16 %v6609
  %v6740 = vunpack.c.l.b16 %v6610
  %v6741 = vunpack.c.h.b16 %v6610
  %v6742 = vunpack.c.l.b16 %v6611
  %v6743 = vunpack.c.h.b16 %v6611
  %v6744 = vunpack.c.l.b16 %v6612
  %v6745 = vunpack.c.h.b16 %v6612
  %v6746 = vunpack.c.l.b16 %v6613
  %v6747 = vunpack.c.h.b16 %v6613
  %v6748 = vunpack.c.l.b16 %v6614
  %v6749 = vunpack.c.h.b16 %v6614
  %v6750 = vunpack.c.l.b16 %v6615
  %v6751 = vunpack.c.h.b16 %v6615
  %v6752 = vunpack.c.l.b16 %v6616
  %v6753 = vunpack.c.h.b16 %v6616
  %v6754 = vunpack.c.l.b16 %v6617
  %v6755 = vunpack.c.h.b16 %v6617
  %v6756 = vunpack.c.l.b16 %v6618
  %v6757 = vunpack.c.h.b16 %v6618
  %v6758 = vunpack.c.l.b16 %v6619
  %v6759 = vunpack.c.h.b16 %v6619
  %v6760 = vunpack.c.l.b16 %v6620
  %v6761 = vunpack.c.h.b16 %v6620
  %v6762 = vunpack.c.l.b16 %v6621
  %v6763 = vunpack.c.h.b16 %v6621
  %v6764 = vunpack.c.l.b16 %v6622
  %v6765 = vunpack.c.h.b16 %v6622
  %v6766 = vunpack.c.l.b16 %v6623
  %v6767 = vunpack.c.h.b16 %v6623
  %v6768 = vunpack.c.l.b16 %v6624
  %v6769 = vunpack.c.h.b16 %v6624
  %v6770 = vunpack.c.l.b16 %v6625
  %v6771 = vunpack.c.h.b16 %v6625
  %v6772 = vunpack.c.l.b16 %v6626
  %v6773 = vunpack.c.h.b16 %v6626
  %v6774 = vunpack.c.l.b16 %v6627
  %v6775 = vunpack.c.h.b16 %v6627
  %v6776 = vunpack.c.l.b16 %v6628
  %v6777 = vunpack.c.h.b16 %v6628
  %v6778 = vunpack.c.l.b16 %v6629
  %v6779 = vunpack.c.h.b16 %v6629
  %v6780 = vunpack.c.l.b16 %v6630
  %v6781 = vunpack.c.h.b16 %v6630
  %v6782 = vunpack.c.l.b16 %v6631
  %v6783 = vunpack.c.h.b16 %v6631
  %v6784 = vunpack.c.l.b16 %v6632
  %v6785 = vunpack.c.h.b16 %v6632
  %v6786 = vunpack.c.l.b16 %v6633
  %v6787 = vunpack.c.h.b16 %v6633
  %v6788 = vunpack.c.l.b16 %v6634
  %v6789 = vunpack.c.h.b16 %v6634
  %v6790 = vunpack.c.l.b16 %v6635
  %v6791 = vunpack.c.h.b16 %v6635
  %v6792 = vunpack.c.l.b16 %v6636
  %v6793 = vunpack.c.h.b16 %v6636
  %v6794 = vunpack.c.l.b16 %v6637
  %v6795 = vunpack.c.h.b16 %v6637
  %v6796 = vunpack.c.l.b16 %v6638
  %v6797 = vunpack.c.h.b16 %v6638
  %v6798 = vunpack.c.l.b16 %v6639
  %v6799 = vunpack.c.h.b16 %v6639
  %v6800 = vunpack.c.l.b16 %v6640
  %v6801 = vunpack.c.h.b16 %v6640
  %v6802 = vunpack.c.l.b16 %v6641
  %v6803 = vunpack.c.h.b16 %v6641
  %v6804 = vunpack.c.l.b16 %v6642
  %v6805 = vunpack.c.h.b16 %v6642
  %v6806 = vpack.c.b16 %v6736, %v6734
  %v6807 = vpack.c.b16 %v6737, %v6735
  %v6808 = vpack.c.b16 %v6740, %v6738
  %v6809 = vpack.c.b16 %v6741, %v6739
  %v6810 = vpack.c.b16 %v6744, %v6742
  %v6811 = vpack.c.b16 %v6745, %v6743
  %v6812 = vpack.c.b16 %v6748, %v6746
  %v6813 = vpack.c.b16 %v6749, %v6747
  %v6814 = vpack.c.b16 %v6752, %v6750
  %v6815 = vpack.c.b16 %v6753, %v6751
  %v6816 = vpack.c.b16 %v6756, %v6754
  %v6817 = vpack.c.b16 %v6757, %v6755
  %v6818 = vpack.c.b16 %v6760, %v6758
  %v6819 = vpack.c.b16 %v6761, %v6759
  %v6820 = vpack.c.b16 %v6764, %v6762
  %v6821 = vpack.c.b16 %v6765, %v6763
  %v6822 = vpack.c.b16 %v6768, %v6766
  %v6823 = vpack.c.b16 %v6769, %v6767
  %v6824 = vpack.c.b16 %v6772, %v6770
  %v6825 = vpack.c.b16 %v6773, %v6771
  %v6826 = vpack.c.b16 %v6776, %v6774
  %v6827 = vpack.c.b16 %v6777, %v6775
  %v6828 = vpack.c.b16 %v6780, %v6778
  %v6829 = vpack.c.b16 %v6781, %v6779
  %v6830 = vpack.c.b16 %v6784, %v6782
  %v6831 = vpack.c.b16 %v6785, %v6783
  %v6832 = vpack.c.b16 %v6788, %v6786
  %v6833 = vpack.c.b16 %v6789, %v6787
  %v6834 = vpack.c.b16 %v6792, %v6790
  %v6835 = vpack.c.b16 %v6793, %v6791
  %v6836 = vpack.c.b16 %v6796, %v6794
  %v6837 = vpack.c.b16 %v6797, %v6795
  %v6838 = vpack.c.b16 %v6800, %v6798
  %v6839 = vpack.c.b16 %v6801, %v6799
  %v6840 = vpack.c.b16 %v6804, %v6802
  %v6841 = vpack.c.b16 %v6805, %v6803
  %v6879 = vsel %vm277, %v6680, 0
  %v6882 = vsel %vm277, %v6683, 0
  %v6885 = vsel %vm277, %v6686, 0
  %v6888 = vsel %vm277, %v6689, 0
  %6890 = vmatprep.subr.bf16.mxu0 %v6807
  %6891 = vmatpush1.bf16.msra.mxu0 %v6806
  %6892 = vmatprep.subr.bf16.mxu0 %v6809
  %6893 = vmatpush1.bf16.msra.mxu0 %v6808
  %6894 = vmatprep.subr.bf16.mxu0 %v6811
  %6895 = vmatpush1.bf16.msra.mxu0 %v6810
  %6896 = vmatprep.subr.bf16.mxu0 %v6813
  %6897 = vmatpush1.bf16.msra.mxu0 %v6812
  %6898 = vmatprep.subr.bf16.mxu0 %v6815
  %6899 = vmatpush1.bf16.msra.mxu0 %v6814
  %6900 = vmatprep.subr.bf16.mxu0 %v6817
  %6901 = vmatpush1.bf16.msra.mxu0 %v6816
  %6902 = vmatprep.subr.bf16.mxu0 %v6819
  %6903 = vmatpush1.bf16.msra.mxu0 %v6818
  %6904 = vmatprep.subr.bf16.mxu0 %v6821
  %6905 = vmatpush1.bf16.msra.mxu0 %v6820
  %6906 = vmatprep.subr.bf16.mxu0 %v6823
  %6907 = vmatpush1.bf16.msra.mxu0 %v6822
  %6908 = vmatprep.subr.bf16.mxu0 %v6825
  %6909 = vmatpush1.bf16.msra.mxu0 %v6824
  %6910 = vmatprep.subr.bf16.mxu0 %v6827
  %6911 = vmatpush1.bf16.msra.mxu0 %v6826
  %6912 = vmatprep.subr.bf16.mxu0 %v6829
  %6913 = vmatpush1.bf16.msra.mxu0 %v6828
  %6914 = vmatprep.subr.bf16.mxu0 %v6831
  %6915 = vmatpush1.bf16.msra.mxu0 %v6830
  %6916 = vmatprep.subr.bf16.mxu0 %v6833
  %6917 = vmatpush1.bf16.msra.mxu0 %v6832
  %6918 = vmatprep.subr.bf16.mxu0 %v6835
  %6919 = vmatpush1.bf16.msra.mxu0 %v6834
  %6920 = vmatprep.subr.bf16.mxu0 %v6837
  %6921 = vmatpush1.bf16.msra.mxu0 %v6836
  %6922 = vmatprep.mubr.bf16.mxu0 %v6679
  %6923 = vmatmul.mubr.bf16.gmra.mrb[0].mxu0 %v6678
  %v6924 = vpop.f32.mrb[0].mxu0
  %v6925 = vadd.f32 0.0, %v6924
  %v6926 = vpop.f32.mrb[0].mxu0
  %v6927 = vadd.f32 0.0, %v6926
  %v6928 = vpop.f32.mrb[0].mxu0
  %v6929 = vadd.f32 0.0, %v6928
  %v6930 = vpop.f32.mrb[0].mxu0
  %v6931 = vadd.f32 0.0, %v6930
  %6932 = vmatprep.mubr.bf16.mxu0 %v6682
  %6933 = vmatmul.mubr.bf16.gmra.mrb[0].mxu0 %v6681
  %v6934 = vpop.f32.mrb[0].mxu0
  %v6935 = vadd.f32 0.0, %v6934
  %v6936 = vpop.f32.mrb[0].mxu0
  %v6937 = vadd.f32 0.0, %v6936
  %v6938 = vpop.f32.mrb[0].mxu0
  %v6939 = vadd.f32 0.0, %v6938
  %v6940 = vpop.f32.mrb[0].mxu0
  %v6941 = vadd.f32 0.0, %v6940
  %6942 = vmatprep.mubr.bf16.mxu0 %v6685
  %6943 = vmatmul.mubr.bf16.gmra.mrb[0].mxu0 %v6684
  %v6944 = vpop.f32.mrb[0].mxu0
  %v6945 = vadd.f32 0.0, %v6944
  %v6946 = vpop.f32.mrb[0].mxu0
  %v6947 = vadd.f32 0.0, %v6946
  %v6948 = vpop.f32.mrb[0].mxu0
  %v6949 = vadd.f32 0.0, %v6948
  %v6950 = vpop.f32.mrb[0].mxu0
  %v6951 = vadd.f32 0.0, %v6950
  %6952 = vmatprep.mubr.bf16.mxu0 %v6688
  %6953 = vmatmul.mubr.bf16.gmra.mrb[0].mxu0 %v6687
  %v6954 = vpop.f32.mrb[0].mxu0
  %v6955 = vadd.f32 0.0, %v6954
  %v6956 = vpop.f32.mrb[0].mxu0
  %v6957 = vadd.f32 0.0, %v6956
  %v6958 = vpop.f32.mrb[0].mxu0
  %v6959 = vpop.f32.mrb[0].mxu0
  %6960 = vdwg.mxu0
  %6961 = vmatprep.subr.bf16.mxu0 %v6839
  %6962 = vmatpush1.bf16.msra.mxu0 %v6838
  %6963 = vmatprep.subr.bf16.mxu0 %v6841
  %6964 = vmatpush1.bf16.msra.mxu0 %v6840
  %6965 = vmatprep.subr.bf16.mxu0 0
  %6966 = vmatpush1.bf16.msra.mxu0 0
  %6967 = vmatprep.subr.bf16.mxu0 0
  %6968 = vmatpush1.bf16.msra.mxu0 0
  %6969 = vmatprep.subr.bf16.mxu0 0
  %6970 = vmatpush1.bf16.msra.mxu0 0
  %6971 = vmatprep.subr.bf16.mxu0 0
  %6972 = vmatpush1.bf16.msra.mxu0 0
  %6973 = vmatprep.subr.bf16.mxu0 0
  %6974 = vmatpush1.bf16.msra.mxu0 0
  %6975 = vmatprep.subr.bf16.mxu0 0
  %6976 = vmatpush1.bf16.msra.mxu0 0
  %6977 = vmatprep.subr.bf16.mxu0 0
  %6978 = vmatpush1.bf16.msra.mxu0 0
  %6979 = vmatprep.subr.bf16.mxu0 0
  %6980 = vmatpush1.bf16.msra.mxu0 0
  %6981 = vmatprep.subr.bf16.mxu0 0
  %6982 = vmatpush1.bf16.msra.mxu0 0
  %6983 = vmatprep.subr.bf16.mxu0 0
  %6984 = vmatpush1.bf16.msra.mxu0 0
  %6985 = vmatprep.subr.bf16.mxu0 0
  %6986 = vmatpush1.bf16.msra.mxu0 0
  %6987 = vmatprep.subr.bf16.mxu0 0
  %6988 = vmatpush1.bf16.msra.mxu0 0
  %6989 = vmatprep.subr.bf16.mxu0 0
  %6990 = vmatpush1.bf16.msra.mxu0 0
  %6991 = vmatprep.subr.bf16.mxu0 0
  %6992 = vmatpush1.bf16.msra.mxu0 0
  %6993 = vmatprep.mubr.bf16.mxu0 0
  %6994 = vmatmul.mubr.bf16.gmra.mrb[0].mxu0 %v6879
  %v6995 = vpop.f32.mrb[0].mxu0
  %v6996 = vadd.f32 %v6925, %v6995
  %v6997 = vpop.f32.mrb[0].mxu0
  %v6998 = vadd.f32 %v6927, %v6997
  %v6999 = vpop.f32.mrb[0].mxu0
  %v7000 = vadd.f32 %v6929, %v6999
  %v7001 = vpop.f32.mrb[0].mxu0
  %v7002 = vadd.f32 %v6931, %v7001
  %7003 = vmatprep.mubr.bf16.mxu0 0
  %7004 = vmatmul.mubr.bf16.gmra.mrb[0].mxu0 %v6882
  %v7005 = vpop.f32.mrb[0].mxu0
  %v7006 = vadd.f32 %v6935, %v7005
  %v7007 = vpop.f32.mrb[0].mxu0
  %v7008 = vadd.f32 %v6937, %v7007
  %v7009 = vpop.f32.mrb[0].mxu0
  %v7010 = vadd.f32 %v6939, %v7009
  %v7011 = vpop.f32.mrb[0].mxu0
  %v7012 = vadd.f32 %v6941, %v7011
  %7013 = vmatprep.mubr.bf16.mxu0 0
  %7014 = vmatmul.mubr.bf16.gmra.mrb[0].mxu0 %v6885
  %v7015 = vpop.f32.mrb[0].mxu0
  %v7016 = vadd.f32 %v6945, %v7015
  %v7017 = vpop.f32.mrb[0].mxu0
  %v7018 = vadd.f32 %v6947, %v7017
  %v7019 = vpop.f32.mrb[0].mxu0
  %v7020 = vadd.f32 %v6949, %v7019
  %v7021 = vpop.f32.mrb[0].mxu0
  %v7022 = vadd.f32 %v6951, %v7021
  %7023 = vmatprep.mubr.bf16.mxu0 0
  %7024 = vmatmul.mubr.bf16.gmra.mrb[0].mxu0 %v6888
  %v7025 = vpop.f32.mrb[0].mxu0
  %v7026 = vadd.f32 %v6955, %v7025
  %v7027 = vpop.f32.mrb[0].mxu0
  %v7028 = vadd.f32 %v6957, %v7027
  %v7029 = vpop.f32.mrb[0].mxu0
  %v7030 = vpop.f32.mrb[0].mxu0
  %7031 = vdwg.mxu0
  %v7032 = vadd.f32 %v6578, %v6996
  %v7033 = vadd.f32 %v6579, %v6998
  %v7034 = vadd.f32 %v6580, %v7000
  %v7035 = vadd.f32 %v6581, %v7002
  %v7036 = vadd.f32 %v6582, %v7006
  %v7037 = vadd.f32 %v6583, %v7008
  %v7038 = vadd.f32 %v6584, %v7010
  %v7039 = vadd.f32 %v6585, %v7012
  %v7040 = vadd.f32 %v6586, %v7016
  %v7041 = vadd.f32 %v6587, %v7018
  %v7042 = vadd.f32 %v6588, %v7020
  %v7043 = vadd.f32 %v6589, %v7022
  %v7044 = vadd.f32 %v6590, %v7026
  %v7045 = vadd.f32 %v6591, %v7028
  %v7046 = vld [vmem:[#allocation3] sm:$0xff]
  %v7047 = vld [vmem:[#allocation3 + $0x8] sm:$0xff]
  %v7048 = vld [vmem:[#allocation3 + $0x10] sm:$0xff]
  %v7049 = vld [vmem:[#allocation3 + $0x18] sm:$0xff]
  %v7050 = vld [vmem:[#allocation3 + $0x20] sm:$0xff]
  %v7051 = vld [vmem:[#allocation3 + $0x28] sm:$0xff]
  %v7052 = vld [vmem:[#allocation3 + $0x30] sm:$0xff]
  %v7053 = vld [vmem:[#allocation3 + $0x38] sm:$0xff]
  %v7054 = vld [vmem:[#allocation3 + $0x40] sm:$0xff]
  %v7055 = vld [vmem:[#allocation3 + $0x48] sm:$0xff]
  %v7056 = vld [vmem:[#allocation3 + $0x50] sm:$0xff]
  %v7057 = vld [vmem:[#allocation3 + $0x58] sm:$0xff]
  %v7058 = vld [vmem:[#allocation3 + $0x60] sm:$0xff]
  %v7059 = vld [vmem:[#allocation3 + $0x68] sm:$0xff]
  %v7060 = vmax.f32 %v7046, %v7032
  %v7061 = vmax.f32 %v7047, %v7033
  %v7062 = vmax.f32 %v7048, %v7034
  %v7063 = vmax.f32 %v7049, %v7035
  %v7064 = vmax.f32 %v7050, %v7036
  %v7065 = vmax.f32 %v7051, %v7037
  %v7066 = vmax.f32 %v7052, %v7038
  %v7067 = vmax.f32 %v7053, %v7039
  %v7068 = vmax.f32 %v7054, %v7040
  %v7069 = vmax.f32 %v7055, %v7041
  %v7070 = vmax.f32 %v7056, %v7042
  %v7071 = vmax.f32 %v7057, %v7043
  %v7072 = vmax.f32 %v7058, %v7044
  %v7073 = vmax.f32 %v7059, %v7045
  %7074 = vst [vmem:[#allocation3] sm:$0xff] %v7060
  %7075 = vst.msk [vmem:[#allocation3 + $0x8] sm:$0xff] %vm4790, %v7061
  %7076 = vst [vmem:[#allocation3 + $0x10] sm:$0xff] %v7062
  %7077 = vst.msk [vmem:[#allocation3 + $0x18] sm:$0xff] %vm4790, %v7063
  %7078 = vst [vmem:[#allocation3 + $0x20] sm:$0xff] %v7064
  %7079 = vst.msk [vmem:[#allocation3 + $0x28] sm:$0xff] %vm4790, %v7065
  %7080 = vst [vmem:[#allocation3 + $0x30] sm:$0xff] %v7066
  %7081 = vst.msk [vmem:[#allocation3 + $0x38] sm:$0xff] %vm4790, %v7067
  %7082 = vst [vmem:[#allocation3 + $0x40] sm:$0xff] %v7068
  %7083 = vst.msk [vmem:[#allocation3 + $0x48] sm:$0xff] %vm4790, %v7069
  %7084 = vst [vmem:[#allocation3 + $0x50] sm:$0xff] %v7070
  %7085 = vst.msk [vmem:[#allocation3 + $0x58] sm:$0xff] %vm4790, %v7071
  %7086 = vst [vmem:[#allocation3 + $0x60] sm:$0xff] %v7072
  %7087 = vst.msk [vmem:[#allocation3 + $0x68] sm:$0xff] %vm4790, %v7073
  %v7088 = vld [vmem:[%s32] sm:$0xff]
  %v7089 = vld [vmem:[%s32 + $0x8] sm:$0xf]
  %v7090 = vld [vmem:[%s32 + $0xc] sm:$0xff]
  %v7091 = vld [vmem:[%s32 + $0x14] sm:$0xf]
  %v7092 = vld [vmem:[%s32 + $0x18] sm:$0xff]
  %v7093 = vld [vmem:[%s32 + $0x20] sm:$0xf]
  %v7094 = vld [vmem:[%s32 + $0x24] sm:$0xff]
  %v7095 = vld [vmem:[%s32 + $0x2c] sm:$0xf]
  %v7096 = vld [vmem:[%s32 + $0x30] sm:$0xff]
  %v7097 = vld [vmem:[%s32 + $0x38] sm:$0xf]
  %v7098 = vld [vmem:[%s32 + $0x3c] sm:$0xff]
  %v7099 = vld [vmem:[%s32 + $0x44] sm:$0xf]
  %v7100 = vld [vmem:[%s32 + $0x48] sm:$0xff]
  %v7101 = vld [vmem:[%s32 + $0x50] sm:$0xf]
  %v7102 = vld [vmem:[%s3] sm:$0xff]
  %v7103 = vld [vmem:[%s3 + $0x8] sm:$0xff]
  %v7104 = vld [vmem:[%s3 + $0x10] sm:$0xff]
  %v7105 = vld [vmem:[%s3 + $0x18] sm:$0xff]
  %v7106 = vld [vmem:[%s3 + $0x20] sm:$0xff]
  %v7107 = vld [vmem:[%s3 + $0x28] sm:$0xff]
  %v7108 = vld [vmem:[%s3 + $0x30] sm:$0xff]
  %v7109 = vld [vmem:[%s3 + $0x38] sm:$0xff]
  %v7110 = vld [vmem:[%s3 + $0x40] sm:$0xff]
  %v7111 = vld [vmem:[%s3 + $0x48] sm:$0xff]
  %v7112 = vld [vmem:[%s3 + $0x50] sm:$0xff]
  %v7113 = vld [vmem:[%s3 + $0x58] sm:$0xff]
  %v7114 = vld [vmem:[%s3 + $0x60] sm:$0xff]
  %v7115 = vld [vmem:[%s3 + $0x68] sm:$0xff]
  %v7116 = vld [vmem:[%s3 + $0x70] sm:$0xff]
  %v7117 = vld [vmem:[%s3 + $0x78] sm:$0xff]
  %v7118 = vld [vmem:[%s3 + $0x80] sm:$0xff]
  %v7119 = vld [vmem:[%s3 + $0x88] sm:$0xff]
  %v7120 = vld [vmem:[%s3 + $0x90] sm:$0xff]
  %v7121 = vld [vmem:[%s3 + $0x98] sm:$0xff]
  %v7122 = vld [vmem:[%s3 + $0xa0] sm:$0xff]
  %v7123 = vld [vmem:[%s3 + $0xa8] sm:$0xff]
  %v7124 = vld [vmem:[%s3 + $0xb0] sm:$0xff]
  %v7125 = vld [vmem:[%s3 + $0xb8] sm:$0xff]
  %v7126 = vld [vmem:[%s3 + $0xc0] sm:$0xff]
  %v7127 = vld [vmem:[%s3 + $0xc8] sm:$0xff]
  %v7128 = vld [vmem:[%s3 + $0xd0] sm:$0xff]
  %v7129 = vld [vmem:[%s3 + $0xd8] sm:$0xff]
  %v7130 = vld [vmem:[%s3 + $0xe0] sm:$0xff]
  %v7131 = vld [vmem:[%s3 + $0xe8] sm:$0xff]
  %v7132 = vld [vmem:[%s3 + $0xf0] sm:$0xff]
  %v7133 = vld [vmem:[%s3 + $0xf8] sm:$0xff]
  %v7134 = vld [vmem:[%s3 + $0x100] sm:$0xff]
  %v7135 = vld [vmem:[%s3 + $0x108] sm:$0xff]
  %v7136 = vld [vmem:[%s3 + $0x110] sm:$0xff]
  %v7137 = vld [vmem:[%s3 + $0x118] sm:$0xff]
  %v7138 = vld [vmem:[#allocation2 + $0xc] sm:$0xff]
  %v7139 = vld [vmem:[#allocation2 + $0x14] sm:$0xf]
  %v7140 = vld [vmem:[#allocation2 + $0x18] sm:$0xff]
  %v7141 = vld [vmem:[#allocation2 + $0x20] sm:$0xf]
  %v7142 = vld [vmem:[#allocation2 + $0x24] sm:$0xff]
  %v7143 = vld [vmem:[#allocation2 + $0x2c] sm:$0xf]
  %v7144 = vld [vmem:[#allocation2 + $0x30] sm:$0xff]
  %v7145 = vld [vmem:[#allocation2 + $0x38] sm:$0xf]
  %v7146 = vld [vmem:[#allocation2 + $0x3c] sm:$0xff]
  %v7147 = vld [vmem:[#allocation2 + $0x44] sm:$0xf]
  %v7148 = vld [vmem:[#allocation2 + $0x48] sm:$0xff]
  %v7149 = vld [vmem:[#allocation2 + $0x50] sm:$0xf]
  %v7150 = vld [vmem:[#allocation2 + $0x54] sm:$0xff]
  %v7151 = vld [vmem:[#allocation2 + $0x5c] sm:$0xf]
  %v7152 = vld [vmem:[%s2612] sm:$0xff]
  %v7153 = vld [vmem:[%s2612 + $0x8] sm:$0xff]
  %v7154 = vld [vmem:[%s2612 + $0x10] sm:$0xff]
  %v7155 = vld [vmem:[%s2612 + $0x18] sm:$0xff]
  %v7156 = vld [vmem:[%s2612 + $0x20] sm:$0xff]
  %v7157 = vld [vmem:[%s2612 + $0x28] sm:$0xff]
  %v7158 = vld [vmem:[%s2612 + $0x30] sm:$0xff]
  %v7159 = vld [vmem:[%s2612 + $0x38] sm:$0xff]
  %v7160 = vld [vmem:[%s2612 + $0x40] sm:$0xff]
  %v7161 = vld [vmem:[%s2612 + $0x48] sm:$0xff]
  %v7162 = vld [vmem:[%s2612 + $0x50] sm:$0xff]
  %v7163 = vld [vmem:[%s2612 + $0x58] sm:$0xff]
  %v7164 = vld [vmem:[%s2612 + $0x60] sm:$0xff]
  %v7165 = vld [vmem:[%s2612 + $0x68] sm:$0xff]
  %v7166 = vld [vmem:[%s2612 + $0x70] sm:$0xff]
  %v7167 = vld [vmem:[%s2612 + $0x78] sm:$0xff]
  %v7168 = vld [vmem:[%s2612 + $0x80] sm:$0xff]
  %v7169 = vld [vmem:[%s2612 + $0x88] sm:$0xff]
  %v7170 = vld [vmem:[%s2612 + $0x90] sm:$0xff]
  %v7171 = vld [vmem:[%s2612 + $0x98] sm:$0xff]
  %v7172 = vld [vmem:[%s2612 + $0xa0] sm:$0xff]
  %v7173 = vld [vmem:[%s2612 + $0xa8] sm:$0xff]
  %v7174 = vld [vmem:[%s2612 + $0xb0] sm:$0xff]
  %v7175 = vld [vmem:[%s2612 + $0xb8] sm:$0xff]
  %v7176 = vld [vmem:[%s2612 + $0xc0] sm:$0xff]
  %v7177 = vld [vmem:[%s2612 + $0xc8] sm:$0xff]
  %v7178 = vld [vmem:[%s2612 + $0xd0] sm:$0xff]
  %v7179 = vld [vmem:[%s2612 + $0xd8] sm:$0xff]
  %v7180 = vld [vmem:[%s2612 + $0xe0] sm:$0xff]
  %v7181 = vld [vmem:[%s2612 + $0xe8] sm:$0xff]
  %v7182 = vld [vmem:[%s2612 + $0xf0] sm:$0xff]
  %v7183 = vld [vmem:[%s2612 + $0xf8] sm:$0xff]
  %v7184 = vld [vmem:[%s2612 + $0x100] sm:$0xff]
  %v7185 = vld [vmem:[%s2612 + $0x108] sm:$0xff]
  %v7186 = vld [vmem:[%s2612 + $0x110] sm:$0xff]
  %v7187 = vld [vmem:[%s2612 + $0x118] sm:$0xff]
  %v7202 = vunpack.c.l.b16 %v7138
  %v7203 = vunpack.c.h.b16 %v7138
  %v7204 = vunpack.c.l.b16 %v7139
  %v7205 = vunpack.c.l.b16 %v7140
  %v7206 = vunpack.c.h.b16 %v7140
  %v7207 = vunpack.c.l.b16 %v7141
  %v7208 = vunpack.c.l.b16 %v7142
  %v7209 = vunpack.c.h.b16 %v7142
  %v7210 = vunpack.c.l.b16 %v7143
  %v7211 = vunpack.c.l.b16 %v7144
  %v7212 = vunpack.c.h.b16 %v7144
  %v7213 = vunpack.c.l.b16 %v7145
  %v7214 = vunpack.c.l.b16 %v7146
  %v7215 = vunpack.c.h.b16 %v7146
  %v7216 = vunpack.c.l.b16 %v7147
  %v7217 = vunpack.c.l.b16 %v7148
  %v7218 = vunpack.c.h.b16 %v7148
  %v7219 = vunpack.c.l.b16 %v7149
  %v7220 = vunpack.c.l.b16 %v7150
  %v7221 = vunpack.c.h.b16 %v7150
  %v7222 = vunpack.c.l.b16 %v7151
  %v7223 = vpack.c.b16 %v7205, %v7202
  %v7224 = vpack.c.b16 %v7206, %v7203
  %v7225 = vpack.c.b16 %v7207, %v7204
  %v7226 = vpack.c.b16 %v7211, %v7208
  %v7227 = vpack.c.b16 %v7212, %v7209
  %v7228 = vpack.c.b16 %v7213, %v7210
  %v7229 = vpack.c.b16 %v7217, %v7214
  %v7230 = vpack.c.b16 %v7218, %v7215
  %v7231 = vpack.c.b16 %v7219, %v7216
  %v7232 = vpack.c.b16 %v7220, %v7220
  %v7233 = vpack.c.b16 %v7221, %v7221
  %v7234 = vpack.c.b16 %v7222, %v7222
  %v7279 = vunpack.c.l.b16 %v7152
  %v7280 = vunpack.c.h.b16 %v7152
  %v7281 = vunpack.c.l.b16 %v7153
  %v7282 = vunpack.c.h.b16 %v7153
  %v7283 = vunpack.c.l.b16 %v7154
  %v7284 = vunpack.c.h.b16 %v7154
  %v7285 = vunpack.c.l.b16 %v7155
  %v7286 = vunpack.c.h.b16 %v7155
  %v7287 = vunpack.c.l.b16 %v7156
  %v7288 = vunpack.c.h.b16 %v7156
  %v7289 = vunpack.c.l.b16 %v7157
  %v7290 = vunpack.c.h.b16 %v7157
  %v7291 = vunpack.c.l.b16 %v7158
  %v7292 = vunpack.c.h.b16 %v7158
  %v7293 = vunpack.c.l.b16 %v7159
  %v7294 = vunpack.c.h.b16 %v7159
  %v7295 = vunpack.c.l.b16 %v7160
  %v7296 = vunpack.c.h.b16 %v7160
  %v7297 = vunpack.c.l.b16 %v7161
  %v7298 = vunpack.c.h.b16 %v7161
  %v7299 = vunpack.c.l.b16 %v7162
  %v7300 = vunpack.c.h.b16 %v7162
  %v7301 = vunpack.c.l.b16 %v7163
  %v7302 = vunpack.c.h.b16 %v7163
  %v7303 = vunpack.c.l.b16 %v7164
  %v7304 = vunpack.c.h.b16 %v7164
  %v7305 = vunpack.c.l.b16 %v7165
  %v7306 = vunpack.c.h.b16 %v7165
  %v7307 = vunpack.c.l.b16 %v7166
  %v7308 = vunpack.c.h.b16 %v7166
  %v7309 = vunpack.c.l.b16 %v7167
  %v7310 = vunpack.c.h.b16 %v7167
  %v7311 = vunpack.c.l.b16 %v7168
  %v7312 = vunpack.c.h.b16 %v7168
  %v7313 = vunpack.c.l.b16 %v7169
  %v7314 = vunpack.c.h.b16 %v7169
  %v7315 = vunpack.c.l.b16 %v7170
  %v7316 = vunpack.c.h.b16 %v7170
  %v7317 = vunpack.c.l.b16 %v7171
  %v7318 = vunpack.c.h.b16 %v7171
  %v7319 = vunpack.c.l.b16 %v7172
  %v7320 = vunpack.c.h.b16 %v7172
  %v7321 = vunpack.c.l.b16 %v7173
  %v7322 = vunpack.c.h.b16 %v7173
  %v7323 = vunpack.c.l.b16 %v7174
  %v7324 = vunpack.c.h.b16 %v7174
  %v7325 = vunpack.c.l.b16 %v7175
  %v7326 = vunpack.c.h.b16 %v7175
  %v7327 = vunpack.c.l.b16 %v7176
  %v7328 = vunpack.c.h.b16 %v7176
  %v7329 = vunpack.c.l.b16 %v7177
  %v7330 = vunpack.c.h.b16 %v7177
  %v7331 = vunpack.c.l.b16 %v7178
  %v7332 = vunpack.c.h.b16 %v7178
  %v7333 = vunpack.c.l.b16 %v7179
  %v7334 = vunpack.c.h.b16 %v7179
  %v7335 = vunpack.c.l.b16 %v7180
  %v7336 = vunpack.c.h.b16 %v7180
  %v7337 = vunpack.c.l.b16 %v7181
  %v7338 = vunpack.c.h.b16 %v7181
  %v7339 = vunpack.c.l.b16 %v7182
  %v7340 = vunpack.c.h.b16 %v7182
  %v7341 = vunpack.c.l.b16 %v7183
  %v7342 = vunpack.c.h.b16 %v7183
  %v7343 = vunpack.c.l.b16 %v7184
  %v7344 = vunpack.c.h.b16 %v7184
  %v7345 = vunpack.c.l.b16 %v7185
  %v7346 = vunpack.c.h.b16 %v7185
  %v7347 = vunpack.c.l.b16 %v7186
  %v7348 = vunpack.c.h.b16 %v7186
  %v7349 = vunpack.c.l.b16 %v7187
  %v7350 = vunpack.c.h.b16 %v7187
  %v7351 = vpack.c.b16 %v7281, %v7279
  %v7352 = vpack.c.b16 %v7282, %v7280
  %v7353 = vpack.c.b16 %v7285, %v7283
  %v7354 = vpack.c.b16 %v7286, %v7284
  %v7355 = vpack.c.b16 %v7289, %v7287
  %v7356 = vpack.c.b16 %v7290, %v7288
  %v7357 = vpack.c.b16 %v7293, %v7291
  %v7358 = vpack.c.b16 %v7294, %v7292
  %v7359 = vpack.c.b16 %v7297, %v7295
  %v7360 = vpack.c.b16 %v7298, %v7296
  %v7361 = vpack.c.b16 %v7301, %v7299
  %v7362 = vpack.c.b16 %v7302, %v7300
  %v7363 = vpack.c.b16 %v7305, %v7303
  %v7364 = vpack.c.b16 %v7306, %v7304
  %v7365 = vpack.c.b16 %v7309, %v7307
  %v7366 = vpack.c.b16 %v7310, %v7308
  %v7367 = vpack.c.b16 %v7313, %v7311
  %v7368 = vpack.c.b16 %v7314, %v7312
  %v7369 = vpack.c.b16 %v7317, %v7315
  %v7370 = vpack.c.b16 %v7318, %v7316
  %v7371 = vpack.c.b16 %v7321, %v7319
  %v7372 = vpack.c.b16 %v7322, %v7320
  %v7373 = vpack.c.b16 %v7325, %v7323
  %v7374 = vpack.c.b16 %v7326, %v7324
  %v7375 = vpack.c.b16 %v7329, %v7327
  %v7376 = vpack.c.b16 %v7330, %v7328
  %v7377 = vpack.c.b16 %v7333, %v7331
  %v7378 = vpack.c.b16 %v7334, %v7332
  %v7379 = vpack.c.b16 %v7337, %v7335
  %v7380 = vpack.c.b16 %v7338, %v7336
  %v7381 = vpack.c.b16 %v7341, %v7339
  %v7382 = vpack.c.b16 %v7342, %v7340
  %v7383 = vpack.c.b16 %v7345, %v7343
  %v7384 = vpack.c.b16 %v7346, %v7344
  %v7385 = vpack.c.b16 %v7349, %v7347
  %v7386 = vpack.c.b16 %v7350, %v7348
  %v7424 = vsel %vm277, %v7225, 0
  %v7427 = vsel %vm277, %v7228, 0
  %v7430 = vsel %vm277, %v7231, 0
  %v7433 = vsel %vm277, %v7234, 0
  %7435 = vmatprep.subr.bf16.mxu0 %v7352
  %7436 = vmatpush1.bf16.msra.mxu0 %v7351
  %7437 = vmatprep.subr.bf16.mxu0 %v7354
  %7438 = vmatpush1.bf16.msra.mxu0 %v7353
  %7439 = vmatprep.subr.bf16.mxu0 %v7356
  %7440 = vmatpush1.bf16.msra.mxu0 %v7355
  %7441 = vmatprep.subr.bf16.mxu0 %v7358
  %7442 = vmatpush1.bf16.msra.mxu0 %v7357
  %7443 = vmatprep.subr.bf16.mxu0 %v7360
  %7444 = vmatpush1.bf16.msra.mxu0 %v7359
  %7445 = vmatprep.subr.bf16.mxu0 %v7362
  %7446 = vmatpush1.bf16.msra.mxu0 %v7361
  %7447 = vmatprep.subr.bf16.mxu0 %v7364
  %7448 = vmatpush1.bf16.msra.mxu0 %v7363
  %7449 = vmatprep.subr.bf16.mxu0 %v7366
  %7450 = vmatpush1.bf16.msra.mxu0 %v7365
  %7451 = vmatprep.subr.bf16.mxu0 %v7368
  %7452 = vmatpush1.bf16.msra.mxu0 %v7367
  %7453 = vmatprep.subr.bf16.mxu0 %v7370
  %7454 = vmatpush1.bf16.msra.mxu0 %v7369
  %7455 = vmatprep.subr.bf16.mxu0 %v7372
  %7456 = vmatpush1.bf16.msra.mxu0 %v7371
  %7457 = vmatprep.subr.bf16.mxu0 %v7374
  %7458 = vmatpush1.bf16.msra.mxu0 %v7373
  %7459 = vmatprep.subr.bf16.mxu0 %v7376
  %7460 = vmatpush1.bf16.msra.mxu0 %v7375
  %7461 = vmatprep.subr.bf16.mxu0 %v7378
  %7462 = vmatpush1.bf16.msra.mxu0 %v7377
  %7463 = vmatprep.subr.bf16.mxu0 %v7380
  %7464 = vmatpush1.bf16.msra.mxu0 %v7379
  %7465 = vmatprep.subr.bf16.mxu0 %v7382
  %7466 = vmatpush1.bf16.msra.mxu0 %v7381
  %7467 = vmatprep.mubr.bf16.mxu0 %v7224
  %7468 = vmatmul.mubr.bf16.gmra.mrb[0].mxu0 %v7223
  %v7469 = vpop.f32.mrb[0].mxu0
  %v7470 = vadd.f32 0.0, %v7469
  %v7471 = vpop.f32.mrb[0].mxu0
  %v7472 = vadd.f32 0.0, %v7471
  %v7473 = vpop.f32.mrb[0].mxu0
  %v7474 = vadd.f32 0.0, %v7473
  %v7475 = vpop.f32.mrb[0].mxu0
  %v7476 = vadd.f32 0.0, %v7475
  %7477 = vmatprep.mubr.bf16.mxu0 %v7227
  %7478 = vmatmul.mubr.bf16.gmra.mrb[0].mxu0 %v7226
  %v7479 = vpop.f32.mrb[0].mxu0
  %v7480 = vadd.f32 0.0, %v7479
  %v7481 = vpop.f32.mrb[0].mxu0
  %v7482 = vadd.f32 0.0, %v7481
  %v7483 = vpop.f32.mrb[0].mxu0
  %v7484 = vadd.f32 0.0, %v7483
  %v7485 = vpop.f32.mrb[0].mxu0
  %v7486 = vadd.f32 0.0, %v7485
  %7487 = vmatprep.mubr.bf16.mxu0 %v7230
  %7488 = vmatmul.mubr.bf16.gmra.mrb[0].mxu0 %v7229
  %v7489 = vpop.f32.mrb[0].mxu0
  %v7490 = vadd.f32 0.0, %v7489
  %v7491 = vpop.f32.mrb[0].mxu0
  %v7492 = vadd.f32 0.0, %v7491
  %v7493 = vpop.f32.mrb[0].mxu0
  %v7494 = vadd.f32 0.0, %v7493
  %v7495 = vpop.f32.mrb[0].mxu0
  %v7496 = vadd.f32 0.0, %v7495
  %7497 = vmatprep.mubr.bf16.mxu0 %v7233
  %7498 = vmatmul.mubr.bf16.gmra.mrb[0].mxu0 %v7232
  %v7499 = vpop.f32.mrb[0].mxu0
  %v7500 = vadd.f32 0.0, %v7499
  %v7501 = vpop.f32.mrb[0].mxu0
  %v7502 = vadd.f32 0.0, %v7501
  %v7503 = vpop.f32.mrb[0].mxu0
  %v7504 = vpop.f32.mrb[0].mxu0
  %7505 = vdwg.mxu0
  %7506 = vmatprep.subr.bf16.mxu0 %v7384
  %7507 = vmatpush1.bf16.msra.mxu0 %v7383
  %7508 = vmatprep.subr.bf16.mxu0 %v7386
  %7509 = vmatpush1.bf16.msra.mxu0 %v7385
  %7510 = vmatprep.subr.bf16.mxu0 0
  %7511 = vmatpush1.bf16.msra.mxu0 0
  %7512 = vmatprep.subr.bf16.mxu0 0
  %7513 = vmatpush1.bf16.msra.mxu0 0
  %7514 = vmatprep.subr.bf16.mxu0 0
  %7515 = vmatpush1.bf16.msra.mxu0 0
  %7516 = vmatprep.subr.bf16.mxu0 0
  %7517 = vmatpush1.bf16.msra.mxu0 0
  %7518 = vmatprep.subr.bf16.mxu0 0
  %7519 = vmatpush1.bf16.msra.mxu0 0
  %7520 = vmatprep.subr.bf16.mxu0 0
  %7521 = vmatpush1.bf16.msra.mxu0 0
  %7522 = vmatprep.subr.bf16.mxu0 0
  %7523 = vmatpush1.bf16.msra.mxu0 0
  %7524 = vmatprep.subr.bf16.mxu0 0
  %7525 = vmatpush1.bf16.msra.mxu0 0
  %7526 = vmatprep.subr.bf16.mxu0 0
  %7527 = vmatpush1.bf16.msra.mxu0 0
  %7528 = vmatprep.subr.bf16.mxu0 0
  %7529 = vmatpush1.bf16.msra.mxu0 0
  %7530 = vmatprep.subr.bf16.mxu0 0
  %7531 = vmatpush1.bf16.msra.mxu0 0
  %7532 = vmatprep.subr.bf16.mxu0 0
  %7533 = vmatpush1.bf16.msra.mxu0 0
  %7534 = vmatprep.subr.bf16.mxu0 0
  %7535 = vmatpush1.bf16.msra.mxu0 0
  %7536 = vmatprep.subr.bf16.mxu0 0
  %7537 = vmatpush1.bf16.msra.mxu0 0
  %7538 = vmatprep.mubr.bf16.mxu0 0
  %7539 = vmatmul.mubr.bf16.gmra.mrb[0].mxu0 %v7424
  %v7540 = vpop.f32.mrb[0].mxu0
  %v7541 = vadd.f32 %v7470, %v7540
  %v7542 = vpop.f32.mrb[0].mxu0
  %v7543 = vadd.f32 %v7472, %v7542
  %v7544 = vpop.f32.mrb[0].mxu0
  %v7545 = vadd.f32 %v7474, %v7544
  %v7546 = vpop.f32.mrb[0].mxu0
  %v7547 = vadd.f32 %v7476, %v7546
  %7548 = vmatprep.mubr.bf16.mxu0 0
  %7549 = vmatmul.mubr.bf16.gmra.mrb[0].mxu0 %v7427
  %v7550 = vpop.f32.mrb[0].mxu0
  %v7551 = vadd.f32 %v7480, %v7550
  %v7552 = vpop.f32.mrb[0].mxu0
  %v7553 = vadd.f32 %v7482, %v7552
  %v7554 = vpop.f32.mrb[0].mxu0
  %v7555 = vadd.f32 %v7484, %v7554
  %v7556 = vpop.f32.mrb[0].mxu0
  %v7557 = vadd.f32 %v7486, %v7556
  %7558 = vmatprep.mubr.bf16.mxu0 0
  %7559 = vmatmul.mubr.bf16.gmra.mrb[0].mxu0 %v7430
  %v7560 = vpop.f32.mrb[0].mxu0
  %v7561 = vadd.f32 %v7490, %v7560
  %v7562 = vpop.f32.mrb[0].mxu0
  %v7563 = vadd.f32 %v7492, %v7562
  %v7564 = vpop.f32.mrb[0].mxu0
  %v7565 = vadd.f32 %v7494, %v7564
  %v7566 = vpop.f32.mrb[0].mxu0
  %v7567 = vadd.f32 %v7496, %v7566
  %7568 = vmatprep.mubr.bf16.mxu0 0
  %7569 = vmatmul.mubr.bf16.gmra.mrb[0].mxu0 %v7433
  %v7570 = vpop.f32.mrb[0].mxu0
  %v7571 = vadd.f32 %v7500, %v7570
  %v7572 = vpop.f32.mrb[0].mxu0
  %v7573 = vadd.f32 %v7502, %v7572
  %v7574 = vpop.f32.mrb[0].mxu0
  %v7575 = vpop.f32.mrb[0].mxu0
  %7576 = vdwg.mxu0
  %v7591 = vunpack.c.l.b16 %v7088
  %v7592 = vunpack.c.h.b16 %v7088
  %v7593 = vunpack.c.l.b16 %v7089
  %v7594 = vunpack.c.l.b16 %v7090
  %v7595 = vunpack.c.h.b16 %v7090
  %v7596 = vunpack.c.l.b16 %v7091
  %v7597 = vunpack.c.l.b16 %v7092
  %v7598 = vunpack.c.h.b16 %v7092
  %v7599 = vunpack.c.l.b16 %v7093
  %v7600 = vunpack.c.l.b16 %v7094
  %v7601 = vunpack.c.h.b16 %v7094
  %v7602 = vunpack.c.l.b16 %v7095
  %v7603 = vunpack.c.l.b16 %v7096
  %v7604 = vunpack.c.h.b16 %v7096
  %v7605 = vunpack.c.l.b16 %v7097
  %v7606 = vunpack.c.l.b16 %v7098
  %v7607 = vunpack.c.h.b16 %v7098
  %v7608 = vunpack.c.l.b16 %v7099
  %v7609 = vunpack.c.l.b16 %v7100
  %v7610 = vunpack.c.h.b16 %v7100
  %v7611 = vunpack.c.l.b16 %v7101
  %v7612 = vpack.c.b16 %v7594, %v7591
  %v7613 = vpack.c.b16 %v7595, %v7592
  %v7614 = vpack.c.b16 %v7596, %v7593
  %v7615 = vpack.c.b16 %v7600, %v7597
  %v7616 = vpack.c.b16 %v7601, %v7598
  %v7617 = vpack.c.b16 %v7602, %v7599
  %v7618 = vpack.c.b16 %v7606, %v7603
  %v7619 = vpack.c.b16 %v7607, %v7604
  %v7620 = vpack.c.b16 %v7608, %v7605
  %v7621 = vpack.c.b16 %v7609, %v7609
  %v7622 = vpack.c.b16 %v7610, %v7610
  %v7623 = vpack.c.b16 %v7611, %v7611
  %v7668 = vunpack.c.l.b16 %v7102
  %v7669 = vunpack.c.h.b16 %v7102
  %v7670 = vunpack.c.l.b16 %v7103
  %v7671 = vunpack.c.h.b16 %v7103
  %v7672 = vunpack.c.l.b16 %v7104
  %v7673 = vunpack.c.h.b16 %v7104
  %v7674 = vunpack.c.l.b16 %v7105
  %v7675 = vunpack.c.h.b16 %v7105
  %v7676 = vunpack.c.l.b16 %v7106
  %v7677 = vunpack.c.h.b16 %v7106
  %v7678 = vunpack.c.l.b16 %v7107
  %v7679 = vunpack.c.h.b16 %v7107
  %v7680 = vunpack.c.l.b16 %v7108
  %v7681 = vunpack.c.h.b16 %v7108
  %v7682 = vunpack.c.l.b16 %v7109
  %v7683 = vunpack.c.h.b16 %v7109
  %v7684 = vunpack.c.l.b16 %v7110
  %v7685 = vunpack.c.h.b16 %v7110
  %v7686 = vunpack.c.l.b16 %v7111
  %v7687 = vunpack.c.h.b16 %v7111
  %v7688 = vunpack.c.l.b16 %v7112
  %v7689 = vunpack.c.h.b16 %v7112
  %v7690 = vunpack.c.l.b16 %v7113
  %v7691 = vunpack.c.h.b16 %v7113
  %v7692 = vunpack.c.l.b16 %v7114
  %v7693 = vunpack.c.h.b16 %v7114
  %v7694 = vunpack.c.l.b16 %v7115
  %v7695 = vunpack.c.h.b16 %v7115
  %v7696 = vunpack.c.l.b16 %v7116
  %v7697 = vunpack.c.h.b16 %v7116
  %v7698 = vunpack.c.l.b16 %v7117
  %v7699 = vunpack.c.h.b16 %v7117
  %v7700 = vunpack.c.l.b16 %v7118
  %v7701 = vunpack.c.h.b16 %v7118
  %v7702 = vunpack.c.l.b16 %v7119
  %v7703 = vunpack.c.h.b16 %v7119
  %v7704 = vunpack.c.l.b16 %v7120
  %v7705 = vunpack.c.h.b16 %v7120
  %v7706 = vunpack.c.l.b16 %v7121
  %v7707 = vunpack.c.h.b16 %v7121
  %v7708 = vunpack.c.l.b16 %v7122
  %v7709 = vunpack.c.h.b16 %v7122
  %v7710 = vunpack.c.l.b16 %v7123
  %v7711 = vunpack.c.h.b16 %v7123
  %v7712 = vunpack.c.l.b16 %v7124
  %v7713 = vunpack.c.h.b16 %v7124
  %v7714 = vunpack.c.l.b16 %v7125
  %v7715 = vunpack.c.h.b16 %v7125
  %v7716 = vunpack.c.l.b16 %v7126
  %v7717 = vunpack.c.h.b16 %v7126
  %v7718 = vunpack.c.l.b16 %v7127
  %v7719 = vunpack.c.h.b16 %v7127
  %v7720 = vunpack.c.l.b16 %v7128
  %v7721 = vunpack.c.h.b16 %v7128
  %v7722 = vunpack.c.l.b16 %v7129
  %v7723 = vunpack.c.h.b16 %v7129
  %v7724 = vunpack.c.l.b16 %v7130
  %v7725 = vunpack.c.h.b16 %v7130
  %v7726 = vunpack.c.l.b16 %v7131
  %v7727 = vunpack.c.h.b16 %v7131
  %v7728 = vunpack.c.l.b16 %v7132
  %v7729 = vunpack.c.h.b16 %v7132
  %v7730 = vunpack.c.l.b16 %v7133
  %v7731 = vunpack.c.h.b16 %v7133
  %v7732 = vunpack.c.l.b16 %v7134
  %v7733 = vunpack.c.h.b16 %v7134
  %v7734 = vunpack.c.l.b16 %v7135
  %v7735 = vunpack.c.h.b16 %v7135
  %v7736 = vunpack.c.l.b16 %v7136
  %v7737 = vunpack.c.h.b16 %v7136
  %v7738 = vunpack.c.l.b16 %v7137
  %v7739 = vunpack.c.h.b16 %v7137
  %v7740 = vpack.c.b16 %v7670, %v7668
  %v7741 = vpack.c.b16 %v7671, %v7669
  %v7742 = vpack.c.b16 %v7674, %v7672
  %v7743 = vpack.c.b16 %v7675, %v7673
  %v7744 = vpack.c.b16 %v7678, %v7676
  %v7745 = vpack.c.b16 %v7679, %v7677
  %v7746 = vpack.c.b16 %v7682, %v7680
  %v7747 = vpack.c.b16 %v7683, %v7681
  %v7748 = vpack.c.b16 %v7686, %v7684
  %v7749 = vpack.c.b16 %v7687, %v7685
  %v7750 = vpack.c.b16 %v7690, %v7688
  %v7751 = vpack.c.b16 %v7691, %v7689
  %v7752 = vpack.c.b16 %v7694, %v7692
  %v7753 = vpack.c.b16 %v7695, %v7693
  %v7754 = vpack.c.b16 %v7698, %v7696
  %v7755 = vpack.c.b16 %v7699, %v7697
  %v7756 = vpack.c.b16 %v7702, %v7700
  %v7757 = vpack.c.b16 %v7703, %v7701
  %v7758 = vpack.c.b16 %v7706, %v7704
  %v7759 = vpack.c.b16 %v7707, %v7705
  %v7760 = vpack.c.b16 %v7710, %v7708
  %v7761 = vpack.c.b16 %v7711, %v7709
  %v7762 = vpack.c.b16 %v7714, %v7712
  %v7763 = vpack.c.b16 %v7715, %v7713
  %v7764 = vpack.c.b16 %v7718, %v7716
  %v7765 = vpack.c.b16 %v7719, %v7717
  %v7766 = vpack.c.b16 %v7722, %v7720
  %v7767 = vpack.c.b16 %v7723, %v7721
  %v7768 = vpack.c.b16 %v7726, %v7724
  %v7769 = vpack.c.b16 %v7727, %v7725
  %v7770 = vpack.c.b16 %v7730, %v7728
  %v7771 = vpack.c.b16 %v7731, %v7729
  %v7772 = vpack.c.b16 %v7734, %v7732
  %v7773 = vpack.c.b16 %v7735, %v7733
  %v7774 = vpack.c.b16 %v7738, %v7736
  %v7775 = vpack.c.b16 %v7739, %v7737
  %v7813 = vsel %vm277, %v7614, 0
  %v7816 = vsel %vm277, %v7617, 0
  %v7819 = vsel %vm277, %v7620, 0
  %v7822 = vsel %vm277, %v7623, 0
  %7824 = vmatprep.subr.bf16.mxu0 %v7741
  %7825 = vmatpush1.bf16.msra.mxu0 %v7740
  %7826 = vmatprep.subr.bf16.mxu0 %v7743
  %7827 = vmatpush1.bf16.msra.mxu0 %v7742
  %7828 = vmatprep.subr.bf16.mxu0 %v7745
  %7829 = vmatpush1.bf16.msra.mxu0 %v7744
  %7830 = vmatprep.subr.bf16.mxu0 %v7747
  %7831 = vmatpush1.bf16.msra.mxu0 %v7746
  %7832 = vmatprep.subr.bf16.mxu0 %v7749
  %7833 = vmatpush1.bf16.msra.mxu0 %v7748
  %7834 = vmatprep.subr.bf16.mxu0 %v7751
  %7835 = vmatpush1.bf16.msra.mxu0 %v7750
  %7836 = vmatprep.subr.bf16.mxu0 %v7753
  %7837 = vmatpush1.bf16.msra.mxu0 %v7752
  %7838 = vmatprep.subr.bf16.mxu0 %v7755
  %7839 = vmatpush1.bf16.msra.mxu0 %v7754
  %7840 = vmatprep.subr.bf16.mxu0 %v7757
  %7841 = vmatpush1.bf16.msra.mxu0 %v7756
  %7842 = vmatprep.subr.bf16.mxu0 %v7759
  %7843 = vmatpush1.bf16.msra.mxu0 %v7758
  %7844 = vmatprep.subr.bf16.mxu0 %v7761
  %7845 = vmatpush1.bf16.msra.mxu0 %v7760
  %7846 = vmatprep.subr.bf16.mxu0 %v7763
  %7847 = vmatpush1.bf16.msra.mxu0 %v7762
  %7848 = vmatprep.subr.bf16.mxu0 %v7765
  %7849 = vmatpush1.bf16.msra.mxu0 %v7764
  %7850 = vmatprep.subr.bf16.mxu0 %v7767
  %7851 = vmatpush1.bf16.msra.mxu0 %v7766
  %7852 = vmatprep.subr.bf16.mxu0 %v7769
  %7853 = vmatpush1.bf16.msra.mxu0 %v7768
  %7854 = vmatprep.subr.bf16.mxu0 %v7771
  %7855 = vmatpush1.bf16.msra.mxu0 %v7770
  %7856 = vmatprep.mubr.bf16.mxu0 %v7613
  %7857 = vmatmul.mubr.bf16.gmra.mrb[0].mxu0 %v7612
  %v7858 = vpop.f32.mrb[0].mxu0
  %v7859 = vadd.f32 %v7541, %v7858
  %v7860 = vpop.f32.mrb[0].mxu0
  %v7861 = vadd.f32 %v7543, %v7860
  %v7862 = vpop.f32.mrb[0].mxu0
  %v7863 = vadd.f32 %v7545, %v7862
  %v7864 = vpop.f32.mrb[0].mxu0
  %v7865 = vadd.f32 %v7547, %v7864
  %7866 = vmatprep.mubr.bf16.mxu0 %v7616
  %7867 = vmatmul.mubr.bf16.gmra.mrb[0].mxu0 %v7615
  %v7868 = vpop.f32.mrb[0].mxu0
  %v7869 = vadd.f32 %v7551, %v7868
  %v7870 = vpop.f32.mrb[0].mxu0
  %v7871 = vadd.f32 %v7553, %v7870
  %v7872 = vpop.f32.mrb[0].mxu0
  %v7873 = vadd.f32 %v7555, %v7872
  %v7874 = vpop.f32.mrb[0].mxu0
  %v7875 = vadd.f32 %v7557, %v7874
  %7876 = vmatprep.mubr.bf16.mxu0 %v7619
  %7877 = vmatmul.mubr.bf16.gmra.mrb[0].mxu0 %v7618
  %v7878 = vpop.f32.mrb[0].mxu0
  %v7879 = vadd.f32 %v7561, %v7878
  %v7880 = vpop.f32.mrb[0].mxu0
  %v7881 = vadd.f32 %v7563, %v7880
  %v7882 = vpop.f32.mrb[0].mxu0
  %v7883 = vadd.f32 %v7565, %v7882
  %v7884 = vpop.f32.mrb[0].mxu0
  %v7885 = vadd.f32 %v7567, %v7884
  %7886 = vmatprep.mubr.bf16.mxu0 %v7622
  %7887 = vmatmul.mubr.bf16.gmra.mrb[0].mxu0 %v7621
  %v7888 = vpop.f32.mrb[0].mxu0
  %v7889 = vadd.f32 %v7571, %v7888
  %v7890 = vpop.f32.mrb[0].mxu0
  %v7891 = vadd.f32 %v7573, %v7890
  %v7892 = vpop.f32.mrb[0].mxu0
  %v7893 = vpop.f32.mrb[0].mxu0
  %7894 = vdwg.mxu0
  %7895 = vmatprep.subr.bf16.mxu0 %v7773
  %7896 = vmatpush1.bf16.msra.mxu0 %v7772
  %7897 = vmatprep.subr.bf16.mxu0 %v7775
  %7898 = vmatpush1.bf16.msra.mxu0 %v7774
  %7899 = vmatprep.subr.bf16.mxu0 0
  %7900 = vmatpush1.bf16.msra.mxu0 0
  %7901 = vmatprep.subr.bf16.mxu0 0
  %7902 = vmatpush1.bf16.msra.mxu0 0
  %7903 = vmatprep.subr.bf16.mxu0 0
  %7904 = vmatpush1.bf16.msra.mxu0 0
  %7905 = vmatprep.subr.bf16.mxu0 0
  %7906 = vmatpush1.bf16.msra.mxu0 0
  %7907 = vmatprep.subr.bf16.mxu0 0
  %7908 = vmatpush1.bf16.msra.mxu0 0
  %7909 = vmatprep.subr.bf16.mxu0 0
  %7910 = vmatpush1.bf16.msra.mxu0 0
  %7911 = vmatprep.subr.bf16.mxu0 0
  %7912 = vmatpush1.bf16.msra.mxu0 0
  %7913 = vmatprep.subr.bf16.mxu0 0
  %7914 = vmatpush1.bf16.msra.mxu0 0
  %7915 = vmatprep.subr.bf16.mxu0 0
  %7916 = vmatpush1.bf16.msra.mxu0 0
  %7917 = vmatprep.subr.bf16.mxu0 0
  %7918 = vmatpush1.bf16.msra.mxu0 0
  %7919 = vmatprep.subr.bf16.mxu0 0
  %7920 = vmatpush1.bf16.msra.mxu0 0
  %7921 = vmatprep.subr.bf16.mxu0 0
  %7922 = vmatpush1.bf16.msra.mxu0 0
  %7923 = vmatprep.subr.bf16.mxu0 0
  %7924 = vmatpush1.bf16.msra.mxu0 0
  %7925 = vmatprep.subr.bf16.mxu0 0
  %7926 = vmatpush1.bf16.msra.mxu0 0
  %7927 = vmatprep.mubr.bf16.mxu0 0
  %7928 = vmatmul.mubr.bf16.gmra.mrb[0].mxu0 %v7813
  %v7929 = vpop.f32.mrb[0].mxu0
  %v7930 = vadd.f32 %v7859, %v7929
  %v7931 = vpop.f32.mrb[0].mxu0
  %v7932 = vadd.f32 %v7861, %v7931
  %v7933 = vpop.f32.mrb[0].mxu0
  %v7934 = vadd.f32 %v7863, %v7933
  %v7935 = vpop.f32.mrb[0].mxu0
  %v7936 = vadd.f32 %v7865, %v7935
  %7937 = vmatprep.mubr.bf16.mxu0 0
  %7938 = vmatmul.mubr.bf16.gmra.mrb[0].mxu0 %v7816
  %v7939 = vpop.f32.mrb[0].mxu0
  %v7940 = vadd.f32 %v7869, %v7939
  %v7941 = vpop.f32.mrb[0].mxu0
  %v7942 = vadd.f32 %v7871, %v7941
  %v7943 = vpop.f32.mrb[0].mxu0
  %v7944 = vadd.f32 %v7873, %v7943
  %v7945 = vpop.f32.mrb[0].mxu0
  %v7946 = vadd.f32 %v7875, %v7945
  %7947 = vmatprep.mubr.bf16.mxu0 0
  %7948 = vmatmul.mubr.bf16.gmra.mrb[0].mxu0 %v7819
  %v7949 = vpop.f32.mrb[0].mxu0
  %v7950 = vadd.f32 %v7879, %v7949
  %v7951 = vpop.f32.mrb[0].mxu0
  %v7952 = vadd.f32 %v7881, %v7951
  %v7953 = vpop.f32.mrb[0].mxu0
  %v7954 = vadd.f32 %v7883, %v7953
  %v7955 = vpop.f32.mrb[0].mxu0
  %v7956 = vadd.f32 %v7885, %v7955
  %7957 = vmatprep.mubr.bf16.mxu0 0
  %7958 = vmatmul.mubr.bf16.gmra.mrb[0].mxu0 %v7822
  %v7959 = vpop.f32.mrb[0].mxu0
  %v7960 = vadd.f32 %v7889, %v7959
  %v7961 = vpop.f32.mrb[0].mxu0
  %v7962 = vadd.f32 %v7891, %v7961
  %v7963 = vpop.f32.mrb[0].mxu0
  %v7964 = vpop.f32.mrb[0].mxu0
  %7965 = vdwg.mxu0
  %v7966 = vld [vmem:[%s32 + $0xc] sm:$0xff]
  %v7967 = vld [vmem:[%s32 + $0x14] sm:$0xf]
  %v7968 = vld [vmem:[%s32 + $0x18] sm:$0xff]
  %v7969 = vld [vmem:[%s32 + $0x20] sm:$0xf]
  %v7970 = vld [vmem:[%s32 + $0x24] sm:$0xff]
  %v7971 = vld [vmem:[%s32 + $0x2c] sm:$0xf]
  %v7972 = vld [vmem:[%s32 + $0x30] sm:$0xff]
  %v7973 = vld [vmem:[%s32 + $0x38] sm:$0xf]
  %v7974 = vld [vmem:[%s32 + $0x3c] sm:$0xff]
  %v7975 = vld [vmem:[%s32 + $0x44] sm:$0xf]
  %v7976 = vld [vmem:[%s32 + $0x48] sm:$0xff]
  %v7977 = vld [vmem:[%s32 + $0x50] sm:$0xf]
  %v7978 = vld [vmem:[%s32 + $0x54] sm:$0xff]
  %v7979 = vld [vmem:[%s32 + $0x5c] sm:$0xf]
  %v7980 = vld [vmem:[%s3441] sm:$0xff]
  %v7981 = vld [vmem:[%s3441 + $0x8] sm:$0xff]
  %v7982 = vld [vmem:[%s3441 + $0x10] sm:$0xff]
  %v7983 = vld [vmem:[%s3441 + $0x18] sm:$0xff]
  %v7984 = vld [vmem:[%s3441 + $0x20] sm:$0xff]
  %v7985 = vld [vmem:[%s3441 + $0x28] sm:$0xff]
  %v7986 = vld [vmem:[%s3441 + $0x30] sm:$0xff]
  %v7987 = vld [vmem:[%s3441 + $0x38] sm:$0xff]
  %v7988 = vld [vmem:[%s3441 + $0x40] sm:$0xff]
  %v7989 = vld [vmem:[%s3441 + $0x48] sm:$0xff]
  %v7990 = vld [vmem:[%s3441 + $0x50] sm:$0xff]
  %v7991 = vld [vmem:[%s3441 + $0x58] sm:$0xff]
  %v7992 = vld [vmem:[%s3441 + $0x60] sm:$0xff]
  %v7993 = vld [vmem:[%s3441 + $0x68] sm:$0xff]
  %v7994 = vld [vmem:[%s3441 + $0x70] sm:$0xff]
  %v7995 = vld [vmem:[%s3441 + $0x78] sm:$0xff]
  %v7996 = vld [vmem:[%s3441 + $0x80] sm:$0xff]
  %v7997 = vld [vmem:[%s3441 + $0x88] sm:$0xff]
  %v7998 = vld [vmem:[%s3441 + $0x90] sm:$0xff]
  %v7999 = vld [vmem:[%s3441 + $0x98] sm:$0xff]
  %v8000 = vld [vmem:[%s3441 + $0xa0] sm:$0xff]
  %v8001 = vld [vmem:[%s3441 + $0xa8] sm:$0xff]
  %v8002 = vld [vmem:[%s3441 + $0xb0] sm:$0xff]
  %v8003 = vld [vmem:[%s3441 + $0xb8] sm:$0xff]
  %v8004 = vld [vmem:[%s3441 + $0xc0] sm:$0xff]
  %v8005 = vld [vmem:[%s3441 + $0xc8] sm:$0xff]
  %v8006 = vld [vmem:[%s3441 + $0xd0] sm:$0xff]
  %v8007 = vld [vmem:[%s3441 + $0xd8] sm:$0xff]
  %v8008 = vld [vmem:[%s3441 + $0xe0] sm:$0xff]
  %v8009 = vld [vmem:[%s3441 + $0xe8] sm:$0xff]
  %v8010 = vld [vmem:[%s3441 + $0xf0] sm:$0xff]
  %v8011 = vld [vmem:[%s3441 + $0xf8] sm:$0xff]
  %v8012 = vld [vmem:[%s3441 + $0x100] sm:$0xff]
  %v8013 = vld [vmem:[%s3441 + $0x108] sm:$0xff]
  %v8014 = vld [vmem:[%s3441 + $0x110] sm:$0xff]
  %v8015 = vld [vmem:[%s3441 + $0x118] sm:$0xff]
  %v8030 = vunpack.c.l.b16 %v7966
  %v8031 = vunpack.c.h.b16 %v7966
  %v8032 = vunpack.c.l.b16 %v7967
  %v8033 = vunpack.c.l.b16 %v7968
  %v8034 = vunpack.c.h.b16 %v7968
  %v8035 = vunpack.c.l.b16 %v7969
  %v8036 = vunpack.c.l.b16 %v7970
  %v8037 = vunpack.c.h.b16 %v7970
  %v8038 = vunpack.c.l.b16 %v7971
  %v8039 = vunpack.c.l.b16 %v7972
  %v8040 = vunpack.c.h.b16 %v7972
  %v8041 = vunpack.c.l.b16 %v7973
  %v8042 = vunpack.c.l.b16 %v7974
  %v8043 = vunpack.c.h.b16 %v7974
  %v8044 = vunpack.c.l.b16 %v7975
  %v8045 = vunpack.c.l.b16 %v7976
  %v8046 = vunpack.c.h.b16 %v7976
  %v8047 = vunpack.c.l.b16 %v7977
  %v8048 = vunpack.c.l.b16 %v7978
  %v8049 = vunpack.c.h.b16 %v7978
  %v8050 = vunpack.c.l.b16 %v7979
  %v8051 = vpack.c.b16 %v8033, %v8030
  %v8052 = vpack.c.b16 %v8034, %v8031
  %v8053 = vpack.c.b16 %v8035, %v8032
  %v8054 = vpack.c.b16 %v8039, %v8036
  %v8055 = vpack.c.b16 %v8040, %v8037
  %v8056 = vpack.c.b16 %v8041, %v8038
  %v8057 = vpack.c.b16 %v8045, %v8042
  %v8058 = vpack.c.b16 %v8046, %v8043
  %v8059 = vpack.c.b16 %v8047, %v8044
  %v8060 = vpack.c.b16 %v8048, %v8048
  %v8061 = vpack.c.b16 %v8049, %v8049
  %v8062 = vpack.c.b16 %v8050, %v8050
  %v8107 = vunpack.c.l.b16 %v7980
  %v8108 = vunpack.c.h.b16 %v7980
  %v8109 = vunpack.c.l.b16 %v7981
  %v8110 = vunpack.c.h.b16 %v7981
  %v8111 = vunpack.c.l.b16 %v7982
  %v8112 = vunpack.c.h.b16 %v7982
  %v8113 = vunpack.c.l.b16 %v7983
  %v8114 = vunpack.c.h.b16 %v7983
  %v8115 = vunpack.c.l.b16 %v7984
  %v8116 = vunpack.c.h.b16 %v7984
  %v8117 = vunpack.c.l.b16 %v7985
  %v8118 = vunpack.c.h.b16 %v7985
  %v8119 = vunpack.c.l.b16 %v7986
  %v8120 = vunpack.c.h.b16 %v7986
  %v8121 = vunpack.c.l.b16 %v7987
  %v8122 = vunpack.c.h.b16 %v7987
  %v8123 = vunpack.c.l.b16 %v7988
  %v8124 = vunpack.c.h.b16 %v7988
  %v8125 = vunpack.c.l.b16 %v7989
  %v8126 = vunpack.c.h.b16 %v7989
  %v8127 = vunpack.c.l.b16 %v7990
  %v8128 = vunpack.c.h.b16 %v7990
  %v8129 = vunpack.c.l.b16 %v7991
  %v8130 = vunpack.c.h.b16 %v7991
  %v8131 = vunpack.c.l.b16 %v7992
  %v8132 = vunpack.c.h.b16 %v7992
  %v8133 = vunpack.c.l.b16 %v7993
  %v8134 = vunpack.c.h.b16 %v7993
  %v8135 = vunpack.c.l.b16 %v7994
  %v8136 = vunpack.c.h.b16 %v7994
  %v8137 = vunpack.c.l.b16 %v7995
  %v8138 = vunpack.c.h.b16 %v7995
  %v8139 = vunpack.c.l.b16 %v7996
  %v8140 = vunpack.c.h.b16 %v7996
  %v8141 = vunpack.c.l.b16 %v7997
  %v8142 = vunpack.c.h.b16 %v7997
  %v8143 = vunpack.c.l.b16 %v7998
  %v8144 = vunpack.c.h.b16 %v7998
  %v8145 = vunpack.c.l.b16 %v7999
  %v8146 = vunpack.c.h.b16 %v7999
  %v8147 = vunpack.c.l.b16 %v8000
  %v8148 = vunpack.c.h.b16 %v8000
  %v8149 = vunpack.c.l.b16 %v8001
  %v8150 = vunpack.c.h.b16 %v8001
  %v8151 = vunpack.c.l.b16 %v8002
  %v8152 = vunpack.c.h.b16 %v8002
  %v8153 = vunpack.c.l.b16 %v8003
  %v8154 = vunpack.c.h.b16 %v8003
  %v8155 = vunpack.c.l.b16 %v8004
  %v8156 = vunpack.c.h.b16 %v8004
  %v8157 = vunpack.c.l.b16 %v8005
  %v8158 = vunpack.c.h.b16 %v8005
  %v8159 = vunpack.c.l.b16 %v8006
  %v8160 = vunpack.c.h.b16 %v8006
  %v8161 = vunpack.c.l.b16 %v8007
  %v8162 = vunpack.c.h.b16 %v8007
  %v8163 = vunpack.c.l.b16 %v8008
  %v8164 = vunpack.c.h.b16 %v8008
  %v8165 = vunpack.c.l.b16 %v8009
  %v8166 = vunpack.c.h.b16 %v8009
  %v8167 = vunpack.c.l.b16 %v8010
  %v8168 = vunpack.c.h.b16 %v8010
  %v8169 = vunpack.c.l.b16 %v8011
  %v8170 = vunpack.c.h.b16 %v8011
  %v8171 = vunpack.c.l.b16 %v8012
  %v8172 = vunpack.c.h.b16 %v8012
  %v8173 = vunpack.c.l.b16 %v8013
  %v8174 = vunpack.c.h.b16 %v8013
  %v8175 = vunpack.c.l.b16 %v8014
  %v8176 = vunpack.c.h.b16 %v8014
  %v8177 = vunpack.c.l.b16 %v8015
  %v8178 = vunpack.c.h.b16 %v8015
  %v8179 = vpack.c.b16 %v8109, %v8107
  %v8180 = vpack.c.b16 %v8110, %v8108
  %v8181 = vpack.c.b16 %v8113, %v8111
  %v8182 = vpack.c.b16 %v8114, %v8112
  %v8183 = vpack.c.b16 %v8117, %v8115
  %v8184 = vpack.c.b16 %v8118, %v8116
  %v8185 = vpack.c.b16 %v8121, %v8119
  %v8186 = vpack.c.b16 %v8122, %v8120
  %v8187 = vpack.c.b16 %v8125, %v8123
  %v8188 = vpack.c.b16 %v8126, %v8124
  %v8189 = vpack.c.b16 %v8129, %v8127
  %v8190 = vpack.c.b16 %v8130, %v8128
  %v8191 = vpack.c.b16 %v8133, %v8131
  %v8192 = vpack.c.b16 %v8134, %v8132
  %v8193 = vpack.c.b16 %v8137, %v8135
  %v8194 = vpack.c.b16 %v8138, %v8136
  %v8195 = vpack.c.b16 %v8141, %v8139
  %v8196 = vpack.c.b16 %v8142, %v8140
  %v8197 = vpack.c.b16 %v8145, %v8143
  %v8198 = vpack.c.b16 %v8146, %v8144
  %v8199 = vpack.c.b16 %v8149, %v8147
  %v8200 = vpack.c.b16 %v8150, %v8148
  %v8201 = vpack.c.b16 %v8153, %v8151
  %v8202 = vpack.c.b16 %v8154, %v8152
  %v8203 = vpack.c.b16 %v8157, %v8155
  %v8204 = vpack.c.b16 %v8158, %v8156
  %v8205 = vpack.c.b16 %v8161, %v8159
  %v8206 = vpack.c.b16 %v8162, %v8160
  %v8207 = vpack.c.b16 %v8165, %v8163
  %v8208 = vpack.c.b16 %v8166, %v8164
  %v8209 = vpack.c.b16 %v8169, %v8167
  %v8210 = vpack.c.b16 %v8170, %v8168
  %v8211 = vpack.c.b16 %v8173, %v8171
  %v8212 = vpack.c.b16 %v8174, %v8172
  %v8213 = vpack.c.b16 %v8177, %v8175
  %v8214 = vpack.c.b16 %v8178, %v8176
  %v8252 = vsel %vm277, %v8053, 0
  %v8255 = vsel %vm277, %v8056, 0
  %v8258 = vsel %vm277, %v8059, 0
  %v8261 = vsel %vm277, %v8062, 0
  %8263 = vmatprep.subr.bf16.mxu0 %v8180
  %8264 = vmatpush1.bf16.msra.mxu0 %v8179
  %8265 = vmatprep.subr.bf16.mxu0 %v8182
  %8266 = vmatpush1.bf16.msra.mxu0 %v8181
  %8267 = vmatprep.subr.bf16.mxu0 %v8184
  %8268 = vmatpush1.bf16.msra.mxu0 %v8183
  %8269 = vmatprep.subr.bf16.mxu0 %v8186
  %8270 = vmatpush1.bf16.msra.mxu0 %v8185
  %8271 = vmatprep.subr.bf16.mxu0 %v8188
  %8272 = vmatpush1.bf16.msra.mxu0 %v8187
  %8273 = vmatprep.subr.bf16.mxu0 %v8190
  %8274 = vmatpush1.bf16.msra.mxu0 %v8189
  %8275 = vmatprep.subr.bf16.mxu0 %v8192
  %8276 = vmatpush1.bf16.msra.mxu0 %v8191
  %8277 = vmatprep.subr.bf16.mxu0 %v8194
  %8278 = vmatpush1.bf16.msra.mxu0 %v8193
  %8279 = vmatprep.subr.bf16.mxu0 %v8196
  %8280 = vmatpush1.bf16.msra.mxu0 %v8195
  %8281 = vmatprep.subr.bf16.mxu0 %v8198
  %8282 = vmatpush1.bf16.msra.mxu0 %v8197
  %8283 = vmatprep.subr.bf16.mxu0 %v8200
  %8284 = vmatpush1.bf16.msra.mxu0 %v8199
  %8285 = vmatprep.subr.bf16.mxu0 %v8202
  %8286 = vmatpush1.bf16.msra.mxu0 %v8201
  %8287 = vmatprep.subr.bf16.mxu0 %v8204
  %8288 = vmatpush1.bf16.msra.mxu0 %v8203
  %8289 = vmatprep.subr.bf16.mxu0 %v8206
  %8290 = vmatpush1.bf16.msra.mxu0 %v8205
  %8291 = vmatprep.subr.bf16.mxu0 %v8208
  %8292 = vmatpush1.bf16.msra.mxu0 %v8207
  %8293 = vmatprep.subr.bf16.mxu0 %v8210
  %8294 = vmatpush1.bf16.msra.mxu0 %v8209
  %8295 = vmatprep.mubr.bf16.mxu0 %v8052
  %8296 = vmatmul.mubr.bf16.gmra.mrb[0].mxu0 %v8051
  %v8297 = vpop.f32.mrb[0].mxu0
  %v8298 = vadd.f32 0.0, %v8297
  %v8299 = vpop.f32.mrb[0].mxu0
  %v8300 = vadd.f32 0.0, %v8299
  %v8301 = vpop.f32.mrb[0].mxu0
  %v8302 = vadd.f32 0.0, %v8301
  %v8303 = vpop.f32.mrb[0].mxu0
  %v8304 = vadd.f32 0.0, %v8303
  %8305 = vmatprep.mubr.bf16.mxu0 %v8055
  %8306 = vmatmul.mubr.bf16.gmra.mrb[0].mxu0 %v8054
  %v8307 = vpop.f32.mrb[0].mxu0
  %v8308 = vadd.f32 0.0, %v8307
  %v8309 = vpop.f32.mrb[0].mxu0
  %v8310 = vadd.f32 0.0, %v8309
  %v8311 = vpop.f32.mrb[0].mxu0
  %v8312 = vadd.f32 0.0, %v8311
  %v8313 = vpop.f32.mrb[0].mxu0
  %v8314 = vadd.f32 0.0, %v8313
  %8315 = vmatprep.mubr.bf16.mxu0 %v8058
  %8316 = vmatmul.mubr.bf16.gmra.mrb[0].mxu0 %v8057
  %v8317 = vpop.f32.mrb[0].mxu0
  %v8318 = vadd.f32 0.0, %v8317
  %v8319 = vpop.f32.mrb[0].mxu0
  %v8320 = vadd.f32 0.0, %v8319
  %v8321 = vpop.f32.mrb[0].mxu0
  %v8322 = vadd.f32 0.0, %v8321
  %v8323 = vpop.f32.mrb[0].mxu0
  %v8324 = vadd.f32 0.0, %v8323
  %8325 = vmatprep.mubr.bf16.mxu0 %v8061
  %8326 = vmatmul.mubr.bf16.gmra.mrb[0].mxu0 %v8060
  %v8327 = vpop.f32.mrb[0].mxu0
  %v8328 = vadd.f32 0.0, %v8327
  %v8329 = vpop.f32.mrb[0].mxu0
  %v8330 = vadd.f32 0.0, %v8329
  %v8331 = vpop.f32.mrb[0].mxu0
  %v8332 = vpop.f32.mrb[0].mxu0
  %8333 = vdwg.mxu0
  %8334 = vmatprep.subr.bf16.mxu0 %v8212
  %8335 = vmatpush1.bf16.msra.mxu0 %v8211
  %8336 = vmatprep.subr.bf16.mxu0 %v8214
  %8337 = vmatpush1.bf16.msra.mxu0 %v8213
  %8338 = vmatprep.subr.bf16.mxu0 0
  %8339 = vmatpush1.bf16.msra.mxu0 0
  %8340 = vmatprep.subr.bf16.mxu0 0
  %8341 = vmatpush1.bf16.msra.mxu0 0
  %8342 = vmatprep.subr.bf16.mxu0 0
  %8343 = vmatpush1.bf16.msra.mxu0 0
  %8344 = vmatprep.subr.bf16.mxu0 0
  %8345 = vmatpush1.bf16.msra.mxu0 0
  %8346 = vmatprep.subr.bf16.mxu0 0
  %8347 = vmatpush1.bf16.msra.mxu0 0
  %8348 = vmatprep.subr.bf16.mxu0 0
  %8349 = vmatpush1.bf16.msra.mxu0 0
  %8350 = vmatprep.subr.bf16.mxu0 0
  %8351 = vmatpush1.bf16.msra.mxu0 0
  %8352 = vmatprep.subr.bf16.mxu0 0
  %8353 = vmatpush1.bf16.msra.mxu0 0
  %8354 = vmatprep.subr.bf16.mxu0 0
  %8355 = vmatpush1.bf16.msra.mxu0 0
  %8356 = vmatprep.subr.bf16.mxu0 0
  %8357 = vmatpush1.bf16.msra.mxu0 0
  %8358 = vmatprep.subr.bf16.mxu0 0
  %8359 = vmatpush1.bf16.msra.mxu0 0
  %8360 = vmatprep.subr.bf16.mxu0 0
  %8361 = vmatpush1.bf16.msra.mxu0 0
  %8362 = vmatprep.subr.bf16.mxu0 0
  %8363 = vmatpush1.bf16.msra.mxu0 0
  %8364 = vmatprep.subr.bf16.mxu0 0
  %8365 = vmatpush1.bf16.msra.mxu0 0
  %8366 = vmatprep.mubr.bf16.mxu0 0
  %8367 = vmatmul.mubr.bf16.gmra.mrb[0].mxu0 %v8252
  %v8368 = vpop.f32.mrb[0].mxu0
  %v8369 = vadd.f32 %v8298, %v8368
  %v8370 = vpop.f32.mrb[0].mxu0
  %v8371 = vadd.f32 %v8300, %v8370
  %v8372 = vpop.f32.mrb[0].mxu0
  %v8373 = vadd.f32 %v8302, %v8372
  %v8374 = vpop.f32.mrb[0].mxu0
  %v8375 = vadd.f32 %v8304, %v8374
  %8376 = vmatprep.mubr.bf16.mxu0 0
  %8377 = vmatmul.mubr.bf16.gmra.mrb[0].mxu0 %v8255
  %v8378 = vpop.f32.mrb[0].mxu0
  %v8379 = vadd.f32 %v8308, %v8378
  %v8380 = vpop.f32.mrb[0].mxu0
  %v8381 = vadd.f32 %v8310, %v8380
  %v8382 = vpop.f32.mrb[0].mxu0
  %v8383 = vadd.f32 %v8312, %v8382
  %v8384 = vpop.f32.mrb[0].mxu0
  %v8385 = vadd.f32 %v8314, %v8384
  %8386 = vmatprep.mubr.bf16.mxu0 0
  %8387 = vmatmul.mubr.bf16.gmra.mrb[0].mxu0 %v8258
  %v8388 = vpop.f32.mrb[0].mxu0
  %v8389 = vadd.f32 %v8318, %v8388
  %v8390 = vpop.f32.mrb[0].mxu0
  %v8391 = vadd.f32 %v8320, %v8390
  %v8392 = vpop.f32.mrb[0].mxu0
  %v8393 = vadd.f32 %v8322, %v8392
  %v8394 = vpop.f32.mrb[0].mxu0
  %v8395 = vadd.f32 %v8324, %v8394
  %8396 = vmatprep.mubr.bf16.mxu0 0
  %8397 = vmatmul.mubr.bf16.gmra.mrb[0].mxu0 %v8261
  %v8398 = vpop.f32.mrb[0].mxu0
  %v8399 = vadd.f32 %v8328, %v8398
  %v8400 = vpop.f32.mrb[0].mxu0
  %v8401 = vadd.f32 %v8330, %v8400
  %v8402 = vpop.f32.mrb[0].mxu0
  %v8403 = vpop.f32.mrb[0].mxu0
  %8404 = vdwg.mxu0
  %v8405 = vadd.f32 %v7930, %v8369
  %v8406 = vadd.f32 %v7932, %v8371
  %v8407 = vadd.f32 %v7934, %v8373
  %v8408 = vadd.f32 %v7936, %v8375
  %v8409 = vadd.f32 %v7940, %v8379
  %v8410 = vadd.f32 %v7942, %v8381
  %v8411 = vadd.f32 %v7944, %v8383
  %v8412 = vadd.f32 %v7946, %v8385
  %v8413 = vadd.f32 %v7950, %v8389
  %v8414 = vadd.f32 %v7952, %v8391
  %v8415 = vadd.f32 %v7954, %v8393
  %v8416 = vadd.f32 %v7956, %v8395
  %v8417 = vadd.f32 %v7960, %v8399
  %v8418 = vadd.f32 %v7962, %v8401
  %v8419 = vld [vmem:[#allocation2 + $0x18] sm:$0xff]
  %v8420 = vld [vmem:[#allocation2 + $0x20] sm:$0xf]
  %v8421 = vld [vmem:[#allocation2 + $0x24] sm:$0xff]
  %v8422 = vld [vmem:[#allocation2 + $0x2c] sm:$0xf]
  %v8423 = vld [vmem:[#allocation2 + $0x30] sm:$0xff]
  %v8424 = vld [vmem:[#allocation2 + $0x38] sm:$0xf]
  %v8425 = vld [vmem:[#allocation2 + $0x3c] sm:$0xff]
  %v8426 = vld [vmem:[#allocation2 + $0x44] sm:$0xf]
  %v8427 = vld [vmem:[#allocation2 + $0x48] sm:$0xff]
  %v8428 = vld [vmem:[#allocation2 + $0x50] sm:$0xf]
  %v8429 = vld [vmem:[#allocation2 + $0x54] sm:$0xff]
  %v8430 = vld [vmem:[#allocation2 + $0x5c] sm:$0xf]
  %v8431 = vld [vmem:[#allocation2 + $0x60] sm:$0xff]
  %v8432 = vld [vmem:[#allocation2 + $0x68] sm:$0xf]
  %v8433 = vld [vmem:[%s3895] sm:$0xff]
  %v8434 = vld [vmem:[%s3895 + $0x8] sm:$0xff]
  %v8435 = vld [vmem:[%s3895 + $0x10] sm:$0xff]
  %v8436 = vld [vmem:[%s3895 + $0x18] sm:$0xff]
  %v8437 = vld [vmem:[%s3895 + $0x20] sm:$0xff]
  %v8438 = vld [vmem:[%s3895 + $0x28] sm:$0xff]
  %v8439 = vld [vmem:[%s3895 + $0x30] sm:$0xff]
  %v8440 = vld [vmem:[%s3895 + $0x38] sm:$0xff]
  %v8441 = vld [vmem:[%s3895 + $0x40] sm:$0xff]
  %v8442 = vld [vmem:[%s3895 + $0x48] sm:$0xff]
  %v8443 = vld [vmem:[%s3895 + $0x50] sm:$0xff]
  %v8444 = vld [vmem:[%s3895 + $0x58] sm:$0xff]
  %v8445 = vld [vmem:[%s3895 + $0x60] sm:$0xff]
  %v8446 = vld [vmem:[%s3895 + $0x68] sm:$0xff]
  %v8447 = vld [vmem:[%s3895 + $0x70] sm:$0xff]
  %v8448 = vld [vmem:[%s3895 + $0x78] sm:$0xff]
  %v8449 = vld [vmem:[%s3895 + $0x80] sm:$0xff]
  %v8450 = vld [vmem:[%s3895 + $0x88] sm:$0xff]
  %v8451 = vld [vmem:[%s3895 + $0x90] sm:$0xff]
  %v8452 = vld [vmem:[%s3895 + $0x98] sm:$0xff]
  %v8453 = vld [vmem:[%s3895 + $0xa0] sm:$0xff]
  %v8454 = vld [vmem:[%s3895 + $0xa8] sm:$0xff]
  %v8455 = vld [vmem:[%s3895 + $0xb0] sm:$0xff]
  %v8456 = vld [vmem:[%s3895 + $0xb8] sm:$0xff]
  %v8457 = vld [vmem:[%s3895 + $0xc0] sm:$0xff]
  %v8458 = vld [vmem:[%s3895 + $0xc8] sm:$0xff]
  %v8459 = vld [vmem:[%s3895 + $0xd0] sm:$0xff]
  %v8460 = vld [vmem:[%s3895 + $0xd8] sm:$0xff]
  %v8461 = vld [vmem:[%s3895 + $0xe0] sm:$0xff]
  %v8462 = vld [vmem:[%s3895 + $0xe8] sm:$0xff]
  %v8463 = vld [vmem:[%s3895 + $0xf0] sm:$0xff]
  %v8464 = vld [vmem:[%s3895 + $0xf8] sm:$0xff]
  %v8465 = vld [vmem:[%s3895 + $0x100] sm:$0xff]
  %v8466 = vld [vmem:[%s3895 + $0x108] sm:$0xff]
  %v8467 = vld [vmem:[%s3895 + $0x110] sm:$0xff]
  %v8468 = vld [vmem:[%s3895 + $0x118] sm:$0xff]
  %v8483 = vunpack.c.l.b16 %v8419
  %v8484 = vunpack.c.h.b16 %v8419
  %v8485 = vunpack.c.l.b16 %v8420
  %v8486 = vunpack.c.l.b16 %v8421
  %v8487 = vunpack.c.h.b16 %v8421
  %v8488 = vunpack.c.l.b16 %v8422
  %v8489 = vunpack.c.l.b16 %v8423
  %v8490 = vunpack.c.h.b16 %v8423
  %v8491 = vunpack.c.l.b16 %v8424
  %v8492 = vunpack.c.l.b16 %v8425
  %v8493 = vunpack.c.h.b16 %v8425
  %v8494 = vunpack.c.l.b16 %v8426
  %v8495 = vunpack.c.l.b16 %v8427
  %v8496 = vunpack.c.h.b16 %v8427
  %v8497 = vunpack.c.l.b16 %v8428
  %v8498 = vunpack.c.l.b16 %v8429
  %v8499 = vunpack.c.h.b16 %v8429
  %v8500 = vunpack.c.l.b16 %v8430
  %v8501 = vunpack.c.l.b16 %v8431
  %v8502 = vunpack.c.h.b16 %v8431
  %v8503 = vunpack.c.l.b16 %v8432
  %v8504 = vpack.c.b16 %v8486, %v8483
  %v8505 = vpack.c.b16 %v8487, %v8484
  %v8506 = vpack.c.b16 %v8488, %v8485
  %v8507 = vpack.c.b16 %v8492, %v8489
  %v8508 = vpack.c.b16 %v8493, %v8490
  %v8509 = vpack.c.b16 %v8494, %v8491
  %v8510 = vpack.c.b16 %v8498, %v8495
  %v8511 = vpack.c.b16 %v8499, %v8496
  %v8512 = vpack.c.b16 %v8500, %v8497
  %v8513 = vpack.c.b16 %v8501, %v8501
  %v8514 = vpack.c.b16 %v8502, %v8502
  %v8515 = vpack.c.b16 %v8503, %v8503
  %v8560 = vunpack.c.l.b16 %v8433
  %v8561 = vunpack.c.h.b16 %v8433
  %v8562 = vunpack.c.l.b16 %v8434
  %v8563 = vunpack.c.h.b16 %v8434
  %v8564 = vunpack.c.l.b16 %v8435
  %v8565 = vunpack.c.h.b16 %v8435
  %v8566 = vunpack.c.l.b16 %v8436
  %v8567 = vunpack.c.h.b16 %v8436
  %v8568 = vunpack.c.l.b16 %v8437
  %v8569 = vunpack.c.h.b16 %v8437
  %v8570 = vunpack.c.l.b16 %v8438
  %v8571 = vunpack.c.h.b16 %v8438
  %v8572 = vunpack.c.l.b16 %v8439
  %v8573 = vunpack.c.h.b16 %v8439
  %v8574 = vunpack.c.l.b16 %v8440
  %v8575 = vunpack.c.h.b16 %v8440
  %v8576 = vunpack.c.l.b16 %v8441
  %v8577 = vunpack.c.h.b16 %v8441
  %v8578 = vunpack.c.l.b16 %v8442
  %v8579 = vunpack.c.h.b16 %v8442
  %v8580 = vunpack.c.l.b16 %v8443
  %v8581 = vunpack.c.h.b16 %v8443
  %v8582 = vunpack.c.l.b16 %v8444
  %v8583 = vunpack.c.h.b16 %v8444
  %v8584 = vunpack.c.l.b16 %v8445
  %v8585 = vunpack.c.h.b16 %v8445
  %v8586 = vunpack.c.l.b16 %v8446
  %v8587 = vunpack.c.h.b16 %v8446
  %v8588 = vunpack.c.l.b16 %v8447
  %v8589 = vunpack.c.h.b16 %v8447
  %v8590 = vunpack.c.l.b16 %v8448
  %v8591 = vunpack.c.h.b16 %v8448
  %v8592 = vunpack.c.l.b16 %v8449
  %v8593 = vunpack.c.h.b16 %v8449
  %v8594 = vunpack.c.l.b16 %v8450
  %v8595 = vunpack.c.h.b16 %v8450
  %v8596 = vunpack.c.l.b16 %v8451
  %v8597 = vunpack.c.h.b16 %v8451
  %v8598 = vunpack.c.l.b16 %v8452
  %v8599 = vunpack.c.h.b16 %v8452
  %v8600 = vunpack.c.l.b16 %v8453
  %v8601 = vunpack.c.h.b16 %v8453
  %v8602 = vunpack.c.l.b16 %v8454
  %v8603 = vunpack.c.h.b16 %v8454
  %v8604 = vunpack.c.l.b16 %v8455
  %v8605 = vunpack.c.h.b16 %v8455
  %v8606 = vunpack.c.l.b16 %v8456
  %v8607 = vunpack.c.h.b16 %v8456
  %v8608 = vunpack.c.l.b16 %v8457
  %v8609 = vunpack.c.h.b16 %v8457
  %v8610 = vunpack.c.l.b16 %v8458
  %v8611 = vunpack.c.h.b16 %v8458
  %v8612 = vunpack.c.l.b16 %v8459
  %v8613 = vunpack.c.h.b16 %v8459
  %v8614 = vunpack.c.l.b16 %v8460
  %v8615 = vunpack.c.h.b16 %v8460
  %v8616 = vunpack.c.l.b16 %v8461
  %v8617 = vunpack.c.h.b16 %v8461
  %v8618 = vunpack.c.l.b16 %v8462
  %v8619 = vunpack.c.h.b16 %v8462
  %v8620 = vunpack.c.l.b16 %v8463
  %v8621 = vunpack.c.h.b16 %v8463
  %v8622 = vunpack.c.l.b16 %v8464
  %v8623 = vunpack.c.h.b16 %v8464
  %v8624 = vunpack.c.l.b16 %v8465
  %v8625 = vunpack.c.h.b16 %v8465
  %v8626 = vunpack.c.l.b16 %v8466
  %v8627 = vunpack.c.h.b16 %v8466
  %v8628 = vunpack.c.l.b16 %v8467
  %v8629 = vunpack.c.h.b16 %v8467
  %v8630 = vunpack.c.l.b16 %v8468
  %v8631 = vunpack.c.h.b16 %v8468
  %v8632 = vpack.c.b16 %v8562, %v8560
  %v8633 = vpack.c.b16 %v8563, %v8561
  %v8634 = vpack.c.b16 %v8566, %v8564
  %v8635 = vpack.c.b16 %v8567, %v8565
  %v8636 = vpack.c.b16 %v8570, %v8568
  %v8637 = vpack.c.b16 %v8571, %v8569
  %v8638 = vpack.c.b16 %v8574, %v8572
  %v8639 = vpack.c.b16 %v8575, %v8573
  %v8640 = vpack.c.b16 %v8578, %v8576
  %v8641 = vpack.c.b16 %v8579, %v8577
  %v8642 = vpack.c.b16 %v8582, %v8580
  %v8643 = vpack.c.b16 %v8583, %v8581
  %v8644 = vpack.c.b16 %v8586, %v8584
  %v8645 = vpack.c.b16 %v8587, %v8585
  %v8646 = vpack.c.b16 %v8590, %v8588
  %v8647 = vpack.c.b16 %v8591, %v8589
  %v8648 = vpack.c.b16 %v8594, %v8592
  %v8649 = vpack.c.b16 %v8595, %v8593
  %v8650 = vpack.c.b16 %v8598, %v8596
  %v8651 = vpack.c.b16 %v8599, %v8597
  %v8652 = vpack.c.b16 %v8602, %v8600
  %v8653 = vpack.c.b16 %v8603, %v8601
  %v8654 = vpack.c.b16 %v8606, %v8604
  %v8655 = vpack.c.b16 %v8607, %v8605
  %v8656 = vpack.c.b16 %v8610, %v8608
  %v8657 = vpack.c.b16 %v8611, %v8609
  %v8658 = vpack.c.b16 %v8614, %v8612
  %v8659 = vpack.c.b16 %v8615, %v8613
  %v8660 = vpack.c.b16 %v8618, %v8616
  %v8661 = vpack.c.b16 %v8619, %v8617
  %v8662 = vpack.c.b16 %v8622, %v8620
  %v8663 = vpack.c.b16 %v8623, %v8621
  %v8664 = vpack.c.b16 %v8626, %v8624
  %v8665 = vpack.c.b16 %v8627, %v8625
  %v8666 = vpack.c.b16 %v8630, %v8628
  %v8667 = vpack.c.b16 %v8631, %v8629
  %v8705 = vsel %vm277, %v8506, 0
  %v8708 = vsel %vm277, %v8509, 0
  %v8711 = vsel %vm277, %v8512, 0
  %v8714 = vsel %vm277, %v8515, 0
  %8716 = vmatprep.subr.bf16.mxu0 %v8633
  %8717 = vmatpush1.bf16.msra.mxu0 %v8632
  %8718 = vmatprep.subr.bf16.mxu0 %v8635
  %8719 = vmatpush1.bf16.msra.mxu0 %v8634
  %8720 = vmatprep.subr.bf16.mxu0 %v8637
  %8721 = vmatpush1.bf16.msra.mxu0 %v8636
  %8722 = vmatprep.subr.bf16.mxu0 %v8639
  %8723 = vmatpush1.bf16.msra.mxu0 %v8638
  %8724 = vmatprep.subr.bf16.mxu0 %v8641
  %8725 = vmatpush1.bf16.msra.mxu0 %v8640
  %8726 = vmatprep.subr.bf16.mxu0 %v8643
  %8727 = vmatpush1.bf16.msra.mxu0 %v8642
  %8728 = vmatprep.subr.bf16.mxu0 %v8645
  %8729 = vmatpush1.bf16.msra.mxu0 %v8644
  %8730 = vmatprep.subr.bf16.mxu0 %v8647
  %8731 = vmatpush1.bf16.msra.mxu0 %v8646
  %8732 = vmatprep.subr.bf16.mxu0 %v8649
  %8733 = vmatpush1.bf16.msra.mxu0 %v8648
  %8734 = vmatprep.subr.bf16.mxu0 %v8651
  %8735 = vmatpush1.bf16.msra.mxu0 %v8650
  %8736 = vmatprep.subr.bf16.mxu0 %v8653
  %8737 = vmatpush1.bf16.msra.mxu0 %v8652
  %8738 = vmatprep.subr.bf16.mxu0 %v8655
  %8739 = vmatpush1.bf16.msra.mxu0 %v8654
  %8740 = vmatprep.subr.bf16.mxu0 %v8657
  %8741 = vmatpush1.bf16.msra.mxu0 %v8656
  %8742 = vmatprep.subr.bf16.mxu0 %v8659
  %8743 = vmatpush1.bf16.msra.mxu0 %v8658
  %8744 = vmatprep.subr.bf16.mxu0 %v8661
  %8745 = vmatpush1.bf16.msra.mxu0 %v8660
  %8746 = vmatprep.subr.bf16.mxu0 %v8663
  %8747 = vmatpush1.bf16.msra.mxu0 %v8662
  %8748 = vmatprep.mubr.bf16.mxu0 %v8505
  %8749 = vmatmul.mubr.bf16.gmra.mrb[0].mxu0 %v8504
  %v8750 = vpop.f32.mrb[0].mxu0
  %v8751 = vadd.f32 0.0, %v8750
  %v8752 = vpop.f32.mrb[0].mxu0
  %v8753 = vadd.f32 0.0, %v8752
  %v8754 = vpop.f32.mrb[0].mxu0
  %v8755 = vadd.f32 0.0, %v8754
  %v8756 = vpop.f32.mrb[0].mxu0
  %v8757 = vadd.f32 0.0, %v8756
  %8758 = vmatprep.mubr.bf16.mxu0 %v8508
  %8759 = vmatmul.mubr.bf16.gmra.mrb[0].mxu0 %v8507
  %v8760 = vpop.f32.mrb[0].mxu0
  %v8761 = vadd.f32 0.0, %v8760
  %v8762 = vpop.f32.mrb[0].mxu0
  %v8763 = vadd.f32 0.0, %v8762
  %v8764 = vpop.f32.mrb[0].mxu0
  %v8765 = vadd.f32 0.0, %v8764
  %v8766 = vpop.f32.mrb[0].mxu0
  %v8767 = vadd.f32 0.0, %v8766
  %8768 = vmatprep.mubr.bf16.mxu0 %v8511
  %8769 = vmatmul.mubr.bf16.gmra.mrb[0].mxu0 %v8510
  %v8770 = vpop.f32.mrb[0].mxu0
  %v8771 = vadd.f32 0.0, %v8770
  %v8772 = vpop.f32.mrb[0].mxu0
  %v8773 = vadd.f32 0.0, %v8772
  %v8774 = vpop.f32.mrb[0].mxu0
  %v8775 = vadd.f32 0.0, %v8774
  %v8776 = vpop.f32.mrb[0].mxu0
  %v8777 = vadd.f32 0.0, %v8776
  %8778 = vmatprep.mubr.bf16.mxu0 %v8514
  %8779 = vmatmul.mubr.bf16.gmra.mrb[0].mxu0 %v8513
  %v8780 = vpop.f32.mrb[0].mxu0
  %v8781 = vadd.f32 0.0, %v8780
  %v8782 = vpop.f32.mrb[0].mxu0
  %v8783 = vadd.f32 0.0, %v8782
  %v8784 = vpop.f32.mrb[0].mxu0
  %v8785 = vpop.f32.mrb[0].mxu0
  %8786 = vdwg.mxu0
  %8787 = vmatprep.subr.bf16.mxu0 %v8665
  %8788 = vmatpush1.bf16.msra.mxu0 %v8664
  %8789 = vmatprep.subr.bf16.mxu0 %v8667
  %8790 = vmatpush1.bf16.msra.mxu0 %v8666
  %8791 = vmatprep.subr.bf16.mxu0 0
  %8792 = vmatpush1.bf16.msra.mxu0 0
  %8793 = vmatprep.subr.bf16.mxu0 0
  %8794 = vmatpush1.bf16.msra.mxu0 0
  %8795 = vmatprep.subr.bf16.mxu0 0
  %8796 = vmatpush1.bf16.msra.mxu0 0
  %8797 = vmatprep.subr.bf16.mxu0 0
  %8798 = vmatpush1.bf16.msra.mxu0 0
  %8799 = vmatprep.subr.bf16.mxu0 0
  %8800 = vmatpush1.bf16.msra.mxu0 0
  %8801 = vmatprep.subr.bf16.mxu0 0
  %8802 = vmatpush1.bf16.msra.mxu0 0
  %8803 = vmatprep.subr.bf16.mxu0 0
  %8804 = vmatpush1.bf16.msra.mxu0 0
  %8805 = vmatprep.subr.bf16.mxu0 0
  %8806 = vmatpush1.bf16.msra.mxu0 0
  %8807 = vmatprep.subr.bf16.mxu0 0
  %8808 = vmatpush1.bf16.msra.mxu0 0
  %8809 = vmatprep.subr.bf16.mxu0 0
  %8810 = vmatpush1.bf16.msra.mxu0 0
  %8811 = vmatprep.subr.bf16.mxu0 0
  %8812 = vmatpush1.bf16.msra.mxu0 0
  %8813 = vmatprep.subr.bf16.mxu0 0
  %8814 = vmatpush1.bf16.msra.mxu0 0
  %8815 = vmatprep.subr.bf16.mxu0 0
  %8816 = vmatpush1.bf16.msra.mxu0 0
  %8817 = vmatprep.subr.bf16.mxu0 0
  %8818 = vmatpush1.bf16.msra.mxu0 0
  %8819 = vmatprep.mubr.bf16.mxu0 0
  %8820 = vmatmul.mubr.bf16.gmra.mrb[0].mxu0 %v8705
  %v8821 = vpop.f32.mrb[0].mxu0
  %v8822 = vadd.f32 %v8751, %v8821
  %v8823 = vpop.f32.mrb[0].mxu0
  %v8824 = vadd.f32 %v8753, %v8823
  %v8825 = vpop.f32.mrb[0].mxu0
  %v8826 = vadd.f32 %v8755, %v8825
  %v8827 = vpop.f32.mrb[0].mxu0
  %v8828 = vadd.f32 %v8757, %v8827
  %8829 = vmatprep.mubr.bf16.mxu0 0
  %8830 = vmatmul.mubr.bf16.gmra.mrb[0].mxu0 %v8708
  %v8831 = vpop.f32.mrb[0].mxu0
  %v8832 = vadd.f32 %v8761, %v8831
  %v8833 = vpop.f32.mrb[0].mxu0
  %v8834 = vadd.f32 %v8763, %v8833
  %v8835 = vpop.f32.mrb[0].mxu0
  %v8836 = vadd.f32 %v8765, %v8835
  %v8837 = vpop.f32.mrb[0].mxu0
  %v8838 = vadd.f32 %v8767, %v8837
  %8839 = vmatprep.mubr.bf16.mxu0 0
  %8840 = vmatmul.mubr.bf16.gmra.mrb[0].mxu0 %v8711
  %v8841 = vpop.f32.mrb[0].mxu0
  %v8842 = vadd.f32 %v8771, %v8841
  %v8843 = vpop.f32.mrb[0].mxu0
  %v8844 = vadd.f32 %v8773, %v8843
  %v8845 = vpop.f32.mrb[0].mxu0
  %v8846 = vadd.f32 %v8775, %v8845
  %v8847 = vpop.f32.mrb[0].mxu0
  %v8848 = vadd.f32 %v8777, %v8847
  %8849 = vmatprep.mubr.bf16.mxu0 0
  %8850 = vmatmul.mubr.bf16.gmra.mrb[0].mxu0 %v8714
  %v8851 = vpop.f32.mrb[0].mxu0
  %v8852 = vadd.f32 %v8781, %v8851
  %v8853 = vpop.f32.mrb[0].mxu0
  %v8854 = vadd.f32 %v8783, %v8853
  %v8855 = vpop.f32.mrb[0].mxu0
  %v8856 = vpop.f32.mrb[0].mxu0
  %8857 = vdwg.mxu0
  %v8858 = vadd.f32 %v8405, %v8822
  %v8859 = vadd.f32 %v8406, %v8824
  %v8860 = vadd.f32 %v8407, %v8826
  %v8861 = vadd.f32 %v8408, %v8828
  %v8862 = vadd.f32 %v8409, %v8832
  %v8863 = vadd.f32 %v8410, %v8834
  %v8864 = vadd.f32 %v8411, %v8836
  %v8865 = vadd.f32 %v8412, %v8838
  %v8866 = vadd.f32 %v8413, %v8842
  %v8867 = vadd.f32 %v8414, %v8844
  %v8868 = vadd.f32 %v8415, %v8846
  %v8869 = vadd.f32 %v8416, %v8848
  %v8870 = vadd.f32 %v8417, %v8852
  %v8871 = vadd.f32 %v8418, %v8854
  %v8872 = vld [vmem:[%s32 + $0x18] sm:$0xff]
  %v8873 = vld [vmem:[%s32 + $0x20] sm:$0xf]
  %v8874 = vld [vmem:[%s32 + $0x24] sm:$0xff]
  %v8875 = vld [vmem:[%s32 + $0x2c] sm:$0xf]
  %v8876 = vld [vmem:[%s32 + $0x30] sm:$0xff]
  %v8877 = vld [vmem:[%s32 + $0x38] sm:$0xf]
  %v8878 = vld [vmem:[%s32 + $0x3c] sm:$0xff]
  %v8879 = vld [vmem:[%s32 + $0x44] sm:$0xf]
  %v8880 = vld [vmem:[%s32 + $0x48] sm:$0xff]
  %v8881 = vld [vmem:[%s32 + $0x50] sm:$0xf]
  %v8882 = vld [vmem:[%s32 + $0x54] sm:$0xff]
  %v8883 = vld [vmem:[%s32 + $0x5c] sm:$0xf]
  %v8884 = vld [vmem:[%s32 + $0x60] sm:$0xff]
  %v8885 = vld [vmem:[%s32 + $0x68] sm:$0xf]
  %v8886 = vld [vmem:[%s4349] sm:$0xff]
  %v8887 = vld [vmem:[%s4349 + $0x8] sm:$0xff]
  %v8888 = vld [vmem:[%s4349 + $0x10] sm:$0xff]
  %v8889 = vld [vmem:[%s4349 + $0x18] sm:$0xff]
  %v8890 = vld [vmem:[%s4349 + $0x20] sm:$0xff]
  %v8891 = vld [vmem:[%s4349 + $0x28] sm:$0xff]
  %v8892 = vld [vmem:[%s4349 + $0x30] sm:$0xff]
  %v8893 = vld [vmem:[%s4349 + $0x38] sm:$0xff]
  %v8894 = vld [vmem:[%s4349 + $0x40] sm:$0xff]
  %v8895 = vld [vmem:[%s4349 + $0x48] sm:$0xff]
  %v8896 = vld [vmem:[%s4349 + $0x50] sm:$0xff]
  %v8897 = vld [vmem:[%s4349 + $0x58] sm:$0xff]
  %v8898 = vld [vmem:[%s4349 + $0x60] sm:$0xff]
  %v8899 = vld [vmem:[%s4349 + $0x68] sm:$0xff]
  %v8900 = vld [vmem:[%s4349 + $0x70] sm:$0xff]
  %v8901 = vld [vmem:[%s4349 + $0x78] sm:$0xff]
  %v8902 = vld [vmem:[%s4349 + $0x80] sm:$0xff]
  %v8903 = vld [vmem:[%s4349 + $0x88] sm:$0xff]
  %v8904 = vld [vmem:[%s4349 + $0x90] sm:$0xff]
  %v8905 = vld [vmem:[%s4349 + $0x98] sm:$0xff]
  %v8906 = vld [vmem:[%s4349 + $0xa0] sm:$0xff]
  %v8907 = vld [vmem:[%s4349 + $0xa8] sm:$0xff]
  %v8908 = vld [vmem:[%s4349 + $0xb0] sm:$0xff]
  %v8909 = vld [vmem:[%s4349 + $0xb8] sm:$0xff]
  %v8910 = vld [vmem:[%s4349 + $0xc0] sm:$0xff]
  %v8911 = vld [vmem:[%s4349 + $0xc8] sm:$0xff]
  %v8912 = vld [vmem:[%s4349 + $0xd0] sm:$0xff]
  %v8913 = vld [vmem:[%s4349 + $0xd8] sm:$0xff]
  %v8914 = vld [vmem:[%s4349 + $0xe0] sm:$0xff]
  %v8915 = vld [vmem:[%s4349 + $0xe8] sm:$0xff]
  %v8916 = vld [vmem:[%s4349 + $0xf0] sm:$0xff]
  %v8917 = vld [vmem:[%s4349 + $0xf8] sm:$0xff]
  %v8918 = vld [vmem:[%s4349 + $0x100] sm:$0xff]
  %v8919 = vld [vmem:[%s4349 + $0x108] sm:$0xff]
  %v8920 = vld [vmem:[%s4349 + $0x110] sm:$0xff]
  %v8921 = vld [vmem:[%s4349 + $0x118] sm:$0xff]
  %v8936 = vunpack.c.l.b16 %v8872
  %v8937 = vunpack.c.h.b16 %v8872
  %v8938 = vunpack.c.l.b16 %v8873
  %v8939 = vunpack.c.l.b16 %v8874
  %v8940 = vunpack.c.h.b16 %v8874
  %v8941 = vunpack.c.l.b16 %v8875
  %v8942 = vunpack.c.l.b16 %v8876
  %v8943 = vunpack.c.h.b16 %v8876
  %v8944 = vunpack.c.l.b16 %v8877
  %v8945 = vunpack.c.l.b16 %v8878
  %v8946 = vunpack.c.h.b16 %v8878
  %v8947 = vunpack.c.l.b16 %v8879
  %v8948 = vunpack.c.l.b16 %v8880
  %v8949 = vunpack.c.h.b16 %v8880
  %v8950 = vunpack.c.l.b16 %v8881
  %v8951 = vunpack.c.l.b16 %v8882
  %v8952 = vunpack.c.h.b16 %v8882
  %v8953 = vunpack.c.l.b16 %v8883
  %v8954 = vunpack.c.l.b16 %v8884
  %v8955 = vunpack.c.h.b16 %v8884
  %v8956 = vunpack.c.l.b16 %v8885
  %v8957 = vpack.c.b16 %v8939, %v8936
  %v8958 = vpack.c.b16 %v8940, %v8937
  %v8959 = vpack.c.b16 %v8941, %v8938
  %v8960 = vpack.c.b16 %v8945, %v8942
  %v8961 = vpack.c.b16 %v8946, %v8943
  %v8962 = vpack.c.b16 %v8947, %v8944
  %v8963 = vpack.c.b16 %v8951, %v8948
  %v8964 = vpack.c.b16 %v8952, %v8949
  %v8965 = vpack.c.b16 %v8953, %v8950
  %v8966 = vpack.c.b16 %v8954, %v8954
  %v8967 = vpack.c.b16 %v8955, %v8955
  %v8968 = vpack.c.b16 %v8956, %v8956
  %v9013 = vunpack.c.l.b16 %v8886
  %v9014 = vunpack.c.h.b16 %v8886
  %v9015 = vunpack.c.l.b16 %v8887
  %v9016 = vunpack.c.h.b16 %v8887
  %v9017 = vunpack.c.l.b16 %v8888
  %v9018 = vunpack.c.h.b16 %v8888
  %v9019 = vunpack.c.l.b16 %v8889
  %v9020 = vunpack.c.h.b16 %v8889
  %v9021 = vunpack.c.l.b16 %v8890
  %v9022 = vunpack.c.h.b16 %v8890
  %v9023 = vunpack.c.l.b16 %v8891
  %v9024 = vunpack.c.h.b16 %v8891
  %v9025 = vunpack.c.l.b16 %v8892
  %v9026 = vunpack.c.h.b16 %v8892
  %v9027 = vunpack.c.l.b16 %v8893
  %v9028 = vunpack.c.h.b16 %v8893
  %v9029 = vunpack.c.l.b16 %v8894
  %v9030 = vunpack.c.h.b16 %v8894
  %v9031 = vunpack.c.l.b16 %v8895
  %v9032 = vunpack.c.h.b16 %v8895
  %v9033 = vunpack.c.l.b16 %v8896
  %v9034 = vunpack.c.h.b16 %v8896
  %v9035 = vunpack.c.l.b16 %v8897
  %v9036 = vunpack.c.h.b16 %v8897
  %v9037 = vunpack.c.l.b16 %v8898
  %v9038 = vunpack.c.h.b16 %v8898
  %v9039 = vunpack.c.l.b16 %v8899
  %v9040 = vunpack.c.h.b16 %v8899
  %v9041 = vunpack.c.l.b16 %v8900
  %v9042 = vunpack.c.h.b16 %v8900
  %v9043 = vunpack.c.l.b16 %v8901
  %v9044 = vunpack.c.h.b16 %v8901
  %v9045 = vunpack.c.l.b16 %v8902
  %v9046 = vunpack.c.h.b16 %v8902
  %v9047 = vunpack.c.l.b16 %v8903
  %v9048 = vunpack.c.h.b16 %v8903
  %v9049 = vunpack.c.l.b16 %v8904
  %v9050 = vunpack.c.h.b16 %v8904
  %v9051 = vunpack.c.l.b16 %v8905
  %v9052 = vunpack.c.h.b16 %v8905
  %v9053 = vunpack.c.l.b16 %v8906
  %v9054 = vunpack.c.h.b16 %v8906
  %v9055 = vunpack.c.l.b16 %v8907
  %v9056 = vunpack.c.h.b16 %v8907
  %v9057 = vunpack.c.l.b16 %v8908
  %v9058 = vunpack.c.h.b16 %v8908
  %v9059 = vunpack.c.l.b16 %v8909
  %v9060 = vunpack.c.h.b16 %v8909
  %v9061 = vunpack.c.l.b16 %v8910
  %v9062 = vunpack.c.h.b16 %v8910
  %v9063 = vunpack.c.l.b16 %v8911
  %v9064 = vunpack.c.h.b16 %v8911
  %v9065 = vunpack.c.l.b16 %v8912
  %v9066 = vunpack.c.h.b16 %v8912
  %v9067 = vunpack.c.l.b16 %v8913
  %v9068 = vunpack.c.h.b16 %v8913
  %v9069 = vunpack.c.l.b16 %v8914
  %v9070 = vunpack.c.h.b16 %v8914
  %v9071 = vunpack.c.l.b16 %v8915
  %v9072 = vunpack.c.h.b16 %v8915
  %v9073 = vunpack.c.l.b16 %v8916
  %v9074 = vunpack.c.h.b16 %v8916
  %v9075 = vunpack.c.l.b16 %v8917
  %v9076 = vunpack.c.h.b16 %v8917
  %v9077 = vunpack.c.l.b16 %v8918
  %v9078 = vunpack.c.h.b16 %v8918
  %v9079 = vunpack.c.l.b16 %v8919
  %v9080 = vunpack.c.h.b16 %v8919
  %v9081 = vunpack.c.l.b16 %v8920
  %v9082 = vunpack.c.h.b16 %v8920
  %v9083 = vunpack.c.l.b16 %v8921
  %v9084 = vunpack.c.h.b16 %v8921
  %v9085 = vpack.c.b16 %v9015, %v9013
  %v9086 = vpack.c.b16 %v9016, %v9014
  %v9087 = vpack.c.b16 %v9019, %v9017
  %v9088 = vpack.c.b16 %v9020, %v9018
  %v9089 = vpack.c.b16 %v9023, %v9021
  %v9090 = vpack.c.b16 %v9024, %v9022
  %v9091 = vpack.c.b16 %v9027, %v9025
  %v9092 = vpack.c.b16 %v9028, %v9026
  %v9093 = vpack.c.b16 %v9031, %v9029
  %v9094 = vpack.c.b16 %v9032, %v9030
  %v9095 = vpack.c.b16 %v9035, %v9033
  %v9096 = vpack.c.b16 %v9036, %v9034
  %v9097 = vpack.c.b16 %v9039, %v9037
  %v9098 = vpack.c.b16 %v9040, %v9038
  %v9099 = vpack.c.b16 %v9043, %v9041
  %v9100 = vpack.c.b16 %v9044, %v9042
  %v9101 = vpack.c.b16 %v9047, %v9045
  %v9102 = vpack.c.b16 %v9048, %v9046
  %v9103 = vpack.c.b16 %v9051, %v9049
  %v9104 = vpack.c.b16 %v9052, %v9050
  %v9105 = vpack.c.b16 %v9055, %v9053
  %v9106 = vpack.c.b16 %v9056, %v9054
  %v9107 = vpack.c.b16 %v9059, %v9057
  %v9108 = vpack.c.b16 %v9060, %v9058
  %v9109 = vpack.c.b16 %v9063, %v9061
  %v9110 = vpack.c.b16 %v9064, %v9062
  %v9111 = vpack.c.b16 %v9067, %v9065
  %v9112 = vpack.c.b16 %v9068, %v9066
  %v9113 = vpack.c.b16 %v9071, %v9069
  %v9114 = vpack.c.b16 %v9072, %v9070
  %v9115 = vpack.c.b16 %v9075, %v9073
  %v9116 = vpack.c.b16 %v9076, %v9074
  %v9117 = vpack.c.b16 %v9079, %v9077
  %v9118 = vpack.c.b16 %v9080, %v9078
  %v9119 = vpack.c.b16 %v9083, %v9081
  %v9120 = vpack.c.b16 %v9084, %v9082
  %v9158 = vsel %vm277, %v8959, 0
  %v9161 = vsel %vm277, %v8962, 0
  %v9164 = vsel %vm277, %v8965, 0
  %v9167 = vsel %vm277, %v8968, 0
  %9169 = vmatprep.subr.bf16.mxu0 %v9086
  %9170 = vmatpush1.bf16.msra.mxu0 %v9085
  %9171 = vmatprep.subr.bf16.mxu0 %v9088
  %9172 = vmatpush1.bf16.msra.mxu0 %v9087
  %9173 = vmatprep.subr.bf16.mxu0 %v9090
  %9174 = vmatpush1.bf16.msra.mxu0 %v9089
  %9175 = vmatprep.subr.bf16.mxu0 %v9092
  %9176 = vmatpush1.bf16.msra.mxu0 %v9091
  %9177 = vmatprep.subr.bf16.mxu0 %v9094
  %9178 = vmatpush1.bf16.msra.mxu0 %v9093
  %9179 = vmatprep.subr.bf16.mxu0 %v9096
  %9180 = vmatpush1.bf16.msra.mxu0 %v9095
  %9181 = vmatprep.subr.bf16.mxu0 %v9098
  %9182 = vmatpush1.bf16.msra.mxu0 %v9097
  %9183 = vmatprep.subr.bf16.mxu0 %v9100
  %9184 = vmatpush1.bf16.msra.mxu0 %v9099
  %9185 = vmatprep.subr.bf16.mxu0 %v9102
  %9186 = vmatpush1.bf16.msra.mxu0 %v9101
  %9187 = vmatprep.subr.bf16.mxu0 %v9104
  %9188 = vmatpush1.bf16.msra.mxu0 %v9103
  %9189 = vmatprep.subr.bf16.mxu0 %v9106
  %9190 = vmatpush1.bf16.msra.mxu0 %v9105
  %9191 = vmatprep.subr.bf16.mxu0 %v9108
  %9192 = vmatpush1.bf16.msra.mxu0 %v9107
  %9193 = vmatprep.subr.bf16.mxu0 %v9110
  %9194 = vmatpush1.bf16.msra.mxu0 %v9109
  %9195 = vmatprep.subr.bf16.mxu0 %v9112
  %9196 = vmatpush1.bf16.msra.mxu0 %v9111
  %9197 = vmatprep.subr.bf16.mxu0 %v9114
  %9198 = vmatpush1.bf16.msra.mxu0 %v9113
  %9199 = vmatprep.subr.bf16.mxu0 %v9116
  %9200 = vmatpush1.bf16.msra.mxu0 %v9115
  %9201 = vmatprep.mubr.bf16.mxu0 %v8958
  %9202 = vmatmul.mubr.bf16.gmra.mrb[0].mxu0 %v8957
  %v9203 = vpop.f32.mrb[0].mxu0
  %v9204 = vadd.f32 0.0, %v9203
  %v9205 = vpop.f32.mrb[0].mxu0
  %v9206 = vadd.f32 0.0, %v9205
  %v9207 = vpop.f32.mrb[0].mxu0
  %v9208 = vadd.f32 0.0, %v9207
  %v9209 = vpop.f32.mrb[0].mxu0
  %v9210 = vadd.f32 0.0, %v9209
  %9211 = vmatprep.mubr.bf16.mxu0 %v8961
  %9212 = vmatmul.mubr.bf16.gmra.mrb[0].mxu0 %v8960
  %v9213 = vpop.f32.mrb[0].mxu0
  %v9214 = vadd.f32 0.0, %v9213
  %v9215 = vpop.f32.mrb[0].mxu0
  %v9216 = vadd.f32 0.0, %v9215
  %v9217 = vpop.f32.mrb[0].mxu0
  %v9218 = vadd.f32 0.0, %v9217
  %v9219 = vpop.f32.mrb[0].mxu0
  %v9220 = vadd.f32 0.0, %v9219
  %9221 = vmatprep.mubr.bf16.mxu0 %v8964
  %9222 = vmatmul.mubr.bf16.gmra.mrb[0].mxu0 %v8963
  %v9223 = vpop.f32.mrb[0].mxu0
  %v9224 = vadd.f32 0.0, %v9223
  %v9225 = vpop.f32.mrb[0].mxu0
  %v9226 = vadd.f32 0.0, %v9225
  %v9227 = vpop.f32.mrb[0].mxu0
  %v9228 = vadd.f32 0.0, %v9227
  %v9229 = vpop.f32.mrb[0].mxu0
  %v9230 = vadd.f32 0.0, %v9229
  %9231 = vmatprep.mubr.bf16.mxu0 %v8967
  %9232 = vmatmul.mubr.bf16.gmra.mrb[0].mxu0 %v8966
  %v9233 = vpop.f32.mrb[0].mxu0
  %v9234 = vadd.f32 0.0, %v9233
  %v9235 = vpop.f32.mrb[0].mxu0
  %v9236 = vadd.f32 0.0, %v9235
  %v9237 = vpop.f32.mrb[0].mxu0
  %v9238 = vpop.f32.mrb[0].mxu0
  %9239 = vdwg.mxu0
  %9240 = vmatprep.subr.bf16.mxu0 %v9118
  %9241 = vmatpush1.bf16.msra.mxu0 %v9117
  %9242 = vmatprep.subr.bf16.mxu0 %v9120
  %9243 = vmatpush1.bf16.msra.mxu0 %v9119
  %9244 = vmatprep.subr.bf16.mxu0 0
  %9245 = vmatpush1.bf16.msra.mxu0 0
  %9246 = vmatprep.subr.bf16.mxu0 0
  %9247 = vmatpush1.bf16.msra.mxu0 0
  %9248 = vmatprep.subr.bf16.mxu0 0
  %9249 = vmatpush1.bf16.msra.mxu0 0
  %9250 = vmatprep.subr.bf16.mxu0 0
  %9251 = vmatpush1.bf16.msra.mxu0 0
  %9252 = vmatprep.subr.bf16.mxu0 0
  %9253 = vmatpush1.bf16.msra.mxu0 0
  %9254 = vmatprep.subr.bf16.mxu0 0
  %9255 = vmatpush1.bf16.msra.mxu0 0
  %9256 = vmatprep.subr.bf16.mxu0 0
  %9257 = vmatpush1.bf16.msra.mxu0 0
  %9258 = vmatprep.subr.bf16.mxu0 0
  %9259 = vmatpush1.bf16.msra.mxu0 0
  %9260 = vmatprep.subr.bf16.mxu0 0
  %9261 = vmatpush1.bf16.msra.mxu0 0
  %9262 = vmatprep.subr.bf16.mxu0 0
  %9263 = vmatpush1.bf16.msra.mxu0 0
  %9264 = vmatprep.subr.bf16.mxu0 0
  %9265 = vmatpush1.bf16.msra.mxu0 0
  %9266 = vmatprep.subr.bf16.mxu0 0
  %9267 = vmatpush1.bf16.msra.mxu0 0
  %9268 = vmatprep.subr.bf16.mxu0 0
  %9269 = vmatpush1.bf16.msra.mxu0 0
  %9270 = vmatprep.subr.bf16.mxu0 0
  %9271 = vmatpush1.bf16.msra.mxu0 0
  %9272 = vmatprep.mubr.bf16.mxu0 0
  %9273 = vmatmul.mubr.bf16.gmra.mrb[0].mxu0 %v9158
  %v9274 = vpop.f32.mrb[0].mxu0
  %v9275 = vadd.f32 %v9204, %v9274
  %v9276 = vpop.f32.mrb[0].mxu0
  %v9277 = vadd.f32 %v9206, %v9276
  %v9278 = vpop.f32.mrb[0].mxu0
  %v9279 = vadd.f32 %v9208, %v9278
  %v9280 = vpop.f32.mrb[0].mxu0
  %v9281 = vadd.f32 %v9210, %v9280
  %9282 = vmatprep.mubr.bf16.mxu0 0
  %9283 = vmatmul.mubr.bf16.gmra.mrb[0].mxu0 %v9161
  %v9284 = vpop.f32.mrb[0].mxu0
  %v9285 = vadd.f32 %v9214, %v9284
  %v9286 = vpop.f32.mrb[0].mxu0
  %v9287 = vadd.f32 %v9216, %v9286
  %v9288 = vpop.f32.mrb[0].mxu0
  %v9289 = vadd.f32 %v9218, %v9288
  %v9290 = vpop.f32.mrb[0].mxu0
  %v9291 = vadd.f32 %v9220, %v9290
  %9292 = vmatprep.mubr.bf16.mxu0 0
  %9293 = vmatmul.mubr.bf16.gmra.mrb[0].mxu0 %v9164
  %v9294 = vpop.f32.mrb[0].mxu0
  %v9295 = vadd.f32 %v9224, %v9294
  %v9296 = vpop.f32.mrb[0].mxu0
  %v9297 = vadd.f32 %v9226, %v9296
  %v9298 = vpop.f32.mrb[0].mxu0
  %v9299 = vadd.f32 %v9228, %v9298
  %v9300 = vpop.f32.mrb[0].mxu0
  %v9301 = vadd.f32 %v9230, %v9300
  %9302 = vmatprep.mubr.bf16.mxu0 0
  %9303 = vmatmul.mubr.bf16.gmra.mrb[0].mxu0 %v9167
  %v9304 = vpop.f32.mrb[0].mxu0
  %v9305 = vadd.f32 %v9234, %v9304
  %v9306 = vpop.f32.mrb[0].mxu0
  %v9307 = vadd.f32 %v9236, %v9306
  %v9308 = vpop.f32.mrb[0].mxu0
  %v9309 = vpop.f32.mrb[0].mxu0
  %9310 = vdwg.mxu0
  %v9311 = vadd.f32 %v8858, %v9275
  %v9312 = vadd.f32 %v8859, %v9277
  %v9313 = vadd.f32 %v8860, %v9279
  %v9314 = vadd.f32 %v8861, %v9281
  %v9315 = vadd.f32 %v8862, %v9285
  %v9316 = vadd.f32 %v8863, %v9287
  %v9317 = vadd.f32 %v8864, %v9289
  %v9318 = vadd.f32 %v8865, %v9291
  %v9319 = vadd.f32 %v8866, %v9295
  %v9320 = vadd.f32 %v8867, %v9297
  %v9321 = vadd.f32 %v8868, %v9299
  %v9322 = vadd.f32 %v8869, %v9301
  %v9323 = vadd.f32 %v8870, %v9305
  %v9324 = vadd.f32 %v8871, %v9307
  %v9325 = vld [vmem:[#allocation3] sm:$0xff]
  %v9326 = vld [vmem:[#allocation3 + $0x8] sm:$0xff]
  %v9327 = vld [vmem:[#allocation3 + $0x10] sm:$0xff]
  %v9328 = vld [vmem:[#allocation3 + $0x18] sm:$0xff]
  %v9329 = vld [vmem:[#allocation3 + $0x20] sm:$0xff]
  %v9330 = vld [vmem:[#allocation3 + $0x28] sm:$0xff]
  %v9331 = vld [vmem:[#allocation3 + $0x30] sm:$0xff]
  %v9332 = vld [vmem:[#allocation3 + $0x38] sm:$0xff]
  %v9333 = vld [vmem:[#allocation3 + $0x40] sm:$0xff]
  %v9334 = vld [vmem:[#allocation3 + $0x48] sm:$0xff]
  %v9335 = vld [vmem:[#allocation3 + $0x50] sm:$0xff]
  %v9336 = vld [vmem:[#allocation3 + $0x58] sm:$0xff]
  %v9337 = vld [vmem:[#allocation3 + $0x60] sm:$0xff]
  %v9338 = vld [vmem:[#allocation3 + $0x68] sm:$0xff]
  %v9339 = vmax.f32 %v9325, %v9311
  %v9340 = vmax.f32 %v9326, %v9312
  %v9341 = vmax.f32 %v9327, %v9313
  %v9342 = vmax.f32 %v9328, %v9314
  %v9343 = vmax.f32 %v9329, %v9315
  %v9344 = vmax.f32 %v9330, %v9316
  %v9345 = vmax.f32 %v9331, %v9317
  %v9346 = vmax.f32 %v9332, %v9318
  %v9347 = vmax.f32 %v9333, %v9319
  %v9348 = vmax.f32 %v9334, %v9320
  %v9349 = vmax.f32 %v9335, %v9321
  %v9350 = vmax.f32 %v9336, %v9322
  %v9351 = vmax.f32 %v9337, %v9323
  %v9352 = vmax.f32 %v9338, %v9324
  %9353 = vst [vmem:[#allocation3] sm:$0xff] %v9339
  %9354 = vst.msk [vmem:[#allocation3 + $0x8] sm:$0xff] %vm4790, %v9340
  %9355 = vst [vmem:[#allocation3 + $0x10] sm:$0xff] %v9341
  %9356 = vst.msk [vmem:[#allocation3 + $0x18] sm:$0xff] %vm4790, %v9342
  %9357 = vst [vmem:[#allocation3 + $0x20] sm:$0xff] %v9343
  %9358 = vst.msk [vmem:[#allocation3 + $0x28] sm:$0xff] %vm4790, %v9344
  %9359 = vst [vmem:[#allocation3 + $0x30] sm:$0xff] %v9345
  %9360 = vst.msk [vmem:[#allocation3 + $0x38] sm:$0xff] %vm4790, %v9346
  %9361 = vst [vmem:[#allocation3 + $0x40] sm:$0xff] %v9347
  %9362 = vst.msk [vmem:[#allocation3 + $0x48] sm:$0xff] %vm4790, %v9348
  %9363 = vst [vmem:[#allocation3 + $0x50] sm:$0xff] %v9349
  %9364 = vst.msk [vmem:[#allocation3 + $0x58] sm:$0xff] %vm4790, %v9350
  %9365 = vst [vmem:[#allocation3 + $0x60] sm:$0xff] %v9351
  %9366 = vst.msk [vmem:[#allocation3 + $0x68] sm:$0xff] %vm4790, %v9352
  %v9367 = vld [vmem:[%s32] sm:$0xff]
  %v9368 = vld [vmem:[%s32 + $0x8] sm:$0xf]
  %v9369 = vld [vmem:[%s32 + $0xc] sm:$0xff]
  %v9370 = vld [vmem:[%s32 + $0x14] sm:$0xf]
  %v9371 = vld [vmem:[%s32 + $0x18] sm:$0xff]
  %v9372 = vld [vmem:[%s32 + $0x20] sm:$0xf]
  %v9373 = vld [vmem:[%s32 + $0x24] sm:$0xff]
  %v9374 = vld [vmem:[%s32 + $0x2c] sm:$0xf]
  %v9375 = vld [vmem:[%s32 + $0x30] sm:$0xff]
  %v9376 = vld [vmem:[%s32 + $0x38] sm:$0xf]
  %v9377 = vld [vmem:[%s32 + $0x3c] sm:$0xff]
  %v9378 = vld [vmem:[%s32 + $0x44] sm:$0xf]
  %v9379 = vld [vmem:[%s32 + $0x48] sm:$0xff]
  %v9380 = vld [vmem:[%s32 + $0x50] sm:$0xf]
  %v9381 = vld [vmem:[%s4818] sm:$0xff]
  %v9382 = vld [vmem:[%s4818 + $0x8] sm:$0xff]
  %v9383 = vld [vmem:[%s4818 + $0x10] sm:$0xff]
  %v9384 = vld [vmem:[%s4818 + $0x18] sm:$0xff]
  %v9385 = vld [vmem:[%s4818 + $0x20] sm:$0xff]
  %v9386 = vld [vmem:[%s4818 + $0x28] sm:$0xff]
  %v9387 = vld [vmem:[%s4818 + $0x30] sm:$0xff]
  %v9388 = vld [vmem:[%s4818 + $0x38] sm:$0xff]
  %v9389 = vld [vmem:[%s4818 + $0x40] sm:$0xff]
  %v9390 = vld [vmem:[%s4818 + $0x48] sm:$0xff]
  %v9391 = vld [vmem:[%s4818 + $0x50] sm:$0xff]
  %v9392 = vld [vmem:[%s4818 + $0x58] sm:$0xff]
  %v9393 = vld [vmem:[%s4818 + $0x60] sm:$0xff]
  %v9394 = vld [vmem:[%s4818 + $0x68] sm:$0xff]
  %v9395 = vld [vmem:[%s4818 + $0x70] sm:$0xff]
  %v9396 = vld [vmem:[%s4818 + $0x78] sm:$0xff]
  %v9397 = vld [vmem:[%s4818 + $0x80] sm:$0xff]
  %v9398 = vld [vmem:[%s4818 + $0x88] sm:$0xff]
  %v9399 = vld [vmem:[%s4818 + $0x90] sm:$0xff]
  %v9400 = vld [vmem:[%s4818 + $0x98] sm:$0xff]
  %v9401 = vld [vmem:[%s4818 + $0xa0] sm:$0xff]
  %v9402 = vld [vmem:[%s4818 + $0xa8] sm:$0xff]
  %v9403 = vld [vmem:[%s4818 + $0xb0] sm:$0xff]
  %v9404 = vld [vmem:[%s4818 + $0xb8] sm:$0xff]
  %v9405 = vld [vmem:[%s4818 + $0xc0] sm:$0xff]
  %v9406 = vld [vmem:[%s4818 + $0xc8] sm:$0xff]
  %v9407 = vld [vmem:[%s4818 + $0xd0] sm:$0xff]
  %v9408 = vld [vmem:[%s4818 + $0xd8] sm:$0xff]
  %v9409 = vld [vmem:[%s4818 + $0xe0] sm:$0xff]
  %v9410 = vld [vmem:[%s4818 + $0xe8] sm:$0xff]
  %v9411 = vld [vmem:[%s4818 + $0xf0] sm:$0xff]
  %v9412 = vld [vmem:[%s4818 + $0xf8] sm:$0xff]
  %v9413 = vld [vmem:[%s4818 + $0x100] sm:$0xff]
  %v9414 = vld [vmem:[%s4818 + $0x108] sm:$0xff]
  %v9415 = vld [vmem:[%s4818 + $0x110] sm:$0xff]
  %v9416 = vld [vmem:[%s4818 + $0x118] sm:$0xff]
  %v9417 = vld [vmem:[#allocation2 + $0xc] sm:$0xff]
  %v9418 = vld [vmem:[#allocation2 + $0x14] sm:$0xf]
  %v9419 = vld [vmem:[#allocation2 + $0x18] sm:$0xff]
  %v9420 = vld [vmem:[#allocation2 + $0x20] sm:$0xf]
  %v9421 = vld [vmem:[#allocation2 + $0x24] sm:$0xff]
  %v9422 = vld [vmem:[#allocation2 + $0x2c] sm:$0xf]
  %v9423 = vld [vmem:[#allocation2 + $0x30] sm:$0xff]
  %v9424 = vld [vmem:[#allocation2 + $0x38] sm:$0xf]
  %v9425 = vld [vmem:[#allocation2 + $0x3c] sm:$0xff]
  %v9426 = vld [vmem:[#allocation2 + $0x44] sm:$0xf]
  %v9427 = vld [vmem:[#allocation2 + $0x48] sm:$0xff]
  %v9428 = vld [vmem:[#allocation2 + $0x50] sm:$0xf]
  %v9429 = vld [vmem:[#allocation2 + $0x54] sm:$0xff]
  %v9430 = vld [vmem:[#allocation2 + $0x5c] sm:$0xf]
  %v9431 = vld [vmem:[%s4869] sm:$0xff]
  %v9432 = vld [vmem:[%s4869 + $0x8] sm:$0xff]
  %v9433 = vld [vmem:[%s4869 + $0x10] sm:$0xff]
  %v9434 = vld [vmem:[%s4869 + $0x18] sm:$0xff]
  %v9435 = vld [vmem:[%s4869 + $0x20] sm:$0xff]
  %v9436 = vld [vmem:[%s4869 + $0x28] sm:$0xff]
  %v9437 = vld [vmem:[%s4869 + $0x30] sm:$0xff]
  %v9438 = vld [vmem:[%s4869 + $0x38] sm:$0xff]
  %v9439 = vld [vmem:[%s4869 + $0x40] sm:$0xff]
  %v9440 = vld [vmem:[%s4869 + $0x48] sm:$0xff]
  %v9441 = vld [vmem:[%s4869 + $0x50] sm:$0xff]
  %v9442 = vld [vmem:[%s4869 + $0x58] sm:$0xff]
  %v9443 = vld [vmem:[%s4869 + $0x60] sm:$0xff]
  %v9444 = vld [vmem:[%s4869 + $0x68] sm:$0xff]
  %v9445 = vld [vmem:[%s4869 + $0x70] sm:$0xff]
  %v9446 = vld [vmem:[%s4869 + $0x78] sm:$0xff]
  %v9447 = vld [vmem:[%s4869 + $0x80] sm:$0xff]
  %v9448 = vld [vmem:[%s4869 + $0x88] sm:$0xff]
  %v9449 = vld [vmem:[%s4869 + $0x90] sm:$0xff]
  %v9450 = vld [vmem:[%s4869 + $0x98] sm:$0xff]
  %v9451 = vld [vmem:[%s4869 + $0xa0] sm:$0xff]
  %v9452 = vld [vmem:[%s4869 + $0xa8] sm:$0xff]
  %v9453 = vld [vmem:[%s4869 + $0xb0] sm:$0xff]
  %v9454 = vld [vmem:[%s4869 + $0xb8] sm:$0xff]
  %v9455 = vld [vmem:[%s4869 + $0xc0] sm:$0xff]
  %v9456 = vld [vmem:[%s4869 + $0xc8] sm:$0xff]
  %v9457 = vld [vmem:[%s4869 + $0xd0] sm:$0xff]
  %v9458 = vld [vmem:[%s4869 + $0xd8] sm:$0xff]
  %v9459 = vld [vmem:[%s4869 + $0xe0] sm:$0xff]
  %v9460 = vld [vmem:[%s4869 + $0xe8] sm:$0xff]
  %v9461 = vld [vmem:[%s4869 + $0xf0] sm:$0xff]
  %v9462 = vld [vmem:[%s4869 + $0xf8] sm:$0xff]
  %v9463 = vld [vmem:[%s4869 + $0x100] sm:$0xff]
  %v9464 = vld [vmem:[%s4869 + $0x108] sm:$0xff]
  %v9465 = vld [vmem:[%s4869 + $0x110] sm:$0xff]
  %v9466 = vld [vmem:[%s4869 + $0x118] sm:$0xff]
  %v9481 = vunpack.c.l.b16 %v9417
  %v9482 = vunpack.c.h.b16 %v9417
  %v9483 = vunpack.c.l.b16 %v9418
  %v9484 = vunpack.c.l.b16 %v9419
  %v9485 = vunpack.c.h.b16 %v9419
  %v9486 = vunpack.c.l.b16 %v9420
  %v9487 = vunpack.c.l.b16 %v9421
  %v9488 = vunpack.c.h.b16 %v9421
  %v9489 = vunpack.c.l.b16 %v9422
  %v9490 = vunpack.c.l.b16 %v9423
  %v9491 = vunpack.c.h.b16 %v9423
  %v9492 = vunpack.c.l.b16 %v9424
  %v9493 = vunpack.c.l.b16 %v9425
  %v9494 = vunpack.c.h.b16 %v9425
  %v9495 = vunpack.c.l.b16 %v9426
  %v9496 = vunpack.c.l.b16 %v9427
  %v9497 = vunpack.c.h.b16 %v9427
  %v9498 = vunpack.c.l.b16 %v9428
  %v9499 = vunpack.c.l.b16 %v9429
  %v9500 = vunpack.c.h.b16 %v9429
  %v9501 = vunpack.c.l.b16 %v9430
  %v9502 = vpack.c.b16 %v9484, %v9481
  %v9503 = vpack.c.b16 %v9485, %v9482
  %v9504 = vpack.c.b16 %v9486, %v9483
  %v9505 = vpack.c.b16 %v9490, %v9487
  %v9506 = vpack.c.b16 %v9491, %v9488
  %v9507 = vpack.c.b16 %v9492, %v9489
  %v9508 = vpack.c.b16 %v9496, %v9493
  %v9509 = vpack.c.b16 %v9497, %v9494
  %v9510 = vpack.c.b16 %v9498, %v9495
  %v9511 = vpack.c.b16 %v9499, %v9499
  %v9512 = vpack.c.b16 %v9500, %v9500
  %v9513 = vpack.c.b16 %v9501, %v9501
  %v9558 = vunpack.c.l.b16 %v9431
  %v9559 = vunpack.c.h.b16 %v9431
  %v9560 = vunpack.c.l.b16 %v9432
  %v9561 = vunpack.c.h.b16 %v9432
  %v9562 = vunpack.c.l.b16 %v9433
  %v9563 = vunpack.c.h.b16 %v9433
  %v9564 = vunpack.c.l.b16 %v9434
  %v9565 = vunpack.c.h.b16 %v9434
  %v9566 = vunpack.c.l.b16 %v9435
  %v9567 = vunpack.c.h.b16 %v9435
  %v9568 = vunpack.c.l.b16 %v9436
  %v9569 = vunpack.c.h.b16 %v9436
  %v9570 = vunpack.c.l.b16 %v9437
  %v9571 = vunpack.c.h.b16 %v9437
  %v9572 = vunpack.c.l.b16 %v9438
  %v9573 = vunpack.c.h.b16 %v9438
  %v9574 = vunpack.c.l.b16 %v9439
  %v9575 = vunpack.c.h.b16 %v9439
  %v9576 = vunpack.c.l.b16 %v9440
  %v9577 = vunpack.c.h.b16 %v9440
  %v9578 = vunpack.c.l.b16 %v9441
  %v9579 = vunpack.c.h.b16 %v9441
  %v9580 = vunpack.c.l.b16 %v9442
  %v9581 = vunpack.c.h.b16 %v9442
  %v9582 = vunpack.c.l.b16 %v9443
  %v9583 = vunpack.c.h.b16 %v9443
  %v9584 = vunpack.c.l.b16 %v9444
  %v9585 = vunpack.c.h.b16 %v9444
  %v9586 = vunpack.c.l.b16 %v9445
  %v9587 = vunpack.c.h.b16 %v9445
  %v9588 = vunpack.c.l.b16 %v9446
  %v9589 = vunpack.c.h.b16 %v9446
  %v9590 = vunpack.c.l.b16 %v9447
  %v9591 = vunpack.c.h.b16 %v9447
  %v9592 = vunpack.c.l.b16 %v9448
  %v9593 = vunpack.c.h.b16 %v9448
  %v9594 = vunpack.c.l.b16 %v9449
  %v9595 = vunpack.c.h.b16 %v9449
  %v9596 = vunpack.c.l.b16 %v9450
  %v9597 = vunpack.c.h.b16 %v9450
  %v9598 = vunpack.c.l.b16 %v9451
  %v9599 = vunpack.c.h.b16 %v9451
  %v9600 = vunpack.c.l.b16 %v9452
  %v9601 = vunpack.c.h.b16 %v9452
  %v9602 = vunpack.c.l.b16 %v9453
  %v9603 = vunpack.c.h.b16 %v9453
  %v9604 = vunpack.c.l.b16 %v9454
  %v9605 = vunpack.c.h.b16 %v9454
  %v9606 = vunpack.c.l.b16 %v9455
  %v9607 = vunpack.c.h.b16 %v9455
  %v9608 = vunpack.c.l.b16 %v9456
  %v9609 = vunpack.c.h.b16 %v9456
  %v9610 = vunpack.c.l.b16 %v9457
  %v9611 = vunpack.c.h.b16 %v9457
  %v9612 = vunpack.c.l.b16 %v9458
  %v9613 = vunpack.c.h.b16 %v9458
  %v9614 = vunpack.c.l.b16 %v9459
  %v9615 = vunpack.c.h.b16 %v9459
  %v9616 = vunpack.c.l.b16 %v9460
  %v9617 = vunpack.c.h.b16 %v9460
  %v9618 = vunpack.c.l.b16 %v9461
  %v9619 = vunpack.c.h.b16 %v9461
  %v9620 = vunpack.c.l.b16 %v9462
  %v9621 = vunpack.c.h.b16 %v9462
  %v9622 = vunpack.c.l.b16 %v9463
  %v9623 = vunpack.c.h.b16 %v9463
  %v9624 = vunpack.c.l.b16 %v9464
  %v9625 = vunpack.c.h.b16 %v9464
  %v9626 = vunpack.c.l.b16 %v9465
  %v9627 = vunpack.c.h.b16 %v9465
  %v9628 = vunpack.c.l.b16 %v9466
  %v9629 = vunpack.c.h.b16 %v9466
  %v9630 = vpack.c.b16 %v9560, %v9558
  %v9631 = vpack.c.b16 %v9561, %v9559
  %v9632 = vpack.c.b16 %v9564, %v9562
  %v9633 = vpack.c.b16 %v9565, %v9563
  %v9634 = vpack.c.b16 %v9568, %v9566
  %v9635 = vpack.c.b16 %v9569, %v9567
  %v9636 = vpack.c.b16 %v9572, %v9570
  %v9637 = vpack.c.b16 %v9573, %v9571
  %v9638 = vpack.c.b16 %v9576, %v9574
  %v9639 = vpack.c.b16 %v9577, %v9575
  %v9640 = vpack.c.b16 %v9580, %v9578
  %v9641 = vpack.c.b16 %v9581, %v9579
  %v9642 = vpack.c.b16 %v9584, %v9582
  %v9643 = vpack.c.b16 %v9585, %v9583
  %v9644 = vpack.c.b16 %v9588, %v9586
  %v9645 = vpack.c.b16 %v9589, %v9587
  %v9646 = vpack.c.b16 %v9592, %v9590
  %v9647 = vpack.c.b16 %v9593, %v9591
  %v9648 = vpack.c.b16 %v9596, %v9594
  %v9649 = vpack.c.b16 %v9597, %v9595
  %v9650 = vpack.c.b16 %v9600, %v9598
  %v9651 = vpack.c.b16 %v9601, %v9599
  %v9652 = vpack.c.b16 %v9604, %v9602
  %v9653 = vpack.c.b16 %v9605, %v9603
  %v9654 = vpack.c.b16 %v9608, %v9606
  %v9655 = vpack.c.b16 %v9609, %v9607
  %v9656 = vpack.c.b16 %v9612, %v9610
  %v9657 = vpack.c.b16 %v9613, %v9611
  %v9658 = vpack.c.b16 %v9616, %v9614
  %v9659 = vpack.c.b16 %v9617, %v9615
  %v9660 = vpack.c.b16 %v9620, %v9618
  %v9661 = vpack.c.b16 %v9621, %v9619
  %v9662 = vpack.c.b16 %v9624, %v9622
  %v9663 = vpack.c.b16 %v9625, %v9623
  %v9664 = vpack.c.b16 %v9628, %v9626
  %v9665 = vpack.c.b16 %v9629, %v9627
  %v9703 = vsel %vm277, %v9504, 0
  %v9706 = vsel %vm277, %v9507, 0
  %v9709 = vsel %vm277, %v9510, 0
  %v9712 = vsel %vm277, %v9513, 0
  %9714 = vmatprep.subr.bf16.mxu0 %v9631
  %9715 = vmatpush1.bf16.msra.mxu0 %v9630
  %9716 = vmatprep.subr.bf16.mxu0 %v9633
  %9717 = vmatpush1.bf16.msra.mxu0 %v9632
  %9718 = vmatprep.subr.bf16.mxu0 %v9635
  %9719 = vmatpush1.bf16.msra.mxu0 %v9634
  %9720 = vmatprep.subr.bf16.mxu0 %v9637
  %9721 = vmatpush1.bf16.msra.mxu0 %v9636
  %9722 = vmatprep.subr.bf16.mxu0 %v9639
  %9723 = vmatpush1.bf16.msra.mxu0 %v9638
  %9724 = vmatprep.subr.bf16.mxu0 %v9641
  %9725 = vmatpush1.bf16.msra.mxu0 %v9640
  %9726 = vmatprep.subr.bf16.mxu0 %v9643
  %9727 = vmatpush1.bf16.msra.mxu0 %v9642
  %9728 = vmatprep.subr.bf16.mxu0 %v9645
  %9729 = vmatpush1.bf16.msra.mxu0 %v9644
  %9730 = vmatprep.subr.bf16.mxu0 %v9647
  %9731 = vmatpush1.bf16.msra.mxu0 %v9646
  %9732 = vmatprep.subr.bf16.mxu0 %v9649
  %9733 = vmatpush1.bf16.msra.mxu0 %v9648
  %9734 = vmatprep.subr.bf16.mxu0 %v9651
  %9735 = vmatpush1.bf16.msra.mxu0 %v9650
  %9736 = vmatprep.subr.bf16.mxu0 %v9653
  %9737 = vmatpush1.bf16.msra.mxu0 %v9652
  %9738 = vmatprep.subr.bf16.mxu0 %v9655
  %9739 = vmatpush1.bf16.msra.mxu0 %v9654
  %9740 = vmatprep.subr.bf16.mxu0 %v9657
  %9741 = vmatpush1.bf16.msra.mxu0 %v9656
  %9742 = vmatprep.subr.bf16.mxu0 %v9659
  %9743 = vmatpush1.bf16.msra.mxu0 %v9658
  %9744 = vmatprep.subr.bf16.mxu0 %v9661
  %9745 = vmatpush1.bf16.msra.mxu0 %v9660
  %9746 = vmatprep.mubr.bf16.mxu0 %v9503
  %9747 = vmatmul.mubr.bf16.gmra.mrb[0].mxu0 %v9502
  %v9748 = vpop.f32.mrb[0].mxu0
  %v9749 = vadd.f32 0.0, %v9748
  %v9750 = vpop.f32.mrb[0].mxu0
  %v9751 = vadd.f32 0.0, %v9750
  %v9752 = vpop.f32.mrb[0].mxu0
  %v9753 = vadd.f32 0.0, %v9752
  %v9754 = vpop.f32.mrb[0].mxu0
  %v9755 = vadd.f32 0.0, %v9754
  %9756 = vmatprep.mubr.bf16.mxu0 %v9506
  %9757 = vmatmul.mubr.bf16.gmra.mrb[0].mxu0 %v9505
  %v9758 = vpop.f32.mrb[0].mxu0
  %v9759 = vadd.f32 0.0, %v9758
  %v9760 = vpop.f32.mrb[0].mxu0
  %v9761 = vadd.f32 0.0, %v9760
  %v9762 = vpop.f32.mrb[0].mxu0
  %v9763 = vadd.f32 0.0, %v9762
  %v9764 = vpop.f32.mrb[0].mxu0
  %v9765 = vadd.f32 0.0, %v9764
  %9766 = vmatprep.mubr.bf16.mxu0 %v9509
  %9767 = vmatmul.mubr.bf16.gmra.mrb[0].mxu0 %v9508
  %v9768 = vpop.f32.mrb[0].mxu0
  %v9769 = vadd.f32 0.0, %v9768
  %v9770 = vpop.f32.mrb[0].mxu0
  %v9771 = vadd.f32 0.0, %v9770
  %v9772 = vpop.f32.mrb[0].mxu0
  %v9773 = vadd.f32 0.0, %v9772
  %v9774 = vpop.f32.mrb[0].mxu0
  %v9775 = vadd.f32 0.0, %v9774
  %9776 = vmatprep.mubr.bf16.mxu0 %v9512
  %9777 = vmatmul.mubr.bf16.gmra.mrb[0].mxu0 %v9511
  %v9778 = vpop.f32.mrb[0].mxu0
  %v9779 = vadd.f32 0.0, %v9778
  %v9780 = vpop.f32.mrb[0].mxu0
  %v9781 = vadd.f32 0.0, %v9780
  %v9782 = vpop.f32.mrb[0].mxu0
  %v9783 = vpop.f32.mrb[0].mxu0
  %9784 = vdwg.mxu0
  %9785 = vmatprep.subr.bf16.mxu0 %v9663
  %9786 = vmatpush1.bf16.msra.mxu0 %v9662
  %9787 = vmatprep.subr.bf16.mxu0 %v9665
  %9788 = vmatpush1.bf16.msra.mxu0 %v9664
  %9789 = vmatprep.subr.bf16.mxu0 0
  %9790 = vmatpush1.bf16.msra.mxu0 0
  %9791 = vmatprep.subr.bf16.mxu0 0
  %9792 = vmatpush1.bf16.msra.mxu0 0
  %9793 = vmatprep.subr.bf16.mxu0 0
  %9794 = vmatpush1.bf16.msra.mxu0 0
  %9795 = vmatprep.subr.bf16.mxu0 0
  %9796 = vmatpush1.bf16.msra.mxu0 0
  %9797 = vmatprep.subr.bf16.mxu0 0
  %9798 = vmatpush1.bf16.msra.mxu0 0
  %9799 = vmatprep.subr.bf16.mxu0 0
  %9800 = vmatpush1.bf16.msra.mxu0 0
  %9801 = vmatprep.subr.bf16.mxu0 0
  %9802 = vmatpush1.bf16.msra.mxu0 0
  %9803 = vmatprep.subr.bf16.mxu0 0
  %9804 = vmatpush1.bf16.msra.mxu0 0
  %9805 = vmatprep.subr.bf16.mxu0 0
  %9806 = vmatpush1.bf16.msra.mxu0 0
  %9807 = vmatprep.subr.bf16.mxu0 0
  %9808 = vmatpush1.bf16.msra.mxu0 0
  %9809 = vmatprep.subr.bf16.mxu0 0
  %9810 = vmatpush1.bf16.msra.mxu0 0
  %9811 = vmatprep.subr.bf16.mxu0 0
  %9812 = vmatpush1.bf16.msra.mxu0 0
  %9813 = vmatprep.subr.bf16.mxu0 0
  %9814 = vmatpush1.bf16.msra.mxu0 0
  %9815 = vmatprep.subr.bf16.mxu0 0
  %9816 = vmatpush1.bf16.msra.mxu0 0
  %9817 = vmatprep.mubr.bf16.mxu0 0
  %9818 = vmatmul.mubr.bf16.gmra.mrb[0].mxu0 %v9703
  %v9819 = vpop.f32.mrb[0].mxu0
  %v9820 = vadd.f32 %v9749, %v9819
  %v9821 = vpop.f32.mrb[0].mxu0
  %v9822 = vadd.f32 %v9751, %v9821
  %v9823 = vpop.f32.mrb[0].mxu0
  %v9824 = vadd.f32 %v9753, %v9823
  %v9825 = vpop.f32.mrb[0].mxu0
  %v9826 = vadd.f32 %v9755, %v9825
  %9827 = vmatprep.mubr.bf16.mxu0 0
  %9828 = vmatmul.mubr.bf16.gmra.mrb[0].mxu0 %v9706
  %v9829 = vpop.f32.mrb[0].mxu0
  %v9830 = vadd.f32 %v9759, %v9829
  %v9831 = vpop.f32.mrb[0].mxu0
  %v9832 = vadd.f32 %v9761, %v9831
  %v9833 = vpop.f32.mrb[0].mxu0
  %v9834 = vadd.f32 %v9763, %v9833
  %v9835 = vpop.f32.mrb[0].mxu0
  %v9836 = vadd.f32 %v9765, %v9835
  %9837 = vmatprep.mubr.bf16.mxu0 0
  %9838 = vmatmul.mubr.bf16.gmra.mrb[0].mxu0 %v9709
  %v9839 = vpop.f32.mrb[0].mxu0
  %v9840 = vadd.f32 %v9769, %v9839
  %v9841 = vpop.f32.mrb[0].mxu0
  %v9842 = vadd.f32 %v9771, %v9841
  %v9843 = vpop.f32.mrb[0].mxu0
  %v9844 = vadd.f32 %v9773, %v9843
  %v9845 = vpop.f32.mrb[0].mxu0
  %v9846 = vadd.f32 %v9775, %v9845
  %9847 = vmatprep.mubr.bf16.mxu0 0
  %9848 = vmatmul.mubr.bf16.gmra.mrb[0].mxu0 %v9712
  %v9849 = vpop.f32.mrb[0].mxu0
  %v9850 = vadd.f32 %v9779, %v9849
  %v9851 = vpop.f32.mrb[0].mxu0
  %v9852 = vadd.f32 %v9781, %v9851
  %v9853 = vpop.f32.mrb[0].mxu0
  %v9854 = vpop.f32.mrb[0].mxu0
  %9855 = vdwg.mxu0
  %v9870 = vunpack.c.l.b16 %v9367
  %v9871 = vunpack.c.h.b16 %v9367
  %v9872 = vunpack.c.l.b16 %v9368
  %v9873 = vunpack.c.l.b16 %v9369
  %v9874 = vunpack.c.h.b16 %v9369
  %v9875 = vunpack.c.l.b16 %v9370
  %v9876 = vunpack.c.l.b16 %v9371
  %v9877 = vunpack.c.h.b16 %v9371
  %v9878 = vunpack.c.l.b16 %v9372
  %v9879 = vunpack.c.l.b16 %v9373
  %v9880 = vunpack.c.h.b16 %v9373
  %v9881 = vunpack.c.l.b16 %v9374
  %v9882 = vunpack.c.l.b16 %v9375
  %v9883 = vunpack.c.h.b16 %v9375
  %v9884 = vunpack.c.l.b16 %v9376
  %v9885 = vunpack.c.l.b16 %v9377
  %v9886 = vunpack.c.h.b16 %v9377
  %v9887 = vunpack.c.l.b16 %v9378
  %v9888 = vunpack.c.l.b16 %v9379
  %v9889 = vunpack.c.h.b16 %v9379
  %v9890 = vunpack.c.l.b16 %v9380
  %v9891 = vpack.c.b16 %v9873, %v9870
  %v9892 = vpack.c.b16 %v9874, %v9871
  %v9893 = vpack.c.b16 %v9875, %v9872
  %v9894 = vpack.c.b16 %v9879, %v9876
  %v9895 = vpack.c.b16 %v9880, %v9877
  %v9896 = vpack.c.b16 %v9881, %v9878
  %v9897 = vpack.c.b16 %v9885, %v9882
  %v9898 = vpack.c.b16 %v9886, %v9883
  %v9899 = vpack.c.b16 %v9887, %v9884
  %v9900 = vpack.c.b16 %v9888, %v9888
  %v9901 = vpack.c.b16 %v9889, %v9889
  %v9902 = vpack.c.b16 %v9890, %v9890
  %v9947 = vunpack.c.l.b16 %v9381
  %v9948 = vunpack.c.h.b16 %v9381
  %v9949 = vunpack.c.l.b16 %v9382
  %v9950 = vunpack.c.h.b16 %v9382
  %v9951 = vunpack.c.l.b16 %v9383
  %v9952 = vunpack.c.h.b16 %v9383
  %v9953 = vunpack.c.l.b16 %v9384
  %v9954 = vunpack.c.h.b16 %v9384
  %v9955 = vunpack.c.l.b16 %v9385
  %v9956 = vunpack.c.h.b16 %v9385
  %v9957 = vunpack.c.l.b16 %v9386
  %v9958 = vunpack.c.h.b16 %v9386
  %v9959 = vunpack.c.l.b16 %v9387
  %v9960 = vunpack.c.h.b16 %v9387
  %v9961 = vunpack.c.l.b16 %v9388
  %v9962 = vunpack.c.h.b16 %v9388
  %v9963 = vunpack.c.l.b16 %v9389
  %v9964 = vunpack.c.h.b16 %v9389
  %v9965 = vunpack.c.l.b16 %v9390
  %v9966 = vunpack.c.h.b16 %v9390
  %v9967 = vunpack.c.l.b16 %v9391
  %v9968 = vunpack.c.h.b16 %v9391
  %v9969 = vunpack.c.l.b16 %v9392
  %v9970 = vunpack.c.h.b16 %v9392
  %v9971 = vunpack.c.l.b16 %v9393
  %v9972 = vunpack.c.h.b16 %v9393
  %v9973 = vunpack.c.l.b16 %v9394
  %v9974 = vunpack.c.h.b16 %v9394
  %v9975 = vunpack.c.l.b16 %v9395
  %v9976 = vunpack.c.h.b16 %v9395
  %v9977 = vunpack.c.l.b16 %v9396
  %v9978 = vunpack.c.h.b16 %v9396
  %v9979 = vunpack.c.l.b16 %v9397
  %v9980 = vunpack.c.h.b16 %v9397
  %v9981 = vunpack.c.l.b16 %v9398
  %v9982 = vunpack.c.h.b16 %v9398
  %v9983 = vunpack.c.l.b16 %v9399
  %v9984 = vunpack.c.h.b16 %v9399
  %v9985 = vunpack.c.l.b16 %v9400
  %v9986 = vunpack.c.h.b16 %v9400
  %v9987 = vunpack.c.l.b16 %v9401
  %v9988 = vunpack.c.h.b16 %v9401
  %v9989 = vunpack.c.l.b16 %v9402
  %v9990 = vunpack.c.h.b16 %v9402
  %v9991 = vunpack.c.l.b16 %v9403
  %v9992 = vunpack.c.h.b16 %v9403
  %v9993 = vunpack.c.l.b16 %v9404
  %v9994 = vunpack.c.h.b16 %v9404
  %v9995 = vunpack.c.l.b16 %v9405
  %v9996 = vunpack.c.h.b16 %v9405
  %v9997 = vunpack.c.l.b16 %v9406
  %v9998 = vunpack.c.h.b16 %v9406
  %v9999 = vunpack.c.l.b16 %v9407
  %v10000 = vunpack.c.h.b16 %v9407
  %v10001 = vunpack.c.l.b16 %v9408
  %v10002 = vunpack.c.h.b16 %v9408
  %v10003 = vunpack.c.l.b16 %v9409
  %v10004 = vunpack.c.h.b16 %v9409
  %v10005 = vunpack.c.l.b16 %v9410
  %v10006 = vunpack.c.h.b16 %v9410
  %v10007 = vunpack.c.l.b16 %v9411
  %v10008 = vunpack.c.h.b16 %v9411
  %v10009 = vunpack.c.l.b16 %v9412
  %v10010 = vunpack.c.h.b16 %v9412
  %v10011 = vunpack.c.l.b16 %v9413
  %v10012 = vunpack.c.h.b16 %v9413
  %v10013 = vunpack.c.l.b16 %v9414
  %v10014 = vunpack.c.h.b16 %v9414
  %v10015 = vunpack.c.l.b16 %v9415
  %v10016 = vunpack.c.h.b16 %v9415
  %v10017 = vunpack.c.l.b16 %v9416
  %v10018 = vunpack.c.h.b16 %v9416
  %v10019 = vpack.c.b16 %v9949, %v9947
  %v10020 = vpack.c.b16 %v9950, %v9948
  %v10021 = vpack.c.b16 %v9953, %v9951
  %v10022 = vpack.c.b16 %v9954, %v9952
  %v10023 = vpack.c.b16 %v9957, %v9955
  %v10024 = vpack.c.b16 %v9958, %v9956
  %v10025 = vpack.c.b16 %v9961, %v9959
  %v10026 = vpack.c.b16 %v9962, %v9960
  %v10027 = vpack.c.b16 %v9965, %v9963
  %v10028 = vpack.c.b16 %v9966, %v9964
  %v10029 = vpack.c.b16 %v9969, %v9967
  %v10030 = vpack.c.b16 %v9970, %v9968
  %v10031 = vpack.c.b16 %v9973, %v9971
  %v10032 = vpack.c.b16 %v9974, %v9972
  %v10033 = vpack.c.b16 %v9977, %v9975
  %v10034 = vpack.c.b16 %v9978, %v9976
  %v10035 = vpack.c.b16 %v9981, %v9979
  %v10036 = vpack.c.b16 %v9982, %v9980
  %v10037 = vpack.c.b16 %v9985, %v9983
  %v10038 = vpack.c.b16 %v9986, %v9984
  %v10039 = vpack.c.b16 %v9989, %v9987
  %v10040 = vpack.c.b16 %v9990, %v9988
  %v10041 = vpack.c.b16 %v9993, %v9991
  %v10042 = vpack.c.b16 %v9994, %v9992
  %v10043 = vpack.c.b16 %v9997, %v9995
  %v10044 = vpack.c.b16 %v9998, %v9996
  %v10045 = vpack.c.b16 %v10001, %v9999
  %v10046 = vpack.c.b16 %v10002, %v10000
  %v10047 = vpack.c.b16 %v10005, %v10003
  %v10048 = vpack.c.b16 %v10006, %v10004
  %v10049 = vpack.c.b16 %v10009, %v10007
  %v10050 = vpack.c.b16 %v10010, %v10008
  %v10051 = vpack.c.b16 %v10013, %v10011
  %v10052 = vpack.c.b16 %v10014, %v10012
  %v10053 = vpack.c.b16 %v10017, %v10015
  %v10054 = vpack.c.b16 %v10018, %v10016
  %v10092 = vsel %vm277, %v9893, 0
  %v10095 = vsel %vm277, %v9896, 0
  %v10098 = vsel %vm277, %v9899, 0
  %v10101 = vsel %vm277, %v9902, 0
  %10103 = vmatprep.subr.bf16.mxu0 %v10020
  %10104 = vmatpush1.bf16.msra.mxu0 %v10019
  %10105 = vmatprep.subr.bf16.mxu0 %v10022
  %10106 = vmatpush1.bf16.msra.mxu0 %v10021
  %10107 = vmatprep.subr.bf16.mxu0 %v10024
  %10108 = vmatpush1.bf16.msra.mxu0 %v10023
  %10109 = vmatprep.subr.bf16.mxu0 %v10026
  %10110 = vmatpush1.bf16.msra.mxu0 %v10025
  %10111 = vmatprep.subr.bf16.mxu0 %v10028
  %10112 = vmatpush1.bf16.msra.mxu0 %v10027
  %10113 = vmatprep.subr.bf16.mxu0 %v10030
  %10114 = vmatpush1.bf16.msra.mxu0 %v10029
  %10115 = vmatprep.subr.bf16.mxu0 %v10032
  %10116 = vmatpush1.bf16.msra.mxu0 %v10031
  %10117 = vmatprep.subr.bf16.mxu0 %v10034
  %10118 = vmatpush1.bf16.msra.mxu0 %v10033
  %10119 = vmatprep.subr.bf16.mxu0 %v10036
  %10120 = vmatpush1.bf16.msra.mxu0 %v10035
  %10121 = vmatprep.subr.bf16.mxu0 %v10038
  %10122 = vmatpush1.bf16.msra.mxu0 %v10037
  %10123 = vmatprep.subr.bf16.mxu0 %v10040
  %10124 = vmatpush1.bf16.msra.mxu0 %v10039
  %10125 = vmatprep.subr.bf16.mxu0 %v10042
  %10126 = vmatpush1.bf16.msra.mxu0 %v10041
  %10127 = vmatprep.subr.bf16.mxu0 %v10044
  %10128 = vmatpush1.bf16.msra.mxu0 %v10043
  %10129 = vmatprep.subr.bf16.mxu0 %v10046
  %10130 = vmatpush1.bf16.msra.mxu0 %v10045
  %10131 = vmatprep.subr.bf16.mxu0 %v10048
  %10132 = vmatpush1.bf16.msra.mxu0 %v10047
  %10133 = vmatprep.subr.bf16.mxu0 %v10050
  %10134 = vmatpush1.bf16.msra.mxu0 %v10049
  %10135 = vmatprep.mubr.bf16.mxu0 %v9892
  %10136 = vmatmul.mubr.bf16.gmra.mrb[0].mxu0 %v9891
  %v10137 = vpop.f32.mrb[0].mxu0
  %v10138 = vadd.f32 %v9820, %v10137
  %v10139 = vpop.f32.mrb[0].mxu0
  %v10140 = vadd.f32 %v9822, %v10139
  %v10141 = vpop.f32.mrb[0].mxu0
  %v10142 = vadd.f32 %v9824, %v10141
  %v10143 = vpop.f32.mrb[0].mxu0
  %v10144 = vadd.f32 %v9826, %v10143
  %10145 = vmatprep.mubr.bf16.mxu0 %v9895
  %10146 = vmatmul.mubr.bf16.gmra.mrb[0].mxu0 %v9894
  %v10147 = vpop.f32.mrb[0].mxu0
  %v10148 = vadd.f32 %v9830, %v10147
  %v10149 = vpop.f32.mrb[0].mxu0
  %v10150 = vadd.f32 %v9832, %v10149
  %v10151 = vpop.f32.mrb[0].mxu0
  %v10152 = vadd.f32 %v9834, %v10151
  %v10153 = vpop.f32.mrb[0].mxu0
  %v10154 = vadd.f32 %v9836, %v10153
  %10155 = vmatprep.mubr.bf16.mxu0 %v9898
  %10156 = vmatmul.mubr.bf16.gmra.mrb[0].mxu0 %v9897
  %v10157 = vpop.f32.mrb[0].mxu0
  %v10158 = vadd.f32 %v9840, %v10157
  %v10159 = vpop.f32.mrb[0].mxu0
  %v10160 = vadd.f32 %v9842, %v10159
  %v10161 = vpop.f32.mrb[0].mxu0
  %v10162 = vadd.f32 %v9844, %v10161
  %v10163 = vpop.f32.mrb[0].mxu0
  %v10164 = vadd.f32 %v9846, %v10163
  %10165 = vmatprep.mubr.bf16.mxu0 %v9901
  %10166 = vmatmul.mubr.bf16.gmra.mrb[0].mxu0 %v9900
  %v10167 = vpop.f32.mrb[0].mxu0
  %v10168 = vadd.f32 %v9850, %v10167
  %v10169 = vpop.f32.mrb[0].mxu0
  %v10170 = vadd.f32 %v9852, %v10169
  %v10171 = vpop.f32.mrb[0].mxu0
  %v10172 = vpop.f32.mrb[0].mxu0
  %10173 = vdwg.mxu0
  %10174 = vmatprep.subr.bf16.mxu0 %v10052
  %10175 = vmatpush1.bf16.msra.mxu0 %v10051
  %10176 = vmatprep.subr.bf16.mxu0 %v10054
  %10177 = vmatpush1.bf16.msra.mxu0 %v10053
  %10178 = vmatprep.subr.bf16.mxu0 0
  %10179 = vmatpush1.bf16.msra.mxu0 0
  %10180 = vmatprep.subr.bf16.mxu0 0
  %10181 = vmatpush1.bf16.msra.mxu0 0
  %10182 = vmatprep.subr.bf16.mxu0 0
  %10183 = vmatpush1.bf16.msra.mxu0 0
  %10184 = vmatprep.subr.bf16.mxu0 0
  %10185 = vmatpush1.bf16.msra.mxu0 0
  %10186 = vmatprep.subr.bf16.mxu0 0
  %10187 = vmatpush1.bf16.msra.mxu0 0
  %10188 = vmatprep.subr.bf16.mxu0 0
  %10189 = vmatpush1.bf16.msra.mxu0 0
  %10190 = vmatprep.subr.bf16.mxu0 0
  %10191 = vmatpush1.bf16.msra.mxu0 0
  %10192 = vmatprep.subr.bf16.mxu0 0
  %10193 = vmatpush1.bf16.msra.mxu0 0
  %10194 = vmatprep.subr.bf16.mxu0 0
  %10195 = vmatpush1.bf16.msra.mxu0 0
  %10196 = vmatprep.subr.bf16.mxu0 0
  %10197 = vmatpush1.bf16.msra.mxu0 0
  %10198 = vmatprep.subr.bf16.mxu0 0
  %10199 = vmatpush1.bf16.msra.mxu0 0
  %10200 = vmatprep.subr.bf16.mxu0 0
  %10201 = vmatpush1.bf16.msra.mxu0 0
  %10202 = vmatprep.subr.bf16.mxu0 0
  %10203 = vmatpush1.bf16.msra.mxu0 0
  %10204 = vmatprep.subr.bf16.mxu0 0
  %10205 = vmatpush1.bf16.msra.mxu0 0
  %10206 = vmatprep.mubr.bf16.mxu0 0
  %10207 = vmatmul.mubr.bf16.gmra.mrb[0].mxu0 %v10092
  %v10208 = vpop.f32.mrb[0].mxu0
  %v10209 = vadd.f32 %v10138, %v10208
  %v10210 = vpop.f32.mrb[0].mxu0
  %v10211 = vadd.f32 %v10140, %v10210
  %v10212 = vpop.f32.mrb[0].mxu0
  %v10213 = vadd.f32 %v10142, %v10212
  %v10214 = vpop.f32.mrb[0].mxu0
  %v10215 = vadd.f32 %v10144, %v10214
  %10216 = vmatprep.mubr.bf16.mxu0 0
  %10217 = vmatmul.mubr.bf16.gmra.mrb[0].mxu0 %v10095
  %v10218 = vpop.f32.mrb[0].mxu0
  %v10219 = vadd.f32 %v10148, %v10218
  %v10220 = vpop.f32.mrb[0].mxu0
  %v10221 = vadd.f32 %v10150, %v10220
  %v10222 = vpop.f32.mrb[0].mxu0
  %v10223 = vadd.f32 %v10152, %v10222
  %v10224 = vpop.f32.mrb[0].mxu0
  %v10225 = vadd.f32 %v10154, %v10224
  %10226 = vmatprep.mubr.bf16.mxu0 0
  %10227 = vmatmul.mubr.bf16.gmra.mrb[0].mxu0 %v10098
  %v10228 = vpop.f32.mrb[0].mxu0
  %v10229 = vadd.f32 %v10158, %v10228
  %v10230 = vpop.f32.mrb[0].mxu0
  %v10231 = vadd.f32 %v10160, %v10230
  %v10232 = vpop.f32.mrb[0].mxu0
  %v10233 = vadd.f32 %v10162, %v10232
  %v10234 = vpop.f32.mrb[0].mxu0
  %v10235 = vadd.f32 %v10164, %v10234
  %10236 = vmatprep.mubr.bf16.mxu0 0
  %10237 = vmatmul.mubr.bf16.gmra.mrb[0].mxu0 %v10101
  %v10238 = vpop.f32.mrb[0].mxu0
  %v10239 = vadd.f32 %v10168, %v10238
  %v10240 = vpop.f32.mrb[0].mxu0
  %v10241 = vadd.f32 %v10170, %v10240
  %v10242 = vpop.f32.mrb[0].mxu0
  %v10243 = vpop.f32.mrb[0].mxu0
  %10244 = vdwg.mxu0
  %v10245 = vld [vmem:[%s32 + $0xc] sm:$0xff]
  %v10246 = vld [vmem:[%s32 + $0x14] sm:$0xf]
  %v10247 = vld [vmem:[%s32 + $0x18] sm:$0xff]
  %v10248 = vld [vmem:[%s32 + $0x20] sm:$0xf]
  %v10249 = vld [vmem:[%s32 + $0x24] sm:$0xff]
  %v10250 = vld [vmem:[%s32 + $0x2c] sm:$0xf]
  %v10251 = vld [vmem:[%s32 + $0x30] sm:$0xff]
  %v10252 = vld [vmem:[%s32 + $0x38] sm:$0xf]
  %v10253 = vld [vmem:[%s32 + $0x3c] sm:$0xff]
  %v10254 = vld [vmem:[%s32 + $0x44] sm:$0xf]
  %v10255 = vld [vmem:[%s32 + $0x48] sm:$0xff]
  %v10256 = vld [vmem:[%s32 + $0x50] sm:$0xf]
  %v10257 = vld [vmem:[%s32 + $0x54] sm:$0xff]
  %v10258 = vld [vmem:[%s32 + $0x5c] sm:$0xf]
  %v10259 = vld [vmem:[%s5698] sm:$0xff]
  %v10260 = vld [vmem:[%s5698 + $0x8] sm:$0xff]
  %v10261 = vld [vmem:[%s5698 + $0x10] sm:$0xff]
  %v10262 = vld [vmem:[%s5698 + $0x18] sm:$0xff]
  %v10263 = vld [vmem:[%s5698 + $0x20] sm:$0xff]
  %v10264 = vld [vmem:[%s5698 + $0x28] sm:$0xff]
  %v10265 = vld [vmem:[%s5698 + $0x30] sm:$0xff]
  %v10266 = vld [vmem:[%s5698 + $0x38] sm:$0xff]
  %v10267 = vld [vmem:[%s5698 + $0x40] sm:$0xff]
  %v10268 = vld [vmem:[%s5698 + $0x48] sm:$0xff]
  %v10269 = vld [vmem:[%s5698 + $0x50] sm:$0xff]
  %v10270 = vld [vmem:[%s5698 + $0x58] sm:$0xff]
  %v10271 = vld [vmem:[%s5698 + $0x60] sm:$0xff]
  %v10272 = vld [vmem:[%s5698 + $0x68] sm:$0xff]
  %v10273 = vld [vmem:[%s5698 + $0x70] sm:$0xff]
  %v10274 = vld [vmem:[%s5698 + $0x78] sm:$0xff]
  %v10275 = vld [vmem:[%s5698 + $0x80] sm:$0xff]
  %v10276 = vld [vmem:[%s5698 + $0x88] sm:$0xff]
  %v10277 = vld [vmem:[%s5698 + $0x90] sm:$0xff]
  %v10278 = vld [vmem:[%s5698 + $0x98] sm:$0xff]
  %v10279 = vld [vmem:[%s5698 + $0xa0] sm:$0xff]
  %v10280 = vld [vmem:[%s5698 + $0xa8] sm:$0xff]
  %v10281 = vld [vmem:[%s5698 + $0xb0] sm:$0xff]
  %v10282 = vld [vmem:[%s5698 + $0xb8] sm:$0xff]
  %v10283 = vld [vmem:[%s5698 + $0xc0] sm:$0xff]
  %v10284 = vld [vmem:[%s5698 + $0xc8] sm:$0xff]
  %v10285 = vld [vmem:[%s5698 + $0xd0] sm:$0xff]
  %v10286 = vld [vmem:[%s5698 + $0xd8] sm:$0xff]
  %v10287 = vld [vmem:[%s5698 + $0xe0] sm:$0xff]
  %v10288 = vld [vmem:[%s5698 + $0xe8] sm:$0xff]
  %v10289 = vld [vmem:[%s5698 + $0xf0] sm:$0xff]
  %v10290 = vld [vmem:[%s5698 + $0xf8] sm:$0xff]
  %v10291 = vld [vmem:[%s5698 + $0x100] sm:$0xff]
  %v10292 = vld [vmem:[%s5698 + $0x108] sm:$0xff]
  %v10293 = vld [vmem:[%s5698 + $0x110] sm:$0xff]
  %v10294 = vld [vmem:[%s5698 + $0x118] sm:$0xff]
  %v10309 = vunpack.c.l.b16 %v10245
  %v10310 = vunpack.c.h.b16 %v10245
  %v10311 = vunpack.c.l.b16 %v10246
  %v10312 = vunpack.c.l.b16 %v10247
  %v10313 = vunpack.c.h.b16 %v10247
  %v10314 = vunpack.c.l.b16 %v10248
  %v10315 = vunpack.c.l.b16 %v10249
  %v10316 = vunpack.c.h.b16 %v10249
  %v10317 = vunpack.c.l.b16 %v10250
  %v10318 = vunpack.c.l.b16 %v10251
  %v10319 = vunpack.c.h.b16 %v10251
  %v10320 = vunpack.c.l.b16 %v10252
  %v10321 = vunpack.c.l.b16 %v10253
  %v10322 = vunpack.c.h.b16 %v10253
  %v10323 = vunpack.c.l.b16 %v10254
  %v10324 = vunpack.c.l.b16 %v10255
  %v10325 = vunpack.c.h.b16 %v10255
  %v10326 = vunpack.c.l.b16 %v10256
  %v10327 = vunpack.c.l.b16 %v10257
  %v10328 = vunpack.c.h.b16 %v10257
  %v10329 = vunpack.c.l.b16 %v10258
  %v10330 = vpack.c.b16 %v10312, %v10309
  %v10331 = vpack.c.b16 %v10313, %v10310
  %v10332 = vpack.c.b16 %v10314, %v10311
  %v10333 = vpack.c.b16 %v10318, %v10315
  %v10334 = vpack.c.b16 %v10319, %v10316
  %v10335 = vpack.c.b16 %v10320, %v10317
  %v10336 = vpack.c.b16 %v10324, %v10321
  %v10337 = vpack.c.b16 %v10325, %v10322
  %v10338 = vpack.c.b16 %v10326, %v10323
  %v10339 = vpack.c.b16 %v10327, %v10327
  %v10340 = vpack.c.b16 %v10328, %v10328
  %v10341 = vpack.c.b16 %v10329, %v10329
  %v10386 = vunpack.c.l.b16 %v10259
  %v10387 = vunpack.c.h.b16 %v10259
  %v10388 = vunpack.c.l.b16 %v10260
  %v10389 = vunpack.c.h.b16 %v10260
  %v10390 = vunpack.c.l.b16 %v10261
  %v10391 = vunpack.c.h.b16 %v10261
  %v10392 = vunpack.c.l.b16 %v10262
  %v10393 = vunpack.c.h.b16 %v10262
  %v10394 = vunpack.c.l.b16 %v10263
  %v10395 = vunpack.c.h.b16 %v10263
  %v10396 = vunpack.c.l.b16 %v10264
  %v10397 = vunpack.c.h.b16 %v10264
  %v10398 = vunpack.c.l.b16 %v10265
  %v10399 = vunpack.c.h.b16 %v10265
  %v10400 = vunpack.c.l.b16 %v10266
  %v10401 = vunpack.c.h.b16 %v10266
  %v10402 = vunpack.c.l.b16 %v10267
  %v10403 = vunpack.c.h.b16 %v10267
  %v10404 = vunpack.c.l.b16 %v10268
  %v10405 = vunpack.c.h.b16 %v10268
  %v10406 = vunpack.c.l.b16 %v10269
  %v10407 = vunpack.c.h.b16 %v10269
  %v10408 = vunpack.c.l.b16 %v10270
  %v10409 = vunpack.c.h.b16 %v10270
  %v10410 = vunpack.c.l.b16 %v10271
  %v10411 = vunpack.c.h.b16 %v10271
  %v10412 = vunpack.c.l.b16 %v10272
  %v10413 = vunpack.c.h.b16 %v10272
  %v10414 = vunpack.c.l.b16 %v10273
  %v10415 = vunpack.c.h.b16 %v10273
  %v10416 = vunpack.c.l.b16 %v10274
  %v10417 = vunpack.c.h.b16 %v10274
  %v10418 = vunpack.c.l.b16 %v10275
  %v10419 = vunpack.c.h.b16 %v10275
  %v10420 = vunpack.c.l.b16 %v10276
  %v10421 = vunpack.c.h.b16 %v10276
  %v10422 = vunpack.c.l.b16 %v10277
  %v10423 = vunpack.c.h.b16 %v10277
  %v10424 = vunpack.c.l.b16 %v10278
  %v10425 = vunpack.c.h.b16 %v10278
  %v10426 = vunpack.c.l.b16 %v10279
  %v10427 = vunpack.c.h.b16 %v10279
  %v10428 = vunpack.c.l.b16 %v10280
  %v10429 = vunpack.c.h.b16 %v10280
  %v10430 = vunpack.c.l.b16 %v10281
  %v10431 = vunpack.c.h.b16 %v10281
  %v10432 = vunpack.c.l.b16 %v10282
  %v10433 = vunpack.c.h.b16 %v10282
  %v10434 = vunpack.c.l.b16 %v10283
  %v10435 = vunpack.c.h.b16 %v10283
  %v10436 = vunpack.c.l.b16 %v10284
  %v10437 = vunpack.c.h.b16 %v10284
  %v10438 = vunpack.c.l.b16 %v10285
  %v10439 = vunpack.c.h.b16 %v10285
  %v10440 = vunpack.c.l.b16 %v10286
  %v10441 = vunpack.c.h.b16 %v10286
  %v10442 = vunpack.c.l.b16 %v10287
  %v10443 = vunpack.c.h.b16 %v10287
  %v10444 = vunpack.c.l.b16 %v10288
  %v10445 = vunpack.c.h.b16 %v10288
  %v10446 = vunpack.c.l.b16 %v10289
  %v10447 = vunpack.c.h.b16 %v10289
  %v10448 = vunpack.c.l.b16 %v10290
  %v10449 = vunpack.c.h.b16 %v10290
  %v10450 = vunpack.c.l.b16 %v10291
  %v10451 = vunpack.c.h.b16 %v10291
  %v10452 = vunpack.c.l.b16 %v10292
  %v10453 = vunpack.c.h.b16 %v10292
  %v10454 = vunpack.c.l.b16 %v10293
  %v10455 = vunpack.c.h.b16 %v10293
  %v10456 = vunpack.c.l.b16 %v10294
  %v10457 = vunpack.c.h.b16 %v10294
  %v10458 = vpack.c.b16 %v10388, %v10386
  %v10459 = vpack.c.b16 %v10389, %v10387
  %v10460 = vpack.c.b16 %v10392, %v10390
  %v10461 = vpack.c.b16 %v10393, %v10391
  %v10462 = vpack.c.b16 %v10396, %v10394
  %v10463 = vpack.c.b16 %v10397, %v10395
  %v10464 = vpack.c.b16 %v10400, %v10398
  %v10465 = vpack.c.b16 %v10401, %v10399
  %v10466 = vpack.c.b16 %v10404, %v10402
  %v10467 = vpack.c.b16 %v10405, %v10403
  %v10468 = vpack.c.b16 %v10408, %v10406
  %v10469 = vpack.c.b16 %v10409, %v10407
  %v10470 = vpack.c.b16 %v10412, %v10410
  %v10471 = vpack.c.b16 %v10413, %v10411
  %v10472 = vpack.c.b16 %v10416, %v10414
  %v10473 = vpack.c.b16 %v10417, %v10415
  %v10474 = vpack.c.b16 %v10420, %v10418
  %v10475 = vpack.c.b16 %v10421, %v10419
  %v10476 = vpack.c.b16 %v10424, %v10422
  %v10477 = vpack.c.b16 %v10425, %v10423
  %v10478 = vpack.c.b16 %v10428, %v10426
  %v10479 = vpack.c.b16 %v10429, %v10427
  %v10480 = vpack.c.b16 %v10432, %v10430
  %v10481 = vpack.c.b16 %v10433, %v10431
  %v10482 = vpack.c.b16 %v10436, %v10434
  %v10483 = vpack.c.b16 %v10437, %v10435
  %v10484 = vpack.c.b16 %v10440, %v10438
  %v10485 = vpack.c.b16 %v10441, %v10439
  %v10486 = vpack.c.b16 %v10444, %v10442
  %v10487 = vpack.c.b16 %v10445, %v10443
  %v10488 = vpack.c.b16 %v10448, %v10446
  %v10489 = vpack.c.b16 %v10449, %v10447
  %v10490 = vpack.c.b16 %v10452, %v10450
  %v10491 = vpack.c.b16 %v10453, %v10451
  %v10492 = vpack.c.b16 %v10456, %v10454
  %v10493 = vpack.c.b16 %v10457, %v10455
  %v10531 = vsel %vm277, %v10332, 0
  %v10534 = vsel %vm277, %v10335, 0
  %v10537 = vsel %vm277, %v10338, 0
  %v10540 = vsel %vm277, %v10341, 0
  %10542 = vmatprep.subr.bf16.mxu0 %v10459
  %10543 = vmatpush1.bf16.msra.mxu0 %v10458
  %10544 = vmatprep.subr.bf16.mxu0 %v10461
  %10545 = vmatpush1.bf16.msra.mxu0 %v10460
  %10546 = vmatprep.subr.bf16.mxu0 %v10463
  %10547 = vmatpush1.bf16.msra.mxu0 %v10462
  %10548 = vmatprep.subr.bf16.mxu0 %v10465
  %10549 = vmatpush1.bf16.msra.mxu0 %v10464
  %10550 = vmatprep.subr.bf16.mxu0 %v10467
  %10551 = vmatpush1.bf16.msra.mxu0 %v10466
  %10552 = vmatprep.subr.bf16.mxu0 %v10469
  %10553 = vmatpush1.bf16.msra.mxu0 %v10468
  %10554 = vmatprep.subr.bf16.mxu0 %v10471
  %10555 = vmatpush1.bf16.msra.mxu0 %v10470
  %10556 = vmatprep.subr.bf16.mxu0 %v10473
  %10557 = vmatpush1.bf16.msra.mxu0 %v10472
  %10558 = vmatprep.subr.bf16.mxu0 %v10475
  %10559 = vmatpush1.bf16.msra.mxu0 %v10474
  %10560 = vmatprep.subr.bf16.mxu0 %v10477
  %10561 = vmatpush1.bf16.msra.mxu0 %v10476
  %10562 = vmatprep.subr.bf16.mxu0 %v10479
  %10563 = vmatpush1.bf16.msra.mxu0 %v10478
  %10564 = vmatprep.subr.bf16.mxu0 %v10481
  %10565 = vmatpush1.bf16.msra.mxu0 %v10480
  %10566 = vmatprep.subr.bf16.mxu0 %v10483
  %10567 = vmatpush1.bf16.msra.mxu0 %v10482
  %10568 = vmatprep.subr.bf16.mxu0 %v10485
  %10569 = vmatpush1.bf16.msra.mxu0 %v10484
  %10570 = vmatprep.subr.bf16.mxu0 %v10487
  %10571 = vmatpush1.bf16.msra.mxu0 %v10486
  %10572 = vmatprep.subr.bf16.mxu0 %v10489
  %10573 = vmatpush1.bf16.msra.mxu0 %v10488
  %10574 = vmatprep.mubr.bf16.mxu0 %v10331
  %10575 = vmatmul.mubr.bf16.gmra.mrb[0].mxu0 %v10330
  %v10576 = vpop.f32.mrb[0].mxu0
  %v10577 = vadd.f32 0.0, %v10576
  %v10578 = vpop.f32.mrb[0].mxu0
  %v10579 = vadd.f32 0.0, %v10578
  %v10580 = vpop.f32.mrb[0].mxu0
  %v10581 = vadd.f32 0.0, %v10580
  %v10582 = vpop.f32.mrb[0].mxu0
  %v10583 = vadd.f32 0.0, %v10582
  %10584 = vmatprep.mubr.bf16.mxu0 %v10334
  %10585 = vmatmul.mubr.bf16.gmra.mrb[0].mxu0 %v10333
  %v10586 = vpop.f32.mrb[0].mxu0
  %v10587 = vadd.f32 0.0, %v10586
  %v10588 = vpop.f32.mrb[0].mxu0
  %v10589 = vadd.f32 0.0, %v10588
  %v10590 = vpop.f32.mrb[0].mxu0
  %v10591 = vadd.f32 0.0, %v10590
  %v10592 = vpop.f32.mrb[0].mxu0
  %v10593 = vadd.f32 0.0, %v10592
  %10594 = vmatprep.mubr.bf16.mxu0 %v10337
  %10595 = vmatmul.mubr.bf16.gmra.mrb[0].mxu0 %v10336
  %v10596 = vpop.f32.mrb[0].mxu0
  %v10597 = vadd.f32 0.0, %v10596
  %v10598 = vpop.f32.mrb[0].mxu0
  %v10599 = vadd.f32 0.0, %v10598
  %v10600 = vpop.f32.mrb[0].mxu0
  %v10601 = vadd.f32 0.0, %v10600
  %v10602 = vpop.f32.mrb[0].mxu0
  %v10603 = vadd.f32 0.0, %v10602
  %10604 = vmatprep.mubr.bf16.mxu0 %v10340
  %10605 = vmatmul.mubr.bf16.gmra.mrb[0].mxu0 %v10339
  %v10606 = vpop.f32.mrb[0].mxu0
  %v10607 = vadd.f32 0.0, %v10606
  %v10608 = vpop.f32.mrb[0].mxu0
  %v10609 = vadd.f32 0.0, %v10608
  %v10610 = vpop.f32.mrb[0].mxu0
  %v10611 = vpop.f32.mrb[0].mxu0
  %10612 = vdwg.mxu0
  %10613 = vmatprep.subr.bf16.mxu0 %v10491
  %10614 = vmatpush1.bf16.msra.mxu0 %v10490
  %10615 = vmatprep.subr.bf16.mxu0 %v10493
  %10616 = vmatpush1.bf16.msra.mxu0 %v10492
  %10617 = vmatprep.subr.bf16.mxu0 0
  %10618 = vmatpush1.bf16.msra.mxu0 0
  %10619 = vmatprep.subr.bf16.mxu0 0
  %10620 = vmatpush1.bf16.msra.mxu0 0
  %10621 = vmatprep.subr.bf16.mxu0 0
  %10622 = vmatpush1.bf16.msra.mxu0 0
  %10623 = vmatprep.subr.bf16.mxu0 0
  %10624 = vmatpush1.bf16.msra.mxu0 0
  %10625 = vmatprep.subr.bf16.mxu0 0
  %10626 = vmatpush1.bf16.msra.mxu0 0
  %10627 = vmatprep.subr.bf16.mxu0 0
  %10628 = vmatpush1.bf16.msra.mxu0 0
  %10629 = vmatprep.subr.bf16.mxu0 0
  %10630 = vmatpush1.bf16.msra.mxu0 0
  %10631 = vmatprep.subr.bf16.mxu0 0
  %10632 = vmatpush1.bf16.msra.mxu0 0
  %10633 = vmatprep.subr.bf16.mxu0 0
  %10634 = vmatpush1.bf16.msra.mxu0 0
  %10635 = vmatprep.subr.bf16.mxu0 0
  %10636 = vmatpush1.bf16.msra.mxu0 0
  %10637 = vmatprep.subr.bf16.mxu0 0
  %10638 = vmatpush1.bf16.msra.mxu0 0
  %10639 = vmatprep.subr.bf16.mxu0 0
  %10640 = vmatpush1.bf16.msra.mxu0 0
  %10641 = vmatprep.subr.bf16.mxu0 0
  %10642 = vmatpush1.bf16.msra.mxu0 0
  %10643 = vmatprep.subr.bf16.mxu0 0
  %10644 = vmatpush1.bf16.msra.mxu0 0
  %10645 = vmatprep.mubr.bf16.mxu0 0
  %10646 = vmatmul.mubr.bf16.gmra.mrb[0].mxu0 %v10531
  %v10647 = vpop.f32.mrb[0].mxu0
  %v10648 = vadd.f32 %v10577, %v10647
  %v10649 = vpop.f32.mrb[0].mxu0
  %v10650 = vadd.f32 %v10579, %v10649
  %v10651 = vpop.f32.mrb[0].mxu0
  %v10652 = vadd.f32 %v10581, %v10651
  %v10653 = vpop.f32.mrb[0].mxu0
  %v10654 = vadd.f32 %v10583, %v10653
  %10655 = vmatprep.mubr.bf16.mxu0 0
  %10656 = vmatmul.mubr.bf16.gmra.mrb[0].mxu0 %v10534
  %v10657 = vpop.f32.mrb[0].mxu0
  %v10658 = vadd.f32 %v10587, %v10657
  %v10659 = vpop.f32.mrb[0].mxu0
  %v10660 = vadd.f32 %v10589, %v10659
  %v10661 = vpop.f32.mrb[0].mxu0
  %v10662 = vadd.f32 %v10591, %v10661
  %v10663 = vpop.f32.mrb[0].mxu0
  %v10664 = vadd.f32 %v10593, %v10663
  %10665 = vmatprep.mubr.bf16.mxu0 0
  %10666 = vmatmul.mubr.bf16.gmra.mrb[0].mxu0 %v10537
  %v10667 = vpop.f32.mrb[0].mxu0
  %v10668 = vadd.f32 %v10597, %v10667
  %v10669 = vpop.f32.mrb[0].mxu0
  %v10670 = vadd.f32 %v10599, %v10669
  %v10671 = vpop.f32.mrb[0].mxu0
  %v10672 = vadd.f32 %v10601, %v10671
  %v10673 = vpop.f32.mrb[0].mxu0
  %v10674 = vadd.f32 %v10603, %v10673
  %10675 = vmatprep.mubr.bf16.mxu0 0
  %10676 = vmatmul.mubr.bf16.gmra.mrb[0].mxu0 %v10540
  %v10677 = vpop.f32.mrb[0].mxu0
  %v10678 = vadd.f32 %v10607, %v10677
  %v10679 = vpop.f32.mrb[0].mxu0
  %v10680 = vadd.f32 %v10609, %v10679
  %v10681 = vpop.f32.mrb[0].mxu0
  %v10682 = vpop.f32.mrb[0].mxu0
  %10683 = vdwg.mxu0
  %v10684 = vadd.f32 %v10209, %v10648
  %v10685 = vadd.f32 %v10211, %v10650
  %v10686 = vadd.f32 %v10213, %v10652
  %v10687 = vadd.f32 %v10215, %v10654
  %v10688 = vadd.f32 %v10219, %v10658
  %v10689 = vadd.f32 %v10221, %v10660
  %v10690 = vadd.f32 %v10223, %v10662
  %v10691 = vadd.f32 %v10225, %v10664
  %v10692 = vadd.f32 %v10229, %v10668
  %v10693 = vadd.f32 %v10231, %v10670
  %v10694 = vadd.f32 %v10233, %v10672
  %v10695 = vadd.f32 %v10235, %v10674
  %v10696 = vadd.f32 %v10239, %v10678
  %v10697 = vadd.f32 %v10241, %v10680
  %v10698 = vld [vmem:[#allocation2 + $0x18] sm:$0xff]
  %v10699 = vld [vmem:[#allocation2 + $0x20] sm:$0xf]
  %v10700 = vld [vmem:[#allocation2 + $0x24] sm:$0xff]
  %v10701 = vld [vmem:[#allocation2 + $0x2c] sm:$0xf]
  %v10702 = vld [vmem:[#allocation2 + $0x30] sm:$0xff]
  %v10703 = vld [vmem:[#allocation2 + $0x38] sm:$0xf]
  %v10704 = vld [vmem:[#allocation2 + $0x3c] sm:$0xff]
  %v10705 = vld [vmem:[#allocation2 + $0x44] sm:$0xf]
  %v10706 = vld [vmem:[#allocation2 + $0x48] sm:$0xff]
  %v10707 = vld [vmem:[#allocation2 + $0x50] sm:$0xf]
  %v10708 = vld [vmem:[#allocation2 + $0x54] sm:$0xff]
  %v10709 = vld [vmem:[#allocation2 + $0x5c] sm:$0xf]
  %v10710 = vld [vmem:[#allocation2 + $0x60] sm:$0xff]
  %v10711 = vld [vmem:[#allocation2 + $0x68] sm:$0xf]
  %v10712 = vld [vmem:[%s6152] sm:$0xff]
  %v10713 = vld [vmem:[%s6152 + $0x8] sm:$0xff]
  %v10714 = vld [vmem:[%s6152 + $0x10] sm:$0xff]
  %v10715 = vld [vmem:[%s6152 + $0x18] sm:$0xff]
  %v10716 = vld [vmem:[%s6152 + $0x20] sm:$0xff]
  %v10717 = vld [vmem:[%s6152 + $0x28] sm:$0xff]
  %v10718 = vld [vmem:[%s6152 + $0x30] sm:$0xff]
  %v10719 = vld [vmem:[%s6152 + $0x38] sm:$0xff]
  %v10720 = vld [vmem:[%s6152 + $0x40] sm:$0xff]
  %v10721 = vld [vmem:[%s6152 + $0x48] sm:$0xff]
  %v10722 = vld [vmem:[%s6152 + $0x50] sm:$0xff]
  %v10723 = vld [vmem:[%s6152 + $0x58] sm:$0xff]
  %v10724 = vld [vmem:[%s6152 + $0x60] sm:$0xff]
  %v10725 = vld [vmem:[%s6152 + $0x68] sm:$0xff]
  %v10726 = vld [vmem:[%s6152 + $0x70] sm:$0xff]
  %v10727 = vld [vmem:[%s6152 + $0x78] sm:$0xff]
  %v10728 = vld [vmem:[%s6152 + $0x80] sm:$0xff]
  %v10729 = vld [vmem:[%s6152 + $0x88] sm:$0xff]
  %v10730 = vld [vmem:[%s6152 + $0x90] sm:$0xff]
  %v10731 = vld [vmem:[%s6152 + $0x98] sm:$0xff]
  %v10732 = vld [vmem:[%s6152 + $0xa0] sm:$0xff]
  %v10733 = vld [vmem:[%s6152 + $0xa8] sm:$0xff]
  %v10734 = vld [vmem:[%s6152 + $0xb0] sm:$0xff]
  %v10735 = vld [vmem:[%s6152 + $0xb8] sm:$0xff]
  %v10736 = vld [vmem:[%s6152 + $0xc0] sm:$0xff]
  %v10737 = vld [vmem:[%s6152 + $0xc8] sm:$0xff]
  %v10738 = vld [vmem:[%s6152 + $0xd0] sm:$0xff]
  %v10739 = vld [vmem:[%s6152 + $0xd8] sm:$0xff]
  %v10740 = vld [vmem:[%s6152 + $0xe0] sm:$0xff]
  %v10741 = vld [vmem:[%s6152 + $0xe8] sm:$0xff]
  %v10742 = vld [vmem:[%s6152 + $0xf0] sm:$0xff]
  %v10743 = vld [vmem:[%s6152 + $0xf8] sm:$0xff]
  %v10744 = vld [vmem:[%s6152 + $0x100] sm:$0xff]
  %v10745 = vld [vmem:[%s6152 + $0x108] sm:$0xff]
  %v10746 = vld [vmem:[%s6152 + $0x110] sm:$0xff]
  %v10747 = vld [vmem:[%s6152 + $0x118] sm:$0xff]
  %v10762 = vunpack.c.l.b16 %v10698
  %v10763 = vunpack.c.h.b16 %v10698
  %v10764 = vunpack.c.l.b16 %v10699
  %v10765 = vunpack.c.l.b16 %v10700
  %v10766 = vunpack.c.h.b16 %v10700
  %v10767 = vunpack.c.l.b16 %v10701
  %v10768 = vunpack.c.l.b16 %v10702
  %v10769 = vunpack.c.h.b16 %v10702
  %v10770 = vunpack.c.l.b16 %v10703
  %v10771 = vunpack.c.l.b16 %v10704
  %v10772 = vunpack.c.h.b16 %v10704
  %v10773 = vunpack.c.l.b16 %v10705
  %v10774 = vunpack.c.l.b16 %v10706
  %v10775 = vunpack.c.h.b16 %v10706
  %v10776 = vunpack.c.l.b16 %v10707
  %v10777 = vunpack.c.l.b16 %v10708
  %v10778 = vunpack.c.h.b16 %v10708
  %v10779 = vunpack.c.l.b16 %v10709
  %v10780 = vunpack.c.l.b16 %v10710
  %v10781 = vunpack.c.h.b16 %v10710
  %v10782 = vunpack.c.l.b16 %v10711
  %v10783 = vpack.c.b16 %v10765, %v10762
  %v10784 = vpack.c.b16 %v10766, %v10763
  %v10785 = vpack.c.b16 %v10767, %v10764
  %v10786 = vpack.c.b16 %v10771, %v10768
  %v10787 = vpack.c.b16 %v10772, %v10769
  %v10788 = vpack.c.b16 %v10773, %v10770
  %v10789 = vpack.c.b16 %v10777, %v10774
  %v10790 = vpack.c.b16 %v10778, %v10775
  %v10791 = vpack.c.b16 %v10779, %v10776
  %v10792 = vpack.c.b16 %v10780, %v10780
  %v10793 = vpack.c.b16 %v10781, %v10781
  %v10794 = vpack.c.b16 %v10782, %v10782
  %v10839 = vunpack.c.l.b16 %v10712
  %v10840 = vunpack.c.h.b16 %v10712
  %v10841 = vunpack.c.l.b16 %v10713
  %v10842 = vunpack.c.h.b16 %v10713
  %v10843 = vunpack.c.l.b16 %v10714
  %v10844 = vunpack.c.h.b16 %v10714
  %v10845 = vunpack.c.l.b16 %v10715
  %v10846 = vunpack.c.h.b16 %v10715
  %v10847 = vunpack.c.l.b16 %v10716
  %v10848 = vunpack.c.h.b16 %v10716
  %v10849 = vunpack.c.l.b16 %v10717
  %v10850 = vunpack.c.h.b16 %v10717
  %v10851 = vunpack.c.l.b16 %v10718
  %v10852 = vunpack.c.h.b16 %v10718
  %v10853 = vunpack.c.l.b16 %v10719
  %v10854 = vunpack.c.h.b16 %v10719
  %v10855 = vunpack.c.l.b16 %v10720
  %v10856 = vunpack.c.h.b16 %v10720
  %v10857 = vunpack.c.l.b16 %v10721
  %v10858 = vunpack.c.h.b16 %v10721
  %v10859 = vunpack.c.l.b16 %v10722
  %v10860 = vunpack.c.h.b16 %v10722
  %v10861 = vunpack.c.l.b16 %v10723
  %v10862 = vunpack.c.h.b16 %v10723
  %v10863 = vunpack.c.l.b16 %v10724
  %v10864 = vunpack.c.h.b16 %v10724
  %v10865 = vunpack.c.l.b16 %v10725
  %v10866 = vunpack.c.h.b16 %v10725
  %v10867 = vunpack.c.l.b16 %v10726
  %v10868 = vunpack.c.h.b16 %v10726
  %v10869 = vunpack.c.l.b16 %v10727
  %v10870 = vunpack.c.h.b16 %v10727
  %v10871 = vunpack.c.l.b16 %v10728
  %v10872 = vunpack.c.h.b16 %v10728
  %v10873 = vunpack.c.l.b16 %v10729
  %v10874 = vunpack.c.h.b16 %v10729
  %v10875 = vunpack.c.l.b16 %v10730
  %v10876 = vunpack.c.h.b16 %v10730
  %v10877 = vunpack.c.l.b16 %v10731
  %v10878 = vunpack.c.h.b16 %v10731
  %v10879 = vunpack.c.l.b16 %v10732
  %v10880 = vunpack.c.h.b16 %v10732
  %v10881 = vunpack.c.l.b16 %v10733
  %v10882 = vunpack.c.h.b16 %v10733
  %v10883 = vunpack.c.l.b16 %v10734
  %v10884 = vunpack.c.h.b16 %v10734
  %v10885 = vunpack.c.l.b16 %v10735
  %v10886 = vunpack.c.h.b16 %v10735
  %v10887 = vunpack.c.l.b16 %v10736
  %v10888 = vunpack.c.h.b16 %v10736
  %v10889 = vunpack.c.l.b16 %v10737
  %v10890 = vunpack.c.h.b16 %v10737
  %v10891 = vunpack.c.l.b16 %v10738
  %v10892 = vunpack.c.h.b16 %v10738
  %v10893 = vunpack.c.l.b16 %v10739
  %v10894 = vunpack.c.h.b16 %v10739
  %v10895 = vunpack.c.l.b16 %v10740
  %v10896 = vunpack.c.h.b16 %v10740
  %v10897 = vunpack.c.l.b16 %v10741
  %v10898 = vunpack.c.h.b16 %v10741
  %v10899 = vunpack.c.l.b16 %v10742
  %v10900 = vunpack.c.h.b16 %v10742
  %v10901 = vunpack.c.l.b16 %v10743
  %v10902 = vunpack.c.h.b16 %v10743
  %v10903 = vunpack.c.l.b16 %v10744
  %v10904 = vunpack.c.h.b16 %v10744
  %v10905 = vunpack.c.l.b16 %v10745
  %v10906 = vunpack.c.h.b16 %v10745
  %v10907 = vunpack.c.l.b16 %v10746
  %v10908 = vunpack.c.h.b16 %v10746
  %v10909 = vunpack.c.l.b16 %v10747
  %v10910 = vunpack.c.h.b16 %v10747
  %v10911 = vpack.c.b16 %v10841, %v10839
  %v10912 = vpack.c.b16 %v10842, %v10840
  %v10913 = vpack.c.b16 %v10845, %v10843
  %v10914 = vpack.c.b16 %v10846, %v10844
  %v10915 = vpack.c.b16 %v10849, %v10847
  %v10916 = vpack.c.b16 %v10850, %v10848
  %v10917 = vpack.c.b16 %v10853, %v10851
  %v10918 = vpack.c.b16 %v10854, %v10852
  %v10919 = vpack.c.b16 %v10857, %v10855
  %v10920 = vpack.c.b16 %v10858, %v10856
  %v10921 = vpack.c.b16 %v10861, %v10859
  %v10922 = vpack.c.b16 %v10862, %v10860
  %v10923 = vpack.c.b16 %v10865, %v10863
  %v10924 = vpack.c.b16 %v10866, %v10864
  %v10925 = vpack.c.b16 %v10869, %v10867
  %v10926 = vpack.c.b16 %v10870, %v10868
  %v10927 = vpack.c.b16 %v10873, %v10871
  %v10928 = vpack.c.b16 %v10874, %v10872
  %v10929 = vpack.c.b16 %v10877, %v10875
  %v10930 = vpack.c.b16 %v10878, %v10876
  %v10931 = vpack.c.b16 %v10881, %v10879
  %v10932 = vpack.c.b16 %v10882, %v10880
  %v10933 = vpack.c.b16 %v10885, %v10883
  %v10934 = vpack.c.b16 %v10886, %v10884
  %v10935 = vpack.c.b16 %v10889, %v10887
  %v10936 = vpack.c.b16 %v10890, %v10888
  %v10937 = vpack.c.b16 %v10893, %v10891
  %v10938 = vpack.c.b16 %v10894, %v10892
  %v10939 = vpack.c.b16 %v10897, %v10895
  %v10940 = vpack.c.b16 %v10898, %v10896
  %v10941 = vpack.c.b16 %v10901, %v10899
  %v10942 = vpack.c.b16 %v10902, %v10900
  %v10943 = vpack.c.b16 %v10905, %v10903
  %v10944 = vpack.c.b16 %v10906, %v10904
  %v10945 = vpack.c.b16 %v10909, %v10907
  %v10946 = vpack.c.b16 %v10910, %v10908
  %v10984 = vsel %vm277, %v10785, 0
  %v10987 = vsel %vm277, %v10788, 0
  %v10990 = vsel %vm277, %v10791, 0
  %v10993 = vsel %vm277, %v10794, 0
  %10995 = vmatprep.subr.bf16.mxu0 %v10912
  %10996 = vmatpush1.bf16.msra.mxu0 %v10911
  %10997 = vmatprep.subr.bf16.mxu0 %v10914
  %10998 = vmatpush1.bf16.msra.mxu0 %v10913
  %10999 = vmatprep.subr.bf16.mxu0 %v10916
  %11000 = vmatpush1.bf16.msra.mxu0 %v10915
  %11001 = vmatprep.subr.bf16.mxu0 %v10918
  %11002 = vmatpush1.bf16.msra.mxu0 %v10917
  %11003 = vmatprep.subr.bf16.mxu0 %v10920
  %11004 = vmatpush1.bf16.msra.mxu0 %v10919
  %11005 = vmatprep.subr.bf16.mxu0 %v10922
  %11006 = vmatpush1.bf16.msra.mxu0 %v10921
  %11007 = vmatprep.subr.bf16.mxu0 %v10924
  %11008 = vmatpush1.bf16.msra.mxu0 %v10923
  %11009 = vmatprep.subr.bf16.mxu0 %v10926
  %11010 = vmatpush1.bf16.msra.mxu0 %v10925
  %11011 = vmatprep.subr.bf16.mxu0 %v10928
  %11012 = vmatpush1.bf16.msra.mxu0 %v10927
  %11013 = vmatprep.subr.bf16.mxu0 %v10930
  %11014 = vmatpush1.bf16.msra.mxu0 %v10929
  %11015 = vmatprep.subr.bf16.mxu0 %v10932
  %11016 = vmatpush1.bf16.msra.mxu0 %v10931
  %11017 = vmatprep.subr.bf16.mxu0 %v10934
  %11018 = vmatpush1.bf16.msra.mxu0 %v10933
  %11019 = vmatprep.subr.bf16.mxu0 %v10936
  %11020 = vmatpush1.bf16.msra.mxu0 %v10935
  %11021 = vmatprep.subr.bf16.mxu0 %v10938
  %11022 = vmatpush1.bf16.msra.mxu0 %v10937
  %11023 = vmatprep.subr.bf16.mxu0 %v10940
  %11024 = vmatpush1.bf16.msra.mxu0 %v10939
  %11025 = vmatprep.subr.bf16.mxu0 %v10942
  %11026 = vmatpush1.bf16.msra.mxu0 %v10941
  %11027 = vmatprep.mubr.bf16.mxu0 %v10784
  %11028 = vmatmul.mubr.bf16.gmra.mrb[0].mxu0 %v10783
  %v11029 = vpop.f32.mrb[0].mxu0
  %v11030 = vadd.f32 0.0, %v11029
  %v11031 = vpop.f32.mrb[0].mxu0
  %v11032 = vadd.f32 0.0, %v11031
  %v11033 = vpop.f32.mrb[0].mxu0
  %v11034 = vadd.f32 0.0, %v11033
  %v11035 = vpop.f32.mrb[0].mxu0
  %v11036 = vadd.f32 0.0, %v11035
  %11037 = vmatprep.mubr.bf16.mxu0 %v10787
  %11038 = vmatmul.mubr.bf16.gmra.mrb[0].mxu0 %v10786
  %v11039 = vpop.f32.mrb[0].mxu0
  %v11040 = vadd.f32 0.0, %v11039
  %v11041 = vpop.f32.mrb[0].mxu0
  %v11042 = vadd.f32 0.0, %v11041
  %v11043 = vpop.f32.mrb[0].mxu0
  %v11044 = vadd.f32 0.0, %v11043
  %v11045 = vpop.f32.mrb[0].mxu0
  %v11046 = vadd.f32 0.0, %v11045
  %11047 = vmatprep.mubr.bf16.mxu0 %v10790
  %11048 = vmatmul.mubr.bf16.gmra.mrb[0].mxu0 %v10789
  %v11049 = vpop.f32.mrb[0].mxu0
  %v11050 = vadd.f32 0.0, %v11049
  %v11051 = vpop.f32.mrb[0].mxu0
  %v11052 = vadd.f32 0.0, %v11051
  %v11053 = vpop.f32.mrb[0].mxu0
  %v11054 = vadd.f32 0.0, %v11053
  %v11055 = vpop.f32.mrb[0].mxu0
  %v11056 = vadd.f32 0.0, %v11055
  %11057 = vmatprep.mubr.bf16.mxu0 %v10793
  %11058 = vmatmul.mubr.bf16.gmra.mrb[0].mxu0 %v10792
  %v11059 = vpop.f32.mrb[0].mxu0
  %v11060 = vadd.f32 0.0, %v11059
  %v11061 = vpop.f32.mrb[0].mxu0
  %v11062 = vadd.f32 0.0, %v11061
  %v11063 = vpop.f32.mrb[0].mxu0
  %v11064 = vpop.f32.mrb[0].mxu0
  %11065 = vdwg.mxu0
  %11066 = vmatprep.subr.bf16.mxu0 %v10944
  %11067 = vmatpush1.bf16.msra.mxu0 %v10943
  %11068 = vmatprep.subr.bf16.mxu0 %v10946
  %11069 = vmatpush1.bf16.msra.mxu0 %v10945
  %11070 = vmatprep.subr.bf16.mxu0 0
  %11071 = vmatpush1.bf16.msra.mxu0 0
  %11072 = vmatprep.subr.bf16.mxu0 0
  %11073 = vmatpush1.bf16.msra.mxu0 0
  %11074 = vmatprep.subr.bf16.mxu0 0
  %11075 = vmatpush1.bf16.msra.mxu0 0
  %11076 = vmatprep.subr.bf16.mxu0 0
  %11077 = vmatpush1.bf16.msra.mxu0 0
  %11078 = vmatprep.subr.bf16.mxu0 0
  %11079 = vmatpush1.bf16.msra.mxu0 0
  %11080 = vmatprep.subr.bf16.mxu0 0
  %11081 = vmatpush1.bf16.msra.mxu0 0
  %11082 = vmatprep.subr.bf16.mxu0 0
  %11083 = vmatpush1.bf16.msra.mxu0 0
  %11084 = vmatprep.subr.bf16.mxu0 0
  %11085 = vmatpush1.bf16.msra.mxu0 0
  %11086 = vmatprep.subr.bf16.mxu0 0
  %11087 = vmatpush1.bf16.msra.mxu0 0
  %11088 = vmatprep.subr.bf16.mxu0 0
  %11089 = vmatpush1.bf16.msra.mxu0 0
  %11090 = vmatprep.subr.bf16.mxu0 0
  %11091 = vmatpush1.bf16.msra.mxu0 0
  %11092 = vmatprep.subr.bf16.mxu0 0
  %11093 = vmatpush1.bf16.msra.mxu0 0
  %11094 = vmatprep.subr.bf16.mxu0 0
  %11095 = vmatpush1.bf16.msra.mxu0 0
  %11096 = vmatprep.subr.bf16.mxu0 0
  %11097 = vmatpush1.bf16.msra.mxu0 0
  %11098 = vmatprep.mubr.bf16.mxu0 0
  %11099 = vmatmul.mubr.bf16.gmra.mrb[0].mxu0 %v10984
  %v11100 = vpop.f32.mrb[0].mxu0
  %v11101 = vadd.f32 %v11030, %v11100
  %v11102 = vpop.f32.mrb[0].mxu0
  %v11103 = vadd.f32 %v11032, %v11102
  %v11104 = vpop.f32.mrb[0].mxu0
  %v11105 = vadd.f32 %v11034, %v11104
  %v11106 = vpop.f32.mrb[0].mxu0
  %v11107 = vadd.f32 %v11036, %v11106
  %11108 = vmatprep.mubr.bf16.mxu0 0
  %11109 = vmatmul.mubr.bf16.gmra.mrb[0].mxu0 %v10987
  %v11110 = vpop.f32.mrb[0].mxu0
  %v11111 = vadd.f32 %v11040, %v11110
  %v11112 = vpop.f32.mrb[0].mxu0
  %v11113 = vadd.f32 %v11042, %v11112
  %v11114 = vpop.f32.mrb[0].mxu0
  %v11115 = vadd.f32 %v11044, %v11114
  %v11116 = vpop.f32.mrb[0].mxu0
  %v11117 = vadd.f32 %v11046, %v11116
  %11118 = vmatprep.mubr.bf16.mxu0 0
  %11119 = vmatmul.mubr.bf16.gmra.mrb[0].mxu0 %v10990
  %v11120 = vpop.f32.mrb[0].mxu0
  %v11121 = vadd.f32 %v11050, %v11120
  %v11122 = vpop.f32.mrb[0].mxu0
  %v11123 = vadd.f32 %v11052, %v11122
  %v11124 = vpop.f32.mrb[0].mxu0
  %v11125 = vadd.f32 %v11054, %v11124
  %v11126 = vpop.f32.mrb[0].mxu0
  %v11127 = vadd.f32 %v11056, %v11126
  %11128 = vmatprep.mubr.bf16.mxu0 0
  %11129 = vmatmul.mubr.bf16.gmra.mrb[0].mxu0 %v10993
  %v11130 = vpop.f32.mrb[0].mxu0
  %v11131 = vadd.f32 %v11060, %v11130
  %v11132 = vpop.f32.mrb[0].mxu0
  %v11133 = vadd.f32 %v11062, %v11132
  %v11134 = vpop.f32.mrb[0].mxu0
  %v11135 = vpop.f32.mrb[0].mxu0
  %11136 = vdwg.mxu0
  %v11137 = vadd.f32 %v10684, %v11101
  %v11138 = vadd.f32 %v10685, %v11103
  %v11139 = vadd.f32 %v10686, %v11105
  %v11140 = vadd.f32 %v10687, %v11107
  %v11141 = vadd.f32 %v10688, %v11111
  %v11142 = vadd.f32 %v10689, %v11113
  %v11143 = vadd.f32 %v10690, %v11115
  %v11144 = vadd.f32 %v10691, %v11117
  %v11145 = vadd.f32 %v10692, %v11121
  %v11146 = vadd.f32 %v10693, %v11123
  %v11147 = vadd.f32 %v10694, %v11125
  %v11148 = vadd.f32 %v10695, %v11127
  %v11149 = vadd.f32 %v10696, %v11131
  %v11150 = vadd.f32 %v10697, %v11133
  %v11151 = vld [vmem:[%s32 + $0x18] sm:$0xff]
  %v11152 = vld [vmem:[%s32 + $0x20] sm:$0xf]
  %v11153 = vld [vmem:[%s32 + $0x24] sm:$0xff]
  %v11154 = vld [vmem:[%s32 + $0x2c] sm:$0xf]
  %v11155 = vld [vmem:[%s32 + $0x30] sm:$0xff]
  %v11156 = vld [vmem:[%s32 + $0x38] sm:$0xf]
  %v11157 = vld [vmem:[%s32 + $0x3c] sm:$0xff]
  %v11158 = vld [vmem:[%s32 + $0x44] sm:$0xf]
  %v11159 = vld [vmem:[%s32 + $0x48] sm:$0xff]
  %v11160 = vld [vmem:[%s32 + $0x50] sm:$0xf]
  %v11161 = vld [vmem:[%s32 + $0x54] sm:$0xff]
  %v11162 = vld [vmem:[%s32 + $0x5c] sm:$0xf]
  %v11163 = vld [vmem:[%s32 + $0x60] sm:$0xff]
  %v11164 = vld [vmem:[%s32 + $0x68] sm:$0xf]
  %v11165 = vld [vmem:[%s6606] sm:$0xff]
  %v11166 = vld [vmem:[%s6606 + $0x8] sm:$0xff]
  %v11167 = vld [vmem:[%s6606 + $0x10] sm:$0xff]
  %v11168 = vld [vmem:[%s6606 + $0x18] sm:$0xff]
  %v11169 = vld [vmem:[%s6606 + $0x20] sm:$0xff]
  %v11170 = vld [vmem:[%s6606 + $0x28] sm:$0xff]
  %v11171 = vld [vmem:[%s6606 + $0x30] sm:$0xff]
  %v11172 = vld [vmem:[%s6606 + $0x38] sm:$0xff]
  %v11173 = vld [vmem:[%s6606 + $0x40] sm:$0xff]
  %v11174 = vld [vmem:[%s6606 + $0x48] sm:$0xff]
  %v11175 = vld [vmem:[%s6606 + $0x50] sm:$0xff]
  %v11176 = vld [vmem:[%s6606 + $0x58] sm:$0xff]
  %v11177 = vld [vmem:[%s6606 + $0x60] sm:$0xff]
  %v11178 = vld [vmem:[%s6606 + $0x68] sm:$0xff]
  %v11179 = vld [vmem:[%s6606 + $0x70] sm:$0xff]
  %v11180 = vld [vmem:[%s6606 + $0x78] sm:$0xff]
  %v11181 = vld [vmem:[%s6606 + $0x80] sm:$0xff]
  %v11182 = vld [vmem:[%s6606 + $0x88] sm:$0xff]
  %v11183 = vld [vmem:[%s6606 + $0x90] sm:$0xff]
  %v11184 = vld [vmem:[%s6606 + $0x98] sm:$0xff]
  %v11185 = vld [vmem:[%s6606 + $0xa0] sm:$0xff]
  %v11186 = vld [vmem:[%s6606 + $0xa8] sm:$0xff]
  %v11187 = vld [vmem:[%s6606 + $0xb0] sm:$0xff]
  %v11188 = vld [vmem:[%s6606 + $0xb8] sm:$0xff]
  %v11189 = vld [vmem:[%s6606 + $0xc0] sm:$0xff]
  %v11190 = vld [vmem:[%s6606 + $0xc8] sm:$0xff]
  %v11191 = vld [vmem:[%s6606 + $0xd0] sm:$0xff]
  %v11192 = vld [vmem:[%s6606 + $0xd8] sm:$0xff]
  %v11193 = vld [vmem:[%s6606 + $0xe0] sm:$0xff]
  %v11194 = vld [vmem:[%s6606 + $0xe8] sm:$0xff]
  %v11195 = vld [vmem:[%s6606 + $0xf0] sm:$0xff]
  %v11196 = vld [vmem:[%s6606 + $0xf8] sm:$0xff]
  %v11197 = vld [vmem:[%s6606 + $0x100] sm:$0xff]
  %v11198 = vld [vmem:[%s6606 + $0x108] sm:$0xff]
  %v11199 = vld [vmem:[%s6606 + $0x110] sm:$0xff]
  %v11200 = vld [vmem:[%s6606 + $0x118] sm:$0xff]
  %v11215 = vunpack.c.l.b16 %v11151
  %v11216 = vunpack.c.h.b16 %v11151
  %v11217 = vunpack.c.l.b16 %v11152
  %v11218 = vunpack.c.l.b16 %v11153
  %v11219 = vunpack.c.h.b16 %v11153
  %v11220 = vunpack.c.l.b16 %v11154
  %v11221 = vunpack.c.l.b16 %v11155
  %v11222 = vunpack.c.h.b16 %v11155
  %v11223 = vunpack.c.l.b16 %v11156
  %v11224 = vunpack.c.l.b16 %v11157
  %v11225 = vunpack.c.h.b16 %v11157
  %v11226 = vunpack.c.l.b16 %v11158
  %v11227 = vunpack.c.l.b16 %v11159
  %v11228 = vunpack.c.h.b16 %v11159
  %v11229 = vunpack.c.l.b16 %v11160
  %v11230 = vunpack.c.l.b16 %v11161
  %v11231 = vunpack.c.h.b16 %v11161
  %v11232 = vunpack.c.l.b16 %v11162
  %v11233 = vunpack.c.l.b16 %v11163
  %v11234 = vunpack.c.h.b16 %v11163
  %v11235 = vunpack.c.l.b16 %v11164
  %v11236 = vpack.c.b16 %v11218, %v11215
  %v11237 = vpack.c.b16 %v11219, %v11216
  %v11238 = vpack.c.b16 %v11220, %v11217
  %v11239 = vpack.c.b16 %v11224, %v11221
  %v11240 = vpack.c.b16 %v11225, %v11222
  %v11241 = vpack.c.b16 %v11226, %v11223
  %v11242 = vpack.c.b16 %v11230, %v11227
  %v11243 = vpack.c.b16 %v11231, %v11228
  %v11244 = vpack.c.b16 %v11232, %v11229
  %v11245 = vpack.c.b16 %v11233, %v11233
  %v11246 = vpack.c.b16 %v11234, %v11234
  %v11247 = vpack.c.b16 %v11235, %v11235
  %v11292 = vunpack.c.l.b16 %v11165
  %v11293 = vunpack.c.h.b16 %v11165
  %v11294 = vunpack.c.l.b16 %v11166
  %v11295 = vunpack.c.h.b16 %v11166
  %v11296 = vunpack.c.l.b16 %v11167
  %v11297 = vunpack.c.h.b16 %v11167
  %v11298 = vunpack.c.l.b16 %v11168
  %v11299 = vunpack.c.h.b16 %v11168
  %v11300 = vunpack.c.l.b16 %v11169
  %v11301 = vunpack.c.h.b16 %v11169
  %v11302 = vunpack.c.l.b16 %v11170
  %v11303 = vunpack.c.h.b16 %v11170
  %v11304 = vunpack.c.l.b16 %v11171
  %v11305 = vunpack.c.h.b16 %v11171
  %v11306 = vunpack.c.l.b16 %v11172
  %v11307 = vunpack.c.h.b16 %v11172
  %v11308 = vunpack.c.l.b16 %v11173
  %v11309 = vunpack.c.h.b16 %v11173
  %v11310 = vunpack.c.l.b16 %v11174
  %v11311 = vunpack.c.h.b16 %v11174
  %v11312 = vunpack.c.l.b16 %v11175
  %v11313 = vunpack.c.h.b16 %v11175
  %v11314 = vunpack.c.l.b16 %v11176
  %v11315 = vunpack.c.h.b16 %v11176
  %v11316 = vunpack.c.l.b16 %v11177
  %v11317 = vunpack.c.h.b16 %v11177
  %v11318 = vunpack.c.l.b16 %v11178
  %v11319 = vunpack.c.h.b16 %v11178
  %v11320 = vunpack.c.l.b16 %v11179
  %v11321 = vunpack.c.h.b16 %v11179
  %v11322 = vunpack.c.l.b16 %v11180
  %v11323 = vunpack.c.h.b16 %v11180
  %v11324 = vunpack.c.l.b16 %v11181
  %v11325 = vunpack.c.h.b16 %v11181
  %v11326 = vunpack.c.l.b16 %v11182
  %v11327 = vunpack.c.h.b16 %v11182
  %v11328 = vunpack.c.l.b16 %v11183
  %v11329 = vunpack.c.h.b16 %v11183
  %v11330 = vunpack.c.l.b16 %v11184
  %v11331 = vunpack.c.h.b16 %v11184
  %v11332 = vunpack.c.l.b16 %v11185
  %v11333 = vunpack.c.h.b16 %v11185
  %v11334 = vunpack.c.l.b16 %v11186
  %v11335 = vunpack.c.h.b16 %v11186
  %v11336 = vunpack.c.l.b16 %v11187
  %v11337 = vunpack.c.h.b16 %v11187
  %v11338 = vunpack.c.l.b16 %v11188
  %v11339 = vunpack.c.h.b16 %v11188
  %v11340 = vunpack.c.l.b16 %v11189
  %v11341 = vunpack.c.h.b16 %v11189
  %v11342 = vunpack.c.l.b16 %v11190
  %v11343 = vunpack.c.h.b16 %v11190
  %v11344 = vunpack.c.l.b16 %v11191
  %v11345 = vunpack.c.h.b16 %v11191
  %v11346 = vunpack.c.l.b16 %v11192
  %v11347 = vunpack.c.h.b16 %v11192
  %v11348 = vunpack.c.l.b16 %v11193
  %v11349 = vunpack.c.h.b16 %v11193
  %v11350 = vunpack.c.l.b16 %v11194
  %v11351 = vunpack.c.h.b16 %v11194
  %v11352 = vunpack.c.l.b16 %v11195
  %v11353 = vunpack.c.h.b16 %v11195
  %v11354 = vunpack.c.l.b16 %v11196
  %v11355 = vunpack.c.h.b16 %v11196
  %v11356 = vunpack.c.l.b16 %v11197
  %v11357 = vunpack.c.h.b16 %v11197
  %v11358 = vunpack.c.l.b16 %v11198
  %v11359 = vunpack.c.h.b16 %v11198
  %v11360 = vunpack.c.l.b16 %v11199
  %v11361 = vunpack.c.h.b16 %v11199
  %v11362 = vunpack.c.l.b16 %v11200
  %v11363 = vunpack.c.h.b16 %v11200
  %v11364 = vpack.c.b16 %v11294, %v11292
  %v11365 = vpack.c.b16 %v11295, %v11293
  %v11366 = vpack.c.b16 %v11298, %v11296
  %v11367 = vpack.c.b16 %v11299, %v11297
  %v11368 = vpack.c.b16 %v11302, %v11300
  %v11369 = vpack.c.b16 %v11303, %v11301
  %v11370 = vpack.c.b16 %v11306, %v11304
  %v11371 = vpack.c.b16 %v11307, %v11305
  %v11372 = vpack.c.b16 %v11310, %v11308
  %v11373 = vpack.c.b16 %v11311, %v11309
  %v11374 = vpack.c.b16 %v11314, %v11312
  %v11375 = vpack.c.b16 %v11315, %v11313
  %v11376 = vpack.c.b16 %v11318, %v11316
  %v11377 = vpack.c.b16 %v11319, %v11317
  %v11378 = vpack.c.b16 %v11322, %v11320
  %v11379 = vpack.c.b16 %v11323, %v11321
  %v11380 = vpack.c.b16 %v11326, %v11324
  %v11381 = vpack.c.b16 %v11327, %v11325
  %v11382 = vpack.c.b16 %v11330, %v11328
  %v11383 = vpack.c.b16 %v11331, %v11329
  %v11384 = vpack.c.b16 %v11334, %v11332
  %v11385 = vpack.c.b16 %v11335, %v11333
  %v11386 = vpack.c.b16 %v11338, %v11336
  %v11387 = vpack.c.b16 %v11339, %v11337
  %v11388 = vpack.c.b16 %v11342, %v11340
  %v11389 = vpack.c.b16 %v11343, %v11341
  %v11390 = vpack.c.b16 %v11346, %v11344
  %v11391 = vpack.c.b16 %v11347, %v11345
  %v11392 = vpack.c.b16 %v11350, %v11348
  %v11393 = vpack.c.b16 %v11351, %v11349
  %v11394 = vpack.c.b16 %v11354, %v11352
  %v11395 = vpack.c.b16 %v11355, %v11353
  %v11396 = vpack.c.b16 %v11358, %v11356
  %v11397 = vpack.c.b16 %v11359, %v11357
  %v11398 = vpack.c.b16 %v11362, %v11360
  %v11399 = vpack.c.b16 %v11363, %v11361
  %v11437 = vsel %vm277, %v11238, 0
  %v11440 = vsel %vm277, %v11241, 0
  %v11443 = vsel %vm277, %v11244, 0
  %v11446 = vsel %vm277, %v11247, 0
  %11448 = vmatprep.subr.bf16.mxu0 %v11365
  %11449 = vmatpush1.bf16.msra.mxu0 %v11364
  %11450 = vmatprep.subr.bf16.mxu0 %v11367
  %11451 = vmatpush1.bf16.msra.mxu0 %v11366
  %11452 = vmatprep.subr.bf16.mxu0 %v11369
  %11453 = vmatpush1.bf16.msra.mxu0 %v11368
  %11454 = vmatprep.subr.bf16.mxu0 %v11371
  %11455 = vmatpush1.bf16.msra.mxu0 %v11370
  %11456 = vmatprep.subr.bf16.mxu0 %v11373
  %11457 = vmatpush1.bf16.msra.mxu0 %v11372
  %11458 = vmatprep.subr.bf16.mxu0 %v11375
  %11459 = vmatpush1.bf16.msra.mxu0 %v11374
  %11460 = vmatprep.subr.bf16.mxu0 %v11377
  %11461 = vmatpush1.bf16.msra.mxu0 %v11376
  %11462 = vmatprep.subr.bf16.mxu0 %v11379
  %11463 = vmatpush1.bf16.msra.mxu0 %v11378
  %11464 = vmatprep.subr.bf16.mxu0 %v11381
  %11465 = vmatpush1.bf16.msra.mxu0 %v11380
  %11466 = vmatprep.subr.bf16.mxu0 %v11383
  %11467 = vmatpush1.bf16.msra.mxu0 %v11382
  %11468 = vmatprep.subr.bf16.mxu0 %v11385
  %11469 = vmatpush1.bf16.msra.mxu0 %v11384
  %11470 = vmatprep.subr.bf16.mxu0 %v11387
  %11471 = vmatpush1.bf16.msra.mxu0 %v11386
  %11472 = vmatprep.subr.bf16.mxu0 %v11389
  %11473 = vmatpush1.bf16.msra.mxu0 %v11388
  %11474 = vmatprep.subr.bf16.mxu0 %v11391
  %11475 = vmatpush1.bf16.msra.mxu0 %v11390
  %11476 = vmatprep.subr.bf16.mxu0 %v11393
  %11477 = vmatpush1.bf16.msra.mxu0 %v11392
  %11478 = vmatprep.subr.bf16.mxu0 %v11395
  %11479 = vmatpush1.bf16.msra.mxu0 %v11394
  %11480 = vmatprep.mubr.bf16.mxu0 %v11237
  %11481 = vmatmul.mubr.bf16.gmra.mrb[0].mxu0 %v11236
  %v11482 = vpop.f32.mrb[0].mxu0
  %v11483 = vadd.f32 0.0, %v11482
  %v11484 = vpop.f32.mrb[0].mxu0
  %v11485 = vadd.f32 0.0, %v11484
  %v11486 = vpop.f32.mrb[0].mxu0
  %v11487 = vadd.f32 0.0, %v11486
  %v11488 = vpop.f32.mrb[0].mxu0
  %v11489 = vadd.f32 0.0, %v11488
  %11490 = vmatprep.mubr.bf16.mxu0 %v11240
  %11491 = vmatmul.mubr.bf16.gmra.mrb[0].mxu0 %v11239
  %v11492 = vpop.f32.mrb[0].mxu0
  %v11493 = vadd.f32 0.0, %v11492
  %v11494 = vpop.f32.mrb[0].mxu0
  %v11495 = vadd.f32 0.0, %v11494
  %v11496 = vpop.f32.mrb[0].mxu0
  %v11497 = vadd.f32 0.0, %v11496
  %v11498 = vpop.f32.mrb[0].mxu0
  %v11499 = vadd.f32 0.0, %v11498
  %11500 = vmatprep.mubr.bf16.mxu0 %v11243
  %11501 = vmatmul.mubr.bf16.gmra.mrb[0].mxu0 %v11242
  %v11502 = vpop.f32.mrb[0].mxu0
  %v11503 = vadd.f32 0.0, %v11502
  %v11504 = vpop.f32.mrb[0].mxu0
  %v11505 = vadd.f32 0.0, %v11504
  %v11506 = vpop.f32.mrb[0].mxu0
  %v11507 = vadd.f32 0.0, %v11506
  %v11508 = vpop.f32.mrb[0].mxu0
  %v11509 = vadd.f32 0.0, %v11508
  %11510 = vmatprep.mubr.bf16.mxu0 %v11246
  %11511 = vmatmul.mubr.bf16.gmra.mrb[0].mxu0 %v11245
  %v11512 = vpop.f32.mrb[0].mxu0
  %v11513 = vadd.f32 0.0, %v11512
  %v11514 = vpop.f32.mrb[0].mxu0
  %v11515 = vadd.f32 0.0, %v11514
  %v11516 = vpop.f32.mrb[0].mxu0
  %v11517 = vpop.f32.mrb[0].mxu0
  %11518 = vdwg.mxu0
  %11519 = vmatprep.subr.bf16.mxu0 %v11397
  %11520 = vmatpush1.bf16.msra.mxu0 %v11396
  %11521 = vmatprep.subr.bf16.mxu0 %v11399
  %11522 = vmatpush1.bf16.msra.mxu0 %v11398
  %11523 = vmatprep.subr.bf16.mxu0 0
  %11524 = vmatpush1.bf16.msra.mxu0 0
  %11525 = vmatprep.subr.bf16.mxu0 0
  %11526 = vmatpush1.bf16.msra.mxu0 0
  %11527 = vmatprep.subr.bf16.mxu0 0
  %11528 = vmatpush1.bf16.msra.mxu0 0
  %11529 = vmatprep.subr.bf16.mxu0 0
  %11530 = vmatpush1.bf16.msra.mxu0 0
  %11531 = vmatprep.subr.bf16.mxu0 0
  %11532 = vmatpush1.bf16.msra.mxu0 0
  %11533 = vmatprep.subr.bf16.mxu0 0
  %11534 = vmatpush1.bf16.msra.mxu0 0
  %11535 = vmatprep.subr.bf16.mxu0 0
  %11536 = vmatpush1.bf16.msra.mxu0 0
  %11537 = vmatprep.subr.bf16.mxu0 0
  %11538 = vmatpush1.bf16.msra.mxu0 0
  %11539 = vmatprep.subr.bf16.mxu0 0
  %11540 = vmatpush1.bf16.msra.mxu0 0
  %11541 = vmatprep.subr.bf16.mxu0 0
  %11542 = vmatpush1.bf16.msra.mxu0 0
  %11543 = vmatprep.subr.bf16.mxu0 0
  %11544 = vmatpush1.bf16.msra.mxu0 0
  %11545 = vmatprep.subr.bf16.mxu0 0
  %11546 = vmatpush1.bf16.msra.mxu0 0
  %11547 = vmatprep.subr.bf16.mxu0 0
  %11548 = vmatpush1.bf16.msra.mxu0 0
  %11549 = vmatprep.subr.bf16.mxu0 0
  %11550 = vmatpush1.bf16.msra.mxu0 0
  %11551 = vmatprep.mubr.bf16.mxu0 0
  %11552 = vmatmul.mubr.bf16.gmra.mrb[0].mxu0 %v11437
  %v11553 = vpop.f32.mrb[0].mxu0
  %v11554 = vadd.f32 %v11483, %v11553
  %v11555 = vpop.f32.mrb[0].mxu0
  %v11556 = vadd.f32 %v11485, %v11555
  %v11557 = vpop.f32.mrb[0].mxu0
  %v11558 = vadd.f32 %v11487, %v11557
  %v11559 = vpop.f32.mrb[0].mxu0
  %v11560 = vadd.f32 %v11489, %v11559
  %11561 = vmatprep.mubr.bf16.mxu0 0
  %11562 = vmatmul.mubr.bf16.gmra.mrb[0].mxu0 %v11440
  %v11563 = vpop.f32.mrb[0].mxu0
  %v11564 = vadd.f32 %v11493, %v11563
  %v11565 = vpop.f32.mrb[0].mxu0
  %v11566 = vadd.f32 %v11495, %v11565
  %v11567 = vpop.f32.mrb[0].mxu0
  %v11568 = vadd.f32 %v11497, %v11567
  %v11569 = vpop.f32.mrb[0].mxu0
  %v11570 = vadd.f32 %v11499, %v11569
  %11571 = vmatprep.mubr.bf16.mxu0 0
  %11572 = vmatmul.mubr.bf16.gmra.mrb[0].mxu0 %v11443
  %v11573 = vpop.f32.mrb[0].mxu0
  %v11574 = vadd.f32 %v11503, %v11573
  %v11575 = vpop.f32.mrb[0].mxu0
  %v11576 = vadd.f32 %v11505, %v11575
  %v11577 = vpop.f32.mrb[0].mxu0
  %v11578 = vadd.f32 %v11507, %v11577
  %v11579 = vpop.f32.mrb[0].mxu0
  %v11580 = vadd.f32 %v11509, %v11579
  %11581 = vmatprep.mubr.bf16.mxu0 0
  %11582 = vmatmul.mubr.bf16.gmra.mrb[0].mxu0 %v11446
  %v11583 = vpop.f32.mrb[0].mxu0
  %v11584 = vadd.f32 %v11513, %v11583
  %v11585 = vpop.f32.mrb[0].mxu0
  %v11586 = vadd.f32 %v11515, %v11585
  %v11587 = vpop.f32.mrb[0].mxu0
  %v11588 = vpop.f32.mrb[0].mxu0
  %11589 = vdwg.mxu0
  %v11590 = vadd.f32 %v11137, %v11554
  %v11591 = vadd.f32 %v11138, %v11556
  %v11592 = vadd.f32 %v11139, %v11558
  %v11593 = vadd.f32 %v11140, %v11560
  %v11594 = vadd.f32 %v11141, %v11564
  %v11595 = vadd.f32 %v11142, %v11566
  %v11596 = vadd.f32 %v11143, %v11568
  %v11597 = vadd.f32 %v11144, %v11570
  %v11598 = vadd.f32 %v11145, %v11574
  %v11599 = vadd.f32 %v11146, %v11576
  %v11600 = vadd.f32 %v11147, %v11578
  %v11601 = vadd.f32 %v11148, %v11580
  %v11602 = vadd.f32 %v11149, %v11584
  %v11603 = vadd.f32 %v11150, %v11586
  %v11604 = vld [vmem:[#allocation3] sm:$0xff]
  %v11605 = vld [vmem:[#allocation3 + $0x8] sm:$0xff]
  %v11606 = vld [vmem:[#allocation3 + $0x10] sm:$0xff]
  %v11607 = vld [vmem:[#allocation3 + $0x18] sm:$0xff]
  %v11608 = vld [vmem:[#allocation3 + $0x20] sm:$0xff]
  %v11609 = vld [vmem:[#allocation3 + $0x28] sm:$0xff]
  %v11610 = vld [vmem:[#allocation3 + $0x30] sm:$0xff]
  %v11611 = vld [vmem:[#allocation3 + $0x38] sm:$0xff]
  %v11612 = vld [vmem:[#allocation3 + $0x40] sm:$0xff]
  %v11613 = vld [vmem:[#allocation3 + $0x48] sm:$0xff]
  %v11614 = vld [vmem:[#allocation3 + $0x50] sm:$0xff]
  %v11615 = vld [vmem:[#allocation3 + $0x58] sm:$0xff]
  %v11616 = vld [vmem:[#allocation3 + $0x60] sm:$0xff]
  %v11617 = vld [vmem:[#allocation3 + $0x68] sm:$0xff]
  %v11618 = vmax.f32 %v11604, %v11590
  %v11619 = vmax.f32 %v11605, %v11591
  %v11620 = vmax.f32 %v11606, %v11592
  %v11621 = vmax.f32 %v11607, %v11593
  %v11622 = vmax.f32 %v11608, %v11594
  %v11623 = vmax.f32 %v11609, %v11595
  %v11624 = vmax.f32 %v11610, %v11596
  %v11625 = vmax.f32 %v11611, %v11597
  %v11626 = vmax.f32 %v11612, %v11598
  %v11627 = vmax.f32 %v11613, %v11599
  %v11628 = vmax.f32 %v11614, %v11600
  %v11629 = vmax.f32 %v11615, %v11601
  %v11630 = vmax.f32 %v11616, %v11602
  %v11631 = vmax.f32 %v11617, %v11603
  %11632 = vst [vmem:[#allocation3] sm:$0xff] %v11618
  %11633 = vst.msk [vmem:[#allocation3 + $0x8] sm:$0xff] %vm4790, %v11619
  %11634 = vst [vmem:[#allocation3 + $0x10] sm:$0xff] %v11620
  %11635 = vst.msk [vmem:[#allocation3 + $0x18] sm:$0xff] %vm4790, %v11621
  %11636 = vst [vmem:[#allocation3 + $0x20] sm:$0xff] %v11622
  %11637 = vst.msk [vmem:[#allocation3 + $0x28] sm:$0xff] %vm4790, %v11623
  %11638 = vst [vmem:[#allocation3 + $0x30] sm:$0xff] %v11624
  %11639 = vst.msk [vmem:[#allocation3 + $0x38] sm:$0xff] %vm4790, %v11625
  %11640 = vst [vmem:[#allocation3 + $0x40] sm:$0xff] %v11626
  %11641 = vst.msk [vmem:[#allocation3 + $0x48] sm:$0xff] %vm4790, %v11627
  %11642 = vst [vmem:[#allocation3 + $0x50] sm:$0xff] %v11628
  %11643 = vst.msk [vmem:[#allocation3 + $0x58] sm:$0xff] %vm4790, %v11629
  %11644 = vst [vmem:[#allocation3 + $0x60] sm:$0xff] %v11630
  %11645 = vst.msk [vmem:[#allocation3 + $0x68] sm:$0xff] %vm4790, %v11631
  %v11646 = vld [vmem:[#allocation3] sm:$0xff]
  %v11647 = vld [vmem:[#allocation3 + $0x8] sm:$0xff]
  %v11648 = vld [vmem:[#allocation3 + $0x10] sm:$0xff]
  %v11649 = vld [vmem:[#allocation3 + $0x18] sm:$0xff]
  %v11650 = vld [vmem:[#allocation3 + $0x20] sm:$0xff]
  %v11651 = vld [vmem:[#allocation3 + $0x28] sm:$0xff]
  %v11652 = vld [vmem:[#allocation3 + $0x30] sm:$0xff]
  %v11653 = vld [vmem:[#allocation3 + $0x38] sm:$0xff]
  %v11654 = vld [vmem:[#allocation3 + $0x40] sm:$0xff]
  %v11655 = vld [vmem:[#allocation3 + $0x48] sm:$0xff]
  %v11656 = vld [vmem:[#allocation3 + $0x50] sm:$0xff]
  %v11657 = vld [vmem:[#allocation3 + $0x58] sm:$0xff]
  %v11658 = vld [vmem:[#allocation3 + $0x60] sm:$0xff]
  %v11659 = vld [vmem:[#allocation3 + $0x68] sm:$0xff]
  %v11660 = vld [vmem:[%s4] sm:$0x3]
  %v11662 = vlaneseq
  %v11663 = vshrl.u32 %v11662, 7
  %v11664 = vsub.s32 0, %v11663
  %v11665 = vrot.slane %v11660, %v11664
  %v11666 = vlaneseq
  %v11667 = vshrl.u32 %v11666, 7
  %v11668 = vsub.s32 1, %v11667
  %v11669 = vrot.slane %v11660, %v11668
  %v11672 = vadd.f32 %v11646, %v11665
  %v11673 = vadd.f32 %v11647, %v11669
  %v11674 = vadd.f32 %v11648, %v11665
  %v11675 = vadd.f32 %v11649, %v11669
  %v11676 = vadd.f32 %v11650, %v11665
  %v11677 = vadd.f32 %v11651, %v11669
  %v11678 = vadd.f32 %v11652, %v11665
  %v11679 = vadd.f32 %v11653, %v11669
  %v11680 = vadd.f32 %v11654, %v11665
  %v11681 = vadd.f32 %v11655, %v11669
  %v11682 = vadd.f32 %v11656, %v11665
  %v11683 = vadd.f32 %v11657, %v11669
  %v11684 = vadd.f32 %v11658, %v11665
  %v11685 = vadd.f32 %v11659, %v11669
  %v11686 = vmax.f32 %v11672, 0.0
  %v11687 = vmax.f32 %v11673, 0.0
  %v11688 = vmax.f32 %v11674, 0.0
  %v11689 = vmax.f32 %v11675, 0.0
  %v11690 = vmax.f32 %v11676, 0.0
  %v11691 = vmax.f32 %v11677, 0.0
  %v11692 = vmax.f32 %v11678, 0.0
  %v11693 = vmax.f32 %v11679, 0.0
  %v11694 = vmax.f32 %v11680, 0.0
  %v11695 = vmax.f32 %v11681, 0.0
  %v11696 = vmax.f32 %v11682, 0.0
  %v11697 = vmax.f32 %v11683, 0.0
  %v11698 = vmax.f32 %v11684, 0.0
  %v11699 = vmax.f32 %v11685, 0.0
  %v11700 = vpack.c.bf16 %v11688, %v11686
  %v11701 = vpack.c.bf16 %v11689, %v11687
  %v11702 = vpack.c.bf16 %v11692, %v11690
  %v11703 = vpack.c.bf16 %v11693, %v11691
  %v11704 = vpack.c.bf16 %v11696, %v11694
  %v11705 = vpack.c.bf16 %v11697, %v11695
  %v11706 = vpack.c.bf16 %v11698, %v11698
  %v11707 = vpack.c.bf16 %v11699, %v11699
  %v11708 = vld [vmem:[%s5] sm:$0xf]
  %v11709 = vld [vmem:[%s5 + $0x4] sm:$0xf]
  %v11710 = vld [vmem:[%s5 + $0x8] sm:$0xf]
  %v11711 = vld [vmem:[%s5 + $0xc] sm:$0xf]
  %v11712 = vld [vmem:[%s5 + $0x10] sm:$0xf]
  %v11713 = vld [vmem:[%s5 + $0x14] sm:$0xf]
  %v11714 = vld [vmem:[%s5 + $0x18] sm:$0xf]
  %v11715 = vld [vmem:[%s5 + $0x1c] sm:$0xf]
  %v11716 = vld [vmem:[%s5 + $0x20] sm:$0xf]
  %v11717 = vld [vmem:[%s5 + $0x24] sm:$0xf]
  %v11718 = vld [vmem:[%s5 + $0x28] sm:$0xf]
  %v11719 = vld [vmem:[%s5 + $0x2c] sm:$0xf]
  %v11720 = vld [vmem:[%s5 + $0x30] sm:$0xf]
  %v11721 = vld [vmem:[%s5 + $0x34] sm:$0xf]
  %v11722 = vld [vmem:[%s5 + $0x38] sm:$0xf]
  %v11723 = vld [vmem:[%s5 + $0x3c] sm:$0xf]
  %v11724 = vld [vmem:[%s5 + $0x40] sm:$0xf]
  %v11725 = vld [vmem:[%s5 + $0x44] sm:$0xf]
  %v11726 = vld [vmem:[%s5 + $0x48] sm:$0xf]
  %v11727 = vld [vmem:[%s5 + $0x4c] sm:$0xf]
  %v11728 = vld [vmem:[%s5 + $0x50] sm:$0xf]
  %v11729 = vld [vmem:[%s5 + $0x54] sm:$0xf]
  %v11730 = vld [vmem:[%s5 + $0x58] sm:$0xf]
  %v11731 = vld [vmem:[%s5 + $0x5c] sm:$0xf]
  %v11732 = vld [vmem:[%s5 + $0x60] sm:$0xf]
  %v11733 = vld [vmem:[%s5 + $0x64] sm:$0xf]
  %v11734 = vld [vmem:[%s5 + $0x68] sm:$0xf]
  %v11735 = vld [vmem:[%s5 + $0x6c] sm:$0xf]
  %s11736 = scalar_lea.vmem %s5, 112
  %v11737 = vld [vmem:[%s11736] sm:$0xf]
  %v11738 = vld [vmem:[%s11736 + $0x4] sm:$0xf]
  %v11739 = vld [vmem:[%s11736 + $0x8] sm:$0xf]
  %v11740 = vld [vmem:[%s11736 + $0xc] sm:$0xf]
  %v11741 = vld [vmem:[%s11736 + $0x10] sm:$0xf]
  %v11742 = vld [vmem:[%s11736 + $0x14] sm:$0xf]
  %v11743 = vld [vmem:[%s11736 + $0x18] sm:$0xf]
  %v11744 = vld [vmem:[%s11736 + $0x1c] sm:$0xf]
  %v11745 = vld [vmem:[%s11736 + $0x20] sm:$0xf]
  %v11746 = vld [vmem:[%s11736 + $0x24] sm:$0xf]
  %v11747 = vld [vmem:[%s11736 + $0x28] sm:$0xf]
  %v11748 = vld [vmem:[%s11736 + $0x2c] sm:$0xf]
  %v11749 = vld [vmem:[%s11736 + $0x30] sm:$0xf]
  %v11750 = vld [vmem:[%s11736 + $0x34] sm:$0xf]
  %v11751 = vld [vmem:[%s11736 + $0x38] sm:$0xf]
  %v11752 = vld [vmem:[%s11736 + $0x3c] sm:$0xf]
  %v11753 = vld [vmem:[%s11736 + $0x40] sm:$0xf]
  %v11754 = vld [vmem:[%s11736 + $0x44] sm:$0xf]
  %v11755 = vld [vmem:[%s11736 + $0x48] sm:$0xf]
  %v11756 = vld [vmem:[%s11736 + $0x4c] sm:$0xf]
  %v11757 = vld [vmem:[%s11736 + $0x50] sm:$0xf]
  %v11758 = vld [vmem:[%s11736 + $0x54] sm:$0xf]
  %v11759 = vld [vmem:[%s11736 + $0x58] sm:$0xf]
  %v11760 = vld [vmem:[%s11736 + $0x5c] sm:$0xf]
  %v11761 = vld [vmem:[%s11736 + $0x60] sm:$0xf]
  %v11762 = vld [vmem:[%s11736 + $0x64] sm:$0xf]
  %v11763 = vld [vmem:[%s11736 + $0x68] sm:$0xf]
  %v11764 = vld [vmem:[%s11736 + $0x6c] sm:$0xf]
  %v11767 = vrot.slane %v11700, 4
  %v11768 = vrot.slane %v11701, 4
  %v11798 = vunpack.c.l.b16 %v11737
  %v11799 = vunpack.c.l.b16 %v11738
  %v11800 = vunpack.c.l.b16 %v11739
  %v11801 = vunpack.c.l.b16 %v11740
  %v11802 = vunpack.c.l.b16 %v11741
  %v11803 = vunpack.c.l.b16 %v11742
  %v11804 = vunpack.c.l.b16 %v11743
  %v11805 = vunpack.c.l.b16 %v11744
  %v11806 = vunpack.c.l.b16 %v11745
  %v11807 = vunpack.c.l.b16 %v11746
  %v11808 = vunpack.c.l.b16 %v11747
  %v11809 = vunpack.c.l.b16 %v11748
  %v11810 = vunpack.c.l.b16 %v11749
  %v11811 = vunpack.c.l.b16 %v11750
  %v11812 = vunpack.c.l.b16 %v11751
  %v11813 = vunpack.c.l.b16 %v11752
  %v11814 = vunpack.c.l.b16 %v11753
  %v11815 = vunpack.c.l.b16 %v11754
  %v11816 = vunpack.c.l.b16 %v11755
  %v11817 = vunpack.c.l.b16 %v11756
  %v11818 = vunpack.c.l.b16 %v11757
  %v11819 = vunpack.c.l.b16 %v11758
  %v11820 = vunpack.c.l.b16 %v11759
  %v11821 = vunpack.c.l.b16 %v11760
  %v11822 = vunpack.c.l.b16 %v11761
  %v11823 = vunpack.c.l.b16 %v11762
  %v11824 = vunpack.c.l.b16 %v11763
  %v11825 = vunpack.c.l.b16 %v11764
  %v11826 = vpack.c.b16 %v11799, %v11798
  %v11827 = vpack.c.b16 %v11801, %v11800
  %v11828 = vpack.c.b16 %v11803, %v11802
  %v11829 = vpack.c.b16 %v11805, %v11804
  %v11830 = vpack.c.b16 %v11807, %v11806
  %v11831 = vpack.c.b16 %v11809, %v11808
  %v11832 = vpack.c.b16 %v11811, %v11810
  %v11833 = vpack.c.b16 %v11813, %v11812
  %v11834 = vpack.c.b16 %v11815, %v11814
  %v11835 = vpack.c.b16 %v11817, %v11816
  %v11836 = vpack.c.b16 %v11819, %v11818
  %v11837 = vpack.c.b16 %v11821, %v11820
  %v11838 = vpack.c.b16 %v11823, %v11822
  %v11839 = vpack.c.b16 %v11825, %v11824
  %v11855 = vsel %vm4790, %v11768, 0
  %11857 = vmatprep.subr.bf16.mxu0 0
  %11858 = vmatpush1.bf16.msra.mxu0 %v11826
  %11859 = vmatprep.subr.bf16.mxu0 0
  %11860 = vmatpush1.bf16.msra.mxu0 %v11827
  %11861 = vmatprep.subr.bf16.mxu0 0
  %11862 = vmatpush1.bf16.msra.mxu0 %v11828
  %11863 = vmatprep.subr.bf16.mxu0 0
  %11864 = vmatpush1.bf16.msra.mxu0 %v11829
  %11865 = vmatprep.subr.bf16.mxu0 0
  %11866 = vmatpush1.bf16.msra.mxu0 %v11830
  %11867 = vmatprep.subr.bf16.mxu0 0
  %11868 = vmatpush1.bf16.msra.mxu0 %v11831
  %11869 = vmatprep.subr.bf16.mxu0 0
  %11870 = vmatpush1.bf16.msra.mxu0 %v11832
  %11871 = vmatprep.subr.bf16.mxu0 0
  %11872 = vmatpush1.bf16.msra.mxu0 %v11833
  %11873 = vmatprep.subr.bf16.mxu0 0
  %11874 = vmatpush1.bf16.msra.mxu0 %v11834
  %11875 = vmatprep.subr.bf16.mxu0 0
  %11876 = vmatpush1.bf16.msra.mxu0 %v11835
  %11877 = vmatprep.subr.bf16.mxu0 0
  %11878 = vmatpush1.bf16.msra.mxu0 %v11836
  %11879 = vmatprep.subr.bf16.mxu0 0
  %11880 = vmatpush1.bf16.msra.mxu0 %v11837
  %11881 = vmatprep.subr.bf16.mxu0 0
  %11882 = vmatpush1.bf16.msra.mxu0 %v11838
  %11883 = vmatprep.subr.bf16.mxu0 0
  %11884 = vmatpush1.bf16.msra.mxu0 %v11839
  %11885 = vmatprep.subr.bf16.mxu0 0
  %11886 = vmatpush1.bf16.msra.mxu0 0
  %11887 = vmatprep.subr.bf16.mxu0 0
  %11888 = vmatpush1.bf16.msra.mxu0 0
  %11889 = vmatprep.mubr.bf16.mxu0 %v11855
  %11890 = vmatmul.mubr.bf16.gmra.mrb[0].mxu0 %v11767
  %v11891 = vpop.f32.mrb[0].mxu0
  %v11892 = vadd.f32 0.0, %v11891
  %v11893 = vpop.f32.mrb[0].mxu0
  %v11894 = vpop.f32.mrb[0].mxu0
  %v11895 = vpop.f32.mrb[0].mxu0
  %11896 = vdwg.mxu0
  %v11925 = vunpack.c.l.b16 %v11708
  %v11926 = vunpack.c.l.b16 %v11709
  %v11927 = vunpack.c.l.b16 %v11710
  %v11928 = vunpack.c.l.b16 %v11711
  %v11929 = vunpack.c.l.b16 %v11712
  %v11930 = vunpack.c.l.b16 %v11713
  %v11931 = vunpack.c.l.b16 %v11714
  %v11932 = vunpack.c.l.b16 %v11715
  %v11933 = vunpack.c.l.b16 %v11716
  %v11934 = vunpack.c.l.b16 %v11717
  %v11935 = vunpack.c.l.b16 %v11718
  %v11936 = vunpack.c.l.b16 %v11719
  %v11937 = vunpack.c.l.b16 %v11720
  %v11938 = vunpack.c.l.b16 %v11721
  %v11939 = vunpack.c.l.b16 %v11722
  %v11940 = vunpack.c.l.b16 %v11723
  %v11941 = vunpack.c.l.b16 %v11724
  %v11942 = vunpack.c.l.b16 %v11725
  %v11943 = vunpack.c.l.b16 %v11726
  %v11944 = vunpack.c.l.b16 %v11727
  %v11945 = vunpack.c.l.b16 %v11728
  %v11946 = vunpack.c.l.b16 %v11729
  %v11947 = vunpack.c.l.b16 %v11730
  %v11948 = vunpack.c.l.b16 %v11731
  %v11949 = vunpack.c.l.b16 %v11732
  %v11950 = vunpack.c.l.b16 %v11733
  %v11951 = vunpack.c.l.b16 %v11734
  %v11952 = vunpack.c.l.b16 %v11735
  %v11953 = vpack.c.b16 %v11926, %v11925
  %v11954 = vpack.c.b16 %v11928, %v11927
  %v11955 = vpack.c.b16 %v11930, %v11929
  %v11956 = vpack.c.b16 %v11932, %v11931
  %v11957 = vpack.c.b16 %v11934, %v11933
  %v11958 = vpack.c.b16 %v11936, %v11935
  %v11959 = vpack.c.b16 %v11938, %v11937
  %v11960 = vpack.c.b16 %v11940, %v11939
  %v11961 = vpack.c.b16 %v11942, %v11941
  %v11962 = vpack.c.b16 %v11944, %v11943
  %v11963 = vpack.c.b16 %v11946, %v11945
  %v11964 = vpack.c.b16 %v11948, %v11947
  %v11965 = vpack.c.b16 %v11950, %v11949
  %v11966 = vpack.c.b16 %v11952, %v11951
  %v11982 = vsel %vm4790, %v11701, 0
  %11984 = vmatprep.subr.bf16.mxu0 0
  %11985 = vmatpush1.bf16.msra.mxu0 %v11953
  %11986 = vmatprep.subr.bf16.mxu0 0
  %11987 = vmatpush1.bf16.msra.mxu0 %v11954
  %11988 = vmatprep.subr.bf16.mxu0 0
  %11989 = vmatpush1.bf16.msra.mxu0 %v11955
  %11990 = vmatprep.subr.bf16.mxu0 0
  %11991 = vmatpush1.bf16.msra.mxu0 %v11956
  %11992 = vmatprep.subr.bf16.mxu0 0
  %11993 = vmatpush1.bf16.msra.mxu0 %v11957
  %11994 = vmatprep.subr.bf16.mxu0 0
  %11995 = vmatpush1.bf16.msra.mxu0 %v11958
  %11996 = vmatprep.subr.bf16.mxu0 0
  %11997 = vmatpush1.bf16.msra.mxu0 %v11959
  %11998 = vmatprep.subr.bf16.mxu0 0
  %11999 = vmatpush1.bf16.msra.mxu0 %v11960
  %12000 = vmatprep.subr.bf16.mxu0 0
  %12001 = vmatpush1.bf16.msra.mxu0 %v11961
  %12002 = vmatprep.subr.bf16.mxu0 0
  %12003 = vmatpush1.bf16.msra.mxu0 %v11962
  %12004 = vmatprep.subr.bf16.mxu0 0
  %12005 = vmatpush1.bf16.msra.mxu0 %v11963
  %12006 = vmatprep.subr.bf16.mxu0 0
  %12007 = vmatpush1.bf16.msra.mxu0 %v11964
  %12008 = vmatprep.subr.bf16.mxu0 0
  %12009 = vmatpush1.bf16.msra.mxu0 %v11965
  %12010 = vmatprep.subr.bf16.mxu0 0
  %12011 = vmatpush1.bf16.msra.mxu0 %v11966
  %12012 = vmatprep.subr.bf16.mxu0 0
  %12013 = vmatpush1.bf16.msra.mxu0 0
  %12014 = vmatprep.subr.bf16.mxu0 0
  %12015 = vmatpush1.bf16.msra.mxu0 0
  %12016 = vmatprep.mubr.bf16.mxu0 %v11982
  %12017 = vmatmul.mubr.bf16.gmra.mrb[0].mxu0 %v11700
  %v12018 = vpop.f32.mrb[0].mxu0
  %v12019 = vadd.f32 %v11892, %v12018
  %v12020 = vpop.f32.mrb[0].mxu0
  %v12021 = vpop.f32.mrb[0].mxu0
  %v12022 = vpop.f32.mrb[0].mxu0
  %12023 = vdwg.mxu0
  %s12024 = scalar_lea.vmem %s5, 224
  %v12025 = vld [vmem:[%s12024] sm:$0xf]
  %v12026 = vld [vmem:[%s12024 + $0x4] sm:$0xf]
  %v12027 = vld [vmem:[%s12024 + $0x8] sm:$0xf]
  %v12028 = vld [vmem:[%s12024 + $0xc] sm:$0xf]
  %v12029 = vld [vmem:[%s12024 + $0x10] sm:$0xf]
  %v12030 = vld [vmem:[%s12024 + $0x14] sm:$0xf]
  %v12031 = vld [vmem:[%s12024 + $0x18] sm:$0xf]
  %v12032 = vld [vmem:[%s12024 + $0x1c] sm:$0xf]
  %v12033 = vld [vmem:[%s12024 + $0x20] sm:$0xf]
  %v12034 = vld [vmem:[%s12024 + $0x24] sm:$0xf]
  %v12035 = vld [vmem:[%s12024 + $0x28] sm:$0xf]
  %v12036 = vld [vmem:[%s12024 + $0x2c] sm:$0xf]
  %v12037 = vld [vmem:[%s12024 + $0x30] sm:$0xf]
  %v12038 = vld [vmem:[%s12024 + $0x34] sm:$0xf]
  %v12039 = vld [vmem:[%s12024 + $0x38] sm:$0xf]
  %v12040 = vld [vmem:[%s12024 + $0x3c] sm:$0xf]
  %v12041 = vld [vmem:[%s12024 + $0x40] sm:$0xf]
  %v12042 = vld [vmem:[%s12024 + $0x44] sm:$0xf]
  %v12043 = vld [vmem:[%s12024 + $0x48] sm:$0xf]
  %v12044 = vld [vmem:[%s12024 + $0x4c] sm:$0xf]
  %v12045 = vld [vmem:[%s12024 + $0x50] sm:$0xf]
  %v12046 = vld [vmem:[%s12024 + $0x54] sm:$0xf]
  %v12047 = vld [vmem:[%s12024 + $0x58] sm:$0xf]
  %v12048 = vld [vmem:[%s12024 + $0x5c] sm:$0xf]
  %v12049 = vld [vmem:[%s12024 + $0x60] sm:$0xf]
  %v12050 = vld [vmem:[%s12024 + $0x64] sm:$0xf]
  %v12051 = vld [vmem:[%s12024 + $0x68] sm:$0xf]
  %v12052 = vld [vmem:[%s12024 + $0x6c] sm:$0xf]
  %v12081 = vunpack.c.l.b16 %v12025
  %v12082 = vunpack.c.l.b16 %v12026
  %v12083 = vunpack.c.l.b16 %v12027
  %v12084 = vunpack.c.l.b16 %v12028
  %v12085 = vunpack.c.l.b16 %v12029
  %v12086 = vunpack.c.l.b16 %v12030
  %v12087 = vunpack.c.l.b16 %v12031
  %v12088 = vunpack.c.l.b16 %v12032
  %v12089 = vunpack.c.l.b16 %v12033
  %v12090 = vunpack.c.l.b16 %v12034
  %v12091 = vunpack.c.l.b16 %v12035
  %v12092 = vunpack.c.l.b16 %v12036
  %v12093 = vunpack.c.l.b16 %v12037
  %v12094 = vunpack.c.l.b16 %v12038
  %v12095 = vunpack.c.l.b16 %v12039
  %v12096 = vunpack.c.l.b16 %v12040
  %v12097 = vunpack.c.l.b16 %v12041
  %v12098 = vunpack.c.l.b16 %v12042
  %v12099 = vunpack.c.l.b16 %v12043
  %v12100 = vunpack.c.l.b16 %v12044
  %v12101 = vunpack.c.l.b16 %v12045
  %v12102 = vunpack.c.l.b16 %v12046
  %v12103 = vunpack.c.l.b16 %v12047
  %v12104 = vunpack.c.l.b16 %v12048
  %v12105 = vunpack.c.l.b16 %v12049
  %v12106 = vunpack.c.l.b16 %v12050
  %v12107 = vunpack.c.l.b16 %v12051
  %v12108 = vunpack.c.l.b16 %v12052
  %v12109 = vpack.c.b16 %v12082, %v12081
  %v12110 = vpack.c.b16 %v12084, %v12083
  %v12111 = vpack.c.b16 %v12086, %v12085
  %v12112 = vpack.c.b16 %v12088, %v12087
  %v12113 = vpack.c.b16 %v12090, %v12089
  %v12114 = vpack.c.b16 %v12092, %v12091
  %v12115 = vpack.c.b16 %v12094, %v12093
  %v12116 = vpack.c.b16 %v12096, %v12095
  %v12117 = vpack.c.b16 %v12098, %v12097
  %v12118 = vpack.c.b16 %v12100, %v12099
  %v12119 = vpack.c.b16 %v12102, %v12101
  %v12120 = vpack.c.b16 %v12104, %v12103
  %v12121 = vpack.c.b16 %v12106, %v12105
  %v12122 = vpack.c.b16 %v12108, %v12107
  %v12138 = vsel %vm4790, %v11703, 0
  %12140 = vmatprep.subr.bf16.mxu0 0
  %12141 = vmatpush1.bf16.msra.mxu0 %v12109
  %12142 = vmatprep.subr.bf16.mxu0 0
  %12143 = vmatpush1.bf16.msra.mxu0 %v12110
  %12144 = vmatprep.subr.bf16.mxu0 0
  %12145 = vmatpush1.bf16.msra.mxu0 %v12111
  %12146 = vmatprep.subr.bf16.mxu0 0
  %12147 = vmatpush1.bf16.msra.mxu0 %v12112
  %12148 = vmatprep.subr.bf16.mxu0 0
  %12149 = vmatpush1.bf16.msra.mxu0 %v12113
  %12150 = vmatprep.subr.bf16.mxu0 0
  %12151 = vmatpush1.bf16.msra.mxu0 %v12114
  %12152 = vmatprep.subr.bf16.mxu0 0
  %12153 = vmatpush1.bf16.msra.mxu0 %v12115
  %12154 = vmatprep.subr.bf16.mxu0 0
  %12155 = vmatpush1.bf16.msra.mxu0 %v12116
  %12156 = vmatprep.subr.bf16.mxu0 0
  %12157 = vmatpush1.bf16.msra.mxu0 %v12117
  %12158 = vmatprep.subr.bf16.mxu0 0
  %12159 = vmatpush1.bf16.msra.mxu0 %v12118
  %12160 = vmatprep.subr.bf16.mxu0 0
  %12161 = vmatpush1.bf16.msra.mxu0 %v12119
  %12162 = vmatprep.subr.bf16.mxu0 0
  %12163 = vmatpush1.bf16.msra.mxu0 %v12120
  %12164 = vmatprep.subr.bf16.mxu0 0
  %12165 = vmatpush1.bf16.msra.mxu0 %v12121
  %12166 = vmatprep.subr.bf16.mxu0 0
  %12167 = vmatpush1.bf16.msra.mxu0 %v12122
  %12168 = vmatprep.subr.bf16.mxu0 0
  %12169 = vmatpush1.bf16.msra.mxu0 0
  %12170 = vmatprep.subr.bf16.mxu0 0
  %12171 = vmatpush1.bf16.msra.mxu0 0
  %12172 = vmatprep.mubr.bf16.mxu0 %v12138
  %12173 = vmatmul.mubr.bf16.gmra.mrb[0].mxu0 %v11702
  %v12174 = vpop.f32.mrb[0].mxu0
  %v12175 = vadd.f32 0.0, %v12174
  %v12176 = vpop.f32.mrb[0].mxu0
  %v12177 = vpop.f32.mrb[0].mxu0
  %v12178 = vpop.f32.mrb[0].mxu0
  %12179 = vdwg.mxu0
  %v12180 = vadd.f32 %v12019, %v12175
  %s12181 = scalar_lea.vmem %s5, 336
  %v12182 = vld [vmem:[%s12181] sm:$0xf]
  %v12183 = vld [vmem:[%s12181 + $0x4] sm:$0xf]
  %v12184 = vld [vmem:[%s12181 + $0x8] sm:$0xf]
  %v12185 = vld [vmem:[%s12181 + $0xc] sm:$0xf]
  %v12186 = vld [vmem:[%s12181 + $0x10] sm:$0xf]
  %v12187 = vld [vmem:[%s12181 + $0x14] sm:$0xf]
  %v12188 = vld [vmem:[%s12181 + $0x18] sm:$0xf]
  %v12189 = vld [vmem:[%s12181 + $0x1c] sm:$0xf]
  %v12190 = vld [vmem:[%s12181 + $0x20] sm:$0xf]
  %v12191 = vld [vmem:[%s12181 + $0x24] sm:$0xf]
  %v12192 = vld [vmem:[%s12181 + $0x28] sm:$0xf]
  %v12193 = vld [vmem:[%s12181 + $0x2c] sm:$0xf]
  %v12194 = vld [vmem:[%s12181 + $0x30] sm:$0xf]
  %v12195 = vld [vmem:[%s12181 + $0x34] sm:$0xf]
  %v12196 = vld [vmem:[%s12181 + $0x38] sm:$0xf]
  %v12197 = vld [vmem:[%s12181 + $0x3c] sm:$0xf]
  %v12198 = vld [vmem:[%s12181 + $0x40] sm:$0xf]
  %v12199 = vld [vmem:[%s12181 + $0x44] sm:$0xf]
  %v12200 = vld [vmem:[%s12181 + $0x48] sm:$0xf]
  %v12201 = vld [vmem:[%s12181 + $0x4c] sm:$0xf]
  %v12202 = vld [vmem:[%s12181 + $0x50] sm:$0xf]
  %v12203 = vld [vmem:[%s12181 + $0x54] sm:$0xf]
  %v12204 = vld [vmem:[%s12181 + $0x58] sm:$0xf]
  %v12205 = vld [vmem:[%s12181 + $0x5c] sm:$0xf]
  %v12206 = vld [vmem:[%s12181 + $0x60] sm:$0xf]
  %v12207 = vld [vmem:[%s12181 + $0x64] sm:$0xf]
  %v12208 = vld [vmem:[%s12181 + $0x68] sm:$0xf]
  %v12209 = vld [vmem:[%s12181 + $0x6c] sm:$0xf]
  %v12212 = vrot.slane %v11702, 4
  %v12213 = vrot.slane %v11703, 4
  %v12243 = vunpack.c.l.b16 %v12182
  %v12244 = vunpack.c.l.b16 %v12183
  %v12245 = vunpack.c.l.b16 %v12184
  %v12246 = vunpack.c.l.b16 %v12185
  %v12247 = vunpack.c.l.b16 %v12186
  %v12248 = vunpack.c.l.b16 %v12187
  %v12249 = vunpack.c.l.b16 %v12188
  %v12250 = vunpack.c.l.b16 %v12189
  %v12251 = vunpack.c.l.b16 %v12190
  %v12252 = vunpack.c.l.b16 %v12191
  %v12253 = vunpack.c.l.b16 %v12192
  %v12254 = vunpack.c.l.b16 %v12193
  %v12255 = vunpack.c.l.b16 %v12194
  %v12256 = vunpack.c.l.b16 %v12195
  %v12257 = vunpack.c.l.b16 %v12196
  %v12258 = vunpack.c.l.b16 %v12197
  %v12259 = vunpack.c.l.b16 %v12198
  %v12260 = vunpack.c.l.b16 %v12199
  %v12261 = vunpack.c.l.b16 %v12200
  %v12262 = vunpack.c.l.b16 %v12201
  %v12263 = vunpack.c.l.b16 %v12202
  %v12264 = vunpack.c.l.b16 %v12203
  %v12265 = vunpack.c.l.b16 %v12204
  %v12266 = vunpack.c.l.b16 %v12205
  %v12267 = vunpack.c.l.b16 %v12206
  %v12268 = vunpack.c.l.b16 %v12207
  %v12269 = vunpack.c.l.b16 %v12208
  %v12270 = vunpack.c.l.b16 %v12209
  %v12271 = vpack.c.b16 %v12244, %v12243
  %v12272 = vpack.c.b16 %v12246, %v12245
  %v12273 = vpack.c.b16 %v12248, %v12247
  %v12274 = vpack.c.b16 %v12250, %v12249
  %v12275 = vpack.c.b16 %v12252, %v12251
  %v12276 = vpack.c.b16 %v12254, %v12253
  %v12277 = vpack.c.b16 %v12256, %v12255
  %v12278 = vpack.c.b16 %v12258, %v12257
  %v12279 = vpack.c.b16 %v12260, %v12259
  %v12280 = vpack.c.b16 %v12262, %v12261
  %v12281 = vpack.c.b16 %v12264, %v12263
  %v12282 = vpack.c.b16 %v12266, %v12265
  %v12283 = vpack.c.b16 %v12268, %v12267
  %v12284 = vpack.c.b16 %v12270, %v12269
  %v12300 = vsel %vm4790, %v12213, 0
  %12302 = vmatprep.subr.bf16.mxu0 0
  %12303 = vmatpush1.bf16.msra.mxu0 %v12271
  %12304 = vmatprep.subr.bf16.mxu0 0
  %12305 = vmatpush1.bf16.msra.mxu0 %v12272
  %12306 = vmatprep.subr.bf16.mxu0 0
  %12307 = vmatpush1.bf16.msra.mxu0 %v12273
  %12308 = vmatprep.subr.bf16.mxu0 0
  %12309 = vmatpush1.bf16.msra.mxu0 %v12274
  %12310 = vmatprep.subr.bf16.mxu0 0
  %12311 = vmatpush1.bf16.msra.mxu0 %v12275
  %12312 = vmatprep.subr.bf16.mxu0 0
  %12313 = vmatpush1.bf16.msra.mxu0 %v12276
  %12314 = vmatprep.subr.bf16.mxu0 0
  %12315 = vmatpush1.bf16.msra.mxu0 %v12277
  %12316 = vmatprep.subr.bf16.mxu0 0
  %12317 = vmatpush1.bf16.msra.mxu0 %v12278
  %12318 = vmatprep.subr.bf16.mxu0 0
  %12319 = vmatpush1.bf16.msra.mxu0 %v12279
  %12320 = vmatprep.subr.bf16.mxu0 0
  %12321 = vmatpush1.bf16.msra.mxu0 %v12280
  %12322 = vmatprep.subr.bf16.mxu0 0
  %12323 = vmatpush1.bf16.msra.mxu0 %v12281
  %12324 = vmatprep.subr.bf16.mxu0 0
  %12325 = vmatpush1.bf16.msra.mxu0 %v12282
  %12326 = vmatprep.subr.bf16.mxu0 0
  %12327 = vmatpush1.bf16.msra.mxu0 %v12283
  %12328 = vmatprep.subr.bf16.mxu0 0
  %12329 = vmatpush1.bf16.msra.mxu0 %v12284
  %12330 = vmatprep.subr.bf16.mxu0 0
  %12331 = vmatpush1.bf16.msra.mxu0 0
  %12332 = vmatprep.subr.bf16.mxu0 0
  %12333 = vmatpush1.bf16.msra.mxu0 0
  %12334 = vmatprep.mubr.bf16.mxu0 %v12300
  %12335 = vmatmul.mubr.bf16.gmra.mrb[0].mxu0 %v12212
  %v12336 = vpop.f32.mrb[0].mxu0
  %v12337 = vadd.f32 0.0, %v12336
  %v12338 = vpop.f32.mrb[0].mxu0
  %v12339 = vpop.f32.mrb[0].mxu0
  %v12340 = vpop.f32.mrb[0].mxu0
  %12341 = vdwg.mxu0
  %v12342 = vadd.f32 %v12180, %v12337
  %s12343 = scalar_lea.vmem %s5, 448
  %v12344 = vld [vmem:[%s12343] sm:$0xf]
  %v12345 = vld [vmem:[%s12343 + $0x4] sm:$0xf]
  %v12346 = vld [vmem:[%s12343 + $0x8] sm:$0xf]
  %v12347 = vld [vmem:[%s12343 + $0xc] sm:$0xf]
  %v12348 = vld [vmem:[%s12343 + $0x10] sm:$0xf]
  %v12349 = vld [vmem:[%s12343 + $0x14] sm:$0xf]
  %v12350 = vld [vmem:[%s12343 + $0x18] sm:$0xf]
  %v12351 = vld [vmem:[%s12343 + $0x1c] sm:$0xf]
  %v12352 = vld [vmem:[%s12343 + $0x20] sm:$0xf]
  %v12353 = vld [vmem:[%s12343 + $0x24] sm:$0xf]
  %v12354 = vld [vmem:[%s12343 + $0x28] sm:$0xf]
  %v12355 = vld [vmem:[%s12343 + $0x2c] sm:$0xf]
  %v12356 = vld [vmem:[%s12343 + $0x30] sm:$0xf]
  %v12357 = vld [vmem:[%s12343 + $0x34] sm:$0xf]
  %v12358 = vld [vmem:[%s12343 + $0x38] sm:$0xf]
  %v12359 = vld [vmem:[%s12343 + $0x3c] sm:$0xf]
  %v12360 = vld [vmem:[%s12343 + $0x40] sm:$0xf]
  %v12361 = vld [vmem:[%s12343 + $0x44] sm:$0xf]
  %v12362 = vld [vmem:[%s12343 + $0x48] sm:$0xf]
  %v12363 = vld [vmem:[%s12343 + $0x4c] sm:$0xf]
  %v12364 = vld [vmem:[%s12343 + $0x50] sm:$0xf]
  %v12365 = vld [vmem:[%s12343 + $0x54] sm:$0xf]
  %v12366 = vld [vmem:[%s12343 + $0x58] sm:$0xf]
  %v12367 = vld [vmem:[%s12343 + $0x5c] sm:$0xf]
  %v12368 = vld [vmem:[%s12343 + $0x60] sm:$0xf]
  %v12369 = vld [vmem:[%s12343 + $0x64] sm:$0xf]
  %v12370 = vld [vmem:[%s12343 + $0x68] sm:$0xf]
  %v12371 = vld [vmem:[%s12343 + $0x6c] sm:$0xf]
  %v12400 = vunpack.c.l.b16 %v12344
  %v12401 = vunpack.c.l.b16 %v12345
  %v12402 = vunpack.c.l.b16 %v12346
  %v12403 = vunpack.c.l.b16 %v12347
  %v12404 = vunpack.c.l.b16 %v12348
  %v12405 = vunpack.c.l.b16 %v12349
  %v12406 = vunpack.c.l.b16 %v12350
  %v12407 = vunpack.c.l.b16 %v12351
  %v12408 = vunpack.c.l.b16 %v12352
  %v12409 = vunpack.c.l.b16 %v12353
  %v12410 = vunpack.c.l.b16 %v12354
  %v12411 = vunpack.c.l.b16 %v12355
  %v12412 = vunpack.c.l.b16 %v12356
  %v12413 = vunpack.c.l.b16 %v12357
  %v12414 = vunpack.c.l.b16 %v12358
  %v12415 = vunpack.c.l.b16 %v12359
  %v12416 = vunpack.c.l.b16 %v12360
  %v12417 = vunpack.c.l.b16 %v12361
  %v12418 = vunpack.c.l.b16 %v12362
  %v12419 = vunpack.c.l.b16 %v12363
  %v12420 = vunpack.c.l.b16 %v12364
  %v12421 = vunpack.c.l.b16 %v12365
  %v12422 = vunpack.c.l.b16 %v12366
  %v12423 = vunpack.c.l.b16 %v12367
  %v12424 = vunpack.c.l.b16 %v12368
  %v12425 = vunpack.c.l.b16 %v12369
  %v12426 = vunpack.c.l.b16 %v12370
  %v12427 = vunpack.c.l.b16 %v12371
  %v12428 = vpack.c.b16 %v12401, %v12400
  %v12429 = vpack.c.b16 %v12403, %v12402
  %v12430 = vpack.c.b16 %v12405, %v12404
  %v12431 = vpack.c.b16 %v12407, %v12406
  %v12432 = vpack.c.b16 %v12409, %v12408
  %v12433 = vpack.c.b16 %v12411, %v12410
  %v12434 = vpack.c.b16 %v12413, %v12412
  %v12435 = vpack.c.b16 %v12415, %v12414
  %v12436 = vpack.c.b16 %v12417, %v12416
  %v12437 = vpack.c.b16 %v12419, %v12418
  %v12438 = vpack.c.b16 %v12421, %v12420
  %v12439 = vpack.c.b16 %v12423, %v12422
  %v12440 = vpack.c.b16 %v12425, %v12424
  %v12441 = vpack.c.b16 %v12427, %v12426
  %v12457 = vsel %vm4790, %v11705, 0
  %12459 = vmatprep.subr.bf16.mxu0 0
  %12460 = vmatpush1.bf16.msra.mxu0 %v12428
  %12461 = vmatprep.subr.bf16.mxu0 0
  %12462 = vmatpush1.bf16.msra.mxu0 %v12429
  %12463 = vmatprep.subr.bf16.mxu0 0
  %12464 = vmatpush1.bf16.msra.mxu0 %v12430
  %12465 = vmatprep.subr.bf16.mxu0 0
  %12466 = vmatpush1.bf16.msra.mxu0 %v12431
  %12467 = vmatprep.subr.bf16.mxu0 0
  %12468 = vmatpush1.bf16.msra.mxu0 %v12432
  %12469 = vmatprep.subr.bf16.mxu0 0
  %12470 = vmatpush1.bf16.msra.mxu0 %v12433
  %12471 = vmatprep.subr.bf16.mxu0 0
  %12472 = vmatpush1.bf16.msra.mxu0 %v12434
  %12473 = vmatprep.subr.bf16.mxu0 0
  %12474 = vmatpush1.bf16.msra.mxu0 %v12435
  %12475 = vmatprep.subr.bf16.mxu0 0
  %12476 = vmatpush1.bf16.msra.mxu0 %v12436
  %12477 = vmatprep.subr.bf16.mxu0 0
  %12478 = vmatpush1.bf16.msra.mxu0 %v12437
  %12479 = vmatprep.subr.bf16.mxu0 0
  %12480 = vmatpush1.bf16.msra.mxu0 %v12438
  %12481 = vmatprep.subr.bf16.mxu0 0
  %12482 = vmatpush1.bf16.msra.mxu0 %v12439
  %12483 = vmatprep.subr.bf16.mxu0 0
  %12484 = vmatpush1.bf16.msra.mxu0 %v12440
  %12485 = vmatprep.subr.bf16.mxu0 0
  %12486 = vmatpush1.bf16.msra.mxu0 %v12441
  %12487 = vmatprep.subr.bf16.mxu0 0
  %12488 = vmatpush1.bf16.msra.mxu0 0
  %12489 = vmatprep.subr.bf16.mxu0 0
  %12490 = vmatpush1.bf16.msra.mxu0 0
  %12491 = vmatprep.mubr.bf16.mxu0 %v12457
  %12492 = vmatmul.mubr.bf16.gmra.mrb[0].mxu0 %v11704
  %v12493 = vpop.f32.mrb[0].mxu0
  %v12494 = vadd.f32 0.0, %v12493
  %v12495 = vpop.f32.mrb[0].mxu0
  %v12496 = vpop.f32.mrb[0].mxu0
  %v12497 = vpop.f32.mrb[0].mxu0
  %12498 = vdwg.mxu0
  %v12499 = vadd.f32 %v12342, %v12494
  %s12500 = scalar_lea.vmem %s5, 560
  %v12501 = vld [vmem:[%s12500] sm:$0xf]
  %v12502 = vld [vmem:[%s12500 + $0x4] sm:$0xf]
  %v12503 = vld [vmem:[%s12500 + $0x8] sm:$0xf]
  %v12504 = vld [vmem:[%s12500 + $0xc] sm:$0xf]
  %v12505 = vld [vmem:[%s12500 + $0x10] sm:$0xf]
  %v12506 = vld [vmem:[%s12500 + $0x14] sm:$0xf]
  %v12507 = vld [vmem:[%s12500 + $0x18] sm:$0xf]
  %v12508 = vld [vmem:[%s12500 + $0x1c] sm:$0xf]
  %v12509 = vld [vmem:[%s12500 + $0x20] sm:$0xf]
  %v12510 = vld [vmem:[%s12500 + $0x24] sm:$0xf]
  %v12511 = vld [vmem:[%s12500 + $0x28] sm:$0xf]
  %v12512 = vld [vmem:[%s12500 + $0x2c] sm:$0xf]
  %v12513 = vld [vmem:[%s12500 + $0x30] sm:$0xf]
  %v12514 = vld [vmem:[%s12500 + $0x34] sm:$0xf]
  %v12515 = vld [vmem:[%s12500 + $0x38] sm:$0xf]
  %v12516 = vld [vmem:[%s12500 + $0x3c] sm:$0xf]
  %v12517 = vld [vmem:[%s12500 + $0x40] sm:$0xf]
  %v12518 = vld [vmem:[%s12500 + $0x44] sm:$0xf]
  %v12519 = vld [vmem:[%s12500 + $0x48] sm:$0xf]
  %v12520 = vld [vmem:[%s12500 + $0x4c] sm:$0xf]
  %v12521 = vld [vmem:[%s12500 + $0x50] sm:$0xf]
  %v12522 = vld [vmem:[%s12500 + $0x54] sm:$0xf]
  %v12523 = vld [vmem:[%s12500 + $0x58] sm:$0xf]
  %v12524 = vld [vmem:[%s12500 + $0x5c] sm:$0xf]
  %v12525 = vld [vmem:[%s12500 + $0x60] sm:$0xf]
  %v12526 = vld [vmem:[%s12500 + $0x64] sm:$0xf]
  %v12527 = vld [vmem:[%s12500 + $0x68] sm:$0xf]
  %v12528 = vld [vmem:[%s12500 + $0x6c] sm:$0xf]
  %v12531 = vrot.slane %v11704, 4
  %v12532 = vrot.slane %v11705, 4
  %v12562 = vunpack.c.l.b16 %v12501
  %v12563 = vunpack.c.l.b16 %v12502
  %v12564 = vunpack.c.l.b16 %v12503
  %v12565 = vunpack.c.l.b16 %v12504
  %v12566 = vunpack.c.l.b16 %v12505
  %v12567 = vunpack.c.l.b16 %v12506
  %v12568 = vunpack.c.l.b16 %v12507
  %v12569 = vunpack.c.l.b16 %v12508
  %v12570 = vunpack.c.l.b16 %v12509
  %v12571 = vunpack.c.l.b16 %v12510
  %v12572 = vunpack.c.l.b16 %v12511
  %v12573 = vunpack.c.l.b16 %v12512
  %v12574 = vunpack.c.l.b16 %v12513
  %v12575 = vunpack.c.l.b16 %v12514
  %v12576 = vunpack.c.l.b16 %v12515
  %v12577 = vunpack.c.l.b16 %v12516
  %v12578 = vunpack.c.l.b16 %v12517
  %v12579 = vunpack.c.l.b16 %v12518
  %v12580 = vunpack.c.l.b16 %v12519
  %v12581 = vunpack.c.l.b16 %v12520
  %v12582 = vunpack.c.l.b16 %v12521
  %v12583 = vunpack.c.l.b16 %v12522
  %v12584 = vunpack.c.l.b16 %v12523
  %v12585 = vunpack.c.l.b16 %v12524
  %v12586 = vunpack.c.l.b16 %v12525
  %v12587 = vunpack.c.l.b16 %v12526
  %v12588 = vunpack.c.l.b16 %v12527
  %v12589 = vunpack.c.l.b16 %v12528
  %v12590 = vpack.c.b16 %v12563, %v12562
  %v12591 = vpack.c.b16 %v12565, %v12564
  %v12592 = vpack.c.b16 %v12567, %v12566
  %v12593 = vpack.c.b16 %v12569, %v12568
  %v12594 = vpack.c.b16 %v12571, %v12570
  %v12595 = vpack.c.b16 %v12573, %v12572
  %v12596 = vpack.c.b16 %v12575, %v12574
  %v12597 = vpack.c.b16 %v12577, %v12576
  %v12598 = vpack.c.b16 %v12579, %v12578
  %v12599 = vpack.c.b16 %v12581, %v12580
  %v12600 = vpack.c.b16 %v12583, %v12582
  %v12601 = vpack.c.b16 %v12585, %v12584
  %v12602 = vpack.c.b16 %v12587, %v12586
  %v12603 = vpack.c.b16 %v12589, %v12588
  %v12619 = vsel %vm4790, %v12532, 0
  %12621 = vmatprep.subr.bf16.mxu0 0
  %12622 = vmatpush1.bf16.msra.mxu0 %v12590
  %12623 = vmatprep.subr.bf16.mxu0 0
  %12624 = vmatpush1.bf16.msra.mxu0 %v12591
  %12625 = vmatprep.subr.bf16.mxu0 0
  %12626 = vmatpush1.bf16.msra.mxu0 %v12592
  %12627 = vmatprep.subr.bf16.mxu0 0
  %12628 = vmatpush1.bf16.msra.mxu0 %v12593
  %12629 = vmatprep.subr.bf16.mxu0 0
  %12630 = vmatpush1.bf16.msra.mxu0 %v12594
  %12631 = vmatprep.subr.bf16.mxu0 0
  %12632 = vmatpush1.bf16.msra.mxu0 %v12595
  %12633 = vmatprep.subr.bf16.mxu0 0
  %12634 = vmatpush1.bf16.msra.mxu0 %v12596
  %12635 = vmatprep.subr.bf16.mxu0 0
  %12636 = vmatpush1.bf16.msra.mxu0 %v12597
  %12637 = vmatprep.subr.bf16.mxu0 0
  %12638 = vmatpush1.bf16.msra.mxu0 %v12598
  %12639 = vmatprep.subr.bf16.mxu0 0
  %12640 = vmatpush1.bf16.msra.mxu0 %v12599
  %12641 = vmatprep.subr.bf16.mxu0 0
  %12642 = vmatpush1.bf16.msra.mxu0 %v12600
  %12643 = vmatprep.subr.bf16.mxu0 0
  %12644 = vmatpush1.bf16.msra.mxu0 %v12601
  %12645 = vmatprep.subr.bf16.mxu0 0
  %12646 = vmatpush1.bf16.msra.mxu0 %v12602
  %12647 = vmatprep.subr.bf16.mxu0 0
  %12648 = vmatpush1.bf16.msra.mxu0 %v12603
  %12649 = vmatprep.subr.bf16.mxu0 0
  %12650 = vmatpush1.bf16.msra.mxu0 0
  %12651 = vmatprep.subr.bf16.mxu0 0
  %12652 = vmatpush1.bf16.msra.mxu0 0
  %12653 = vmatprep.mubr.bf16.mxu0 %v12619
  %12654 = vmatmul.mubr.bf16.gmra.mrb[0].mxu0 %v12531
  %v12655 = vpop.f32.mrb[0].mxu0
  %v12656 = vadd.f32 0.0, %v12655
  %v12657 = vpop.f32.mrb[0].mxu0
  %v12658 = vpop.f32.mrb[0].mxu0
  %v12659 = vpop.f32.mrb[0].mxu0
  %12660 = vdwg.mxu0
  %v12661 = vadd.f32 %v12499, %v12656
  %s12662 = scalar_lea.vmem %s5, 672
  %v12663 = vld [vmem:[%s12662] sm:$0xf]
  %v12664 = vld [vmem:[%s12662 + $0x4] sm:$0xf]
  %v12665 = vld [vmem:[%s12662 + $0x8] sm:$0xf]
  %v12666 = vld [vmem:[%s12662 + $0xc] sm:$0xf]
  %v12667 = vld [vmem:[%s12662 + $0x10] sm:$0xf]
  %v12668 = vld [vmem:[%s12662 + $0x14] sm:$0xf]
  %v12669 = vld [vmem:[%s12662 + $0x18] sm:$0xf]
  %v12670 = vld [vmem:[%s12662 + $0x1c] sm:$0xf]
  %v12671 = vld [vmem:[%s12662 + $0x20] sm:$0xf]
  %v12672 = vld [vmem:[%s12662 + $0x24] sm:$0xf]
  %v12673 = vld [vmem:[%s12662 + $0x28] sm:$0xf]
  %v12674 = vld [vmem:[%s12662 + $0x2c] sm:$0xf]
  %v12675 = vld [vmem:[%s12662 + $0x30] sm:$0xf]
  %v12676 = vld [vmem:[%s12662 + $0x34] sm:$0xf]
  %v12677 = vld [vmem:[%s12662 + $0x38] sm:$0xf]
  %v12678 = vld [vmem:[%s12662 + $0x3c] sm:$0xf]
  %v12679 = vld [vmem:[%s12662 + $0x40] sm:$0xf]
  %v12680 = vld [vmem:[%s12662 + $0x44] sm:$0xf]
  %v12681 = vld [vmem:[%s12662 + $0x48] sm:$0xf]
  %v12682 = vld [vmem:[%s12662 + $0x4c] sm:$0xf]
  %v12683 = vld [vmem:[%s12662 + $0x50] sm:$0xf]
  %v12684 = vld [vmem:[%s12662 + $0x54] sm:$0xf]
  %v12685 = vld [vmem:[%s12662 + $0x58] sm:$0xf]
  %v12686 = vld [vmem:[%s12662 + $0x5c] sm:$0xf]
  %v12687 = vld [vmem:[%s12662 + $0x60] sm:$0xf]
  %v12688 = vld [vmem:[%s12662 + $0x64] sm:$0xf]
  %v12689 = vld [vmem:[%s12662 + $0x68] sm:$0xf]
  %v12690 = vld [vmem:[%s12662 + $0x6c] sm:$0xf]
  %v12719 = vunpack.c.l.b16 %v12663
  %v12720 = vunpack.c.l.b16 %v12664
  %v12721 = vunpack.c.l.b16 %v12665
  %v12722 = vunpack.c.l.b16 %v12666
  %v12723 = vunpack.c.l.b16 %v12667
  %v12724 = vunpack.c.l.b16 %v12668
  %v12725 = vunpack.c.l.b16 %v12669
  %v12726 = vunpack.c.l.b16 %v12670
  %v12727 = vunpack.c.l.b16 %v12671
  %v12728 = vunpack.c.l.b16 %v12672
  %v12729 = vunpack.c.l.b16 %v12673
  %v12730 = vunpack.c.l.b16 %v12674
  %v12731 = vunpack.c.l.b16 %v12675
  %v12732 = vunpack.c.l.b16 %v12676
  %v12733 = vunpack.c.l.b16 %v12677
  %v12734 = vunpack.c.l.b16 %v12678
  %v12735 = vunpack.c.l.b16 %v12679
  %v12736 = vunpack.c.l.b16 %v12680
  %v12737 = vunpack.c.l.b16 %v12681
  %v12738 = vunpack.c.l.b16 %v12682
  %v12739 = vunpack.c.l.b16 %v12683
  %v12740 = vunpack.c.l.b16 %v12684
  %v12741 = vunpack.c.l.b16 %v12685
  %v12742 = vunpack.c.l.b16 %v12686
  %v12743 = vunpack.c.l.b16 %v12687
  %v12744 = vunpack.c.l.b16 %v12688
  %v12745 = vunpack.c.l.b16 %v12689
  %v12746 = vunpack.c.l.b16 %v12690
  %v12747 = vpack.c.b16 %v12720, %v12719
  %v12748 = vpack.c.b16 %v12722, %v12721
  %v12749 = vpack.c.b16 %v12724, %v12723
  %v12750 = vpack.c.b16 %v12726, %v12725
  %v12751 = vpack.c.b16 %v12728, %v12727
  %v12752 = vpack.c.b16 %v12730, %v12729
  %v12753 = vpack.c.b16 %v12732, %v12731
  %v12754 = vpack.c.b16 %v12734, %v12733
  %v12755 = vpack.c.b16 %v12736, %v12735
  %v12756 = vpack.c.b16 %v12738, %v12737
  %v12757 = vpack.c.b16 %v12740, %v12739
  %v12758 = vpack.c.b16 %v12742, %v12741
  %v12759 = vpack.c.b16 %v12744, %v12743
  %v12760 = vpack.c.b16 %v12746, %v12745
  %v12776 = vsel %vm4790, %v11707, 0
  %12778 = vmatprep.subr.bf16.mxu0 0
  %12779 = vmatpush1.bf16.msra.mxu0 %v12747
  %12780 = vmatprep.subr.bf16.mxu0 0
  %12781 = vmatpush1.bf16.msra.mxu0 %v12748
  %12782 = vmatprep.subr.bf16.mxu0 0
  %12783 = vmatpush1.bf16.msra.mxu0 %v12749
  %12784 = vmatprep.subr.bf16.mxu0 0
  %12785 = vmatpush1.bf16.msra.mxu0 %v12750
  %12786 = vmatprep.subr.bf16.mxu0 0
  %12787 = vmatpush1.bf16.msra.mxu0 %v12751
  %12788 = vmatprep.subr.bf16.mxu0 0
  %12789 = vmatpush1.bf16.msra.mxu0 %v12752
  %12790 = vmatprep.subr.bf16.mxu0 0
  %12791 = vmatpush1.bf16.msra.mxu0 %v12753
  %12792 = vmatprep.subr.bf16.mxu0 0
  %12793 = vmatpush1.bf16.msra.mxu0 %v12754
  %12794 = vmatprep.subr.bf16.mxu0 0
  %12795 = vmatpush1.bf16.msra.mxu0 %v12755
  %12796 = vmatprep.subr.bf16.mxu0 0
  %12797 = vmatpush1.bf16.msra.mxu0 %v12756
  %12798 = vmatprep.subr.bf16.mxu0 0
  %12799 = vmatpush1.bf16.msra.mxu0 %v12757
  %12800 = vmatprep.subr.bf16.mxu0 0
  %12801 = vmatpush1.bf16.msra.mxu0 %v12758
  %12802 = vmatprep.subr.bf16.mxu0 0
  %12803 = vmatpush1.bf16.msra.mxu0 %v12759
  %12804 = vmatprep.subr.bf16.mxu0 0
  %12805 = vmatpush1.bf16.msra.mxu0 %v12760
  %12806 = vmatprep.subr.bf16.mxu0 0
  %12807 = vmatpush1.bf16.msra.mxu0 0
  %12808 = vmatprep.subr.bf16.mxu0 0
  %12809 = vmatpush1.bf16.msra.mxu0 0
  %12810 = vmatprep.mubr.bf16.mxu0 %v12776
  %12811 = vmatmul.mubr.bf16.gmra.mrb[0].mxu0 %v11706
  %v12812 = vpop.f32.mrb[0].mxu0
  %v12813 = vadd.f32 0.0, %v12812
  %v12814 = vpop.f32.mrb[0].mxu0
  %v12815 = vpop.f32.mrb[0].mxu0
  %v12816 = vpop.f32.mrb[0].mxu0
  %12817 = vdwg.mxu0
  %v12818 = vadd.f32 %v12661, %v12813
  %v12819 = vld [vmem:[%s6] sm:$0x1]
  %v12821 = vlaneseq
  %v12822 = vshrl.u32 %v12821, 7
  %v12823 = vsub.s32 0, %v12822
  %v12824 = vrot.slane %v12819, %v12823
  %v12826 = vadd.f32 %v12818, %v12824
  %12827 = vst [vmem:[%s7] sm:$0xff] %v12826
  // Predicated region
  $region30: #{cnn_forward.1} parent=0 // pred_check
    _
  $region31: #{cnn_forward.1} parent=0 // pred_check_branch
    %12829 = sbr.rel (0) target = $region33
  $region32: #{cnn_forward.1} parent=0 // pred_region
    _
  $region33: #{cnn_forward.1} parent=0 // pred_fallthru
    _
  // Predicated region
  $region34: #{cnn_forward.1} parent=0 // pred_check
    _
  $region35: #{cnn_forward.1} parent=0 // pred_check_branch
    %12831 = sbr.rel (0) target = $region37
  $region36: #{cnn_forward.1} parent=0 // pred_region
    _
  $region37: #{cnn_forward.1} parent=0 // pred_fallthru
    _

</llo_original>
